<compile_context>
chip_gen: v7x
topology: tpu7x:2x2x1
jax: 0.10.0
libtpu: 0.0.40
codegen_flags: <defaults>
</compile_context>

<pallas_src>
import functools

import jax
import jax.numpy as jnp
import numpy as np
from jax.experimental import pallas as pl
from jax.experimental.pallas import tpu as pltpu

BN_EPS = 1e-5


# ----------------------------- Pallas kernels ------------------------------

def _stem_kernel(p_ref, w_ref, g_ref, b_ref, o_ref):
    """7x7/s2 conv (as matmul over pre-built patches) + BatchNorm(batch stats) + ReLU."""
    y = jnp.dot(p_ref[...], w_ref[...], preferred_element_type=jnp.float32)   # (M, 64) f32
    inv_m = 1.0 / p_ref.shape[0]
    mean = jnp.sum(y, axis=0, keepdims=True) * inv_m
    var = jnp.maximum(jnp.sum(y * y, axis=0, keepdims=True) * inv_m - mean * mean, 0.0)
    s = g_ref[...] * jax.lax.rsqrt(var + BN_EPS)
    t = b_ref[...] - mean * s
    o_ref[...] = jnp.maximum(y * s + t, 0.0)


def _fused_kernel(*refs, cfg):
    """Whole post-stem network in one kernel.

    Input ref order (forward-execution order, built by densenet_fwd):
      x2, then per block: [mask, (g1,b1,w1,g2,b2,w2f) per layer, (P,gt,bt,wt) if transition],
      then final_gamma, final_beta, cls_w, cls_b.
    After the inputs: out_ref, then one VMEM activation scratch per dense block.
    """
    g = cfg['growth']
    n_batch = cfg['batch']
    lpb = cfg['layers_per_block']
    hw = cfg['block_hw']
    n_in = cfg['n_inputs']
    nblk = len(lpb)

    out_ref = refs[n_in]
    act_refs = refs[n_in + 1:n_in + 1 + nblk]

    pos = [0]

    def nxt():
        r = refs[pos[0]]
        pos[0] += 1
        return r

    def bn_scale_shift(xin, gamma_ref, beta_ref, inv_m):
        # training-mode BatchNorm: batch statistics, biased variance, clamped for safety
        mean = jnp.sum(xin, axis=0, keepdims=True) * inv_m
        var = jnp.maximum(jnp.sum(xin * xin, axis=0, keepdims=True) * inv_m - mean * mean, 0.0)
        s = gamma_ref[...] * jax.lax.rsqrt(var + BN_EPS)
        t = beta_ref[...] - mean * s
        return s, t

    # ---- load post-maxpool activation into block-0 scratch ----
    x_ref = nxt()
    C = x_ref.shape[1]
    act_refs[0][:, 0:C] = x_ref[...]

    # ---- dense blocks (+ transitions) ----
    for bi in range(nblk):
        H, W = hw[bi]
        act = act_refs[bi]
        mask_ref = nxt()
        M = mask_ref.shape[0]
        inv_m = 1.0 / M
        mask = mask_ref[...]                                        # (M, 9) validity of 3x3 taps

        for _ in range(lpb[bi]):
            g1 = nxt(); b1 = nxt(); w1 = nxt(); g2 = nxt(); b2 = nxt(); w2 = nxt()
            xin = act[:, 0:C]                                       # (M, C) concat activation
            s1, t1 = bn_scale_shift(xin, g1, b1, inv_m)
            a1 = jnp.maximum(xin * s1 + t1, 0.0)
            h = jnp.dot(a1.astype(jnp.bfloat16), w1[...],
                        preferred_element_type=jnp.float32)         # 1x1 conv -> (M, 4g)
            s2, t2 = bn_scale_shift(h, g2, b2, inv_m)
            a2 = jnp.maximum(h * s2 + t2, 0.0).astype(jnp.bfloat16)  # (M, 4g)

            # 3x3 conv, pad 1: channel contraction first, then 9 sublane rolls + mask.
            partial = jnp.dot(a2, w2[...], preferred_element_type=jnp.float32)   # (M, 9*g)
            acc = jnp.zeros((M, g), jnp.float32)
            tap = 0
            for dy in (-1, 0, 1):
                for dx in (-1, 0, 1):
                    d = dy * W + dx                                 # flat-row offset of this tap
                    p = partial[:, tap * g:(tap + 1) * g]           # (M, g) = a2 @ W_tap
                    if d % M != 0:
                        # want shifted[m] = p[(m + d) mod M]  (roll semantics match jnp.roll)
                        p = pltpu.roll(p, shift=(-d) % M, axis=0)
                    acc = acc + p * mask[:, tap:tap + 1]
                    tap += 1

            act[:, C:C + g] = acc                                   # torch.cat([x, out], dim=1)
            C += g

        if bi < nblk - 1:
            p_ref = nxt(); gt = nxt(); bt = nxt(); wt = nxt()
            xin = act[:, 0:C]
            s, t = bn_scale_shift(xin, gt, bt, inv_m)
            a = jnp.maximum(xin * s + t, 0.0)
            h = jnp.dot(a.astype(jnp.bfloat16), wt[...],
                        preferred_element_type=jnp.float32)         # 1x1 conv -> (M, Cout)
            pooled = jnp.dot(p_ref[...], h,
                             preferred_element_type=jnp.float32)    # 2x2 avg pool -> (M/4, Cout)
            C = h.shape[1]
            act_refs[bi + 1][:, 0:C] = pooled

    # ---- head: final BN -> ReLU -> global average pool -> classifier ----
    gf = nxt(); bf_ = nxt(); wc = nxt(); bc = nxt()
    H, W = hw[-1]
    act = act_refs[-1]
    M = act.shape[0]
    inv_m = 1.0 / M
    xin = act[:, 0:C]
    s, t = bn_scale_shift(xin, gf, bf_, inv_m)
    a = jnp.maximum(xin * s + t, 0.0)                               # (M, C)
    hw_pix = H * W
    feat = jnp.sum(a.reshape(n_batch, hw_pix, C), axis=1) * (1.0 / hw_pix)   # (N, C)
    out_ref[...] = jnp.dot(feat, wc[...], preferred_element_type=jnp.float32) + bc[...]


# ----------------------------- Pallas wrappers ------------------------------

def _fs(shape):
    """Full-array block (single grid step): whole tensor resident in VMEM."""
    nd = len(shape)
    return pl.BlockSpec(shape, lambda i, _nd=nd: (0,) * _nd)


_ARB = pltpu.CompilerParams(dimension_semantics=("arbitrary",))
# TODO(synk): with batch/spatial this small a single-step grid is fine; larger batches should
# tile rows over a leading "parallel" grid axis to use v7x's second TensorCore.


def pallas_stem(patches, wb, gamma, beta):
    M, K = patches.shape
    Cout = wb.shape[1]
    return pl.pallas_call(
        _stem_kernel,
        out_shape=jax.ShapeDtypeStruct((M, Cout), jnp.float32),
        grid=(1,),
        in_specs=[_fs((M, K)), _fs((K, Cout)), _fs((1, Cout)), _fs((1, Cout))],
        out_specs=_fs((M, Cout)),
        compiler_params=_ARB,
    )(patches, wb, gamma, beta)


# ----------------------------- JAX glue ------------------------------------

def im2col(x, kh, kw, stride, pad):
    # x: (N, H, W, C) NHWC  (only used for the 7x7/s2 stem; tiny tensor)
    N, H, W, C = x.shape
    xp = jnp.pad(x, ((0, 0), (pad, pad), (pad, pad), (0, 0)))
    Ho = (H + 2 * pad - kh) // stride + 1
    Wo = (W + 2 * pad - kw) // stride + 1
    cols = []
    for i in range(kh):
        for j in range(kw):
            cols.append(xp[:, i:i + (Ho - 1) * stride + 1:stride,
                           j:j + (Wo - 1) * stride + 1:stride, :])
    patches = jnp.concatenate(cols, axis=-1)          # (N, Ho, Wo, kh*kw*C)
    return patches.reshape(N * Ho * Wo, kh * kw * C), Ho, Wo


def w_1x1(w_oihw):          # (O, I, 1, 1) -> (I, O)
    return jnp.transpose(w_oihw[:, :, 0, 0], (1, 0))


def w_kxk(w_oihw):          # (O, I, Kh, Kw) -> (Kh*Kw*I, O), matches im2col ordering
    O, I, Kh, Kw = w_oihw.shape
    return jnp.transpose(w_oihw, (2, 3, 1, 0)).reshape(Kh * Kw * I, O)


def w_3x3_flat(w_oihw):     # (O, I, 3, 3) -> (I, 9*O): column block tap*O:(tap+1)*O is W_tap
    O, I, Kh, Kw = w_oihw.shape
    return jnp.transpose(w_oihw, (1, 2, 3, 0)).reshape(I, Kh * Kw * O)


def _tap_valid_mask(N, H, W):
    """(M, 9) f32: 1 where 3x3 tap (dy,dx) at flattened row m stays inside the image."""
    idx = np.arange(N * H * W)
    y = (idx // W) % H
    x = idx % W
    cols = []
    for dy in (-1, 0, 1):
        for dx in (-1, 0, 1):
            v = ((y + dy >= 0) & (y + dy < H) & (x + dx >= 0) & (x + dx < W))
            cols.append(v.astype(np.float32))
    return jnp.asarray(np.stack(cols, axis=1))


def _avgpool2_matrix(N, H, W):
    """(M/4, M) f32 pooling matrix for 2x2/s2 average pooling over flattened NHW rows."""
    Ho, Wo = H // 2, W // 2
    P = np.zeros((N * Ho * Wo, N * H * W), np.float32)
    for n in range(N):
        for yo in range(Ho):
            for xo in range(Wo):
                q = (n * Ho + yo) * Wo + xo
                for a in range(2):
                    for b in range(2):
                        m = (n * H + 2 * yo + a) * W + 2 * xo + b
                        P[q, m] = 0.25
    return jnp.asarray(P)


def maxpool_3x3_s2_p1(x):
    return jax.lax.reduce_window(
        x, -jnp.inf, jax.lax.max,
        window_dimensions=(1, 3, 3, 1), window_strides=(1, 2, 2, 1),
        padding=[(0, 0), (1, 1), (1, 1), (0, 0)])


# ----------------------------- model ---------------------------------------

def densenet_fwd(x_nchw, params):
    x = jnp.transpose(x_nchw, (0, 2, 3, 1)).astype(jnp.float32)   # NCHW -> NHWC
    N = x.shape[0]

    # stem: conv 7x7/s2/p3 -> BN -> ReLU (one fused kernel) -> maxpool 3x3/s2/p1 (XLA)
    patches, Ho, Wo = im2col(x, 7, 7, 2, 3)
    stem_c = params['stem']['w'].shape[0]
    y = pallas_stem(patches.astype(jnp.bfloat16),
                    w_kxk(params['stem']['w']).astype(jnp.bfloat16),
                    params['stem']['gamma'].reshape(1, -1),
                    params['stem']['beta'].reshape(1, -1))
    y = y.reshape(N, Ho, Wo, stem_c)
    # TODO(synk): the 3x3/s2 max-pool stays in XLA (strided window has no cheap roll form).
    y = maxpool_3x3_s2_p1(y)
    _, H, W, C = y.shape
    x2 = y.reshape(-1, C)

    # Flatten everything the fused kernel needs, in forward-execution order.
    growth = params['blocks'][0][0]['w2'].shape[0]
    layers_per_block = [len(b) for b in params['blocks']]
    inputs = [x2]
    block_hw, scratch_shapes = [], []
    Hc, Wc, Cc = H, W, C
    for bi, blk in enumerate(params['blocks']):
        block_hw.append((Hc, Wc))
        inputs.append(_tap_valid_mask(N, Hc, Wc))
        c_final = Cc + len(blk) * growth
        scratch_shapes.append(pltpu.VMEM((N * Hc * Wc, c_final), jnp.float32))
        for lp in blk:
            inputs += [lp['gamma1'].reshape(1, -1), lp['beta1'].reshape(1, -1),
                       w_1x1(lp['w1']).astype(jnp.bfloat16),
                       lp['gamma2'].reshape(1, -1), lp['beta2'].reshape(1, -1),
                       w_3x3_flat(lp['w2']).astype(jnp.bfloat16)]
        Cc = c_final
        if bi < len(params['transitions']):
            tp = params['transitions'][bi]
            inputs += [_avgpool2_matrix(N, Hc, Wc),
                       tp['gamma'].reshape(1, -1), tp['beta'].reshape(1, -1),
                       w_1x1(tp['w']).astype(jnp.bfloat16)]
            Cc = tp['w'].shape[0]
            Hc, Wc = Hc // 2, Wc // 2
    inputs += [params['final_gamma'].reshape(1, -1),
               params['final_beta'].reshape(1, -1),
               jnp.transpose(params['cls_w'], (1, 0)),
               params['cls_b'].reshape(1, -1)]

    num_classes = params['cls_w'].shape[0]
    cfg = dict(growth=growth, batch=N, layers_per_block=layers_per_block,
               block_hw=block_hw, n_inputs=len(inputs))

    kernel = functools.partial(_fused_kernel, cfg=cfg)
    return pl.pallas_call(
        kernel,
        out_shape=jax.ShapeDtypeStruct((N, num_classes), jnp.float32),
        grid=(1,),
        in_specs=[_fs(a.shape) for a in inputs],
        out_specs=_fs((N, num_classes)),
        scratch_shapes=scratch_shapes,
        compiler_params=_ARB,
    )(*inputs)


# ----------------------------- parameters -----------------------------------

def init_params(key, growth_rate, num_blocks, num_classes):
    keys = iter(jax.random.split(key, 256))

    def conv_w(o, i, kh, kw):
        fan_in = i * kh * kw
        return (jax.random.normal(next(keys), (o, i, kh, kw), jnp.float32)
                / jnp.sqrt(float(fan_in)))

    params = {
        'stem': {
            'w': conv_w(64, 3, 7, 7),
            'gamma': jnp.ones((64,), jnp.float32),
            'beta': jnp.zeros((64,), jnp.float32),
        }
    }
    channels = 64
    blocks, transitions = [], []
    for bi, layers in enumerate(num_blocks):
        blk = []
        for _ in range(layers):
            blk.append({
                'gamma1': jnp.ones((channels,), jnp.float32),
                'beta1': jnp.zeros((channels,), jnp.float32),
                'w1': conv_w(4 * growth_rate, channels, 1, 1),
                'gamma2': jnp.ones((4 * growth_rate,), jnp.float32),
                'beta2': jnp.zeros((4 * growth_rate,), jnp.float32),
                'w2': conv_w(growth_rate, 4 * growth_rate, 3, 3),
            })
            channels += growth_rate
        blocks.append(blk)
        if bi < len(num_blocks) - 1:
            out_ch = int(channels * 0.5)
            transitions.append({
                'gamma': jnp.ones((channels,), jnp.float32),
                'beta': jnp.zeros((channels,), jnp.float32),
                'w': conv_w(out_ch, channels, 1, 1),
            })
            channels = out_ch
    params['blocks'] = blocks
    params['transitions'] = transitions
    params['final_gamma'] = jnp.ones((channels,), jnp.float32)
    params['final_beta'] = jnp.zeros((channels,), jnp.float32)
    params['cls_w'] = (jax.random.normal(next(keys), (num_classes, channels), jnp.float32)
                       / jnp.sqrt(float(channels)))
    params['cls_b'] = 0.01 * jax.random.normal(next(keys), (num_classes,), jnp.float32)
    return params


# ----------------------------- main ------------------------------------------

if __name__ == "__main__":
    growth_rate = 8
    num_blocks = [2, 2]
    num_classes = 10

    key = jax.random.PRNGKey(0)
    k_x, k_p = jax.random.split(key)
    x = jax.random.normal(k_x, (2, 3, 32, 32), jnp.float32)   # NCHW, like PyTorch
    params = init_params(k_p, growth_rate, num_blocks, num_classes)

    fwd = jax.jit(densenet_fwd)
    logits = fwd(x, params)
    logits = jax.block_until_ready(logits)
    assert logits.shape == (2, num_classes), logits.shape
    assert bool(jnp.all(jnp.isfinite(logits)))
    print("KERNEL_OK")
</pallas_src>

<mosaic_0001>
module attributes {stable_mosaic.version = 11 : i64} {
  func.func @_stem_kernel(%arg0: i32, %arg1: memref<512x147xbf16, #tpu.memory_space<vmem>>, %arg2: memref<147x64xbf16, #tpu.memory_space<vmem>>, %arg3: memref<1x64xf32, #tpu.memory_space<vmem>>, %arg4: memref<1x64xf32, #tpu.memory_space<vmem>>, %arg5: memref<512x64xf32, #tpu.memory_space<vmem>>) attributes {dimension_semantics = [#tpu.dimension_semantics<arbitrary>], iteration_bounds = array<i64: 1>, scalar_prefetch = 0 : i64, scratch_operands = 0 : i64, tpu.core_type = #tpu.core_type<tc>, window_params = [{pipeline_mode = #tpu.pipeline_mode<synchronous>, transform_indices = @transform_0, window_bounds = array<i64: 512, 147>}, {pipeline_mode = #tpu.pipeline_mode<synchronous>, transform_indices = @transform_1, window_bounds = array<i64: 147, 64>}, {pipeline_mode = #tpu.pipeline_mode<synchronous>, transform_indices = @transform_2, window_bounds = array<i64: 1, 64>}, {pipeline_mode = #tpu.pipeline_mode<synchronous>, transform_indices = @transform_3, window_bounds = array<i64: 1, 64>}, {pipeline_mode = #tpu.pipeline_mode<synchronous>, transform_indices = @transform_4, window_bounds = array<i64: 512, 64>}]} {
    %c0 = arith.constant 0 : index
    %c0_0 = arith.constant 0 : index
    %0 = vector.load %arg1[%c0, %c0_0] : memref<512x147xbf16, #tpu.memory_space<vmem>>, vector<512x147xbf16>
    %c0_1 = arith.constant 0 : index
    %c0_2 = arith.constant 0 : index
    %1 = vector.load %arg2[%c0_1, %c0_2] : memref<147x64xbf16, #tpu.memory_space<vmem>>, vector<147x64xbf16>
    %cst = arith.constant dense<0.000000e+00> : vector<512x64xf32>
    %2 = tpu.matmul %0, %1, %cst {dimension_numbers = #tpu.dot_dimension_numbers<[1], [0], [0], [1], [0, 0, 1, 1], [], []>} : vector<512x147xbf16>, vector<147x64xbf16>, vector<512x64xf32> -> vector<512x64xf32>
    %cst_3 = arith.constant dense<0.000000e+00> : vector<64xf32>
    %3 = vector.multi_reduction <add>, %2, %cst_3 [0] : vector<512x64xf32> to vector<64xf32>
    %4 = vector.shape_cast %3 : vector<64xf32> to vector<1x64xf32>
    %cst_4 = arith.constant 0.001953125 : f32
    %5 = vector.broadcast %cst_4 : f32 to vector<1x64xf32>
    %6 = arith.mulf %4, %5 : vector<1x64xf32>
    %7 = arith.mulf %2, %2 : vector<512x64xf32>
    %cst_5 = arith.constant dense<0.000000e+00> : vector<64xf32>
    %8 = vector.multi_reduction <add>, %7, %cst_5 [0] : vector<512x64xf32> to vector<64xf32>
    %9 = vector.shape_cast %8 : vector<64xf32> to vector<1x64xf32>
    %cst_6 = arith.constant 0.001953125 : f32
    %10 = vector.broadcast %cst_6 : f32 to vector<1x64xf32>
    %11 = arith.mulf %9, %10 : vector<1x64xf32>
    %12 = arith.mulf %6, %6 : vector<1x64xf32>
    %13 = arith.subf %11, %12 : vector<1x64xf32>
    %cst_7 = arith.constant 0.000000e+00 : f32
    %14 = vector.broadcast %cst_7 : f32 to vector<1x64xf32>
    %15 = arith.maximumf %13, %14 : vector<1x64xf32>
    %c0_8 = arith.constant 0 : index
    %c0_9 = arith.constant 0 : index
    %16 = vector.load %arg3[%c0_8, %c0_9] : memref<1x64xf32, #tpu.memory_space<vmem>>, vector<1x64xf32>
    %cst_10 = arith.constant 9.99999974E-6 : f32
    %17 = vector.broadcast %cst_10 : f32 to vector<1x64xf32>
    %18 = arith.addf %15, %17 : vector<1x64xf32>
    %19 = math.rsqrt %18 : vector<1x64xf32>
    %20 = arith.mulf %16, %19 : vector<1x64xf32>
    %c0_11 = arith.constant 0 : index
    %c0_12 = arith.constant 0 : index
    %21 = vector.load %arg4[%c0_11, %c0_12] : memref<1x64xf32, #tpu.memory_space<vmem>>, vector<1x64xf32>
    %22 = arith.mulf %6, %20 : vector<1x64xf32>
    %23 = arith.subf %21, %22 : vector<1x64xf32>
    %24 = vector.broadcast %20 : vector<1x64xf32> to vector<512x64xf32>
    %25 = arith.mulf %2, %24 : vector<512x64xf32>
    %26 = vector.broadcast %23 : vector<1x64xf32> to vector<512x64xf32>
    %27 = arith.addf %25, %26 : vector<512x64xf32>
    %cst_13 = arith.constant 0.000000e+00 : f32
    %28 = vector.broadcast %cst_13 : f32 to vector<512x64xf32>
    %29 = arith.maximumf %27, %28 : vector<512x64xf32>
    %c0_14 = arith.constant 0 : index
    %c0_15 = arith.constant 0 : index
    %30 = vector.load %arg5[%c0_14, %c0_15] : memref<512x64xf32, #tpu.memory_space<vmem>>, vector<512x64xf32>
    tpu.vector_store %arg5[%c0_14, %c0_15], %29 {strides = array<i32>} : memref<512x64xf32, #tpu.memory_space<vmem>>, vector<512x64xf32>,
    return
  }
  func.func @transform_0(%arg0: i32) -> (i32, i32) {
    %c0_i32 = arith.constant 0 : i32
    %c0_i32_0 = arith.constant 0 : i32
    %c0_i32_1 = arith.constant 0 : i32
    return %c0_i32, %c0_i32_0 : i32, i32
  }
  func.func @transform_1(%arg0: i32) -> (i32, i32) {
    %c0_i32 = arith.constant 0 : i32
    %c0_i32_0 = arith.constant 0 : i32
    %c0_i32_1 = arith.constant 0 : i32
    return %c0_i32, %c0_i32_0 : i32, i32
  }
  func.func @transform_2(%arg0: i32) -> (i32, i32) {
    %c0_i32 = arith.constant 0 : i32
    %c0_i32_0 = arith.constant 0 : i32
    %c0_i32_1 = arith.constant 0 : i32
    return %c0_i32, %c0_i32_0 : i32, i32
  }
  func.func @transform_3(%arg0: i32) -> (i32, i32) {
    %c0_i32 = arith.constant 0 : i32
    %c0_i32_0 = arith.constant 0 : i32
    %c0_i32_1 = arith.constant 0 : i32
    return %c0_i32, %c0_i32_0 : i32, i32
  }
  func.func @transform_4(%arg0: i32) -> (i32, i32) {
    %c0_i32 = arith.constant 0 : i32
    %c0_i32_0 = arith.constant 0 : i32
    %c0_i32_1 = arith.constant 0 : i32
    return %c0_i32, %c0_i32_0 : i32, i32
  }
}

module attributes {stable_mosaic.version = 11 : i64} {
  func.func @_fused_kernel(%arg0: i32, %arg1: memref<128x64xf32, #tpu.memory_space<vmem>>, %arg2: memref<128x9xf32, #tpu.memory_space<vmem>>, %arg3: memref<1x64xf32, #tpu.memory_space<vmem>>, %arg4: memref<1x64xf32, #tpu.memory_space<vmem>>, %arg5: memref<64x32xbf16, #tpu.memory_space<vmem>>, %arg6: memref<1x32xf32, #tpu.memory_space<vmem>>, %arg7: memref<1x32xf32, #tpu.memory_space<vmem>>, %arg8: memref<32x72xbf16, #tpu.memory_space<vmem>>, %arg9: memref<1x72xf32, #tpu.memory_space<vmem>>, %arg10: memref<1x72xf32, #tpu.memory_space<vmem>>, %arg11: memref<72x32xbf16, #tpu.memory_space<vmem>>, %arg12: memref<1x32xf32, #tpu.memory_space<vmem>>, %arg13: memref<1x32xf32, #tpu.memory_space<vmem>>, %arg14: memref<32x72xbf16, #tpu.memory_space<vmem>>, %arg15: memref<32x128xf32, #tpu.memory_space<vmem>>, %arg16: memref<1x80xf32, #tpu.memory_space<vmem>>, %arg17: memref<1x80xf32, #tpu.memory_space<vmem>>, %arg18: memref<80x40xbf16, #tpu.memory_space<vmem>>, %arg19: memref<32x9xf32, #tpu.memory_space<vmem>>, %arg20: memref<1x40xf32, #tpu.memory_space<vmem>>, %arg21: memref<1x40xf32, #tpu.memory_space<vmem>>, %arg22: memref<40x32xbf16, #tpu.memory_space<vmem>>, %arg23: memref<1x32xf32, #tpu.memory_space<vmem>>, %arg24: memref<1x32xf32, #tpu.memory_space<vmem>>, %arg25: memref<32x72xbf16, #tpu.memory_space<vmem>>, %arg26: memref<1x48xf32, #tpu.memory_space<vmem>>, %arg27: memref<1x48xf32, #tpu.memory_space<vmem>>, %arg28: memref<48x32xbf16, #tpu.memory_space<vmem>>, %arg29: memref<1x32xf32, #tpu.memory_space<vmem>>, %arg30: memref<1x32xf32, #tpu.memory_space<vmem>>, %arg31: memref<32x72xbf16, #tpu.memory_space<vmem>>, %arg32: memref<1x56xf32, #tpu.memory_space<vmem>>, %arg33: memref<1x56xf32, #tpu.memory_space<vmem>>, %arg34: memref<56x10xf32, #tpu.memory_space<vmem>>, %arg35: memref<1x10xf32, #tpu.memory_space<vmem>>, %arg36: memref<2x10xf32, #tpu.memory_space<vmem>>, %arg37: memref<128x80xf32, #tpu.memory_space<vmem>>, %arg38: memref<32x56xf32, #tpu.memory_space<vmem>>) attributes {dimension_semantics = [#tpu.dimension_semantics<arbitrary>], iteration_bounds = array<i64: 1>, scalar_prefetch = 0 : i64, scratch_operands = 2 : i64, tpu.core_type = #tpu.core_type<tc>, window_params = [{pipeline_mode = #tpu.pipeline_mode<synchronous>, transform_indices = @transform_0, window_bounds = array<i64: 128, 64>}, {pipeline_mode = #tpu.pipeline_mode<synchronous>, transform_indices = @transform_1, window_bounds = array<i64: 128, 9>}, {pipeline_mode = #tpu.pipeline_mode<synchronous>, transform_indices = @transform_2, window_bounds = array<i64: 1, 64>}, {pipeline_mode = #tpu.pipeline_mode<synchronous>, transform_indices = @transform_3, window_bounds = array<i64: 1, 64>}, {pipeline_mode = #tpu.pipeline_mode<synchronous>, transform_indices = @transform_4, window_bounds = array<i64: 64, 32>}, {pipeline_mode = #tpu.pipeline_mode<synchronous>, transform_indices = @transform_5, window_bounds = array<i64: 1, 32>}, {pipeline_mode = #tpu.pipeline_mode<synchronous>, transform_indices = @transform_6, window_bounds = array<i64: 1, 32>}, {pipeline_mode = #tpu.pipeline_mode<synchronous>, transform_indices = @transform_7, window_bounds = array<i64: 32, 72>}, {pipeline_mode = #tpu.pipeline_mode<synchronous>, transform_indices = @transform_8, window_bounds = array<i64: 1, 72>}, {pipeline_mode = #tpu.pipeline_mode<synchronous>, transform_indices = @transform_9, window_bounds = array<i64: 1, 72>}, {pipeline_mode = #tpu.pipeline_mode<synchronous>, transform_indices = @transform_10, window_bounds = array<i64: 72, 32>}, {pipeline_mode = #tpu.pipeline_mode<synchronous>, transform_indices = @transform_11, window_bounds = array<i64: 1, 32>}, {pipeline_mode = #tpu.pipeline_mode<synchronous>, transform_indices = @transform_12, window_bounds = array<i64: 1, 32>}, {pipeline_mode = #tpu.pipeline_mode<synchronous>, transform_indices = @transform_13, window_bounds = array<i64: 32, 72>}, {pipeline_mode = #tpu.pipeline_mode<synchronous>, transform_indices = @transform_14, window_bounds = array<i64: 32, 128>}, {pipeline_mode = #tpu.pipeline_mode<synchronous>, transform_indices = @transform_15, window_bounds = array<i64: 1, 80>}, {pipeline_mode = #tpu.pipeline_mode<synchronous>, transform_indices = @transform_16, window_bounds = array<i64: 1, 80>}, {pipeline_mode = #tpu.pipeline_mode<synchronous>, transform_indices = @transform_17, window_bounds = array<i64: 80, 40>}, {pipeline_mode = #tpu.pipeline_mode<synchronous>, transform_indices = @transform_18, window_bounds = array<i64: 32, 9>}, {pipeline_mode = #tpu.pipeline_mode<synchronous>, transform_indices = @transform_19, window_bounds = array<i64: 1, 40>}, {pipeline_mode = #tpu.pipeline_mode<synchronous>, transform_indices = @transform_20, window_bounds = array<i64: 1, 40>}, {pipeline_mode = #tpu.pipeline_mode<synchronous>, transform_indices = @transform_21, window_bounds = array<i64: 40, 32>}, {pipeline_mode = #tpu.pipeline_mode<synchronous>, transform_indices = @transform_22, window_bounds = array<i64: 1, 32>}, {pipeline_mode = #tpu.pipeline_mode<synchronous>, transform_indices = @transform_23, window_bounds = array<i64: 1, 32>}, {pipeline_mode = #tpu.pipeline_mode<synchronous>, transform_indices = @transform_24, window_bounds = array<i64: 32, 72>}, {pipeline_mode = #tpu.pipeline_mode<synchronous>, transform_indices = @transform_25, window_bounds = array<i64: 1, 48>}, {pipeline_mode = #tpu.pipeline_mode<synchronous>, transform_indices = @transform_26, window_bounds = array<i64: 1, 48>}, {pipeline_mode = #tpu.pipeline_mode<synchronous>, transform_indices = @transform_27, window_bounds = array<i64: 48, 32>}, {pipeline_mode = #tpu.pipeline_mode<synchronous>, transform_indices = @transform_28, window_bounds = array<i64: 1, 32>}, {pipeline_mode = #tpu.pipeline_mode<synchronous>, transform_indices = @transform_29, window_bounds = array<i64: 1, 32>}, {pipeline_mode = #tpu.pipeline_mode<synchronous>, transform_indices = @transform_30, window_bounds = array<i64: 32, 72>}, {pipeline_mode = #tpu.pipeline_mode<synchronous>, transform_indices = @transform_31, window_bounds = array<i64: 1, 56>}, {pipeline_mode = #tpu.pipeline_mode<synchronous>, transform_indices = @transform_32, window_bounds = array<i64: 1, 56>}, {pipeline_mode = #tpu.pipeline_mode<synchronous>, transform_indices = @transform_33, window_bounds = array<i64: 56, 10>}, {pipeline_mode = #tpu.pipeline_mode<synchronous>, transform_indices = @transform_34, window_bounds = array<i64: 1, 10>}, {pipeline_mode = #tpu.pipeline_mode<synchronous>, transform_indices = @transform_35, window_bounds = array<i64: 2, 10>}]} {
    %c0 = arith.constant 0 : index
    %c0_0 = arith.constant 0 : index
    %0 = vector.load %arg1[%c0, %c0_0] : memref<128x64xf32, #tpu.memory_space<vmem>>, vector<128x64xf32>
    %c0_1 = arith.constant 0 : index
    %c0_2 = arith.constant 0 : index
    %1 = vector.load %arg37[%c0_1, %c0_2] : memref<128x80xf32, #tpu.memory_space<vmem>>, vector<128x64xf32>
    tpu.vector_store %arg37[%c0_1, %c0_2], %0 {strides = array<i32>} : memref<128x80xf32, #tpu.memory_space<vmem>>, vector<128x64xf32>,
    %c0_3 = arith.constant 0 : index
    %c0_4 = arith.constant 0 : index
    %2 = vector.load %arg2[%c0_3, %c0_4] : memref<128x9xf32, #tpu.memory_space<vmem>>, vector<128x9xf32>
    %c0_5 = arith.constant 0 : index
    %c0_6 = arith.constant 0 : index
    %3 = vector.load %arg37[%c0_5, %c0_6] : memref<128x80xf32, #tpu.memory_space<vmem>>, vector<128x64xf32>
    %cst = arith.constant dense<0.000000e+00> : vector<64xf32>
    %4 = vector.multi_reduction <add>, %3, %cst [0] : vector<128x64xf32> to vector<64xf32>
    %5 = vector.shape_cast %4 : vector<64xf32> to vector<1x64xf32>
    %cst_7 = arith.constant 7.812500e-03 : f32
    %6 = vector.broadcast %cst_7 : f32 to vector<1x64xf32>
    %7 = arith.mulf %5, %6 : vector<1x64xf32>
    %8 = arith.mulf %3, %3 : vector<128x64xf32>
    %cst_8 = arith.constant dense<0.000000e+00> : vector<64xf32>
    %9 = vector.multi_reduction <add>, %8, %cst_8 [0] : vector<128x64xf32> to vector<64xf32>
    %10 = vector.shape_cast %9 : vector<64xf32> to vector<1x64xf32>
    %cst_9 = arith.constant 7.812500e-03 : f32
    %11 = vector.broadcast %cst_9 : f32 to vector<1x64xf32>
    %12 = arith.mulf %10, %11 : vector<1x64xf32>
    %13 = arith.mulf %7, %7 : vector<1x64xf32>
    %14 = arith.subf %12, %13 : vector<1x64xf32>
    %cst_10 = arith.constant 0.000000e+00 : f32
    %15 = vector.broadcast %cst_10 : f32 to vector<1x64xf32>
    %16 = arith.maximumf %14, %15 : vector<1x64xf32>
    %c0_11 = arith.constant 0 : index
    %c0_12 = arith.constant 0 : index
    %17 = vector.load %arg3[%c0_11, %c0_12] : memref<1x64xf32, #tpu.memory_space<vmem>>, vector<1x64xf32>
    %cst_13 = arith.constant 9.99999974E-6 : f32
    %18 = vector.broadcast %cst_13 : f32 to vector<1x64xf32>
    %19 = arith.addf %16, %18 : vector<1x64xf32>
    %20 = math.rsqrt %19 : vector<1x64xf32>
    %21 = arith.mulf %17, %20 : vector<1x64xf32>
    %c0_14 = arith.constant 0 : index
    %c0_15 = arith.constant 0 : index
    %22 = vector.load %arg4[%c0_14, %c0_15] : memref<1x64xf32, #tpu.memory_space<vmem>>, vector<1x64xf32>
    %23 = arith.mulf %7, %21 : vector<1x64xf32>
    %24 = arith.subf %22, %23 : vector<1x64xf32>
    %25 = vector.broadcast %21 : vector<1x64xf32> to vector<128x64xf32>
    %26 = arith.mulf %3, %25 : vector<128x64xf32>
    %27 = vector.broadcast %24 : vector<1x64xf32> to vector<128x64xf32>
    %28 = arith.addf %26, %27 : vector<128x64xf32>
    %cst_16 = arith.constant 0.000000e+00 : f32
    %29 = vector.broadcast %cst_16 : f32 to vector<128x64xf32>
    %30 = arith.maximumf %28, %29 : vector<128x64xf32>
    %31 = arith.truncf %30 : vector<128x64xf32> to vector<128x64xbf16>
    %c0_17 = arith.constant 0 : index
    %c0_18 = arith.constant 0 : index
    %32 = vector.load %arg5[%c0_17, %c0_18] : memref<64x32xbf16, #tpu.memory_space<vmem>>, vector<64x32xbf16>
    %cst_19 = arith.constant dense<0.000000e+00> : vector<128x32xf32>
    %33 = tpu.matmul %31, %32, %cst_19 {dimension_numbers = #tpu.dot_dimension_numbers<[1], [0], [0], [1], [0, 0, 1, 1], [], []>} : vector<128x64xbf16>, vector<64x32xbf16>, vector<128x32xf32> -> vector<128x32xf32>
    %cst_20 = arith.constant dense<0.000000e+00> : vector<32xf32>
    %34 = vector.multi_reduction <add>, %33, %cst_20 [0] : vector<128x32xf32> to vector<32xf32>
    %35 = vector.shape_cast %34 : vector<32xf32> to vector<1x32xf32>
    %cst_21 = arith.constant 7.812500e-03 : f32
    %36 = vector.broadcast %cst_21 : f32 to vector<1x32xf32>
    %37 = arith.mulf %35, %36 : vector<1x32xf32>
    %38 = arith.mulf %33, %33 : vector<128x32xf32>
    %cst_22 = arith.constant dense<0.000000e+00> : vector<32xf32>
    %39 = vector.multi_reduction <add>, %38, %cst_22 [0] : vector<128x32xf32> to vector<32xf32>
    %40 = vector.shape_cast %39 : vector<32xf32> to vector<1x32xf32>
    %cst_23 = arith.constant 7.812500e-03 : f32
    %41 = vector.broadcast %cst_23 : f32 to vector<1x32xf32>
    %42 = arith.mulf %40, %41 : vector<1x32xf32>
    %43 = arith.mulf %37, %37 : vector<1x32xf32>
    %44 = arith.subf %42, %43 : vector<1x32xf32>
    %cst_24 = arith.constant 0.000000e+00 : f32
    %45 = vector.broadcast %cst_24 : f32 to vector<1x32xf32>
    %46 = arith.maximumf %44, %45 : vector<1x32xf32>
    %c0_25 = arith.constant 0 : index
    %c0_26 = arith.constant 0 : index
    %47 = vector.load %arg6[%c0_25, %c0_26] : memref<1x32xf32, #tpu.memory_space<vmem>>, vector<1x32xf32>
    %cst_27 = arith.constant 9.99999974E-6 : f32
    %48 = vector.broadcast %cst_27 : f32 to vector<1x32xf32>
    %49 = arith.addf %46, %48 : vector<1x32xf32>
    %50 = math.rsqrt %49 : vector<1x32xf32>
    %51 = arith.mulf %47, %50 : vector<1x32xf32>
    %c0_28 = arith.constant 0 : index
    %c0_29 = arith.constant 0 : index
    %52 = vector.load %arg7[%c0_28, %c0_29] : memref<1x32xf32, #tpu.memory_space<vmem>>, vector<1x32xf32>
    %53 = arith.mulf %37, %51 : vector<1x32xf32>
    %54 = arith.subf %52, %53 : vector<1x32xf32>
    %55 = vector.broadcast %51 : vector<1x32xf32> to vector<128x32xf32>
    %56 = arith.mulf %33, %55 : vector<128x32xf32>
    %57 = vector.broadcast %54 : vector<1x32xf32> to vector<128x32xf32>
    %58 = arith.addf %56, %57 : vector<128x32xf32>
    %cst_30 = arith.constant 0.000000e+00 : f32
    %59 = vector.broadcast %cst_30 : f32 to vector<128x32xf32>
    %60 = arith.maximumf %58, %59 : vector<128x32xf32>
    %61 = arith.truncf %60 : vector<128x32xf32> to vector<128x32xbf16>
    %c0_31 = arith.constant 0 : index
    %c0_32 = arith.constant 0 : index
    %62 = vector.load %arg8[%c0_31, %c0_32] : memref<32x72xbf16, #tpu.memory_space<vmem>>, vector<32x72xbf16>
    %cst_33 = arith.constant dense<0.000000e+00> : vector<128x72xf32>
    %63 = tpu.matmul %61, %62, %cst_33 {dimension_numbers = #tpu.dot_dimension_numbers<[1], [0], [0], [1], [0, 0, 1, 1], [], []>} : vector<128x32xbf16>, vector<32x72xbf16>, vector<128x72xf32> -> vector<128x72xf32>
    %cst_34 = arith.constant 0.000000e+00 : f32
    %64 = vector.broadcast %cst_34 : f32 to vector<128x8xf32>
    %65 = vector.extract_strided_slice %63 {offsets = [0, 0], sizes = [128, 8], strides = [1, 1]} : vector<128x72xf32> to vector<128x8xf32>
    %c9_i32 = arith.constant 9 : i32
    %66 = tpu.dynamic_rotate %65 by %c9_i32 dim 0 : vector<128x8xf32>, i32 -> vector<128x8xf32>
    %67 = vector.extract_strided_slice %2 {offsets = [0, 0], sizes = [128, 1], strides = [1, 1]} : vector<128x9xf32> to vector<128x1xf32>
    %68 = vector.broadcast %67 : vector<128x1xf32> to vector<128x8xf32>
    %69 = arith.mulf %66, %68 : vector<128x8xf32>
    %70 = arith.addf %64, %69 : vector<128x8xf32>
    %71 = vector.extract_strided_slice %63 {offsets = [0, 8], sizes = [128, 8], strides = [1, 1]} : vector<128x72xf32> to vector<128x8xf32>
    %c8_i32 = arith.constant 8 : i32
    %72 = tpu.dynamic_rotate %71 by %c8_i32 dim 0 : vector<128x8xf32>, i32 -> vector<128x8xf32>
    %73 = vector.extract_strided_slice %2 {offsets = [0, 1], sizes = [128, 1], strides = [1, 1]} : vector<128x9xf32> to vector<128x1xf32>
    %74 = vector.broadcast %73 : vector<128x1xf32> to vector<128x8xf32>
    %75 = arith.mulf %72, %74 : vector<128x8xf32>
    %76 = arith.addf %70, %75 : vector<128x8xf32>
    %77 = vector.extract_strided_slice %63 {offsets = [0, 16], sizes = [128, 8], strides = [1, 1]} : vector<128x72xf32> to vector<128x8xf32>
    %c7_i32 = arith.constant 7 : i32
    %78 = tpu.dynamic_rotate %77 by %c7_i32 dim 0 : vector<128x8xf32>, i32 -> vector<128x8xf32>
    %79 = vector.extract_strided_slice %2 {offsets = [0, 2], sizes = [128, 1], strides = [1, 1]} : vector<128x9xf32> to vector<128x1xf32>
    %80 = vector.broadcast %79 : vector<128x1xf32> to vector<128x8xf32>
    %81 = arith.mulf %78, %80 : vector<128x8xf32>
    %82 = arith.addf %76, %81 : vector<128x8xf32>
    %83 = vector.extract_strided_slice %63 {offsets = [0, 24], sizes = [128, 8], strides = [1, 1]} : vector<128x72xf32> to vector<128x8xf32>
    %c1_i32 = arith.constant 1 : i32
    %84 = tpu.dynamic_rotate %83 by %c1_i32 dim 0 : vector<128x8xf32>, i32 -> vector<128x8xf32>
    %85 = vector.extract_strided_slice %2 {offsets = [0, 3], sizes = [128, 1], strides = [1, 1]} : vector<128x9xf32> to vector<128x1xf32>
    %86 = vector.broadcast %85 : vector<128x1xf32> to vector<128x8xf32>
    %87 = arith.mulf %84, %86 : vector<128x8xf32>
    %88 = arith.addf %82, %87 : vector<128x8xf32>
    %89 = vector.extract_strided_slice %63 {offsets = [0, 32], sizes = [128, 8], strides = [1, 1]} : vector<128x72xf32> to vector<128x8xf32>
    %90 = vector.extract_strided_slice %2 {offsets = [0, 4], sizes = [128, 1], strides = [1, 1]} : vector<128x9xf32> to vector<128x1xf32>
    %91 = vector.broadcast %90 : vector<128x1xf32> to vector<128x8xf32>
    %92 = arith.mulf %89, %91 : vector<128x8xf32>
    %93 = arith.addf %88, %92 : vector<128x8xf32>
    %94 = vector.extract_strided_slice %63 {offsets = [0, 40], sizes = [128, 8], strides = [1, 1]} : vector<128x72xf32> to vector<128x8xf32>
    %c127_i32 = arith.constant 127 : i32
    %95 = tpu.dynamic_rotate %94 by %c127_i32 dim 0 : vector<128x8xf32>, i32 -> vector<128x8xf32>
    %96 = vector.extract_strided_slice %2 {offsets = [0, 5], sizes = [128, 1], strides = [1, 1]} : vector<128x9xf32> to vector<128x1xf32>
    %97 = vector.broadcast %96 : vector<128x1xf32> to vector<128x8xf32>
    %98 = arith.mulf %95, %97 : vector<128x8xf32>
    %99 = arith.addf %93, %98 : vector<128x8xf32>
    %100 = vector.extract_strided_slice %63 {offsets = [0, 48], sizes = [128, 8], strides = [1, 1]} : vector<128x72xf32> to vector<128x8xf32>
    %c121_i32 = arith.constant 121 : i32
    %101 = tpu.dynamic_rotate %100 by %c121_i32 dim 0 : vector<128x8xf32>, i32 -> vector<128x8xf32>
    %102 = vector.extract_strided_slice %2 {offsets = [0, 6], sizes = [128, 1], strides = [1, 1]} : vector<128x9xf32> to vector<128x1xf32>
    %103 = vector.broadcast %102 : vector<128x1xf32> to vector<128x8xf32>
    %104 = arith.mulf %101, %103 : vector<128x8xf32>
    %105 = arith.addf %99, %104 : vector<128x8xf32>
    %106 = vector.extract_strided_slice %63 {offsets = [0, 56], sizes = [128, 8], strides = [1, 1]} : vector<128x72xf32> to vector<128x8xf32>
    %c120_i32 = arith.constant 120 : i32
    %107 = tpu.dynamic_rotate %106 by %c120_i32 dim 0 : vector<128x8xf32>, i32 -> vector<128x8xf32>
    %108 = vector.extract_strided_slice %2 {offsets = [0, 7], sizes = [128, 1], strides = [1, 1]} : vector<128x9xf32> to vector<128x1xf32>
    %109 = vector.broadcast %108 : vector<128x1xf32> to vector<128x8xf32>
    %110 = arith.mulf %107, %109 : vector<128x8xf32>
    %111 = arith.addf %105, %110 : vector<128x8xf32>
    %112 = vector.extract_strided_slice %63 {offsets = [0, 64], sizes = [128, 8], strides = [1, 1]} : vector<128x72xf32> to vector<128x8xf32>
    %c119_i32 = arith.constant 119 : i32
    %113 = tpu.dynamic_rotate %112 by %c119_i32 dim 0 : vector<128x8xf32>, i32 -> vector<128x8xf32>
    %114 = vector.extract_strided_slice %2 {offsets = [0, 8], sizes = [128, 1], strides = [1, 1]} : vector<128x9xf32> to vector<128x1xf32>
    %115 = vector.broadcast %114 : vector<128x1xf32> to vector<128x8xf32>
    %116 = arith.mulf %113, %115 : vector<128x8xf32>
    %117 = arith.addf %111, %116 : vector<128x8xf32>
    %c0_35 = arith.constant 0 : index
    %c64 = arith.constant 64 : index
    %118 = vector.load %arg37[%c0_35, %c64] : memref<128x80xf32, #tpu.memory_space<vmem>>, vector<128x8xf32>
    tpu.vector_store %arg37[%c0_35, %c64], %117 {strides = array<i32>} : memref<128x80xf32, #tpu.memory_space<vmem>>, vector<128x8xf32>,
    %c0_36 = arith.constant 0 : index
    %c0_37 = arith.constant 0 : index
    %119 = vector.load %arg37[%c0_36, %c0_37] : memref<128x80xf32, #tpu.memory_space<vmem>>, vector<128x72xf32>
    %cst_38 = arith.constant dense<0.000000e+00> : vector<72xf32>
    %120 = vector.multi_reduction <add>, %119, %cst_38 [0] : vector<128x72xf32> to vector<72xf32>
    %121 = vector.shape_cast %120 : vector<72xf32> to vector<1x72xf32>
    %cst_39 = arith.constant 7.812500e-03 : f32
    %122 = vector.broadcast %cst_39 : f32 to vector<1x72xf32>
    %123 = arith.mulf %121, %122 : vector<1x72xf32>
    %124 = arith.mulf %119, %119 : vector<128x72xf32>
    %cst_40 = arith.constant dense<0.000000e+00> : vector<72xf32>
    %125 = vector.multi_reduction <add>, %124, %cst_40 [0] : vector<128x72xf32> to vector<72xf32>
    %126 = vector.shape_cast %125 : vector<72xf32> to vector<1x72xf32>
    %cst_41 = arith.constant 7.812500e-03 : f32
    %127 = vector.broadcast %cst_41 : f32 to vector<1x72xf32>
    %128 = arith.mulf %126, %127 : vector<1x72xf32>
    %129 = arith.mulf %123, %123 : vector<1x72xf32>
    %130 = arith.subf %128, %129 : vector<1x72xf32>
    %cst_42 = arith.constant 0.000000e+00 : f32
    %131 = vector.broadcast %cst_42 : f32 to vector<1x72xf32>
    %132 = arith.maximumf %130, %131 : vector<1x72xf32>
    %c0_43 = arith.constant 0 : index
    %c0_44 = arith.constant 0 : index
    %133 = vector.load %arg9[%c0_43, %c0_44] : memref<1x72xf32, #tpu.memory_space<vmem>>, vector<1x72xf32>
    %cst_45 = arith.constant 9.99999974E-6 : f32
    %134 = vector.broadcast %cst_45 : f32 to vector<1x72xf32>
    %135 = arith.addf %132, %134 : vector<1x72xf32>
    %136 = math.rsqrt %135 : vector<1x72xf32>
    %137 = arith.mulf %133, %136 : vector<1x72xf32>
    %c0_46 = arith.constant 0 : index
    %c0_47 = arith.constant 0 : index
    %138 = vector.load %arg10[%c0_46, %c0_47] : memref<1x72xf32, #tpu.memory_space<vmem>>, vector<1x72xf32>
    %139 = arith.mulf %123, %137 : vector<1x72xf32>
    %140 = arith.subf %138, %139 : vector<1x72xf32>
    %141 = vector.broadcast %137 : vector<1x72xf32> to vector<128x72xf32>
    %142 = arith.mulf %119, %141 : vector<128x72xf32>
    %143 = vector.broadcast %140 : vector<1x72xf32> to vector<128x72xf32>
    %144 = arith.addf %142, %143 : vector<128x72xf32>
    %cst_48 = arith.constant 0.000000e+00 : f32
    %145 = vector.broadcast %cst_48 : f32 to vector<128x72xf32>
    %146 = arith.maximumf %144, %145 : vector<128x72xf32>
    %147 = arith.truncf %146 : vector<128x72xf32> to vector<128x72xbf16>
    %c0_49 = arith.constant 0 : index
    %c0_50 = arith.constant 0 : index
    %148 = vector.load %arg11[%c0_49, %c0_50] : memref<72x32xbf16, #tpu.memory_space<vmem>>, vector<72x32xbf16>
    %cst_51 = arith.constant dense<0.000000e+00> : vector<128x32xf32>
    %149 = tpu.matmul %147, %148, %cst_51 {dimension_numbers = #tpu.dot_dimension_numbers<[1], [0], [0], [1], [0, 0, 1, 1], [], []>} : vector<128x72xbf16>, vector<72x32xbf16>, vector<128x32xf32> -> vector<128x32xf32>
    %cst_52 = arith.constant dense<0.000000e+00> : vector<32xf32>
    %150 = vector.multi_reduction <add>, %149, %cst_52 [0] : vector<128x32xf32> to vector<32xf32>
    %151 = vector.shape_cast %150 : vector<32xf32> to vector<1x32xf32>
    %cst_53 = arith.constant 7.812500e-03 : f32
    %152 = vector.broadcast %cst_53 : f32 to vector<1x32xf32>
    %153 = arith.mulf %151, %152 : vector<1x32xf32>
    %154 = arith.mulf %149, %149 : vector<128x32xf32>
    %cst_54 = arith.constant dense<0.000000e+00> : vector<32xf32>
    %155 = vector.multi_reduction <add>, %154, %cst_54 [0] : vector<128x32xf32> to vector<32xf32>
    %156 = vector.shape_cast %155 : vector<32xf32> to vector<1x32xf32>
    %cst_55 = arith.constant 7.812500e-03 : f32
    %157 = vector.broadcast %cst_55 : f32 to vector<1x32xf32>
    %158 = arith.mulf %156, %157 : vector<1x32xf32>
    %159 = arith.mulf %153, %153 : vector<1x32xf32>
    %160 = arith.subf %158, %159 : vector<1x32xf32>
    %cst_56 = arith.constant 0.000000e+00 : f32
    %161 = vector.broadcast %cst_56 : f32 to vector<1x32xf32>
    %162 = arith.maximumf %160, %161 : vector<1x32xf32>
    %c0_57 = arith.constant 0 : index
    %c0_58 = arith.constant 0 : index
    %163 = vector.load %arg12[%c0_57, %c0_58] : memref<1x32xf32, #tpu.memory_space<vmem>>, vector<1x32xf32>
    %cst_59 = arith.constant 9.99999974E-6 : f32
    %164 = vector.broadcast %cst_59 : f32 to vector<1x32xf32>
    %165 = arith.addf %162, %164 : vector<1x32xf32>
    %166 = math.rsqrt %165 : vector<1x32xf32>
    %167 = arith.mulf %163, %166 : vector<1x32xf32>
    %c0_60 = arith.constant 0 : index
    %c0_61 = arith.constant 0 : index
    %168 = vector.load %arg13[%c0_60, %c0_61] : memref<1x32xf32, #tpu.memory_space<vmem>>, vector<1x32xf32>
    %169 = arith.mulf %153, %167 : vector<1x32xf32>
    %170 = arith.subf %168, %169 : vector<1x32xf32>
    %171 = vector.broadcast %167 : vector<1x32xf32> to vector<128x32xf32>
    %172 = arith.mulf %149, %171 : vector<128x32xf32>
    %173 = vector.broadcast %170 : vector<1x32xf32> to vector<128x32xf32>
    %174 = arith.addf %172, %173 : vector<128x32xf32>
    %cst_62 = arith.constant 0.000000e+00 : f32
    %175 = vector.broadcast %cst_62 : f32 to vector<128x32xf32>
    %176 = arith.maximumf %174, %175 : vector<128x32xf32>
    %177 = arith.truncf %176 : vector<128x32xf32> to vector<128x32xbf16>
    %c0_63 = arith.constant 0 : index
    %c0_64 = arith.constant 0 : index
    %178 = vector.load %arg14[%c0_63, %c0_64] : memref<32x72xbf16, #tpu.memory_space<vmem>>, vector<32x72xbf16>
    %cst_65 = arith.constant dense<0.000000e+00> : vector<128x72xf32>
    %179 = tpu.matmul %177, %178, %cst_65 {dimension_numbers = #tpu.dot_dimension_numbers<[1], [0], [0], [1], [0, 0, 1, 1], [], []>} : vector<128x32xbf16>, vector<32x72xbf16>, vector<128x72xf32> -> vector<128x72xf32>
    %cst_66 = arith.constant 0.000000e+00 : f32
    %180 = vector.broadcast %cst_66 : f32 to vector<128x8xf32>
    %181 = vector.extract_strided_slice %179 {offsets = [0, 0], sizes = [128, 8], strides = [1, 1]} : vector<128x72xf32> to vector<128x8xf32>
    %c9_i32_67 = arith.constant 9 : i32
    %182 = tpu.dynamic_rotate %181 by %c9_i32_67 dim 0 : vector<128x8xf32>, i32 -> vector<128x8xf32>
    %183 = vector.extract_strided_slice %2 {offsets = [0, 0], sizes = [128, 1], strides = [1, 1]} : vector<128x9xf32> to vector<128x1xf32>
    %184 = vector.broadcast %183 : vector<128x1xf32> to vector<128x8xf32>
    %185 = arith.mulf %182, %184 : vector<128x8xf32>
    %186 = arith.addf %180, %185 : vector<128x8xf32>
    %187 = vector.extract_strided_slice %179 {offsets = [0, 8], sizes = [128, 8], strides = [1, 1]} : vector<128x72xf32> to vector<128x8xf32>
    %c8_i32_68 = arith.constant 8 : i32
    %188 = tpu.dynamic_rotate %187 by %c8_i32_68 dim 0 : vector<128x8xf32>, i32 -> vector<128x8xf32>
    %189 = vector.extract_strided_slice %2 {offsets = [0, 1], sizes = [128, 1], strides = [1, 1]} : vector<128x9xf32> to vector<128x1xf32>
    %190 = vector.broadcast %189 : vector<128x1xf32> to vector<128x8xf32>
    %191 = arith.mulf %188, %190 : vector<128x8xf32>
    %192 = arith.addf %186, %191 : vector<128x8xf32>
    %193 = vector.extract_strided_slice %179 {offsets = [0, 16], sizes = [128, 8], strides = [1, 1]} : vector<128x72xf32> to vector<128x8xf32>
    %c7_i32_69 = arith.constant 7 : i32
    %194 = tpu.dynamic_rotate %193 by %c7_i32_69 dim 0 : vector<128x8xf32>, i32 -> vector<128x8xf32>
    %195 = vector.extract_strided_slice %2 {offsets = [0, 2], sizes = [128, 1], strides = [1, 1]} : vector<128x9xf32> to vector<128x1xf32>
    %196 = vector.broadcast %195 : vector<128x1xf32> to vector<128x8xf32>
    %197 = arith.mulf %194, %196 : vector<128x8xf32>
    %198 = arith.addf %192, %197 : vector<128x8xf32>
    %199 = vector.extract_strided_slice %179 {offsets = [0, 24], sizes = [128, 8], strides = [1, 1]} : vector<128x72xf32> to vector<128x8xf32>
    %c1_i32_70 = arith.constant 1 : i32
    %200 = tpu.dynamic_rotate %199 by %c1_i32_70 dim 0 : vector<128x8xf32>, i32 -> vector<128x8xf32>
    %201 = vector.extract_strided_slice %2 {offsets = [0, 3], sizes = [128, 1], strides = [1, 1]} : vector<128x9xf32> to vector<128x1xf32>
    %202 = vector.broadcast %201 : vector<128x1xf32> to vector<128x8xf32>
    %203 = arith.mulf %200, %202 : vector<128x8xf32>
    %204 = arith.addf %198, %203 : vector<128x8xf32>
    %205 = vector.extract_strided_slice %179 {offsets = [0, 32], sizes = [128, 8], strides = [1, 1]} : vector<128x72xf32> to vector<128x8xf32>
    %206 = vector.extract_strided_slice %2 {offsets = [0, 4], sizes = [128, 1], strides = [1, 1]} : vector<128x9xf32> to vector<128x1xf32>
    %207 = vector.broadcast %206 : vector<128x1xf32> to vector<128x8xf32>
    %208 = arith.mulf %205, %207 : vector<128x8xf32>
    %209 = arith.addf %204, %208 : vector<128x8xf32>
    %210 = vector.extract_strided_slice %179 {offsets = [0, 40], sizes = [128, 8], strides = [1, 1]} : vector<128x72xf32> to vector<128x8xf32>
    %c127_i32_71 = arith.constant 127 : i32
    %211 = tpu.dynamic_rotate %210 by %c127_i32_71 dim 0 : vector<128x8xf32>, i32 -> vector<128x8xf32>
    %212 = vector.extract_strided_slice %2 {offsets = [0, 5], sizes = [128, 1], strides = [1, 1]} : vector<128x9xf32> to vector<128x1xf32>
    %213 = vector.broadcast %212 : vector<128x1xf32> to vector<128x8xf32>
    %214 = arith.mulf %211, %213 : vector<128x8xf32>
    %215 = arith.addf %209, %214 : vector<128x8xf32>
    %216 = vector.extract_strided_slice %179 {offsets = [0, 48], sizes = [128, 8], strides = [1, 1]} : vector<128x72xf32> to vector<128x8xf32>
    %c121_i32_72 = arith.constant 121 : i32
    %217 = tpu.dynamic_rotate %216 by %c121_i32_72 dim 0 : vector<128x8xf32>, i32 -> vector<128x8xf32>
    %218 = vector.extract_strided_slice %2 {offsets = [0, 6], sizes = [128, 1], strides = [1, 1]} : vector<128x9xf32> to vector<128x1xf32>
    %219 = vector.broadcast %218 : vector<128x1xf32> to vector<128x8xf32>
    %220 = arith.mulf %217, %219 : vector<128x8xf32>
    %221 = arith.addf %215, %220 : vector<128x8xf32>
    %222 = vector.extract_strided_slice %179 {offsets = [0, 56], sizes = [128, 8], strides = [1, 1]} : vector<128x72xf32> to vector<128x8xf32>
    %c120_i32_73 = arith.constant 120 : i32
    %223 = tpu.dynamic_rotate %222 by %c120_i32_73 dim 0 : vector<128x8xf32>, i32 -> vector<128x8xf32>
    %224 = vector.extract_strided_slice %2 {offsets = [0, 7], sizes = [128, 1], strides = [1, 1]} : vector<128x9xf32> to vector<128x1xf32>
    %225 = vector.broadcast %224 : vector<128x1xf32> to vector<128x8xf32>
    %226 = arith.mulf %223, %225 : vector<128x8xf32>
    %227 = arith.addf %221, %226 : vector<128x8xf32>
    %228 = vector.extract_strided_slice %179 {offsets = [0, 64], sizes = [128, 8], strides = [1, 1]} : vector<128x72xf32> to vector<128x8xf32>
    %c119_i32_74 = arith.constant 119 : i32
    %229 = tpu.dynamic_rotate %228 by %c119_i32_74 dim 0 : vector<128x8xf32>, i32 -> vector<128x8xf32>
    %230 = vector.extract_strided_slice %2 {offsets = [0, 8], sizes = [128, 1], strides = [1, 1]} : vector<128x9xf32> to vector<128x1xf32>
    %231 = vector.broadcast %230 : vector<128x1xf32> to vector<128x8xf32>
    %232 = arith.mulf %229, %231 : vector<128x8xf32>
    %233 = arith.addf %227, %232 : vector<128x8xf32>
    %c0_75 = arith.constant 0 : index
    %c72 = arith.constant 72 : index
    %234 = vector.load %arg37[%c0_75, %c72] : memref<128x80xf32, #tpu.memory_space<vmem>>, vector<128x8xf32>
    tpu.vector_store %arg37[%c0_75, %c72], %233 {strides = array<i32>} : memref<128x80xf32, #tpu.memory_space<vmem>>, vector<128x8xf32>,
    %c0_76 = arith.constant 0 : index
    %c0_77 = arith.constant 0 : index
    %235 = vector.load %arg37[%c0_76, %c0_77] : memref<128x80xf32, #tpu.memory_space<vmem>>, vector<128x80xf32>
    %cst_78 = arith.constant dense<0.000000e+00> : vector<80xf32>
    %236 = vector.multi_reduction <add>, %235, %cst_78 [0] : vector<128x80xf32> to vector<80xf32>
    %237 = vector.shape_cast %236 : vector<80xf32> to vector<1x80xf32>
    %cst_79 = arith.constant 7.812500e-03 : f32
    %238 = vector.broadcast %cst_79 : f32 to vector<1x80xf32>
    %239 = arith.mulf %237, %238 : vector<1x80xf32>
    %240 = arith.mulf %235, %235 : vector<128x80xf32>
    %cst_80 = arith.constant dense<0.000000e+00> : vector<80xf32>
    %241 = vector.multi_reduction <add>, %240, %cst_80 [0] : vector<128x80xf32> to vector<80xf32>
    %242 = vector.shape_cast %241 : vector<80xf32> to vector<1x80xf32>
    %cst_81 = arith.constant 7.812500e-03 : f32
    %243 = vector.broadcast %cst_81 : f32 to vector<1x80xf32>
    %244 = arith.mulf %242, %243 : vector<1x80xf32>
    %245 = arith.mulf %239, %239 : vector<1x80xf32>
    %246 = arith.subf %244, %245 : vector<1x80xf32>
    %cst_82 = arith.constant 0.000000e+00 : f32
    %247 = vector.broadcast %cst_82 : f32 to vector<1x80xf32>
    %248 = arith.maximumf %246, %247 : vector<1x80xf32>
    %c0_83 = arith.constant 0 : index
    %c0_84 = arith.constant 0 : index
    %249 = vector.load %arg16[%c0_83, %c0_84] : memref<1x80xf32, #tpu.memory_space<vmem>>, vector<1x80xf32>
    %cst_85 = arith.constant 9.99999974E-6 : f32
    %250 = vector.broadcast %cst_85 : f32 to vector<1x80xf32>
    %251 = arith.addf %248, %250 : vector<1x80xf32>
    %252 = math.rsqrt %251 : vector<1x80xf32>
    %253 = arith.mulf %249, %252 : vector<1x80xf32>
    %c0_86 = arith.constant 0 : index
    %c0_87 = arith.constant 0 : index
    %254 = vector.load %arg17[%c0_86, %c0_87] : memref<1x80xf32, #tpu.memory_space<vmem>>, vector<1x80xf32>
    %255 = arith.mulf %239, %253 : vector<1x80xf32>
    %256 = arith.subf %254, %255 : vector<1x80xf32>
    %257 = vector.broadcast %253 : vector<1x80xf32> to vector<128x80xf32>
    %258 = arith.mulf %235, %257 : vector<128x80xf32>
    %259 = vector.broadcast %256 : vector<1x80xf32> to vector<128x80xf32>
    %260 = arith.addf %258, %259 : vector<128x80xf32>
    %cst_88 = arith.constant 0.000000e+00 : f32
    %261 = vector.broadcast %cst_88 : f32 to vector<128x80xf32>
    %262 = arith.maximumf %260, %261 : vector<128x80xf32>
    %263 = arith.truncf %262 : vector<128x80xf32> to vector<128x80xbf16>
    %c0_89 = arith.constant 0 : index
    %c0_90 = arith.constant 0 : index
    %264 = vector.load %arg18[%c0_89, %c0_90] : memref<80x40xbf16, #tpu.memory_space<vmem>>, vector<80x40xbf16>
    %cst_91 = arith.constant dense<0.000000e+00> : vector<128x40xf32>
    %265 = tpu.matmul %263, %264, %cst_91 {dimension_numbers = #tpu.dot_dimension_numbers<[1], [0], [0], [1], [0, 0, 1, 1], [], []>} : vector<128x80xbf16>, vector<80x40xbf16>, vector<128x40xf32> -> vector<128x40xf32>
    %c0_92 = arith.constant 0 : index
    %c0_93 = arith.constant 0 : index
    %266 = vector.load %arg15[%c0_92, %c0_93] : memref<32x128xf32, #tpu.memory_space<vmem>>, vector<32x128xf32>
    %cst_94 = arith.constant dense<0.000000e+00> : vector<32x40xf32>
    %267 = tpu.matmul %266, %265, %cst_94 {dimension_numbers = #tpu.dot_dimension_numbers<[1], [0], [0], [1], [0, 0, 1, 1], [], []>} : vector<32x128xf32>, vector<128x40xf32>, vector<32x40xf32> -> vector<32x40xf32>
    %c0_95 = arith.constant 0 : index
    %c0_96 = arith.constant 0 : index
    %268 = vector.load %arg38[%c0_95, %c0_96] : memref<32x56xf32, #tpu.memory_space<vmem>>, vector<32x40xf32>
    tpu.vector_store %arg38[%c0_95, %c0_96], %267 {strides = array<i32>} : memref<32x56xf32, #tpu.memory_space<vmem>>, vector<32x40xf32>,
    %c0_97 = arith.constant 0 : index
    %c0_98 = arith.constant 0 : index
    %269 = vector.load %arg19[%c0_97, %c0_98] : memref<32x9xf32, #tpu.memory_space<vmem>>, vector<32x9xf32>
    %c0_99 = arith.constant 0 : index
    %c0_100 = arith.constant 0 : index
    %270 = vector.load %arg38[%c0_99, %c0_100] : memref<32x56xf32, #tpu.memory_space<vmem>>, vector<32x40xf32>
    %cst_101 = arith.constant dense<0.000000e+00> : vector<40xf32>
    %271 = vector.multi_reduction <add>, %270, %cst_101 [0] : vector<32x40xf32> to vector<40xf32>
    %272 = vector.shape_cast %271 : vector<40xf32> to vector<1x40xf32>
    %cst_102 = arith.constant 3.125000e-02 : f32
    %273 = vector.broadcast %cst_102 : f32 to vector<1x40xf32>
    %274 = arith.mulf %272, %273 : vector<1x40xf32>
    %275 = arith.mulf %270, %270 : vector<32x40xf32>
    %cst_103 = arith.constant dense<0.000000e+00> : vector<40xf32>
    %276 = vector.multi_reduction <add>, %275, %cst_103 [0] : vector<32x40xf32> to vector<40xf32>
    %277 = vector.shape_cast %276 : vector<40xf32> to vector<1x40xf32>
    %cst_104 = arith.constant 3.125000e-02 : f32
    %278 = vector.broadcast %cst_104 : f32 to vector<1x40xf32>
    %279 = arith.mulf %277, %278 : vector<1x40xf32>
    %280 = arith.mulf %274, %274 : vector<1x40xf32>
    %281 = arith.subf %279, %280 : vector<1x40xf32>
    %cst_105 = arith.constant 0.000000e+00 : f32
    %282 = vector.broadcast %cst_105 : f32 to vector<1x40xf32>
    %283 = arith.maximumf %281, %282 : vector<1x40xf32>
    %c0_106 = arith.constant 0 : index
    %c0_107 = arith.constant 0 : index
    %284 = vector.load %arg20[%c0_106, %c0_107] : memref<1x40xf32, #tpu.memory_space<vmem>>, vector<1x40xf32>
    %cst_108 = arith.constant 9.99999974E-6 : f32
    %285 = vector.broadcast %cst_108 : f32 to vector<1x40xf32>
    %286 = arith.addf %283, %285 : vector<1x40xf32>
    %287 = math.rsqrt %286 : vector<1x40xf32>
    %288 = arith.mulf %284, %287 : vector<1x40xf32>
    %c0_109 = arith.constant 0 : index
    %c0_110 = arith.constant 0 : index
    %289 = vector.load %arg21[%c0_109, %c0_110] : memref<1x40xf32, #tpu.memory_space<vmem>>, vector<1x40xf32>
    %290 = arith.mulf %274, %288 : vector<1x40xf32>
    %291 = arith.subf %289, %290 : vector<1x40xf32>
    %292 = vector.broadcast %288 : vector<1x40xf32> to vector<32x40xf32>
    %293 = arith.mulf %270, %292 : vector<32x40xf32>
    %294 = vector.broadcast %291 : vector<1x40xf32> to vector<32x40xf32>
    %295 = arith.addf %293, %294 : vector<32x40xf32>
    %cst_111 = arith.constant 0.000000e+00 : f32
    %296 = vector.broadcast %cst_111 : f32 to vector<32x40xf32>
    %297 = arith.maximumf %295, %296 : vector<32x40xf32>
    %298 = arith.truncf %297 : vector<32x40xf32> to vector<32x40xbf16>
    %c0_112 = arith.constant 0 : index
    %c0_113 = arith.constant 0 : index
    %299 = vector.load %arg22[%c0_112, %c0_113] : memref<40x32xbf16, #tpu.memory_space<vmem>>, vector<40x32xbf16>
    %cst_114 = arith.constant dense<0.000000e+00> : vector<32x32xf32>
    %300 = tpu.matmul %298, %299, %cst_114 {dimension_numbers = #tpu.dot_dimension_numbers<[1], [0], [0], [1], [0, 0, 1, 1], [], []>} : vector<32x40xbf16>, vector<40x32xbf16>, vector<32x32xf32> -> vector<32x32xf32>
    %cst_115 = arith.constant dense<0.000000e+00> : vector<32xf32>
    %301 = vector.multi_reduction <add>, %300, %cst_115 [0] : vector<32x32xf32> to vector<32xf32>
    %302 = vector.shape_cast %301 : vector<32xf32> to vector<1x32xf32>
    %cst_116 = arith.constant 3.125000e-02 : f32
    %303 = vector.broadcast %cst_116 : f32 to vector<1x32xf32>
    %304 = arith.mulf %302, %303 : vector<1x32xf32>
    %305 = arith.mulf %300, %300 : vector<32x32xf32>
    %cst_117 = arith.constant dense<0.000000e+00> : vector<32xf32>
    %306 = vector.multi_reduction <add>, %305, %cst_117 [0] : vector<32x32xf32> to vector<32xf32>
    %307 = vector.shape_cast %306 : vector<32xf32> to vector<1x32xf32>
    %cst_118 = arith.constant 3.125000e-02 : f32
    %308 = vector.broadcast %cst_118 : f32 to vector<1x32xf32>
    %309 = arith.mulf %307, %308 : vector<1x32xf32>
    %310 = arith.mulf %304, %304 : vector<1x32xf32>
    %311 = arith.subf %309, %310 : vector<1x32xf32>
    %cst_119 = arith.constant 0.000000e+00 : f32
    %312 = vector.broadcast %cst_119 : f32 to vector<1x32xf32>
    %313 = arith.maximumf %311, %312 : vector<1x32xf32>
    %c0_120 = arith.constant 0 : index
    %c0_121 = arith.constant 0 : index
    %314 = vector.load %arg23[%c0_120, %c0_121] : memref<1x32xf32, #tpu.memory_space<vmem>>, vector<1x32xf32>
    %cst_122 = arith.constant 9.99999974E-6 : f32
    %315 = vector.broadcast %cst_122 : f32 to vector<1x32xf32>
    %316 = arith.addf %313, %315 : vector<1x32xf32>
    %317 = math.rsqrt %316 : vector<1x32xf32>
    %318 = arith.mulf %314, %317 : vector<1x32xf32>
    %c0_123 = arith.constant 0 : index
    %c0_124 = arith.constant 0 : index
    %319 = vector.load %arg24[%c0_123, %c0_124] : memref<1x32xf32, #tpu.memory_space<vmem>>, vector<1x32xf32>
    %320 = arith.mulf %304, %318 : vector<1x32xf32>
    %321 = arith.subf %319, %320 : vector<1x32xf32>
    %322 = vector.broadcast %318 : vector<1x32xf32> to vector<32x32xf32>
    %323 = arith.mulf %300, %322 : vector<32x32xf32>
    %324 = vector.broadcast %321 : vector<1x32xf32> to vector<32x32xf32>
    %325 = arith.addf %323, %324 : vector<32x32xf32>
    %cst_125 = arith.constant 0.000000e+00 : f32
    %326 = vector.broadcast %cst_125 : f32 to vector<32x32xf32>
    %327 = arith.maximumf %325, %326 : vector<32x32xf32>
    %328 = arith.truncf %327 : vector<32x32xf32> to vector<32x32xbf16>
    %c0_126 = arith.constant 0 : index
    %c0_127 = arith.constant 0 : index
    %329 = vector.load %arg25[%c0_126, %c0_127] : memref<32x72xbf16, #tpu.memory_space<vmem>>, vector<32x72xbf16>
    %cst_128 = arith.constant dense<0.000000e+00> : vector<32x72xf32>
    %330 = tpu.matmul %328, %329, %cst_128 {dimension_numbers = #tpu.dot_dimension_numbers<[1], [0], [0], [1], [0, 0, 1, 1], [], []>} : vector<32x32xbf16>, vector<32x72xbf16>, vector<32x72xf32> -> vector<32x72xf32>
    %cst_129 = arith.constant 0.000000e+00 : f32
    %331 = vector.broadcast %cst_129 : f32 to vector<32x8xf32>
    %332 = vector.extract_strided_slice %330 {offsets = [0, 0], sizes = [32, 8], strides = [1, 1]} : vector<32x72xf32> to vector<32x8xf32>
    %c5_i32 = arith.constant 5 : i32
    %333 = tpu.dynamic_rotate %332 by %c5_i32 dim 0 : vector<32x8xf32>, i32 -> vector<32x8xf32>
    %334 = vector.extract_strided_slice %269 {offsets = [0, 0], sizes = [32, 1], strides = [1, 1]} : vector<32x9xf32> to vector<32x1xf32>
    %335 = vector.broadcast %334 : vector<32x1xf32> to vector<32x8xf32>
    %336 = arith.mulf %333, %335 : vector<32x8xf32>
    %337 = arith.addf %331, %336 : vector<32x8xf32>
    %338 = vector.extract_strided_slice %330 {offsets = [0, 8], sizes = [32, 8], strides = [1, 1]} : vector<32x72xf32> to vector<32x8xf32>
    %c4_i32 = arith.constant 4 : i32
    %339 = tpu.dynamic_rotate %338 by %c4_i32 dim 0 : vector<32x8xf32>, i32 -> vector<32x8xf32>
    %340 = vector.extract_strided_slice %269 {offsets = [0, 1], sizes = [32, 1], strides = [1, 1]} : vector<32x9xf32> to vector<32x1xf32>
    %341 = vector.broadcast %340 : vector<32x1xf32> to vector<32x8xf32>
    %342 = arith.mulf %339, %341 : vector<32x8xf32>
    %343 = arith.addf %337, %342 : vector<32x8xf32>
    %344 = vector.extract_strided_slice %330 {offsets = [0, 16], sizes = [32, 8], strides = [1, 1]} : vector<32x72xf32> to vector<32x8xf32>
    %c3_i32 = arith.constant 3 : i32
    %345 = tpu.dynamic_rotate %344 by %c3_i32 dim 0 : vector<32x8xf32>, i32 -> vector<32x8xf32>
    %346 = vector.extract_strided_slice %269 {offsets = [0, 2], sizes = [32, 1], strides = [1, 1]} : vector<32x9xf32> to vector<32x1xf32>
    %347 = vector.broadcast %346 : vector<32x1xf32> to vector<32x8xf32>
    %348 = arith.mulf %345, %347 : vector<32x8xf32>
    %349 = arith.addf %343, %348 : vector<32x8xf32>
    %350 = vector.extract_strided_slice %330 {offsets = [0, 24], sizes = [32, 8], strides = [1, 1]} : vector<32x72xf32> to vector<32x8xf32>
    %c1_i32_130 = arith.constant 1 : i32
    %351 = tpu.dynamic_rotate %350 by %c1_i32_130 dim 0 : vector<32x8xf32>, i32 -> vector<32x8xf32>
    %352 = vector.extract_strided_slice %269 {offsets = [0, 3], sizes = [32, 1], strides = [1, 1]} : vector<32x9xf32> to vector<32x1xf32>
    %353 = vector.broadcast %352 : vector<32x1xf32> to vector<32x8xf32>
    %354 = arith.mulf %351, %353 : vector<32x8xf32>
    %355 = arith.addf %349, %354 : vector<32x8xf32>
    %356 = vector.extract_strided_slice %330 {offsets = [0, 32], sizes = [32, 8], strides = [1, 1]} : vector<32x72xf32> to vector<32x8xf32>
    %357 = vector.extract_strided_slice %269 {offsets = [0, 4], sizes = [32, 1], strides = [1, 1]} : vector<32x9xf32> to vector<32x1xf32>
    %358 = vector.broadcast %357 : vector<32x1xf32> to vector<32x8xf32>
    %359 = arith.mulf %356, %358 : vector<32x8xf32>
    %360 = arith.addf %355, %359 : vector<32x8xf32>
    %361 = vector.extract_strided_slice %330 {offsets = [0, 40], sizes = [32, 8], strides = [1, 1]} : vector<32x72xf32> to vector<32x8xf32>
    %c31_i32 = arith.constant 31 : i32
    %362 = tpu.dynamic_rotate %361 by %c31_i32 dim 0 : vector<32x8xf32>, i32 -> vector<32x8xf32>
    %363 = vector.extract_strided_slice %269 {offsets = [0, 5], sizes = [32, 1], strides = [1, 1]} : vector<32x9xf32> to vector<32x1xf32>
    %364 = vector.broadcast %363 : vector<32x1xf32> to vector<32x8xf32>
    %365 = arith.mulf %362, %364 : vector<32x8xf32>
    %366 = arith.addf %360, %365 : vector<32x8xf32>
    %367 = vector.extract_strided_slice %330 {offsets = [0, 48], sizes = [32, 8], strides = [1, 1]} : vector<32x72xf32> to vector<32x8xf32>
    %c29_i32 = arith.constant 29 : i32
    %368 = tpu.dynamic_rotate %367 by %c29_i32 dim 0 : vector<32x8xf32>, i32 -> vector<32x8xf32>
    %369 = vector.extract_strided_slice %269 {offsets = [0, 6], sizes = [32, 1], strides = [1, 1]} : vector<32x9xf32> to vector<32x1xf32>
    %370 = vector.broadcast %369 : vector<32x1xf32> to vector<32x8xf32>
    %371 = arith.mulf %368, %370 : vector<32x8xf32>
    %372 = arith.addf %366, %371 : vector<32x8xf32>
    %373 = vector.extract_strided_slice %330 {offsets = [0, 56], sizes = [32, 8], strides = [1, 1]} : vector<32x72xf32> to vector<32x8xf32>
    %c28_i32 = arith.constant 28 : i32
    %374 = tpu.dynamic_rotate %373 by %c28_i32 dim 0 : vector<32x8xf32>, i32 -> vector<32x8xf32>
    %375 = vector.extract_strided_slice %269 {offsets = [0, 7], sizes = [32, 1], strides = [1, 1]} : vector<32x9xf32> to vector<32x1xf32>
    %376 = vector.broadcast %375 : vector<32x1xf32> to vector<32x8xf32>
    %377 = arith.mulf %374, %376 : vector<32x8xf32>
    %378 = arith.addf %372, %377 : vector<32x8xf32>
    %379 = vector.extract_strided_slice %330 {offsets = [0, 64], sizes = [32, 8], strides = [1, 1]} : vector<32x72xf32> to vector<32x8xf32>
    %c27_i32 = arith.constant 27 : i32
    %380 = tpu.dynamic_rotate %379 by %c27_i32 dim 0 : vector<32x8xf32>, i32 -> vector<32x8xf32>
    %381 = vector.extract_strided_slice %269 {offsets = [0, 8], sizes = [32, 1], strides = [1, 1]} : vector<32x9xf32> to vector<32x1xf32>
    %382 = vector.broadcast %381 : vector<32x1xf32> to vector<32x8xf32>
    %383 = arith.mulf %380, %382 : vector<32x8xf32>
    %384 = arith.addf %378, %383 : vector<32x8xf32>
    %c0_131 = arith.constant 0 : index
    %c40 = arith.constant 40 : index
    %385 = vector.load %arg38[%c0_131, %c40] : memref<32x56xf32, #tpu.memory_space<vmem>>, vector<32x8xf32>
    tpu.vector_store %arg38[%c0_131, %c40], %384 {strides = array<i32>} : memref<32x56xf32, #tpu.memory_space<vmem>>, vector<32x8xf32>,
    %c0_132 = arith.constant 0 : index
    %c0_133 = arith.constant 0 : index
    %386 = vector.load %arg38[%c0_132, %c0_133] : memref<32x56xf32, #tpu.memory_space<vmem>>, vector<32x48xf32>
    %cst_134 = arith.constant dense<0.000000e+00> : vector<48xf32>
    %387 = vector.multi_reduction <add>, %386, %cst_134 [0] : vector<32x48xf32> to vector<48xf32>
    %388 = vector.shape_cast %387 : vector<48xf32> to vector<1x48xf32>
    %cst_135 = arith.constant 3.125000e-02 : f32
    %389 = vector.broadcast %cst_135 : f32 to vector<1x48xf32>
    %390 = arith.mulf %388, %389 : vector<1x48xf32>
    %391 = arith.mulf %386, %386 : vector<32x48xf32>
    %cst_136 = arith.constant dense<0.000000e+00> : vector<48xf32>
    %392 = vector.multi_reduction <add>, %391, %cst_136 [0] : vector<32x48xf32> to vector<48xf32>
    %393 = vector.shape_cast %392 : vector<48xf32> to vector<1x48xf32>
    %cst_137 = arith.constant 3.125000e-02 : f32
    %394 = vector.broadcast %cst_137 : f32 to vector<1x48xf32>
    %395 = arith.mulf %393, %394 : vector<1x48xf32>
    %396 = arith.mulf %390, %390 : vector<1x48xf32>
    %397 = arith.subf %395, %396 : vector<1x48xf32>
    %cst_138 = arith.constant 0.000000e+00 : f32
    %398 = vector.broadcast %cst_138 : f32 to vector<1x48xf32>
    %399 = arith.maximumf %397, %398 : vector<1x48xf32>
    %c0_139 = arith.constant 0 : index
    %c0_140 = arith.constant 0 : index
    %400 = vector.load %arg26[%c0_139, %c0_140] : memref<1x48xf32, #tpu.memory_space<vmem>>, vector<1x48xf32>
    %cst_141 = arith.constant 9.99999974E-6 : f32
    %401 = vector.broadcast %cst_141 : f32 to vector<1x48xf32>
    %402 = arith.addf %399, %401 : vector<1x48xf32>
    %403 = math.rsqrt %402 : vector<1x48xf32>
    %404 = arith.mulf %400, %403 : vector<1x48xf32>
    %c0_142 = arith.constant 0 : index
    %c0_143 = arith.constant 0 : index
    %405 = vector.load %arg27[%c0_142, %c0_143] : memref<1x48xf32, #tpu.memory_space<vmem>>, vector<1x48xf32>
    %406 = arith.mulf %390, %404 : vector<1x48xf32>
    %407 = arith.subf %405, %406 : vector<1x48xf32>
    %408 = vector.broadcast %404 : vector<1x48xf32> to vector<32x48xf32>
    %409 = arith.mulf %386, %408 : vector<32x48xf32>
    %410 = vector.broadcast %407 : vector<1x48xf32> to vector<32x48xf32>
    %411 = arith.addf %409, %410 : vector<32x48xf32>
    %cst_144 = arith.constant 0.000000e+00 : f32
    %412 = vector.broadcast %cst_144 : f32 to vector<32x48xf32>
    %413 = arith.maximumf %411, %412 : vector<32x48xf32>
    %414 = arith.truncf %413 : vector<32x48xf32> to vector<32x48xbf16>
    %c0_145 = arith.constant 0 : index
    %c0_146 = arith.constant 0 : index
    %415 = vector.load %arg28[%c0_145, %c0_146] : memref<48x32xbf16, #tpu.memory_space<vmem>>, vector<48x32xbf16>
    %cst_147 = arith.constant dense<0.000000e+00> : vector<32x32xf32>
    %416 = tpu.matmul %414, %415, %cst_147 {dimension_numbers = #tpu.dot_dimension_numbers<[1], [0], [0], [1], [0, 0, 1, 1], [], []>} : vector<32x48xbf16>, vector<48x32xbf16>, vector<32x32xf32> -> vector<32x32xf32>
    %cst_148 = arith.constant dense<0.000000e+00> : vector<32xf32>
    %417 = vector.multi_reduction <add>, %416, %cst_148 [0] : vector<32x32xf32> to vector<32xf32>
    %418 = vector.shape_cast %417 : vector<32xf32> to vector<1x32xf32>
    %cst_149 = arith.constant 3.125000e-02 : f32
    %419 = vector.broadcast %cst_149 : f32 to vector<1x32xf32>
    %420 = arith.mulf %418, %419 : vector<1x32xf32>
    %421 = arith.mulf %416, %416 : vector<32x32xf32>
    %cst_150 = arith.constant dense<0.000000e+00> : vector<32xf32>
    %422 = vector.multi_reduction <add>, %421, %cst_150 [0] : vector<32x32xf32> to vector<32xf32>
    %423 = vector.shape_cast %422 : vector<32xf32> to vector<1x32xf32>
    %cst_151 = arith.constant 3.125000e-02 : f32
    %424 = vector.broadcast %cst_151 : f32 to vector<1x32xf32>
    %425 = arith.mulf %423, %424 : vector<1x32xf32>
    %426 = arith.mulf %420, %420 : vector<1x32xf32>
    %427 = arith.subf %425, %426 : vector<1x32xf32>
    %cst_152 = arith.constant 0.000000e+00 : f32
    %428 = vector.broadcast %cst_152 : f32 to vector<1x32xf32>
    %429 = arith.maximumf %427, %428 : vector<1x32xf32>
    %c0_153 = arith.constant 0 : index
    %c0_154 = arith.constant 0 : index
    %430 = vector.load %arg29[%c0_153, %c0_154] : memref<1x32xf32, #tpu.memory_space<vmem>>, vector<1x32xf32>
    %cst_155 = arith.constant 9.99999974E-6 : f32
    %431 = vector.broadcast %cst_155 : f32 to vector<1x32xf32>
    %432 = arith.addf %429, %431 : vector<1x32xf32>
    %433 = math.rsqrt %432 : vector<1x32xf32>
    %434 = arith.mulf %430, %433 : vector<1x32xf32>
    %c0_156 = arith.constant 0 : index
    %c0_157 = arith.constant 0 : index
    %435 = vector.load %arg30[%c0_156, %c0_157] : memref<1x32xf32, #tpu.memory_space<vmem>>, vector<1x32xf32>
    %436 = arith.mulf %420, %434 : vector<1x32xf32>
    %437 = arith.subf %435, %436 : vector<1x32xf32>
    %438 = vector.broadcast %434 : vector<1x32xf32> to vector<32x32xf32>
    %439 = arith.mulf %416, %438 : vector<32x32xf32>
    %440 = vector.broadcast %437 : vector<1x32xf32> to vector<32x32xf32>
    %441 = arith.addf %439, %440 : vector<32x32xf32>
    %cst_158 = arith.constant 0.000000e+00 : f32
    %442 = vector.broadcast %cst_158 : f32 to vector<32x32xf32>
    %443 = arith.maximumf %441, %442 : vector<32x32xf32>
    %444 = arith.truncf %443 : vector<32x32xf32> to vector<32x32xbf16>
    %c0_159 = arith.constant 0 : index
    %c0_160 = arith.constant 0 : index
    %445 = vector.load %arg31[%c0_159, %c0_160] : memref<32x72xbf16, #tpu.memory_space<vmem>>, vector<32x72xbf16>
    %cst_161 = arith.constant dense<0.000000e+00> : vector<32x72xf32>
    %446 = tpu.matmul %444, %445, %cst_161 {dimension_numbers = #tpu.dot_dimension_numbers<[1], [0], [0], [1], [0, 0, 1, 1], [], []>} : vector<32x32xbf16>, vector<32x72xbf16>, vector<32x72xf32> -> vector<32x72xf32>
    %cst_162 = arith.constant 0.000000e+00 : f32
    %447 = vector.broadcast %cst_162 : f32 to vector<32x8xf32>
    %448 = vector.extract_strided_slice %446 {offsets = [0, 0], sizes = [32, 8], strides = [1, 1]} : vector<32x72xf32> to vector<32x8xf32>
    %c5_i32_163 = arith.constant 5 : i32
    %449 = tpu.dynamic_rotate %448 by %c5_i32_163 dim 0 : vector<32x8xf32>, i32 -> vector<32x8xf32>
    %450 = vector.extract_strided_slice %269 {offsets = [0, 0], sizes = [32, 1], strides = [1, 1]} : vector<32x9xf32> to vector<32x1xf32>
    %451 = vector.broadcast %450 : vector<32x1xf32> to vector<32x8xf32>
    %452 = arith.mulf %449, %451 : vector<32x8xf32>
    %453 = arith.addf %447, %452 : vector<32x8xf32>
    %454 = vector.extract_strided_slice %446 {offsets = [0, 8], sizes = [32, 8], strides = [1, 1]} : vector<32x72xf32> to vector<32x8xf32>
    %c4_i32_164 = arith.constant 4 : i32
    %455 = tpu.dynamic_rotate %454 by %c4_i32_164 dim 0 : vector<32x8xf32>, i32 -> vector<32x8xf32>
    %456 = vector.extract_strided_slice %269 {offsets = [0, 1], sizes = [32, 1], strides = [1, 1]} : vector<32x9xf32> to vector<32x1xf32>
    %457 = vector.broadcast %456 : vector<32x1xf32> to vector<32x8xf32>
    %458 = arith.mulf %455, %457 : vector<32x8xf32>
    %459 = arith.addf %453, %458 : vector<32x8xf32>
    %460 = vector.extract_strided_slice %446 {offsets = [0, 16], sizes = [32, 8], strides = [1, 1]} : vector<32x72xf32> to vector<32x8xf32>
    %c3_i32_165 = arith.constant 3 : i32
    %461 = tpu.dynamic_rotate %460 by %c3_i32_165 dim 0 : vector<32x8xf32>, i32 -> vector<32x8xf32>
    %462 = vector.extract_strided_slice %269 {offsets = [0, 2], sizes = [32, 1], strides = [1, 1]} : vector<32x9xf32> to vector<32x1xf32>
    %463 = vector.broadcast %462 : vector<32x1xf32> to vector<32x8xf32>
    %464 = arith.mulf %461, %463 : vector<32x8xf32>
    %465 = arith.addf %459, %464 : vector<32x8xf32>
    %466 = vector.extract_strided_slice %446 {offsets = [0, 24], sizes = [32, 8], strides = [1, 1]} : vector<32x72xf32> to vector<32x8xf32>
    %c1_i32_166 = arith.constant 1 : i32
    %467 = tpu.dynamic_rotate %466 by %c1_i32_166 dim 0 : vector<32x8xf32>, i32 -> vector<32x8xf32>
    %468 = vector.extract_strided_slice %269 {offsets = [0, 3], sizes = [32, 1], strides = [1, 1]} : vector<32x9xf32> to vector<32x1xf32>
    %469 = vector.broadcast %468 : vector<32x1xf32> to vector<32x8xf32>
    %470 = arith.mulf %467, %469 : vector<32x8xf32>
    %471 = arith.addf %465, %470 : vector<32x8xf32>
    %472 = vector.extract_strided_slice %446 {offsets = [0, 32], sizes = [32, 8], strides = [1, 1]} : vector<32x72xf32> to vector<32x8xf32>
    %473 = vector.extract_strided_slice %269 {offsets = [0, 4], sizes = [32, 1], strides = [1, 1]} : vector<32x9xf32> to vector<32x1xf32>
    %474 = vector.broadcast %473 : vector<32x1xf32> to vector<32x8xf32>
    %475 = arith.mulf %472, %474 : vector<32x8xf32>
    %476 = arith.addf %471, %475 : vector<32x8xf32>
    %477 = vector.extract_strided_slice %446 {offsets = [0, 40], sizes = [32, 8], strides = [1, 1]} : vector<32x72xf32> to vector<32x8xf32>
    %c31_i32_167 = arith.constant 31 : i32
    %478 = tpu.dynamic_rotate %477 by %c31_i32_167 dim 0 : vector<32x8xf32>, i32 -> vector<32x8xf32>
    %479 = vector.extract_strided_slice %269 {offsets = [0, 5], sizes = [32, 1], strides = [1, 1]} : vector<32x9xf32> to vector<32x1xf32>
    %480 = vector.broadcast %479 : vector<32x1xf32> to vector<32x8xf32>
    %481 = arith.mulf %478, %480 : vector<32x8xf32>
    %482 = arith.addf %476, %481 : vector<32x8xf32>
    %483 = vector.extract_strided_slice %446 {offsets = [0, 48], sizes = [32, 8], strides = [1, 1]} : vector<32x72xf32> to vector<32x8xf32>
    %c29_i32_168 = arith.constant 29 : i32
    %484 = tpu.dynamic_rotate %483 by %c29_i32_168 dim 0 : vector<32x8xf32>, i32 -> vector<32x8xf32>
    %485 = vector.extract_strided_slice %269 {offsets = [0, 6], sizes = [32, 1], strides = [1, 1]} : vector<32x9xf32> to vector<32x1xf32>
    %486 = vector.broadcast %485 : vector<32x1xf32> to vector<32x8xf32>
    %487 = arith.mulf %484, %486 : vector<32x8xf32>
    %488 = arith.addf %482, %487 : vector<32x8xf32>
    %489 = vector.extract_strided_slice %446 {offsets = [0, 56], sizes = [32, 8], strides = [1, 1]} : vector<32x72xf32> to vector<32x8xf32>
    %c28_i32_169 = arith.constant 28 : i32
    %490 = tpu.dynamic_rotate %489 by %c28_i32_169 dim 0 : vector<32x8xf32>, i32 -> vector<32x8xf32>
    %491 = vector.extract_strided_slice %269 {offsets = [0, 7], sizes = [32, 1], strides = [1, 1]} : vector<32x9xf32> to vector<32x1xf32>
    %492 = vector.broadcast %491 : vector<32x1xf32> to vector<32x8xf32>
    %493 = arith.mulf %490, %492 : vector<32x8xf32>
    %494 = arith.addf %488, %493 : vector<32x8xf32>
    %495 = vector.extract_strided_slice %446 {offsets = [0, 64], sizes = [32, 8], strides = [1, 1]} : vector<32x72xf32> to vector<32x8xf32>
    %c27_i32_170 = arith.constant 27 : i32
    %496 = tpu.dynamic_rotate %495 by %c27_i32_170 dim 0 : vector<32x8xf32>, i32 -> vector<32x8xf32>
    %497 = vector.extract_strided_slice %269 {offsets = [0, 8], sizes = [32, 1], strides = [1, 1]} : vector<32x9xf32> to vector<32x1xf32>
    %498 = vector.broadcast %497 : vector<32x1xf32> to vector<32x8xf32>
    %499 = arith.mulf %496, %498 : vector<32x8xf32>
    %500 = arith.addf %494, %499 : vector<32x8xf32>
    %c0_171 = arith.constant 0 : index
    %c48 = arith.constant 48 : index
    %501 = vector.load %arg38[%c0_171, %c48] : memref<32x56xf32, #tpu.memory_space<vmem>>, vector<32x8xf32>
    tpu.vector_store %arg38[%c0_171, %c48], %500 {strides = array<i32>} : memref<32x56xf32, #tpu.memory_space<vmem>>, vector<32x8xf32>,
    %c0_172 = arith.constant 0 : index
    %c0_173 = arith.constant 0 : index
    %502 = vector.load %arg38[%c0_172, %c0_173] : memref<32x56xf32, #tpu.memory_space<vmem>>, vector<32x56xf32>
    %cst_174 = arith.constant dense<0.000000e+00> : vector<56xf32>
    %503 = vector.multi_reduction <add>, %502, %cst_174 [0] : vector<32x56xf32> to vector<56xf32>
    %504 = vector.shape_cast %503 : vector<56xf32> to vector<1x56xf32>
    %cst_175 = arith.constant 3.125000e-02 : f32
    %505 = vector.broadcast %cst_175 : f32 to vector<1x56xf32>
    %506 = arith.mulf %504, %505 : vector<1x56xf32>
    %507 = arith.mulf %502, %502 : vector<32x56xf32>
    %cst_176 = arith.constant dense<0.000000e+00> : vector<56xf32>
    %508 = vector.multi_reduction <add>, %507, %cst_176 [0] : vector<32x56xf32> to vector<56xf32>
    %509 = vector.shape_cast %508 : vector<56xf32> to vector<1x56xf32>
    %cst_177 = arith.constant 3.125000e-02 : f32
    %510 = vector.broadcast %cst_177 : f32 to vector<1x56xf32>
    %511 = arith.mulf %509, %510 : vector<1x56xf32>
    %512 = arith.mulf %506, %506 : vector<1x56xf32>
    %513 = arith.subf %511, %512 : vector<1x56xf32>
    %cst_178 = arith.constant 0.000000e+00 : f32
    %514 = vector.broadcast %cst_178 : f32 to vector<1x56xf32>
    %515 = arith.maximumf %513, %514 : vector<1x56xf32>
    %c0_179 = arith.constant 0 : index
    %c0_180 = arith.constant 0 : index
    %516 = vector.load %arg32[%c0_179, %c0_180] : memref<1x56xf32, #tpu.memory_space<vmem>>, vector<1x56xf32>
    %cst_181 = arith.constant 9.99999974E-6 : f32
    %517 = vector.broadcast %cst_181 : f32 to vector<1x56xf32>
    %518 = arith.addf %515, %517 : vector<1x56xf32>
    %519 = math.rsqrt %518 : vector<1x56xf32>
    %520 = arith.mulf %516, %519 : vector<1x56xf32>
    %c0_182 = arith.constant 0 : index
    %c0_183 = arith.constant 0 : index
    %521 = vector.load %arg33[%c0_182, %c0_183] : memref<1x56xf32, #tpu.memory_space<vmem>>, vector<1x56xf32>
    %522 = arith.mulf %506, %520 : vector<1x56xf32>
    %523 = arith.subf %521, %522 : vector<1x56xf32>
    %524 = vector.broadcast %520 : vector<1x56xf32> to vector<32x56xf32>
    %525 = arith.mulf %502, %524 : vector<32x56xf32>
    %526 = vector.broadcast %523 : vector<1x56xf32> to vector<32x56xf32>
    %527 = arith.addf %525, %526 : vector<32x56xf32>
    %cst_184 = arith.constant 0.000000e+00 : f32
    %528 = vector.broadcast %cst_184 : f32 to vector<32x56xf32>
    %529 = arith.maximumf %527, %528 : vector<32x56xf32>
    %530 = vector.shape_cast %529 : vector<32x56xf32> to vector<2x16x56xf32>
    %cst_185 = arith.constant dense<0.000000e+00> : vector<2x56xf32>
    %531 = vector.multi_reduction <add>, %530, %cst_185 [1] : vector<2x16x56xf32> to vector<2x56xf32>
    %cst_186 = arith.constant 6.250000e-02 : f32
    %532 = vector.broadcast %cst_186 : f32 to vector<2x56xf32>
    %533 = arith.mulf %531, %532 : vector<2x56xf32>
    %c0_187 = arith.constant 0 : index
    %c0_188 = arith.constant 0 : index
    %534 = vector.load %arg34[%c0_187, %c0_188] : memref<56x10xf32, #tpu.memory_space<vmem>>, vector<56x10xf32>
    %cst_189 = arith.constant dense<0.000000e+00> : vector<2x10xf32>
    %535 = tpu.matmul %533, %534, %cst_189 {dimension_numbers = #tpu.dot_dimension_numbers<[1], [0], [0], [1], [0, 0, 1, 1], [], []>} : vector<2x56xf32>, vector<56x10xf32>, vector<2x10xf32> -> vector<2x10xf32>
    %c0_190 = arith.constant 0 : index
    %c0_191 = arith.constant 0 : index
    %536 = vector.load %arg35[%c0_190, %c0_191] : memref<1x10xf32, #tpu.memory_space<vmem>>, vector<1x10xf32>
    %537 = vector.broadcast %536 : vector<1x10xf32> to vector<2x10xf32>
    %538 = arith.addf %535, %537 : vector<2x10xf32>
    %c0_192 = arith.constant 0 : index
    %c0_193 = arith.constant 0 : index
    %539 = vector.load %arg36[%c0_192, %c0_193] : memref<2x10xf32, #tpu.memory_space<vmem>>, vector<2x10xf32>
    tpu.vector_store %arg36[%c0_192, %c0_193], %538 {strides = array<i32>} : memref<2x10xf32, #tpu.memory_space<vmem>>, vector<2x10xf32>,
    return
  }
  func.func @transform_0(%arg0: i32) -> (i32, i32) {
    %c0_i32 = arith.constant 0 : i32
    %c0_i32_0 = arith.constant 0 : i32
    %c0_i32_1 = arith.constant 0 : i32
    return %c0_i32, %c0_i32_0 : i32, i32
  }
  func.func @transform_1(%arg0: i32) -> (i32, i32) {
    %c0_i32 = arith.constant 0 : i32
    %c0_i32_0 = arith.constant 0 : i32
    %c0_i32_1 = arith.constant 0 : i32
    return %c0_i32, %c0_i32_0 : i32, i32
  }
  func.func @transform_2(%arg0: i32) -> (i32, i32) {
    %c0_i32 = arith.constant 0 : i32
    %c0_i32_0 = arith.constant 0 : i32
    %c0_i32_1 = arith.constant 0 : i32
    return %c0_i32, %c0_i32_0 : i32, i32
  }
  func.func @transform_3(%arg0: i32) -> (i32, i32) {
    %c0_i32 = arith.constant 0 : i32
    %c0_i32_0 = arith.constant 0 : i32
    %c0_i32_1 = arith.constant 0 : i32
    return %c0_i32, %c0_i32_0 : i32, i32
  }
  func.func @transform_4(%arg0: i32) -> (i32, i32) {
    %c0_i32 = arith.constant 0 : i32
    %c0_i32_0 = arith.constant 0 : i32
    %c0_i32_1 = arith.constant 0 : i32
    return %c0_i32, %c0_i32_0 : i32, i32
  }
  func.func @transform_5(%arg0: i32) -> (i32, i32) {
    %c0_i32 = arith.constant 0 : i32
    %c0_i32_0 = arith.constant 0 : i32
    %c0_i32_1 = arith.constant 0 : i32
    return %c0_i32, %c0_i32_0 : i32, i32
  }
  func.func @transform_6(%arg0: i32) -> (i32, i32) {
    %c0_i32 = arith.constant 0 : i32
    %c0_i32_0 = arith.constant 0 : i32
    %c0_i32_1 = arith.constant 0 : i32
    return %c0_i32, %c0_i32_0 : i32, i32
  }
  func.func @transform_7(%arg0: i32) -> (i32, i32) {
    %c0_i32 = arith.constant 0 : i32
    %c0_i32_0 = arith.constant 0 : i32
    %c0_i32_1 = arith.constant 0 : i32
    return %c0_i32, %c0_i32_0 : i32, i32
  }
  func.func @transform_8(%arg0: i32) -> (i32, i32) {
    %c0_i32 = arith.constant 0 : i32
    %c0_i32_0 = arith.constant 0 : i32
    %c0_i32_1 = arith.constant 0 : i32
    return %c0_i32, %c0_i32_0 : i32, i32
  }
  func.func @transform_9(%arg0: i32) -> (i32, i32) {
    %c0_i32 = arith.constant 0 : i32
    %c0_i32_0 = arith.constant 0 : i32
    %c0_i32_1 = arith.constant 0 : i32
    return %c0_i32, %c0_i32_0 : i32, i32
  }
  func.func @transform_10(%arg0: i32) -> (i32, i32) {
    %c0_i32 = arith.constant 0 : i32
    %c0_i32_0 = arith.constant 0 : i32
    %c0_i32_1 = arith.constant 0 : i32
    return %c0_i32, %c0_i32_0 : i32, i32
  }
  func.func @transform_11(%arg0: i32) -> (i32, i32) {
    %c0_i32 = arith.constant 0 : i32
    %c0_i32_0 = arith.constant 0 : i32
    %c0_i32_1 = arith.constant 0 : i32
    return %c0_i32, %c0_i32_0 : i32, i32
  }
  func.func @transform_12(%arg0: i32) -> (i32, i32) {
    %c0_i32 = arith.constant 0 : i32
    %c0_i32_0 = arith.constant 0 : i32
    %c0_i32_1 = arith.constant 0 : i32
    return %c0_i32, %c0_i32_0 : i32, i32
  }
  func.func @transform_13(%arg0: i32) -> (i32, i32) {
    %c0_i32 = arith.constant 0 : i32
    %c0_i32_0 = arith.constant 0 : i32
    %c0_i32_1 = arith.constant 0 : i32
    return %c0_i32, %c0_i32_0 : i32, i32
  }
  func.func @transform_14(%arg0: i32) -> (i32, i32) {
    %c0_i32 = arith.constant 0 : i32
    %c0_i32_0 = arith.constant 0 : i32
    %c0_i32_1 = arith.constant 0 : i32
    return %c0_i32, %c0_i32_0 : i32, i32
  }
  func.func @transform_15(%arg0: i32) -> (i32, i32) {
    %c0_i32 = arith.constant 0 : i32
    %c0_i32_0 = arith.constant 0 : i32
    %c0_i32_1 = arith.constant 0 : i32
    return %c0_i32, %c0_i32_0 : i32, i32
  }
  func.func @transform_16(%arg0: i32) -> (i32, i32) {
    %c0_i32 = arith.constant 0 : i32
    %c0_i32_0 = arith.constant 0 : i32
    %c0_i32_1 = arith.constant 0 : i32
    return %c0_i32, %c0_i32_0 : i32, i32
  }
  func.func @transform_17(%arg0: i32) -> (i32, i32) {
    %c0_i32 = arith.constant 0 : i32
    %c0_i32_0 = arith.constant 0 : i32
    %c0_i32_1 = arith.constant 0 : i32
    return %c0_i32, %c0_i32_0 : i32, i32
  }
  func.func @transform_18(%arg0: i32) -> (i32, i32) {
    %c0_i32 = arith.constant 0 : i32
    %c0_i32_0 = arith.constant 0 : i32
    %c0_i32_1 = arith.constant 0 : i32
    return %c0_i32, %c0_i32_0 : i32, i32
  }
  func.func @transform_19(%arg0: i32) -> (i32, i32) {
    %c0_i32 = arith.constant 0 : i32
    %c0_i32_0 = arith.constant 0 : i32
    %c0_i32_1 = arith.constant 0 : i32
    return %c0_i32, %c0_i32_0 : i32, i32
  }
  func.func @transform_20(%arg0: i32) -> (i32, i32) {
    %c0_i32 = arith.constant 0 : i32
    %c0_i32_0 = arith.constant 0 : i32
    %c0_i32_1 = arith.constant 0 : i32
    return %c0_i32, %c0_i32_0 : i32, i32
  }
  func.func @transform_21(%arg0: i32) -> (i32, i32) {
    %c0_i32 = arith.constant 0 : i32
    %c0_i32_0 = arith.constant 0 : i32
    %c0_i32_1 = arith.constant 0 : i32
    return %c0_i32, %c0_i32_0 : i32, i32
  }
  func.func @transform_22(%arg0: i32) -> (i32, i32) {
    %c0_i32 = arith.constant 0 : i32
    %c0_i32_0 = arith.constant 0 : i32
    %c0_i32_1 = arith.constant 0 : i32
    return %c0_i32, %c0_i32_0 : i32, i32
  }
  func.func @transform_23(%arg0: i32) -> (i32, i32) {
    %c0_i32 = arith.constant 0 : i32
    %c0_i32_0 = arith.constant 0 : i32
    %c0_i32_1 = arith.constant 0 : i32
    return %c0_i32, %c0_i32_0 : i32, i32
  }
  func.func @transform_24(%arg0: i32) -> (i32, i32) {
    %c0_i32 = arith.constant 0 : i32
    %c0_i32_0 = arith.constant 0 : i32
    %c0_i32_1 = arith.constant 0 : i32
    return %c0_i32, %c0_i32_0 : i32, i32
  }
  func.func @transform_25(%arg0: i32) -> (i32, i32) {
    %c0_i32 = arith.constant 0 : i32
    %c0_i32_0 = arith.constant 0 : i32
    %c0_i32_1 = arith.constant 0 : i32
    return %c0_i32, %c0_i32_0 : i32, i32
  }
  func.func @transform_26(%arg0: i32) -> (i32, i32) {
    %c0_i32 = arith.constant 0 : i32
    %c0_i32_0 = arith.constant 0 : i32
    %c0_i32_1 = arith.constant 0 : i32
    return %c0_i32, %c0_i32_0 : i32, i32
  }
  func.func @transform_27(%arg0: i32) -> (i32, i32) {
    %c0_i32 = arith.constant 0 : i32
    %c0_i32_0 = arith.constant 0 : i32
    %c0_i32_1 = arith.constant 0 : i32
    return %c0_i32, %c0_i32_0 : i32, i32
  }
  func.func @transform_28(%arg0: i32) -> (i32, i32) {
    %c0_i32 = arith.constant 0 : i32
    %c0_i32_0 = arith.constant 0 : i32
    %c0_i32_1 = arith.constant 0 : i32
    return %c0_i32, %c0_i32_0 : i32, i32
  }
  func.func @transform_29(%arg0: i32) -> (i32, i32) {
    %c0_i32 = arith.constant 0 : i32
    %c0_i32_0 = arith.constant 0 : i32
    %c0_i32_1 = arith.constant 0 : i32
    return %c0_i32, %c0_i32_0 : i32, i32
  }
  func.func @transform_30(%arg0: i32) -> (i32, i32) {
    %c0_i32 = arith.constant 0 : i32
    %c0_i32_0 = arith.constant 0 : i32
    %c0_i32_1 = arith.constant 0 : i32
    return %c0_i32, %c0_i32_0 : i32, i32
  }
  func.func @transform_31(%arg0: i32) -> (i32, i32) {
    %c0_i32 = arith.constant 0 : i32
    %c0_i32_0 = arith.constant 0 : i32
    %c0_i32_1 = arith.constant 0 : i32
    return %c0_i32, %c0_i32_0 : i32, i32
  }
  func.func @transform_32(%arg0: i32) -> (i32, i32) {
    %c0_i32 = arith.constant 0 : i32
    %c0_i32_0 = arith.constant 0 : i32
    %c0_i32_1 = arith.constant 0 : i32
    return %c0_i32, %c0_i32_0 : i32, i32
  }
  func.func @transform_33(%arg0: i32) -> (i32, i32) {
    %c0_i32 = arith.constant 0 : i32
    %c0_i32_0 = arith.constant 0 : i32
    %c0_i32_1 = arith.constant 0 : i32
    return %c0_i32, %c0_i32_0 : i32, i32
  }
  func.func @transform_34(%arg0: i32) -> (i32, i32) {
    %c0_i32 = arith.constant 0 : i32
    %c0_i32_0 = arith.constant 0 : i32
    %c0_i32_1 = arith.constant 0 : i32
    return %c0_i32, %c0_i32_0 : i32, i32
  }
  func.func @transform_35(%arg0: i32) -> (i32, i32) {
    %c0_i32 = arith.constant 0 : i32
    %c0_i32_0 = arith.constant 0 : i32
    %c0_i32_1 = arith.constant 0 : i32
    return %c0_i32, %c0_i32_0 : i32, i32
  }
}

</mosaic_0001>

<llo_original>
// kernel: densenet_fwd.2
$region0: #{densenet_fwd.2}
  #allocation0 [shape = 'u32[]', space=smem, size = 0x4, offset = 0x4, fixed_abs, tag = 'smem constant byte address 0x4 - core index']
  #allocation1 [shape = 'u32[144,128]{1,0:T(1,128)}', space=vmem, size = 0x12000, scoped, tag = 'internal scratch']
  %s0 = inlined_call_operand.vmem [shape: bf16[512,147], index: 0, kind: input, shape index: {}]
  %s1 = inlined_call_operand.vmem [shape: bf16[147,64], index: 1, kind: input, shape index: {}]
  %s2 = inlined_call_operand.vmem [shape: f32[1,64], index: 2, kind: input, shape index: {}]
  %s3 = inlined_call_operand.vmem [shape: f32[1,64], index: 3, kind: input, shape index: {}]
  %s4 = inlined_call_operand.vmem [shape: f32[512,64], index: 4, kind: output, shape index: {}]
  %s5 = sld [smem:[#allocation0]]
  $region26: #{densenet_fwd.2} parent=0
    _
  %s7 = ssub.s32 1, %s5
  %s8 = scalar_select 0, %s7, %s5
  // Predicated region
  $region2: #{densenet_fwd.2} parent=0 // pred_check
    _
  $region3: #{densenet_fwd.2} parent=0 // pred_check_branch
    %10 = sbr.rel (0) target = $region5
  $region4: #{densenet_fwd.2} parent=0 // pred_region
    _
  $region5: #{densenet_fwd.2} parent=0 // pred_fallthru
    _
  // Predicated region
  $region6: #{densenet_fwd.2} parent=0 // pred_check
    _
  $region7: #{densenet_fwd.2} parent=0 // pred_check_branch
    %12 = sbr.rel (0) target = $region9
  $region8: #{densenet_fwd.2} parent=0 // pred_region
    _
  $region9: #{densenet_fwd.2} parent=0 // pred_fallthru
    _
  // Predicated region
  $region10: #{densenet_fwd.2} parent=0 // pred_check
    _
  $region11: #{densenet_fwd.2} parent=0 // pred_check_branch
    %14 = sbr.rel (0) target = $region13
  $region12: #{densenet_fwd.2} parent=0 // pred_region
    _
  $region13: #{densenet_fwd.2} parent=0 // pred_fallthru
    _
  // Predicated region
  $region14: #{densenet_fwd.2} parent=0 // pred_check
    _
  $region15: #{densenet_fwd.2} parent=0 // pred_check_branch
    %16 = sbr.rel (0) target = $region17
  $region16: #{densenet_fwd.2} parent=0 // pred_region
    _
  $region17: #{densenet_fwd.2} parent=0 // pred_fallthru
    _
  %v18 = vld [vmem:[%s0] sm:$0xff]
  %v19 = vld [vmem:[%s0 + $0x8] sm:$0xff]
  %v20 = vld [vmem:[%s0 + $0x10] sm:$0xff]
  %v21 = vld [vmem:[%s0 + $0x18] sm:$0xff]
  %v22 = vld [vmem:[%s0 + $0x20] sm:$0xff]
  %v23 = vld [vmem:[%s0 + $0x28] sm:$0xff]
  %v24 = vld [vmem:[%s0 + $0x30] sm:$0xff]
  %v25 = vld [vmem:[%s0 + $0x38] sm:$0xff]
  %v26 = vld [vmem:[%s0 + $0x40] sm:$0xff]
  %v27 = vld [vmem:[%s0 + $0x48] sm:$0xff]
  %v28 = vld [vmem:[%s0 + $0x50] sm:$0xff]
  %v29 = vld [vmem:[%s0 + $0x58] sm:$0xff]
  %v30 = vld [vmem:[%s0 + $0x60] sm:$0xff]
  %v31 = vld [vmem:[%s0 + $0x68] sm:$0xff]
  %v32 = vld [vmem:[%s0 + $0x70] sm:$0xff]
  %v33 = vld [vmem:[%s0 + $0x78] sm:$0xff]
  %v34 = vld [vmem:[%s0 + $0x80] sm:$0xff]
  %v35 = vld [vmem:[%s0 + $0x88] sm:$0xff]
  %v36 = vld [vmem:[%s0 + $0x90] sm:$0xff]
  %v37 = vld [vmem:[%s0 + $0x98] sm:$0xff]
  %v38 = vld [vmem:[%s0 + $0xa0] sm:$0xff]
  %v39 = vld [vmem:[%s0 + $0xa8] sm:$0xff]
  %v40 = vld [vmem:[%s0 + $0xb0] sm:$0xff]
  %v41 = vld [vmem:[%s0 + $0xb8] sm:$0xff]
  %v42 = vld [vmem:[%s0 + $0xc0] sm:$0xff]
  %v43 = vld [vmem:[%s0 + $0xc8] sm:$0xff]
  %v44 = vld [vmem:[%s0 + $0xd0] sm:$0xff]
  %v45 = vld [vmem:[%s0 + $0xd8] sm:$0xff]
  %v46 = vld [vmem:[%s0 + $0xe0] sm:$0xff]
  %v47 = vld [vmem:[%s0 + $0xe8] sm:$0xff]
  %v48 = vld [vmem:[%s0 + $0xf0] sm:$0xff]
  %v49 = vld [vmem:[%s0 + $0xf8] sm:$0xff]
  %v50 = vld [vmem:[%s0 + $0x100] sm:$0xff]
  %v51 = vld [vmem:[%s0 + $0x108] sm:$0xff]
  %v52 = vld [vmem:[%s0 + $0x110] sm:$0xff]
  %v53 = vld [vmem:[%s0 + $0x118] sm:$0xff]
  %v54 = vld [vmem:[%s0 + $0x120] sm:$0xff]
  %v55 = vld [vmem:[%s0 + $0x128] sm:$0xff]
  %v56 = vld [vmem:[%s0 + $0x130] sm:$0xff]
  %v57 = vld [vmem:[%s0 + $0x138] sm:$0xff]
  %v58 = vld [vmem:[%s0 + $0x140] sm:$0xff]
  %v59 = vld [vmem:[%s0 + $0x148] sm:$0xff]
  %v60 = vld [vmem:[%s0 + $0x150] sm:$0xff]
  %v61 = vld [vmem:[%s0 + $0x158] sm:$0xff]
  %v62 = vld [vmem:[%s0 + $0x160] sm:$0xff]
  %v63 = vld [vmem:[%s0 + $0x168] sm:$0xff]
  %v64 = vld [vmem:[%s0 + $0x170] sm:$0xff]
  %v65 = vld [vmem:[%s0 + $0x178] sm:$0xff]
  %v66 = vld [vmem:[%s0 + $0x180] sm:$0xff]
  %v67 = vld [vmem:[%s0 + $0x188] sm:$0xff]
  %v68 = vld [vmem:[%s0 + $0x190] sm:$0xff]
  %v69 = vld [vmem:[%s0 + $0x198] sm:$0xff]
  %v70 = vld [vmem:[%s0 + $0x1a0] sm:$0xff]
  %v71 = vld [vmem:[%s0 + $0x1a8] sm:$0xff]
  %v72 = vld [vmem:[%s0 + $0x1b0] sm:$0xff]
  %v73 = vld [vmem:[%s0 + $0x1b8] sm:$0xff]
  %v74 = vld [vmem:[%s0 + $0x1c0] sm:$0xff]
  %v75 = vld [vmem:[%s0 + $0x1c8] sm:$0xff]
  %v76 = vld [vmem:[%s0 + $0x1d0] sm:$0xff]
  %v77 = vld [vmem:[%s0 + $0x1d8] sm:$0xff]
  %v78 = vld [vmem:[%s0 + $0x1e0] sm:$0xff]
  %v79 = vld [vmem:[%s0 + $0x1e8] sm:$0xff]
  %v80 = vld [vmem:[%s0 + $0x1f0] sm:$0xff]
  %v81 = vld [vmem:[%s0 + $0x1f8] sm:$0xff]
  %v82 = vld [vmem:[%s1] sm:$0xf]
  %v83 = vld [vmem:[%s1 + $0x4] sm:$0xf]
  %v84 = vld [vmem:[%s1 + $0x8] sm:$0xf]
  %v85 = vld [vmem:[%s1 + $0xc] sm:$0xf]
  %v86 = vld [vmem:[%s1 + $0x10] sm:$0xf]
  %v87 = vld [vmem:[%s1 + $0x14] sm:$0xf]
  %v88 = vld [vmem:[%s1 + $0x18] sm:$0xf]
  %v89 = vld [vmem:[%s1 + $0x1c] sm:$0xf]
  %v90 = vld [vmem:[%s1 + $0x20] sm:$0xf]
  %v91 = vld [vmem:[%s1 + $0x24] sm:$0xf]
  %v92 = vld [vmem:[%s1 + $0x28] sm:$0xf]
  %v93 = vld [vmem:[%s1 + $0x2c] sm:$0xf]
  %v94 = vld [vmem:[%s1 + $0x30] sm:$0xf]
  %v95 = vld [vmem:[%s1 + $0x34] sm:$0xf]
  %v96 = vld [vmem:[%s1 + $0x38] sm:$0xf]
  %v97 = vld [vmem:[%s1 + $0x3c] sm:$0xf]
  %v98 = vld [vmem:[%s1 + $0x40] sm:$0xf]
  %v99 = vld [vmem:[%s1 + $0x44] sm:$0xf]
  %v100 = vld [vmem:[%s1 + $0x48] sm:$0x3]
  %v165 = vunpack.c.l.b16 %v18
  %v166 = vunpack.c.h.b16 %v18
  %v167 = vunpack.c.l.b16 %v19
  %v168 = vunpack.c.h.b16 %v19
  %v169 = vunpack.c.l.b16 %v20
  %v170 = vunpack.c.h.b16 %v20
  %v171 = vunpack.c.l.b16 %v21
  %v172 = vunpack.c.h.b16 %v21
  %v173 = vunpack.c.l.b16 %v22
  %v174 = vunpack.c.h.b16 %v22
  %v175 = vunpack.c.l.b16 %v23
  %v176 = vunpack.c.h.b16 %v23
  %v177 = vunpack.c.l.b16 %v24
  %v178 = vunpack.c.h.b16 %v24
  %v179 = vunpack.c.l.b16 %v25
  %v180 = vunpack.c.h.b16 %v25
  %v181 = vunpack.c.l.b16 %v26
  %v182 = vunpack.c.h.b16 %v26
  %v183 = vunpack.c.l.b16 %v27
  %v184 = vunpack.c.h.b16 %v27
  %v185 = vunpack.c.l.b16 %v28
  %v186 = vunpack.c.h.b16 %v28
  %v187 = vunpack.c.l.b16 %v29
  %v188 = vunpack.c.h.b16 %v29
  %v189 = vunpack.c.l.b16 %v30
  %v190 = vunpack.c.h.b16 %v30
  %v191 = vunpack.c.l.b16 %v31
  %v192 = vunpack.c.h.b16 %v31
  %v193 = vunpack.c.l.b16 %v32
  %v194 = vunpack.c.h.b16 %v32
  %v195 = vunpack.c.l.b16 %v33
  %v196 = vunpack.c.h.b16 %v33
  %v197 = vunpack.c.l.b16 %v34
  %v198 = vunpack.c.h.b16 %v34
  %v199 = vunpack.c.l.b16 %v35
  %v200 = vunpack.c.h.b16 %v35
  %v201 = vunpack.c.l.b16 %v36
  %v202 = vunpack.c.h.b16 %v36
  %v203 = vunpack.c.l.b16 %v37
  %v204 = vunpack.c.h.b16 %v37
  %v205 = vunpack.c.l.b16 %v38
  %v206 = vunpack.c.h.b16 %v38
  %v207 = vunpack.c.l.b16 %v39
  %v208 = vunpack.c.h.b16 %v39
  %v209 = vunpack.c.l.b16 %v40
  %v210 = vunpack.c.h.b16 %v40
  %v211 = vunpack.c.l.b16 %v41
  %v212 = vunpack.c.h.b16 %v41
  %v213 = vunpack.c.l.b16 %v42
  %v214 = vunpack.c.h.b16 %v42
  %v215 = vunpack.c.l.b16 %v43
  %v216 = vunpack.c.h.b16 %v43
  %v217 = vunpack.c.l.b16 %v44
  %v218 = vunpack.c.h.b16 %v44
  %v219 = vunpack.c.l.b16 %v45
  %v220 = vunpack.c.h.b16 %v45
  %v221 = vunpack.c.l.b16 %v46
  %v222 = vunpack.c.h.b16 %v46
  %v223 = vunpack.c.l.b16 %v47
  %v224 = vunpack.c.h.b16 %v47
  %v225 = vunpack.c.l.b16 %v48
  %v226 = vunpack.c.h.b16 %v48
  %v227 = vunpack.c.l.b16 %v49
  %v228 = vunpack.c.h.b16 %v49
  %v229 = vunpack.c.l.b16 %v50
  %v230 = vunpack.c.h.b16 %v50
  %v231 = vunpack.c.l.b16 %v51
  %v232 = vunpack.c.h.b16 %v51
  %v233 = vunpack.c.l.b16 %v52
  %v234 = vunpack.c.h.b16 %v52
  %v235 = vunpack.c.l.b16 %v53
  %v236 = vunpack.c.h.b16 %v53
  %v237 = vunpack.c.l.b16 %v54
  %v238 = vunpack.c.h.b16 %v54
  %v239 = vunpack.c.l.b16 %v55
  %v240 = vunpack.c.h.b16 %v55
  %v241 = vunpack.c.l.b16 %v56
  %v242 = vunpack.c.h.b16 %v56
  %v243 = vunpack.c.l.b16 %v57
  %v244 = vunpack.c.h.b16 %v57
  %v245 = vunpack.c.l.b16 %v58
  %v246 = vunpack.c.h.b16 %v58
  %v247 = vunpack.c.l.b16 %v59
  %v248 = vunpack.c.h.b16 %v59
  %v249 = vunpack.c.l.b16 %v60
  %v250 = vunpack.c.h.b16 %v60
  %v251 = vunpack.c.l.b16 %v61
  %v252 = vunpack.c.h.b16 %v61
  %v253 = vunpack.c.l.b16 %v62
  %v254 = vunpack.c.h.b16 %v62
  %v255 = vunpack.c.l.b16 %v63
  %v256 = vunpack.c.h.b16 %v63
  %v257 = vunpack.c.l.b16 %v64
  %v258 = vunpack.c.h.b16 %v64
  %v259 = vunpack.c.l.b16 %v65
  %v260 = vunpack.c.h.b16 %v65
  %v261 = vunpack.c.l.b16 %v66
  %v262 = vunpack.c.h.b16 %v66
  %v263 = vunpack.c.l.b16 %v67
  %v264 = vunpack.c.h.b16 %v67
  %v265 = vunpack.c.l.b16 %v68
  %v266 = vunpack.c.h.b16 %v68
  %v267 = vunpack.c.l.b16 %v69
  %v268 = vunpack.c.h.b16 %v69
  %v269 = vunpack.c.l.b16 %v70
  %v270 = vunpack.c.h.b16 %v70
  %v271 = vunpack.c.l.b16 %v71
  %v272 = vunpack.c.h.b16 %v71
  %v273 = vunpack.c.l.b16 %v72
  %v274 = vunpack.c.h.b16 %v72
  %v275 = vunpack.c.l.b16 %v73
  %v276 = vunpack.c.h.b16 %v73
  %v277 = vunpack.c.l.b16 %v74
  %v278 = vunpack.c.h.b16 %v74
  %v279 = vunpack.c.l.b16 %v75
  %v280 = vunpack.c.h.b16 %v75
  %v281 = vunpack.c.l.b16 %v76
  %v282 = vunpack.c.h.b16 %v76
  %v283 = vunpack.c.l.b16 %v77
  %v284 = vunpack.c.h.b16 %v77
  %v285 = vunpack.c.l.b16 %v78
  %v286 = vunpack.c.h.b16 %v78
  %v287 = vunpack.c.l.b16 %v79
  %v288 = vunpack.c.h.b16 %v79
  %v289 = vunpack.c.l.b16 %v80
  %v290 = vunpack.c.h.b16 %v80
  %v291 = vunpack.c.l.b16 %v81
  %v292 = vunpack.c.h.b16 %v81
  %v293 = vpack.c.b16 %v167, %v165
  %v294 = vpack.c.b16 %v168, %v166
  %v295 = vpack.c.b16 %v171, %v169
  %v296 = vpack.c.b16 %v172, %v170
  %v297 = vpack.c.b16 %v175, %v173
  %v298 = vpack.c.b16 %v176, %v174
  %v299 = vpack.c.b16 %v179, %v177
  %v300 = vpack.c.b16 %v180, %v178
  %v301 = vpack.c.b16 %v183, %v181
  %v302 = vpack.c.b16 %v184, %v182
  %v303 = vpack.c.b16 %v187, %v185
  %v304 = vpack.c.b16 %v188, %v186
  %v305 = vpack.c.b16 %v191, %v189
  %v306 = vpack.c.b16 %v192, %v190
  %v307 = vpack.c.b16 %v195, %v193
  %v308 = vpack.c.b16 %v196, %v194
  %v309 = vpack.c.b16 %v199, %v197
  %v310 = vpack.c.b16 %v200, %v198
  %v311 = vpack.c.b16 %v203, %v201
  %v312 = vpack.c.b16 %v204, %v202
  %v313 = vpack.c.b16 %v207, %v205
  %v314 = vpack.c.b16 %v208, %v206
  %v315 = vpack.c.b16 %v211, %v209
  %v316 = vpack.c.b16 %v212, %v210
  %v317 = vpack.c.b16 %v215, %v213
  %v318 = vpack.c.b16 %v216, %v214
  %v319 = vpack.c.b16 %v219, %v217
  %v320 = vpack.c.b16 %v220, %v218
  %v321 = vpack.c.b16 %v223, %v221
  %v322 = vpack.c.b16 %v224, %v222
  %v323 = vpack.c.b16 %v227, %v225
  %v324 = vpack.c.b16 %v228, %v226
  %v325 = vpack.c.b16 %v231, %v229
  %v326 = vpack.c.b16 %v232, %v230
  %v327 = vpack.c.b16 %v235, %v233
  %v328 = vpack.c.b16 %v236, %v234
  %v329 = vpack.c.b16 %v239, %v237
  %v330 = vpack.c.b16 %v240, %v238
  %v331 = vpack.c.b16 %v243, %v241
  %v332 = vpack.c.b16 %v244, %v242
  %v333 = vpack.c.b16 %v247, %v245
  %v334 = vpack.c.b16 %v248, %v246
  %v335 = vpack.c.b16 %v251, %v249
  %v336 = vpack.c.b16 %v252, %v250
  %v337 = vpack.c.b16 %v255, %v253
  %v338 = vpack.c.b16 %v256, %v254
  %v339 = vpack.c.b16 %v259, %v257
  %v340 = vpack.c.b16 %v260, %v258
  %v341 = vpack.c.b16 %v263, %v261
  %v342 = vpack.c.b16 %v264, %v262
  %v343 = vpack.c.b16 %v267, %v265
  %v344 = vpack.c.b16 %v268, %v266
  %v345 = vpack.c.b16 %v271, %v269
  %v346 = vpack.c.b16 %v272, %v270
  %v347 = vpack.c.b16 %v275, %v273
  %v348 = vpack.c.b16 %v276, %v274
  %v349 = vpack.c.b16 %v279, %v277
  %v350 = vpack.c.b16 %v280, %v278
  %v351 = vpack.c.b16 %v283, %v281
  %v352 = vpack.c.b16 %v284, %v282
  %v353 = vpack.c.b16 %v287, %v285
  %v354 = vpack.c.b16 %v288, %v286
  %v355 = vpack.c.b16 %v291, %v289
  %v356 = vpack.c.b16 %v292, %v290
  %v408 = vunpack.c.l.b16 %v82
  %v409 = vunpack.c.l.b16 %v83
  %v410 = vunpack.c.l.b16 %v84
  %v411 = vunpack.c.l.b16 %v85
  %v412 = vunpack.c.l.b16 %v86
  %v413 = vunpack.c.l.b16 %v87
  %v414 = vunpack.c.l.b16 %v88
  %v415 = vunpack.c.l.b16 %v89
  %v416 = vunpack.c.l.b16 %v90
  %v417 = vunpack.c.l.b16 %v91
  %v418 = vunpack.c.l.b16 %v92
  %v419 = vunpack.c.l.b16 %v93
  %v420 = vunpack.c.l.b16 %v94
  %v421 = vunpack.c.l.b16 %v95
  %v422 = vunpack.c.l.b16 %v96
  %v423 = vunpack.c.l.b16 %v97
  %v424 = vunpack.c.l.b16 %v98
  %v425 = vunpack.c.l.b16 %v99
  %v426 = vunpack.c.l.b16 %v100
  %v427 = vpack.c.b16 %v409, %v408
  %v428 = vpack.c.b16 %v411, %v410
  %v429 = vpack.c.b16 %v413, %v412
  %v430 = vpack.c.b16 %v415, %v414
  %v431 = vpack.c.b16 %v417, %v416
  %v432 = vpack.c.b16 %v419, %v418
  %v433 = vpack.c.b16 %v421, %v420
  %v434 = vpack.c.b16 %v423, %v422
  %v435 = vpack.c.b16 %v425, %v424
  %v436 = vpack.c.b16 %v426, %v426
  %vm446 = vcmask 154624
  %v448 = vsel %vm446, %v294, 0
  %v451 = vsel %vm446, %v296, 0
  %v454 = vsel %vm446, %v298, 0
  %v457 = vsel %vm446, %v300, 0
  %v460 = vsel %vm446, %v302, 0
  %v463 = vsel %vm446, %v304, 0
  %v466 = vsel %vm446, %v306, 0
  %v469 = vsel %vm446, %v308, 0
  %v472 = vsel %vm446, %v310, 0
  %v475 = vsel %vm446, %v312, 0
  %v478 = vsel %vm446, %v314, 0
  %v481 = vsel %vm446, %v316, 0
  %v484 = vsel %vm446, %v318, 0
  %v487 = vsel %vm446, %v320, 0
  %v490 = vsel %vm446, %v322, 0
  %v493 = vsel %vm446, %v324, 0
  %v496 = vsel %vm446, %v326, 0
  %v499 = vsel %vm446, %v328, 0
  %v502 = vsel %vm446, %v330, 0
  %v505 = vsel %vm446, %v332, 0
  %v508 = vsel %vm446, %v334, 0
  %v511 = vsel %vm446, %v336, 0
  %v514 = vsel %vm446, %v338, 0
  %v517 = vsel %vm446, %v340, 0
  %v520 = vsel %vm446, %v342, 0
  %v523 = vsel %vm446, %v344, 0
  %v526 = vsel %vm446, %v346, 0
  %v529 = vsel %vm446, %v348, 0
  %v532 = vsel %vm446, %v350, 0
  %v535 = vsel %vm446, %v352, 0
  %v538 = vsel %vm446, %v354, 0
  %v541 = vsel %vm446, %v356, 0
  %vm543 = vcmask 1040384
  %vm544 = vcmask 1041408
  %v545 = vsel %vm543, 4294967295, 65535
  %v546 = vsel %vm544, %v545, 0
  %v548 = vand.u32 %v436, %v546
  %550 = vmatprep.subr.bf16.mxu0 0
  %551 = vmatpush1.bf16.msra.mxu0 %v427
  %552 = vmatprep.subr.bf16.mxu0 0
  %553 = vmatpush1.bf16.msra.mxu0 %v428
  %554 = vmatprep.subr.bf16.mxu0 0
  %555 = vmatpush1.bf16.msra.mxu0 %v429
  %556 = vmatprep.subr.bf16.mxu0 0
  %557 = vmatpush1.bf16.msra.mxu0 %v430
  %558 = vmatprep.subr.bf16.mxu0 0
  %559 = vmatpush1.bf16.msra.mxu0 %v431
  %560 = vmatprep.subr.bf16.mxu0 0
  %561 = vmatpush1.bf16.msra.mxu0 %v432
  %562 = vmatprep.subr.bf16.mxu0 0
  %563 = vmatpush1.bf16.msra.mxu0 %v433
  %564 = vmatprep.subr.bf16.mxu0 0
  %565 = vmatpush1.bf16.msra.mxu0 %v434
  %566 = vmatprep.subr.bf16.mxu0 0
  %567 = vmatpush1.bf16.msra.mxu0 %v435
  %568 = vmatprep.subr.bf16.mxu0 0
  %569 = vmatpush1.bf16.msra.mxu0 %v548
  %570 = vmatprep.subr.bf16.mxu0 0
  %571 = vmatpush1.bf16.msra.mxu0 0
  %572 = vmatprep.subr.bf16.mxu0 0
  %573 = vmatpush1.bf16.msra.mxu0 0
  %574 = vmatprep.subr.bf16.mxu0 0
  %575 = vmatpush1.bf16.msra.mxu0 0
  %576 = vmatprep.subr.bf16.mxu0 0
  %577 = vmatpush1.bf16.msra.mxu0 0
  %578 = vmatprep.subr.bf16.mxu0 0
  %579 = vmatpush1.bf16.msra.mxu0 0
  %580 = vmatprep.subr.bf16.mxu0 0
  %581 = vmatpush1.bf16.msra.mxu0 0
  %582 = vmatprep.mubr.bf16.mxu0 %v448
  %583 = vmatmul.mubr.bf16.gmra.mrb[0].mxu0 %v293
  %v584 = vpop.f32.mrb[0].mxu0
  %v585 = vadd.f32 0.0, %v584
  %v586 = vpop.f32.mrb[0].mxu0
  %v587 = vpop.f32.mrb[0].mxu0
  %v588 = vadd.f32 0.0, %v587
  %v589 = vpop.f32.mrb[0].mxu0
  %590 = vmatprep.mubr.bf16.mxu0 %v451
  %591 = vmatmul.mubr.bf16.gmra.mrb[0].mxu0 %v295
  %v592 = vpop.f32.mrb[0].mxu0
  %v593 = vadd.f32 0.0, %v592
  %v594 = vpop.f32.mrb[0].mxu0
  %v595 = vpop.f32.mrb[0].mxu0
  %v596 = vadd.f32 0.0, %v595
  %v597 = vpop.f32.mrb[0].mxu0
  %598 = vmatprep.mubr.bf16.mxu0 %v454
  %599 = vmatmul.mubr.bf16.gmra.mrb[0].mxu0 %v297
  %v600 = vpop.f32.mrb[0].mxu0
  %v601 = vadd.f32 0.0, %v600
  %v602 = vpop.f32.mrb[0].mxu0
  %v603 = vpop.f32.mrb[0].mxu0
  %v604 = vadd.f32 0.0, %v603
  %v605 = vpop.f32.mrb[0].mxu0
  %606 = vmatprep.mubr.bf16.mxu0 %v457
  %607 = vmatmul.mubr.bf16.gmra.mrb[0].mxu0 %v299
  %v608 = vpop.f32.mrb[0].mxu0
  %v609 = vadd.f32 0.0, %v608
  %v610 = vpop.f32.mrb[0].mxu0
  %v611 = vpop.f32.mrb[0].mxu0
  %v612 = vadd.f32 0.0, %v611
  %v613 = vpop.f32.mrb[0].mxu0
  %614 = vmatprep.mubr.bf16.mxu0 %v460
  %615 = vmatmul.mubr.bf16.gmra.mrb[0].mxu0 %v301
  %v616 = vpop.f32.mrb[0].mxu0
  %v617 = vadd.f32 0.0, %v616
  %v618 = vpop.f32.mrb[0].mxu0
  %v619 = vpop.f32.mrb[0].mxu0
  %v620 = vadd.f32 0.0, %v619
  %v621 = vpop.f32.mrb[0].mxu0
  %622 = vmatprep.mubr.bf16.mxu0 %v463
  %623 = vmatmul.mubr.bf16.gmra.mrb[0].mxu0 %v303
  %v624 = vpop.f32.mrb[0].mxu0
  %v625 = vadd.f32 0.0, %v624
  %v626 = vpop.f32.mrb[0].mxu0
  %v627 = vpop.f32.mrb[0].mxu0
  %v628 = vadd.f32 0.0, %v627
  %v629 = vpop.f32.mrb[0].mxu0
  %630 = vmatprep.mubr.bf16.mxu0 %v466
  %631 = vmatmul.mubr.bf16.gmra.mrb[0].mxu0 %v305
  %v632 = vpop.f32.mrb[0].mxu0
  %v633 = vadd.f32 0.0, %v632
  %v634 = vpop.f32.mrb[0].mxu0
  %v635 = vpop.f32.mrb[0].mxu0
  %v636 = vadd.f32 0.0, %v635
  %v637 = vpop.f32.mrb[0].mxu0
  %638 = vmatprep.mubr.bf16.mxu0 %v469
  %639 = vmatmul.mubr.bf16.gmra.mrb[0].mxu0 %v307
  %v640 = vpop.f32.mrb[0].mxu0
  %v641 = vadd.f32 0.0, %v640
  %v642 = vpop.f32.mrb[0].mxu0
  %v643 = vpop.f32.mrb[0].mxu0
  %v644 = vadd.f32 0.0, %v643
  %v645 = vpop.f32.mrb[0].mxu0
  %646 = vmatprep.mubr.bf16.mxu0 %v472
  %647 = vmatmul.mubr.bf16.gmra.mrb[0].mxu0 %v309
  %v648 = vpop.f32.mrb[0].mxu0
  %v649 = vadd.f32 0.0, %v648
  %v650 = vpop.f32.mrb[0].mxu0
  %v651 = vpop.f32.mrb[0].mxu0
  %v652 = vadd.f32 0.0, %v651
  %v653 = vpop.f32.mrb[0].mxu0
  %654 = vmatprep.mubr.bf16.mxu0 %v475
  %655 = vmatmul.mubr.bf16.gmra.mrb[0].mxu0 %v311
  %v656 = vpop.f32.mrb[0].mxu0
  %v657 = vadd.f32 0.0, %v656
  %v658 = vpop.f32.mrb[0].mxu0
  %v659 = vpop.f32.mrb[0].mxu0
  %v660 = vadd.f32 0.0, %v659
  %v661 = vpop.f32.mrb[0].mxu0
  %662 = vmatprep.mubr.bf16.mxu0 %v478
  %663 = vmatmul.mubr.bf16.gmra.mrb[0].mxu0 %v313
  %v664 = vpop.f32.mrb[0].mxu0
  %v665 = vadd.f32 0.0, %v664
  %v666 = vpop.f32.mrb[0].mxu0
  %v667 = vpop.f32.mrb[0].mxu0
  %v668 = vadd.f32 0.0, %v667
  %v669 = vpop.f32.mrb[0].mxu0
  %670 = vmatprep.mubr.bf16.mxu0 %v481
  %671 = vmatmul.mubr.bf16.gmra.mrb[0].mxu0 %v315
  %v672 = vpop.f32.mrb[0].mxu0
  %v673 = vadd.f32 0.0, %v672
  %v674 = vpop.f32.mrb[0].mxu0
  %v675 = vpop.f32.mrb[0].mxu0
  %v676 = vadd.f32 0.0, %v675
  %v677 = vpop.f32.mrb[0].mxu0
  %678 = vmatprep.mubr.bf16.mxu0 %v484
  %679 = vmatmul.mubr.bf16.gmra.mrb[0].mxu0 %v317
  %v680 = vpop.f32.mrb[0].mxu0
  %v681 = vadd.f32 0.0, %v680
  %v682 = vpop.f32.mrb[0].mxu0
  %v683 = vpop.f32.mrb[0].mxu0
  %v684 = vadd.f32 0.0, %v683
  %v685 = vpop.f32.mrb[0].mxu0
  %686 = vmatprep.mubr.bf16.mxu0 %v487
  %687 = vmatmul.mubr.bf16.gmra.mrb[0].mxu0 %v319
  %v688 = vpop.f32.mrb[0].mxu0
  %v689 = vadd.f32 0.0, %v688
  %v690 = vpop.f32.mrb[0].mxu0
  %v691 = vpop.f32.mrb[0].mxu0
  %v692 = vadd.f32 0.0, %v691
  %v693 = vpop.f32.mrb[0].mxu0
  %694 = vmatprep.mubr.bf16.mxu0 %v490
  %695 = vmatmul.mubr.bf16.gmra.mrb[0].mxu0 %v321
  %v696 = vpop.f32.mrb[0].mxu0
  %v697 = vadd.f32 0.0, %v696
  %v698 = vpop.f32.mrb[0].mxu0
  %v699 = vpop.f32.mrb[0].mxu0
  %v700 = vadd.f32 0.0, %v699
  %v701 = vpop.f32.mrb[0].mxu0
  %702 = vmatprep.mubr.bf16.mxu0 %v493
  %703 = vmatmul.mubr.bf16.gmra.mrb[0].mxu0 %v323
  %v704 = vpop.f32.mrb[0].mxu0
  %v705 = vadd.f32 0.0, %v704
  %v706 = vpop.f32.mrb[0].mxu0
  %v707 = vpop.f32.mrb[0].mxu0
  %v708 = vadd.f32 0.0, %v707
  %v709 = vpop.f32.mrb[0].mxu0
  %710 = vmatprep.mubr.bf16.mxu0 %v496
  %711 = vmatmul.mubr.bf16.gmra.mrb[0].mxu0 %v325
  %v712 = vpop.f32.mrb[0].mxu0
  %v713 = vadd.f32 0.0, %v712
  %v714 = vpop.f32.mrb[0].mxu0
  %v715 = vpop.f32.mrb[0].mxu0
  %v716 = vadd.f32 0.0, %v715
  %v717 = vpop.f32.mrb[0].mxu0
  %718 = vmatprep.mubr.bf16.mxu0 %v499
  %719 = vmatmul.mubr.bf16.gmra.mrb[0].mxu0 %v327
  %v720 = vpop.f32.mrb[0].mxu0
  %v721 = vadd.f32 0.0, %v720
  %v722 = vpop.f32.mrb[0].mxu0
  %v723 = vpop.f32.mrb[0].mxu0
  %v724 = vadd.f32 0.0, %v723
  %v725 = vpop.f32.mrb[0].mxu0
  %726 = vmatprep.mubr.bf16.mxu0 %v502
  %727 = vmatmul.mubr.bf16.gmra.mrb[0].mxu0 %v329
  %v728 = vpop.f32.mrb[0].mxu0
  %v729 = vadd.f32 0.0, %v728
  %v730 = vpop.f32.mrb[0].mxu0
  %v731 = vpop.f32.mrb[0].mxu0
  %v732 = vadd.f32 0.0, %v731
  %v733 = vpop.f32.mrb[0].mxu0
  %734 = vmatprep.mubr.bf16.mxu0 %v505
  %735 = vmatmul.mubr.bf16.gmra.mrb[0].mxu0 %v331
  %v736 = vpop.f32.mrb[0].mxu0
  %v737 = vadd.f32 0.0, %v736
  %v738 = vpop.f32.mrb[0].mxu0
  %v739 = vpop.f32.mrb[0].mxu0
  %v740 = vadd.f32 0.0, %v739
  %v741 = vpop.f32.mrb[0].mxu0
  %742 = vmatprep.mubr.bf16.mxu0 %v508
  %743 = vmatmul.mubr.bf16.gmra.mrb[0].mxu0 %v333
  %v744 = vpop.f32.mrb[0].mxu0
  %v745 = vadd.f32 0.0, %v744
  %v746 = vpop.f32.mrb[0].mxu0
  %v747 = vpop.f32.mrb[0].mxu0
  %v748 = vadd.f32 0.0, %v747
  %v749 = vpop.f32.mrb[0].mxu0
  %750 = vmatprep.mubr.bf16.mxu0 %v511
  %751 = vmatmul.mubr.bf16.gmra.mrb[0].mxu0 %v335
  %v752 = vpop.f32.mrb[0].mxu0
  %v753 = vadd.f32 0.0, %v752
  %v754 = vpop.f32.mrb[0].mxu0
  %v755 = vpop.f32.mrb[0].mxu0
  %v756 = vadd.f32 0.0, %v755
  %v757 = vpop.f32.mrb[0].mxu0
  %758 = vmatprep.mubr.bf16.mxu0 %v514
  %759 = vmatmul.mubr.bf16.gmra.mrb[0].mxu0 %v337
  %v760 = vpop.f32.mrb[0].mxu0
  %v761 = vadd.f32 0.0, %v760
  %v762 = vpop.f32.mrb[0].mxu0
  %v763 = vpop.f32.mrb[0].mxu0
  %v764 = vadd.f32 0.0, %v763
  %v765 = vpop.f32.mrb[0].mxu0
  %766 = vmatprep.mubr.bf16.mxu0 %v517
  %767 = vmatmul.mubr.bf16.gmra.mrb[0].mxu0 %v339
  %v768 = vpop.f32.mrb[0].mxu0
  %v769 = vadd.f32 0.0, %v768
  %v770 = vpop.f32.mrb[0].mxu0
  %v771 = vpop.f32.mrb[0].mxu0
  %v772 = vadd.f32 0.0, %v771
  %v773 = vpop.f32.mrb[0].mxu0
  %774 = vmatprep.mubr.bf16.mxu0 %v520
  %775 = vmatmul.mubr.bf16.gmra.mrb[0].mxu0 %v341
  %v776 = vpop.f32.mrb[0].mxu0
  %v777 = vadd.f32 0.0, %v776
  %v778 = vpop.f32.mrb[0].mxu0
  %v779 = vpop.f32.mrb[0].mxu0
  %v780 = vadd.f32 0.0, %v779
  %v781 = vpop.f32.mrb[0].mxu0
  %782 = vmatprep.mubr.bf16.mxu0 %v523
  %783 = vmatmul.mubr.bf16.gmra.mrb[0].mxu0 %v343
  %v784 = vpop.f32.mrb[0].mxu0
  %v785 = vadd.f32 0.0, %v784
  %v786 = vpop.f32.mrb[0].mxu0
  %v787 = vpop.f32.mrb[0].mxu0
  %v788 = vadd.f32 0.0, %v787
  %v789 = vpop.f32.mrb[0].mxu0
  %790 = vmatprep.mubr.bf16.mxu0 %v526
  %791 = vmatmul.mubr.bf16.gmra.mrb[0].mxu0 %v345
  %v792 = vpop.f32.mrb[0].mxu0
  %v793 = vadd.f32 0.0, %v792
  %v794 = vpop.f32.mrb[0].mxu0
  %v795 = vpop.f32.mrb[0].mxu0
  %v796 = vadd.f32 0.0, %v795
  %v797 = vpop.f32.mrb[0].mxu0
  %798 = vmatprep.mubr.bf16.mxu0 %v529
  %799 = vmatmul.mubr.bf16.gmra.mrb[0].mxu0 %v347
  %v800 = vpop.f32.mrb[0].mxu0
  %v801 = vadd.f32 0.0, %v800
  %v802 = vpop.f32.mrb[0].mxu0
  %v803 = vpop.f32.mrb[0].mxu0
  %v804 = vadd.f32 0.0, %v803
  %v805 = vpop.f32.mrb[0].mxu0
  %806 = vmatprep.mubr.bf16.mxu0 %v532
  %807 = vmatmul.mubr.bf16.gmra.mrb[0].mxu0 %v349
  %v808 = vpop.f32.mrb[0].mxu0
  %v809 = vadd.f32 0.0, %v808
  %v810 = vpop.f32.mrb[0].mxu0
  %v811 = vpop.f32.mrb[0].mxu0
  %v812 = vadd.f32 0.0, %v811
  %v813 = vpop.f32.mrb[0].mxu0
  %814 = vmatprep.mubr.bf16.mxu0 %v535
  %815 = vmatmul.mubr.bf16.gmra.mrb[0].mxu0 %v351
  %v816 = vpop.f32.mrb[0].mxu0
  %v817 = vadd.f32 0.0, %v816
  %v818 = vpop.f32.mrb[0].mxu0
  %v819 = vpop.f32.mrb[0].mxu0
  %v820 = vadd.f32 0.0, %v819
  %v821 = vpop.f32.mrb[0].mxu0
  %822 = vmatprep.mubr.bf16.mxu0 %v538
  %823 = vmatmul.mubr.bf16.gmra.mrb[0].mxu0 %v353
  %v824 = vpop.f32.mrb[0].mxu0
  %v825 = vadd.f32 0.0, %v824
  %v826 = vpop.f32.mrb[0].mxu0
  %v827 = vpop.f32.mrb[0].mxu0
  %v828 = vadd.f32 0.0, %v827
  %v829 = vpop.f32.mrb[0].mxu0
  %830 = vmatprep.mubr.bf16.mxu0 %v541
  %831 = vmatmul.mubr.bf16.gmra.mrb[0].mxu0 %v355
  %v832 = vpop.f32.mrb[0].mxu0
  %v833 = vadd.f32 0.0, %v832
  %v834 = vpop.f32.mrb[0].mxu0
  %v835 = vpop.f32.mrb[0].mxu0
  %v836 = vadd.f32 0.0, %v835
  %v837 = vpop.f32.mrb[0].mxu0
  %838 = vdwg.mxu0
  %vm839 = vcmask 523264
  %v840 = vsel %vm839, %v585, 0.0
  %v841 = vsel %vm839, %v588, 0.0
  %v842 = vadd.f32 %v840, %v841
  %v843 = vsel %vm839, %v593, 0.0
  %v844 = vadd.f32 %v842, %v843
  %v845 = vsel %vm839, %v596, 0.0
  %v846 = vadd.f32 %v844, %v845
  %v847 = vsel %vm839, %v601, 0.0
  %v848 = vadd.f32 %v846, %v847
  %v849 = vsel %vm839, %v604, 0.0
  %v850 = vadd.f32 %v848, %v849
  %v851 = vsel %vm839, %v609, 0.0
  %v852 = vadd.f32 %v850, %v851
  %v853 = vsel %vm839, %v612, 0.0
  %v854 = vadd.f32 %v852, %v853
  %v855 = vsel %vm839, %v617, 0.0
  %v856 = vadd.f32 %v854, %v855
  %v857 = vsel %vm839, %v620, 0.0
  %v858 = vadd.f32 %v856, %v857
  %v859 = vsel %vm839, %v625, 0.0
  %v860 = vadd.f32 %v858, %v859
  %v861 = vsel %vm839, %v628, 0.0
  %v862 = vadd.f32 %v860, %v861
  %v863 = vsel %vm839, %v633, 0.0
  %v864 = vadd.f32 %v862, %v863
  %v865 = vsel %vm839, %v636, 0.0
  %v866 = vadd.f32 %v864, %v865
  %v867 = vsel %vm839, %v641, 0.0
  %v868 = vadd.f32 %v866, %v867
  %v869 = vsel %vm839, %v644, 0.0
  %v870 = vadd.f32 %v868, %v869
  %v871 = vsel %vm839, %v649, 0.0
  %v872 = vadd.f32 %v870, %v871
  %v873 = vsel %vm839, %v652, 0.0
  %v874 = vadd.f32 %v872, %v873
  %v875 = vsel %vm839, %v657, 0.0
  %v876 = vadd.f32 %v874, %v875
  %v877 = vsel %vm839, %v660, 0.0
  %v878 = vadd.f32 %v876, %v877
  %v879 = vsel %vm839, %v665, 0.0
  %v880 = vadd.f32 %v878, %v879
  %v881 = vsel %vm839, %v668, 0.0
  %v882 = vadd.f32 %v880, %v881
  %v883 = vsel %vm839, %v673, 0.0
  %v884 = vadd.f32 %v882, %v883
  %v885 = vsel %vm839, %v676, 0.0
  %v886 = vadd.f32 %v884, %v885
  %v887 = vsel %vm839, %v681, 0.0
  %v888 = vadd.f32 %v886, %v887
  %v889 = vsel %vm839, %v684, 0.0
  %v890 = vadd.f32 %v888, %v889
  %v891 = vsel %vm839, %v689, 0.0
  %v892 = vadd.f32 %v890, %v891
  %v893 = vsel %vm839, %v692, 0.0
  %v894 = vadd.f32 %v892, %v893
  %v895 = vsel %vm839, %v697, 0.0
  %v896 = vadd.f32 %v894, %v895
  %v897 = vsel %vm839, %v700, 0.0
  %v898 = vadd.f32 %v896, %v897
  %v899 = vsel %vm839, %v705, 0.0
  %v900 = vadd.f32 %v898, %v899
  %v901 = vsel %vm839, %v708, 0.0
  %v902 = vadd.f32 %v900, %v901
  %v903 = vsel %vm839, %v713, 0.0
  %v904 = vadd.f32 %v902, %v903
  %v905 = vsel %vm839, %v716, 0.0
  %v906 = vadd.f32 %v904, %v905
  %v907 = vsel %vm839, %v721, 0.0
  %v908 = vadd.f32 %v906, %v907
  %v909 = vsel %vm839, %v724, 0.0
  %v910 = vadd.f32 %v908, %v909
  %v911 = vsel %vm839, %v729, 0.0
  %v912 = vadd.f32 %v910, %v911
  %v913 = vsel %vm839, %v732, 0.0
  %v914 = vadd.f32 %v912, %v913
  %v915 = vsel %vm839, %v737, 0.0
  %v916 = vadd.f32 %v914, %v915
  %v917 = vsel %vm839, %v740, 0.0
  %v918 = vadd.f32 %v916, %v917
  %v919 = vsel %vm839, %v745, 0.0
  %v920 = vadd.f32 %v918, %v919
  %v921 = vsel %vm839, %v748, 0.0
  %v922 = vadd.f32 %v920, %v921
  %v923 = vsel %vm839, %v753, 0.0
  %v924 = vadd.f32 %v922, %v923
  %v925 = vsel %vm839, %v756, 0.0
  %v926 = vadd.f32 %v924, %v925
  %v927 = vsel %vm839, %v761, 0.0
  %v928 = vadd.f32 %v926, %v927
  %v929 = vsel %vm839, %v764, 0.0
  %v930 = vadd.f32 %v928, %v929
  %v931 = vsel %vm839, %v769, 0.0
  %v932 = vadd.f32 %v930, %v931
  %v933 = vsel %vm839, %v772, 0.0
  %v934 = vadd.f32 %v932, %v933
  %v935 = vsel %vm839, %v777, 0.0
  %v936 = vadd.f32 %v934, %v935
  %v937 = vsel %vm839, %v780, 0.0
  %v938 = vadd.f32 %v936, %v937
  %v939 = vsel %vm839, %v785, 0.0
  %v940 = vadd.f32 %v938, %v939
  %v941 = vsel %vm839, %v788, 0.0
  %v942 = vadd.f32 %v940, %v941
  %v943 = vsel %vm839, %v793, 0.0
  %v944 = vadd.f32 %v942, %v943
  %v945 = vsel %vm839, %v796, 0.0
  %v946 = vadd.f32 %v944, %v945
  %v947 = vsel %vm839, %v801, 0.0
  %v948 = vadd.f32 %v946, %v947
  %v949 = vsel %vm839, %v804, 0.0
  %v950 = vadd.f32 %v948, %v949
  %v951 = vsel %vm839, %v809, 0.0
  %v952 = vadd.f32 %v950, %v951
  %v953 = vsel %vm839, %v812, 0.0
  %v954 = vadd.f32 %v952, %v953
  %v955 = vsel %vm839, %v817, 0.0
  %v956 = vadd.f32 %v954, %v955
  %v957 = vsel %vm839, %v820, 0.0
  %v958 = vadd.f32 %v956, %v957
  %v959 = vsel %vm839, %v825, 0.0
  %v960 = vadd.f32 %v958, %v959
  %v961 = vsel %vm839, %v828, 0.0
  %v962 = vadd.f32 %v960, %v961
  %v963 = vsel %vm839, %v833, 0.0
  %v964 = vadd.f32 %v962, %v963
  %v965 = vsel %vm839, %v836, 0.0
  %v966 = vadd.f32 %v964, %v965
  %v967 = vrot.slane %v966, 4
  %v968 = vadd.f32 %v966, %v967
  %v969 = vrot.slane %v968, 2
  %v970 = vadd.f32 %v968, %v969
  %v971 = vrot.slane %v970, 1
  %v972 = vadd.f32 %v970, %v971
  %v973 = vmul.f32 %v972, 0.001953125
  %v974 = vmul.f32 %v585, %v585
  %v975 = vmul.f32 %v588, %v588
  %v976 = vmul.f32 %v593, %v593
  %v977 = vmul.f32 %v596, %v596
  %v978 = vmul.f32 %v601, %v601
  %v979 = vmul.f32 %v604, %v604
  %v980 = vmul.f32 %v609, %v609
  %v981 = vmul.f32 %v612, %v612
  %v982 = vmul.f32 %v617, %v617
  %v983 = vmul.f32 %v620, %v620
  %v984 = vmul.f32 %v625, %v625
  %v985 = vmul.f32 %v628, %v628
  %v986 = vmul.f32 %v633, %v633
  %v987 = vmul.f32 %v636, %v636
  %v988 = vmul.f32 %v641, %v641
  %v989 = vmul.f32 %v644, %v644
  %v990 = vmul.f32 %v649, %v649
  %v991 = vmul.f32 %v652, %v652
  %v992 = vmul.f32 %v657, %v657
  %v993 = vmul.f32 %v660, %v660
  %v994 = vmul.f32 %v665, %v665
  %v995 = vmul.f32 %v668, %v668
  %v996 = vmul.f32 %v673, %v673
  %v997 = vmul.f32 %v676, %v676
  %v998 = vmul.f32 %v681, %v681
  %v999 = vmul.f32 %v684, %v684
  %v1000 = vmul.f32 %v689, %v689
  %v1001 = vmul.f32 %v692, %v692
  %v1002 = vmul.f32 %v697, %v697
  %v1003 = vmul.f32 %v700, %v700
  %v1004 = vmul.f32 %v705, %v705
  %v1005 = vmul.f32 %v708, %v708
  %v1006 = vmul.f32 %v713, %v713
  %v1007 = vmul.f32 %v716, %v716
  %v1008 = vmul.f32 %v721, %v721
  %v1009 = vmul.f32 %v724, %v724
  %v1010 = vmul.f32 %v729, %v729
  %v1011 = vmul.f32 %v732, %v732
  %v1012 = vmul.f32 %v737, %v737
  %v1013 = vmul.f32 %v740, %v740
  %v1014 = vmul.f32 %v745, %v745
  %v1015 = vmul.f32 %v748, %v748
  %v1016 = vmul.f32 %v753, %v753
  %v1017 = vmul.f32 %v756, %v756
  %v1018 = vmul.f32 %v761, %v761
  %v1019 = vmul.f32 %v764, %v764
  %v1020 = vmul.f32 %v769, %v769
  %v1021 = vmul.f32 %v772, %v772
  %v1022 = vmul.f32 %v777, %v777
  %v1023 = vmul.f32 %v780, %v780
  %v1024 = vmul.f32 %v785, %v785
  %v1025 = vmul.f32 %v788, %v788
  %v1026 = vmul.f32 %v793, %v793
  %v1027 = vmul.f32 %v796, %v796
  %v1028 = vmul.f32 %v801, %v801
  %v1029 = vmul.f32 %v804, %v804
  %v1030 = vmul.f32 %v809, %v809
  %v1031 = vmul.f32 %v812, %v812
  %v1032 = vmul.f32 %v817, %v817
  %v1033 = vmul.f32 %v820, %v820
  %v1034 = vmul.f32 %v825, %v825
  %v1035 = vmul.f32 %v828, %v828
  %v1036 = vmul.f32 %v833, %v833
  %v1037 = vmul.f32 %v836, %v836
  %v1038 = vsel %vm839, %v974, 0.0
  %v1039 = vsel %vm839, %v975, 0.0
  %v1040 = vadd.f32 %v1038, %v1039
  %v1041 = vsel %vm839, %v976, 0.0
  %v1042 = vadd.f32 %v1040, %v1041
  %v1043 = vsel %vm839, %v977, 0.0
  %v1044 = vadd.f32 %v1042, %v1043
  %v1045 = vsel %vm839, %v978, 0.0
  %v1046 = vadd.f32 %v1044, %v1045
  %v1047 = vsel %vm839, %v979, 0.0
  %v1048 = vadd.f32 %v1046, %v1047
  %v1049 = vsel %vm839, %v980, 0.0
  %v1050 = vadd.f32 %v1048, %v1049
  %v1051 = vsel %vm839, %v981, 0.0
  %v1052 = vadd.f32 %v1050, %v1051
  %v1053 = vsel %vm839, %v982, 0.0
  %v1054 = vadd.f32 %v1052, %v1053
  %v1055 = vsel %vm839, %v983, 0.0
  %v1056 = vadd.f32 %v1054, %v1055
  %v1057 = vsel %vm839, %v984, 0.0
  %v1058 = vadd.f32 %v1056, %v1057
  %v1059 = vsel %vm839, %v985, 0.0
  %v1060 = vadd.f32 %v1058, %v1059
  %v1061 = vsel %vm839, %v986, 0.0
  %v1062 = vadd.f32 %v1060, %v1061
  %v1063 = vsel %vm839, %v987, 0.0
  %v1064 = vadd.f32 %v1062, %v1063
  %v1065 = vsel %vm839, %v988, 0.0
  %v1066 = vadd.f32 %v1064, %v1065
  %v1067 = vsel %vm839, %v989, 0.0
  %v1068 = vadd.f32 %v1066, %v1067
  %v1069 = vsel %vm839, %v990, 0.0
  %v1070 = vadd.f32 %v1068, %v1069
  %v1071 = vsel %vm839, %v991, 0.0
  %v1072 = vadd.f32 %v1070, %v1071
  %v1073 = vsel %vm839, %v992, 0.0
  %v1074 = vadd.f32 %v1072, %v1073
  %v1075 = vsel %vm839, %v993, 0.0
  %v1076 = vadd.f32 %v1074, %v1075
  %v1077 = vsel %vm839, %v994, 0.0
  %v1078 = vadd.f32 %v1076, %v1077
  %v1079 = vsel %vm839, %v995, 0.0
  %v1080 = vadd.f32 %v1078, %v1079
  %v1081 = vsel %vm839, %v996, 0.0
  %v1082 = vadd.f32 %v1080, %v1081
  %v1083 = vsel %vm839, %v997, 0.0
  %v1084 = vadd.f32 %v1082, %v1083
  %v1085 = vsel %vm839, %v998, 0.0
  %v1086 = vadd.f32 %v1084, %v1085
  %v1087 = vsel %vm839, %v999, 0.0
  %v1088 = vadd.f32 %v1086, %v1087
  %v1089 = vsel %vm839, %v1000, 0.0
  %v1090 = vadd.f32 %v1088, %v1089
  %v1091 = vsel %vm839, %v1001, 0.0
  %v1092 = vadd.f32 %v1090, %v1091
  %v1093 = vsel %vm839, %v1002, 0.0
  %v1094 = vadd.f32 %v1092, %v1093
  %v1095 = vsel %vm839, %v1003, 0.0
  %v1096 = vadd.f32 %v1094, %v1095
  %v1097 = vsel %vm839, %v1004, 0.0
  %v1098 = vadd.f32 %v1096, %v1097
  %v1099 = vsel %vm839, %v1005, 0.0
  %v1100 = vadd.f32 %v1098, %v1099
  %v1101 = vsel %vm839, %v1006, 0.0
  %v1102 = vadd.f32 %v1100, %v1101
  %v1103 = vsel %vm839, %v1007, 0.0
  %v1104 = vadd.f32 %v1102, %v1103
  %v1105 = vsel %vm839, %v1008, 0.0
  %v1106 = vadd.f32 %v1104, %v1105
  %v1107 = vsel %vm839, %v1009, 0.0
  %v1108 = vadd.f32 %v1106, %v1107
  %v1109 = vsel %vm839, %v1010, 0.0
  %v1110 = vadd.f32 %v1108, %v1109
  %v1111 = vsel %vm839, %v1011, 0.0
  %v1112 = vadd.f32 %v1110, %v1111
  %v1113 = vsel %vm839, %v1012, 0.0
  %v1114 = vadd.f32 %v1112, %v1113
  %v1115 = vsel %vm839, %v1013, 0.0
  %v1116 = vadd.f32 %v1114, %v1115
  %v1117 = vsel %vm839, %v1014, 0.0
  %v1118 = vadd.f32 %v1116, %v1117
  %v1119 = vsel %vm839, %v1015, 0.0
  %v1120 = vadd.f32 %v1118, %v1119
  %v1121 = vsel %vm839, %v1016, 0.0
  %v1122 = vadd.f32 %v1120, %v1121
  %v1123 = vsel %vm839, %v1017, 0.0
  %v1124 = vadd.f32 %v1122, %v1123
  %v1125 = vsel %vm839, %v1018, 0.0
  %v1126 = vadd.f32 %v1124, %v1125
  %v1127 = vsel %vm839, %v1019, 0.0
  %v1128 = vadd.f32 %v1126, %v1127
  %v1129 = vsel %vm839, %v1020, 0.0
  %v1130 = vadd.f32 %v1128, %v1129
  %v1131 = vsel %vm839, %v1021, 0.0
  %v1132 = vadd.f32 %v1130, %v1131
  %v1133 = vsel %vm839, %v1022, 0.0
  %v1134 = vadd.f32 %v1132, %v1133
  %v1135 = vsel %vm839, %v1023, 0.0
  %v1136 = vadd.f32 %v1134, %v1135
  %v1137 = vsel %vm839, %v1024, 0.0
  %v1138 = vadd.f32 %v1136, %v1137
  %v1139 = vsel %vm839, %v1025, 0.0
  %v1140 = vadd.f32 %v1138, %v1139
  %v1141 = vsel %vm839, %v1026, 0.0
  %v1142 = vadd.f32 %v1140, %v1141
  %v1143 = vsel %vm839, %v1027, 0.0
  %v1144 = vadd.f32 %v1142, %v1143
  %v1145 = vsel %vm839, %v1028, 0.0
  %v1146 = vadd.f32 %v1144, %v1145
  %v1147 = vsel %vm839, %v1029, 0.0
  %v1148 = vadd.f32 %v1146, %v1147
  %v1149 = vsel %vm839, %v1030, 0.0
  %v1150 = vadd.f32 %v1148, %v1149
  %v1151 = vsel %vm839, %v1031, 0.0
  %v1152 = vadd.f32 %v1150, %v1151
  %v1153 = vsel %vm839, %v1032, 0.0
  %v1154 = vadd.f32 %v1152, %v1153
  %v1155 = vsel %vm839, %v1033, 0.0
  %v1156 = vadd.f32 %v1154, %v1155
  %v1157 = vsel %vm839, %v1034, 0.0
  %v1158 = vadd.f32 %v1156, %v1157
  %v1159 = vsel %vm839, %v1035, 0.0
  %v1160 = vadd.f32 %v1158, %v1159
  %v1161 = vsel %vm839, %v1036, 0.0
  %v1162 = vadd.f32 %v1160, %v1161
  %v1163 = vsel %vm839, %v1037, 0.0
  %v1164 = vadd.f32 %v1162, %v1163
  %v1165 = vrot.slane %v1164, 4
  %v1166 = vadd.f32 %v1164, %v1165
  %v1167 = vrot.slane %v1166, 2
  %v1168 = vadd.f32 %v1166, %v1167
  %v1169 = vrot.slane %v1168, 1
  %v1170 = vadd.f32 %v1168, %v1169
  %v1171 = vmul.f32 %v1170, 0.001953125
  %v1172 = vmul.f32 %v973, %v973
  %v1173 = vsub.f32 %v1171, %v1172
  %v1174 = vmax.f32 %v1173, 0.0
  %v1175 = vld [vmem:[%s2] sm:$0x1]
  %v1176 = vadd.f32 %v1174, 1e-05
  %v1177 = vrsqrt.pop %v1176
  %v1178 = vmul.f32 %v1175, %v1177
  %v1179 = vld [vmem:[%s3] sm:$0x1]
  %v1180 = vmul.f32 %v973, %v1178
  %v1181 = vsub.f32 %v1179, %v1180
  %v1183 = vlaneseq
  %v1184 = vshrl.u32 %v1183, 7
  %v1185 = vsub.s32 0, %v1184
  %v1186 = vrot.slane %v1178, %v1185
  %v1188 = vmul.f32 %v585, %v1186
  %v1189 = vmul.f32 %v588, %v1186
  %v1190 = vmul.f32 %v593, %v1186
  %v1191 = vmul.f32 %v596, %v1186
  %v1192 = vmul.f32 %v601, %v1186
  %v1193 = vmul.f32 %v604, %v1186
  %v1194 = vmul.f32 %v609, %v1186
  %v1195 = vmul.f32 %v612, %v1186
  %v1196 = vmul.f32 %v617, %v1186
  %v1197 = vmul.f32 %v620, %v1186
  %v1198 = vmul.f32 %v625, %v1186
  %v1199 = vmul.f32 %v628, %v1186
  %v1200 = vmul.f32 %v633, %v1186
  %v1201 = vmul.f32 %v636, %v1186
  %v1202 = vmul.f32 %v641, %v1186
  %v1203 = vmul.f32 %v644, %v1186
  %v1204 = vmul.f32 %v649, %v1186
  %v1205 = vmul.f32 %v652, %v1186
  %v1206 = vmul.f32 %v657, %v1186
  %v1207 = vmul.f32 %v660, %v1186
  %v1208 = vmul.f32 %v665, %v1186
  %v1209 = vmul.f32 %v668, %v1186
  %v1210 = vmul.f32 %v673, %v1186
  %v1211 = vmul.f32 %v676, %v1186
  %v1212 = vmul.f32 %v681, %v1186
  %v1213 = vmul.f32 %v684, %v1186
  %v1214 = vmul.f32 %v689, %v1186
  %v1215 = vmul.f32 %v692, %v1186
  %v1216 = vmul.f32 %v697, %v1186
  %v1217 = vmul.f32 %v700, %v1186
  %v1218 = vmul.f32 %v705, %v1186
  %v1219 = vmul.f32 %v708, %v1186
  %v1220 = vmul.f32 %v713, %v1186
  %v1221 = vmul.f32 %v716, %v1186
  %v1222 = vmul.f32 %v721, %v1186
  %v1223 = vmul.f32 %v724, %v1186
  %v1224 = vmul.f32 %v729, %v1186
  %v1225 = vmul.f32 %v732, %v1186
  %v1226 = vmul.f32 %v737, %v1186
  %v1227 = vmul.f32 %v740, %v1186
  %v1228 = vmul.f32 %v745, %v1186
  %v1229 = vmul.f32 %v748, %v1186
  %v1230 = vmul.f32 %v753, %v1186
  %v1231 = vmul.f32 %v756, %v1186
  %v1232 = vmul.f32 %v761, %v1186
  %v1233 = vmul.f32 %v764, %v1186
  %v1234 = vmul.f32 %v769, %v1186
  %v1235 = vmul.f32 %v772, %v1186
  %v1236 = vmul.f32 %v777, %v1186
  %v1237 = vmul.f32 %v780, %v1186
  %v1238 = vmul.f32 %v785, %v1186
  %v1239 = vmul.f32 %v788, %v1186
  %v1240 = vmul.f32 %v793, %v1186
  %v1241 = vmul.f32 %v796, %v1186
  %v1242 = vmul.f32 %v801, %v1186
  %v1243 = vmul.f32 %v804, %v1186
  %v1244 = vmul.f32 %v809, %v1186
  %v1245 = vmul.f32 %v812, %v1186
  %v1246 = vmul.f32 %v817, %v1186
  %v1247 = vmul.f32 %v820, %v1186
  %v1248 = vmul.f32 %v825, %v1186
  %v1249 = vmul.f32 %v828, %v1186
  %v1250 = vmul.f32 %v833, %v1186
  %v1251 = vmul.f32 %v836, %v1186
  %v1253 = vlaneseq
  %v1254 = vshrl.u32 %v1253, 7
  %v1255 = vsub.s32 0, %v1254
  %v1256 = vrot.slane %v1181, %v1255
  %v1258 = vadd.f32 %v1188, %v1256
  %v1259 = vadd.f32 %v1189, %v1256
  %v1260 = vadd.f32 %v1190, %v1256
  %v1261 = vadd.f32 %v1191, %v1256
  %v1262 = vadd.f32 %v1192, %v1256
  %v1263 = vadd.f32 %v1193, %v1256
  %v1264 = vadd.f32 %v1194, %v1256
  %v1265 = vadd.f32 %v1195, %v1256
  %v1266 = vadd.f32 %v1196, %v1256
  %v1267 = vadd.f32 %v1197, %v1256
  %v1268 = vadd.f32 %v1198, %v1256
  %v1269 = vadd.f32 %v1199, %v1256
  %v1270 = vadd.f32 %v1200, %v1256
  %v1271 = vadd.f32 %v1201, %v1256
  %v1272 = vadd.f32 %v1202, %v1256
  %v1273 = vadd.f32 %v1203, %v1256
  %v1274 = vadd.f32 %v1204, %v1256
  %v1275 = vadd.f32 %v1205, %v1256
  %v1276 = vadd.f32 %v1206, %v1256
  %v1277 = vadd.f32 %v1207, %v1256
  %v1278 = vadd.f32 %v1208, %v1256
  %v1279 = vadd.f32 %v1209, %v1256
  %v1280 = vadd.f32 %v1210, %v1256
  %v1281 = vadd.f32 %v1211, %v1256
  %v1282 = vadd.f32 %v1212, %v1256
  %v1283 = vadd.f32 %v1213, %v1256
  %v1284 = vadd.f32 %v1214, %v1256
  %v1285 = vadd.f32 %v1215, %v1256
  %v1286 = vadd.f32 %v1216, %v1256
  %v1287 = vadd.f32 %v1217, %v1256
  %v1288 = vadd.f32 %v1218, %v1256
  %v1289 = vadd.f32 %v1219, %v1256
  %v1290 = vadd.f32 %v1220, %v1256
  %v1291 = vadd.f32 %v1221, %v1256
  %v1292 = vadd.f32 %v1222, %v1256
  %v1293 = vadd.f32 %v1223, %v1256
  %v1294 = vadd.f32 %v1224, %v1256
  %v1295 = vadd.f32 %v1225, %v1256
  %v1296 = vadd.f32 %v1226, %v1256
  %v1297 = vadd.f32 %v1227, %v1256
  %v1298 = vadd.f32 %v1228, %v1256
  %v1299 = vadd.f32 %v1229, %v1256
  %v1300 = vadd.f32 %v1230, %v1256
  %v1301 = vadd.f32 %v1231, %v1256
  %v1302 = vadd.f32 %v1232, %v1256
  %v1303 = vadd.f32 %v1233, %v1256
  %v1304 = vadd.f32 %v1234, %v1256
  %v1305 = vadd.f32 %v1235, %v1256
  %v1306 = vadd.f32 %v1236, %v1256
  %v1307 = vadd.f32 %v1237, %v1256
  %v1308 = vadd.f32 %v1238, %v1256
  %v1309 = vadd.f32 %v1239, %v1256
  %v1310 = vadd.f32 %v1240, %v1256
  %v1311 = vadd.f32 %v1241, %v1256
  %v1312 = vadd.f32 %v1242, %v1256
  %v1313 = vadd.f32 %v1243, %v1256
  %v1314 = vadd.f32 %v1244, %v1256
  %v1315 = vadd.f32 %v1245, %v1256
  %v1316 = vadd.f32 %v1246, %v1256
  %v1317 = vadd.f32 %v1247, %v1256
  %v1318 = vadd.f32 %v1248, %v1256
  %v1319 = vadd.f32 %v1249, %v1256
  %v1320 = vadd.f32 %v1250, %v1256
  %v1321 = vadd.f32 %v1251, %v1256
  %v1322 = vmax.f32 %v1258, 0.0
  %v1323 = vmax.f32 %v1259, 0.0
  %v1324 = vmax.f32 %v1260, 0.0
  %v1325 = vmax.f32 %v1261, 0.0
  %v1326 = vmax.f32 %v1262, 0.0
  %v1327 = vmax.f32 %v1263, 0.0
  %v1328 = vmax.f32 %v1264, 0.0
  %v1329 = vmax.f32 %v1265, 0.0
  %v1330 = vmax.f32 %v1266, 0.0
  %v1331 = vmax.f32 %v1267, 0.0
  %v1332 = vmax.f32 %v1268, 0.0
  %v1333 = vmax.f32 %v1269, 0.0
  %v1334 = vmax.f32 %v1270, 0.0
  %v1335 = vmax.f32 %v1271, 0.0
  %v1336 = vmax.f32 %v1272, 0.0
  %v1337 = vmax.f32 %v1273, 0.0
  %v1338 = vmax.f32 %v1274, 0.0
  %v1339 = vmax.f32 %v1275, 0.0
  %v1340 = vmax.f32 %v1276, 0.0
  %v1341 = vmax.f32 %v1277, 0.0
  %v1342 = vmax.f32 %v1278, 0.0
  %v1343 = vmax.f32 %v1279, 0.0
  %v1344 = vmax.f32 %v1280, 0.0
  %v1345 = vmax.f32 %v1281, 0.0
  %v1346 = vmax.f32 %v1282, 0.0
  %v1347 = vmax.f32 %v1283, 0.0
  %v1348 = vmax.f32 %v1284, 0.0
  %v1349 = vmax.f32 %v1285, 0.0
  %v1350 = vmax.f32 %v1286, 0.0
  %v1351 = vmax.f32 %v1287, 0.0
  %v1352 = vmax.f32 %v1288, 0.0
  %v1353 = vmax.f32 %v1289, 0.0
  %v1354 = vmax.f32 %v1290, 0.0
  %v1355 = vmax.f32 %v1291, 0.0
  %v1356 = vmax.f32 %v1292, 0.0
  %v1357 = vmax.f32 %v1293, 0.0
  %v1358 = vmax.f32 %v1294, 0.0
  %v1359 = vmax.f32 %v1295, 0.0
  %v1360 = vmax.f32 %v1296, 0.0
  %v1361 = vmax.f32 %v1297, 0.0
  %v1362 = vmax.f32 %v1298, 0.0
  %v1363 = vmax.f32 %v1299, 0.0
  %v1364 = vmax.f32 %v1300, 0.0
  %v1365 = vmax.f32 %v1301, 0.0
  %v1366 = vmax.f32 %v1302, 0.0
  %v1367 = vmax.f32 %v1303, 0.0
  %v1368 = vmax.f32 %v1304, 0.0
  %v1369 = vmax.f32 %v1305, 0.0
  %v1370 = vmax.f32 %v1306, 0.0
  %v1371 = vmax.f32 %v1307, 0.0
  %v1372 = vmax.f32 %v1308, 0.0
  %v1373 = vmax.f32 %v1309, 0.0
  %v1374 = vmax.f32 %v1310, 0.0
  %v1375 = vmax.f32 %v1311, 0.0
  %v1376 = vmax.f32 %v1312, 0.0
  %v1377 = vmax.f32 %v1313, 0.0
  %v1378 = vmax.f32 %v1314, 0.0
  %v1379 = vmax.f32 %v1315, 0.0
  %v1380 = vmax.f32 %v1316, 0.0
  %v1381 = vmax.f32 %v1317, 0.0
  %v1382 = vmax.f32 %v1318, 0.0
  %v1383 = vmax.f32 %v1319, 0.0
  %v1384 = vmax.f32 %v1320, 0.0
  %v1385 = vmax.f32 %v1321, 0.0
  %1386 = vst.msk [vmem:[%s4] sm:$0xff] %vm839, %v1322
  %1387 = vst.msk [vmem:[%s4 + $0x8] sm:$0xff] %vm839, %v1323
  %1388 = vst.msk [vmem:[%s4 + $0x10] sm:$0xff] %vm839, %v1324
  %1389 = vst.msk [vmem:[%s4 + $0x18] sm:$0xff] %vm839, %v1325
  %1390 = vst.msk [vmem:[%s4 + $0x20] sm:$0xff] %vm839, %v1326
  %1391 = vst.msk [vmem:[%s4 + $0x28] sm:$0xff] %vm839, %v1327
  %1392 = vst.msk [vmem:[%s4 + $0x30] sm:$0xff] %vm839, %v1328
  %1393 = vst.msk [vmem:[%s4 + $0x38] sm:$0xff] %vm839, %v1329
  %1394 = vst.msk [vmem:[%s4 + $0x40] sm:$0xff] %vm839, %v1330
  %1395 = vst.msk [vmem:[%s4 + $0x48] sm:$0xff] %vm839, %v1331
  %1396 = vst.msk [vmem:[%s4 + $0x50] sm:$0xff] %vm839, %v1332
  %1397 = vst.msk [vmem:[%s4 + $0x58] sm:$0xff] %vm839, %v1333
  %1398 = vst.msk [vmem:[%s4 + $0x60] sm:$0xff] %vm839, %v1334
  %1399 = vst.msk [vmem:[%s4 + $0x68] sm:$0xff] %vm839, %v1335
  %1400 = vst.msk [vmem:[%s4 + $0x70] sm:$0xff] %vm839, %v1336
  %1401 = vst.msk [vmem:[%s4 + $0x78] sm:$0xff] %vm839, %v1337
  %1402 = vst.msk [vmem:[%s4 + $0x80] sm:$0xff] %vm839, %v1338
  %1403 = vst.msk [vmem:[%s4 + $0x88] sm:$0xff] %vm839, %v1339
  %1404 = vst.msk [vmem:[%s4 + $0x90] sm:$0xff] %vm839, %v1340
  %1405 = vst.msk [vmem:[%s4 + $0x98] sm:$0xff] %vm839, %v1341
  %1406 = vst.msk [vmem:[%s4 + $0xa0] sm:$0xff] %vm839, %v1342
  %1407 = vst.msk [vmem:[%s4 + $0xa8] sm:$0xff] %vm839, %v1343
  %1408 = vst.msk [vmem:[%s4 + $0xb0] sm:$0xff] %vm839, %v1344
  %1409 = vst.msk [vmem:[%s4 + $0xb8] sm:$0xff] %vm839, %v1345
  %1410 = vst.msk [vmem:[%s4 + $0xc0] sm:$0xff] %vm839, %v1346
  %1411 = vst.msk [vmem:[%s4 + $0xc8] sm:$0xff] %vm839, %v1347
  %1412 = vst.msk [vmem:[%s4 + $0xd0] sm:$0xff] %vm839, %v1348
  %1413 = vst.msk [vmem:[%s4 + $0xd8] sm:$0xff] %vm839, %v1349
  %1414 = vst.msk [vmem:[%s4 + $0xe0] sm:$0xff] %vm839, %v1350
  %1415 = vst.msk [vmem:[%s4 + $0xe8] sm:$0xff] %vm839, %v1351
  %1416 = vst.msk [vmem:[%s4 + $0xf0] sm:$0xff] %vm839, %v1352
  %1417 = vst.msk [vmem:[%s4 + $0xf8] sm:$0xff] %vm839, %v1353
  %1418 = vst.msk [vmem:[%s4 + $0x100] sm:$0xff] %vm839, %v1354
  %1419 = vst.msk [vmem:[%s4 + $0x108] sm:$0xff] %vm839, %v1355
  %1420 = vst.msk [vmem:[%s4 + $0x110] sm:$0xff] %vm839, %v1356
  %1421 = vst.msk [vmem:[%s4 + $0x118] sm:$0xff] %vm839, %v1357
  %1422 = vst.msk [vmem:[%s4 + $0x120] sm:$0xff] %vm839, %v1358
  %1423 = vst.msk [vmem:[%s4 + $0x128] sm:$0xff] %vm839, %v1359
  %1424 = vst.msk [vmem:[%s4 + $0x130] sm:$0xff] %vm839, %v1360
  %1425 = vst.msk [vmem:[%s4 + $0x138] sm:$0xff] %vm839, %v1361
  %1426 = vst.msk [vmem:[%s4 + $0x140] sm:$0xff] %vm839, %v1362
  %1427 = vst.msk [vmem:[%s4 + $0x148] sm:$0xff] %vm839, %v1363
  %1428 = vst.msk [vmem:[%s4 + $0x150] sm:$0xff] %vm839, %v1364
  %1429 = vst.msk [vmem:[%s4 + $0x158] sm:$0xff] %vm839, %v1365
  %1430 = vst.msk [vmem:[%s4 + $0x160] sm:$0xff] %vm839, %v1366
  %1431 = vst.msk [vmem:[%s4 + $0x168] sm:$0xff] %vm839, %v1367
  %1432 = vst.msk [vmem:[%s4 + $0x170] sm:$0xff] %vm839, %v1368
  %1433 = vst.msk [vmem:[%s4 + $0x178] sm:$0xff] %vm839, %v1369
  %1434 = vst.msk [vmem:[%s4 + $0x180] sm:$0xff] %vm839, %v1370
  %1435 = vst.msk [vmem:[%s4 + $0x188] sm:$0xff] %vm839, %v1371
  %1436 = vst.msk [vmem:[%s4 + $0x190] sm:$0xff] %vm839, %v1372
  %1437 = vst.msk [vmem:[%s4 + $0x198] sm:$0xff] %vm839, %v1373
  %1438 = vst.msk [vmem:[%s4 + $0x1a0] sm:$0xff] %vm839, %v1374
  %1439 = vst.msk [vmem:[%s4 + $0x1a8] sm:$0xff] %vm839, %v1375
  %1440 = vst.msk [vmem:[%s4 + $0x1b0] sm:$0xff] %vm839, %v1376
  %1441 = vst.msk [vmem:[%s4 + $0x1b8] sm:$0xff] %vm839, %v1377
  %1442 = vst.msk [vmem:[%s4 + $0x1c0] sm:$0xff] %vm839, %v1378
  %1443 = vst.msk [vmem:[%s4 + $0x1c8] sm:$0xff] %vm839, %v1379
  %1444 = vst.msk [vmem:[%s4 + $0x1d0] sm:$0xff] %vm839, %v1380
  %1445 = vst.msk [vmem:[%s4 + $0x1d8] sm:$0xff] %vm839, %v1381
  %1446 = vst.msk [vmem:[%s4 + $0x1e0] sm:$0xff] %vm839, %v1382
  %1447 = vst.msk [vmem:[%s4 + $0x1e8] sm:$0xff] %vm839, %v1383
  %1448 = vst.msk [vmem:[%s4 + $0x1f0] sm:$0xff] %vm839, %v1384
  %1449 = vst.msk [vmem:[%s4 + $0x1f8] sm:$0xff] %vm839, %v1385
  // Predicated region
  $region18: #{densenet_fwd.2} parent=0 // pred_check
    _
  $region19: #{densenet_fwd.2} parent=0 // pred_check_branch
    %1451 = sbr.rel (0) target = $region21
  $region20: #{densenet_fwd.2} parent=0 // pred_region
    _
  $region21: #{densenet_fwd.2} parent=0 // pred_fallthru
    _
  // Predicated region
  $region22: #{densenet_fwd.2} parent=0 // pred_check
    _
  $region23: #{densenet_fwd.2} parent=0 // pred_check_branch
    %1453 = sbr.rel (0) target = $region25
  $region24: #{densenet_fwd.2} parent=0 // pred_region
    _
  $region25: #{densenet_fwd.2} parent=0 // pred_fallthru
    _

// kernel: densenet_fwd.3
$region0: #{densenet_fwd.3}
  #allocation0 [shape = 'u32[]', space=smem, size = 0x4, offset = 0x4, fixed_abs, tag = 'smem constant byte address 0x4 - core index']
  #allocation1 [shape = 'u32[144,128]{1,0:T(1,128)}', space=vmem, size = 0x12000, scoped, tag = 'internal scratch']
  #allocation2 [shape = 'f32[128,80]{1,0:T(8,128)}', space=vmem, size = 0x10000, scoped, tag = 'scratch operand']
  #allocation3 [shape = 'f32[32,56]{1,0:T(8,128)}', space=vmem, size = 0x4000, scoped, tag = 'scratch operand']
  %s0 = inlined_call_operand.smem [shape: u32[36], index: -1, kind: input, shape index: {}]
  %s1 = sld [smem:[%s0]]
  %s2 = scalar_lea.smem %s0, 1
  %s3 = sld [smem:[%s2]]
  %s4 = scalar_lea.smem %s0, 2
  %s5 = sld [smem:[%s4]]
  %s6 = scalar_lea.smem %s0, 3
  %s7 = sld [smem:[%s6]]
  %s8 = scalar_lea.smem %s0, 4
  %s9 = sld [smem:[%s8]]
  %s10 = scalar_lea.smem %s0, 5
  %s11 = sld [smem:[%s10]]
  %s12 = scalar_lea.smem %s0, 6
  %s13 = sld [smem:[%s12]]
  %s14 = scalar_lea.smem %s0, 7
  %s15 = sld [smem:[%s14]]
  %s16 = scalar_lea.smem %s0, 8
  %s17 = sld [smem:[%s16]]
  %s18 = scalar_lea.smem %s0, 9
  %s19 = sld [smem:[%s18]]
  %s20 = scalar_lea.smem %s0, 10
  %s21 = sld [smem:[%s20]]
  %s22 = scalar_lea.smem %s0, 11
  %s23 = sld [smem:[%s22]]
  %s24 = scalar_lea.smem %s0, 12
  %s25 = sld [smem:[%s24]]
  %s26 = scalar_lea.smem %s0, 13
  %s27 = sld [smem:[%s26]]
  %s28 = scalar_lea.smem %s0, 14
  %s29 = sld [smem:[%s28]]
  %s30 = scalar_lea.smem %s0, 15
  %s31 = sld [smem:[%s30]]
  %s32 = scalar_lea.smem %s0, 16
  %s33 = sld [smem:[%s32]]
  %s34 = scalar_lea.smem %s0, 17
  %s35 = sld [smem:[%s34]]
  %s36 = scalar_lea.smem %s0, 18
  %s37 = sld [smem:[%s36]]
  %s38 = scalar_lea.smem %s0, 19
  %s39 = sld [smem:[%s38]]
  %s40 = scalar_lea.smem %s0, 20
  %s41 = sld [smem:[%s40]]
  %s42 = scalar_lea.smem %s0, 21
  %s43 = sld [smem:[%s42]]
  %s44 = scalar_lea.smem %s0, 22
  %s45 = sld [smem:[%s44]]
  %s46 = scalar_lea.smem %s0, 23
  %s47 = sld [smem:[%s46]]
  %s48 = scalar_lea.smem %s0, 24
  %s49 = sld [smem:[%s48]]
  %s50 = scalar_lea.smem %s0, 25
  %s51 = sld [smem:[%s50]]
  %s52 = scalar_lea.smem %s0, 26
  %s53 = sld [smem:[%s52]]
  %s54 = scalar_lea.smem %s0, 27
  %s55 = sld [smem:[%s54]]
  %s56 = scalar_lea.smem %s0, 28
  %s57 = sld [smem:[%s56]]
  %s58 = scalar_lea.smem %s0, 29
  %s59 = sld [smem:[%s58]]
  %s60 = scalar_lea.smem %s0, 30
  %s61 = sld [smem:[%s60]]
  %s62 = scalar_lea.smem %s0, 31
  %s63 = sld [smem:[%s62]]
  %s64 = scalar_lea.smem %s0, 32
  %s65 = sld [smem:[%s64]]
  %s66 = scalar_lea.smem %s0, 33
  %s67 = sld [smem:[%s66]]
  %s68 = scalar_lea.smem %s0, 34
  %s69 = sld [smem:[%s68]]
  %s70 = scalar_lea.smem %s0, 35
  %s71 = sld [smem:[%s70]]
  %s72 = sld [smem:[#allocation0]]
  $region150: #{densenet_fwd.3} parent=0
    _
  %s74 = ssub.s32 1, %s72
  %s75 = scalar_select 0, %s74, %s72
  $region1: #{densenet_fwd.3} parent=0
    #allocation4 [shape = 'u8[1024]{0}', space=vmem, size = 0x400, scoped, tag = 'output window, operand 0, single buffered']
    #allocation5 [shape = 's32[1]{0}', space=sflag, size = 0x4, scoped, tag = 'scoped memory for densenet_fwd.3']
    %76 = vsyncpa [#allocation5], 0
    // Predicated region
    $region2: #{densenet_fwd.3} parent=1 // pred_check
      _
    $region3: #{densenet_fwd.3} parent=1 // pred_check_branch
      %78 = sbr.rel (0) target = $region5
    $region4: #{densenet_fwd.3} parent=1 // pred_region
      _
    $region5: #{densenet_fwd.3} parent=1 // pred_fallthru
      _
    // Predicated region
    $region6: #{densenet_fwd.3} parent=1 // pred_check
      _
    $region7: #{densenet_fwd.3} parent=1 // pred_check_branch
      %80 = sbr.rel (0) target = $region9
    $region8: #{densenet_fwd.3} parent=1 // pred_region
      _
    $region9: #{densenet_fwd.3} parent=1 // pred_fallthru
      _
    // Predicated region
    $region10: #{densenet_fwd.3} parent=1 // pred_check
      _
    $region11: #{densenet_fwd.3} parent=1 // pred_check_branch
      %82 = sbr.rel (0) target = $region13
    $region12: #{densenet_fwd.3} parent=1 // pred_region
      _
    $region13: #{densenet_fwd.3} parent=1 // pred_fallthru
      _
    // Predicated region
    $region14: #{densenet_fwd.3} parent=1 // pred_check
      _
    $region15: #{densenet_fwd.3} parent=1 // pred_check_branch
      %84 = sbr.rel (0) target = $region17
    $region16: #{densenet_fwd.3} parent=1 // pred_region
      _
    $region17: #{densenet_fwd.3} parent=1 // pred_fallthru
      _
    // Predicated region
    $region18: #{densenet_fwd.3} parent=1 // pred_check
      _
    $region19: #{densenet_fwd.3} parent=1 // pred_check_branch
      %86 = sbr.rel (0) target = $region21
    $region20: #{densenet_fwd.3} parent=1 // pred_region
      _
    $region21: #{densenet_fwd.3} parent=1 // pred_fallthru
      _
    // Predicated region
    $region22: #{densenet_fwd.3} parent=1 // pred_check
      _
    $region23: #{densenet_fwd.3} parent=1 // pred_check_branch
      %88 = sbr.rel (0) target = $region25
    $region24: #{densenet_fwd.3} parent=1 // pred_region
      _
    $region25: #{densenet_fwd.3} parent=1 // pred_fallthru
      _
    // Predicated region
    $region26: #{densenet_fwd.3} parent=1 // pred_check
      _
    $region27: #{densenet_fwd.3} parent=1 // pred_check_branch
      %90 = sbr.rel (0) target = $region29
    $region28: #{densenet_fwd.3} parent=1 // pred_region
      _
    $region29: #{densenet_fwd.3} parent=1 // pred_fallthru
      _
    // Predicated region
    $region30: #{densenet_fwd.3} parent=1 // pred_check
      _
    $region31: #{densenet_fwd.3} parent=1 // pred_check_branch
      %92 = sbr.rel (0) target = $region33
    $region32: #{densenet_fwd.3} parent=1 // pred_region
      _
    $region33: #{densenet_fwd.3} parent=1 // pred_fallthru
      _
    // Predicated region
    $region34: #{densenet_fwd.3} parent=1 // pred_check
      _
    $region35: #{densenet_fwd.3} parent=1 // pred_check_branch
      %94 = sbr.rel (0) target = $region37
    $region36: #{densenet_fwd.3} parent=1 // pred_region
      _
    $region37: #{densenet_fwd.3} parent=1 // pred_fallthru
      _
    // Predicated region
    $region38: #{densenet_fwd.3} parent=1 // pred_check
      _
    $region39: #{densenet_fwd.3} parent=1 // pred_check_branch
      %96 = sbr.rel (0) target = $region41
    $region40: #{densenet_fwd.3} parent=1 // pred_region
      _
    $region41: #{densenet_fwd.3} parent=1 // pred_fallthru
      _
    // Predicated region
    $region42: #{densenet_fwd.3} parent=1 // pred_check
      _
    $region43: #{densenet_fwd.3} parent=1 // pred_check_branch
      %98 = sbr.rel (0) target = $region45
    $region44: #{densenet_fwd.3} parent=1 // pred_region
      _
    $region45: #{densenet_fwd.3} parent=1 // pred_fallthru
      _
    // Predicated region
    $region46: #{densenet_fwd.3} parent=1 // pred_check
      _
    $region47: #{densenet_fwd.3} parent=1 // pred_check_branch
      %100 = sbr.rel (0) target = $region49
    $region48: #{densenet_fwd.3} parent=1 // pred_region
      _
    $region49: #{densenet_fwd.3} parent=1 // pred_fallthru
      _
    // Predicated region
    $region50: #{densenet_fwd.3} parent=1 // pred_check
      _
    $region51: #{densenet_fwd.3} parent=1 // pred_check_branch
      %102 = sbr.rel (0) target = $region53
    $region52: #{densenet_fwd.3} parent=1 // pred_region
      _
    $region53: #{densenet_fwd.3} parent=1 // pred_fallthru
      _
    // Predicated region
    $region54: #{densenet_fwd.3} parent=1 // pred_check
      _
    $region55: #{densenet_fwd.3} parent=1 // pred_check_branch
      %104 = sbr.rel (0) target = $region57
    $region56: #{densenet_fwd.3} parent=1 // pred_region
      _
    $region57: #{densenet_fwd.3} parent=1 // pred_fallthru
      _
    // Predicated region
    $region58: #{densenet_fwd.3} parent=1 // pred_check
      _
    $region59: #{densenet_fwd.3} parent=1 // pred_check_branch
      %106 = sbr.rel (0) target = $region61
    $region60: #{densenet_fwd.3} parent=1 // pred_region
      _
    $region61: #{densenet_fwd.3} parent=1 // pred_fallthru
      _
    // Predicated region
    $region62: #{densenet_fwd.3} parent=1 // pred_check
      _
    $region63: #{densenet_fwd.3} parent=1 // pred_check_branch
      %108 = sbr.rel (0) target = $region65
    $region64: #{densenet_fwd.3} parent=1 // pred_region
      _
    $region65: #{densenet_fwd.3} parent=1 // pred_fallthru
      _
    // Predicated region
    $region66: #{densenet_fwd.3} parent=1 // pred_check
      _
    $region67: #{densenet_fwd.3} parent=1 // pred_check_branch
      %110 = sbr.rel (0) target = $region69
    $region68: #{densenet_fwd.3} parent=1 // pred_region
      _
    $region69: #{densenet_fwd.3} parent=1 // pred_fallthru
      _
    // Predicated region
    $region70: #{densenet_fwd.3} parent=1 // pred_check
      _
    $region71: #{densenet_fwd.3} parent=1 // pred_check_branch
      %112 = sbr.rel (0) target = $region73
    $region72: #{densenet_fwd.3} parent=1 // pred_region
      _
    $region73: #{densenet_fwd.3} parent=1 // pred_fallthru
      _
    // Predicated region
    $region74: #{densenet_fwd.3} parent=1 // pred_check
      _
    $region75: #{densenet_fwd.3} parent=1 // pred_check_branch
      %114 = sbr.rel (0) target = $region77
    $region76: #{densenet_fwd.3} parent=1 // pred_region
      _
    $region77: #{densenet_fwd.3} parent=1 // pred_fallthru
      _
    // Predicated region
    $region78: #{densenet_fwd.3} parent=1 // pred_check
      _
    $region79: #{densenet_fwd.3} parent=1 // pred_check_branch
      %116 = sbr.rel (0) target = $region81
    $region80: #{densenet_fwd.3} parent=1 // pred_region
      _
    $region81: #{densenet_fwd.3} parent=1 // pred_fallthru
      _
    // Predicated region
    $region82: #{densenet_fwd.3} parent=1 // pred_check
      _
    $region83: #{densenet_fwd.3} parent=1 // pred_check_branch
      %118 = sbr.rel (0) target = $region85
    $region84: #{densenet_fwd.3} parent=1 // pred_region
      _
    $region85: #{densenet_fwd.3} parent=1 // pred_fallthru
      _
    // Predicated region
    $region86: #{densenet_fwd.3} parent=1 // pred_check
      _
    $region87: #{densenet_fwd.3} parent=1 // pred_check_branch
      %120 = sbr.rel (0) target = $region89
    $region88: #{densenet_fwd.3} parent=1 // pred_region
      _
    $region89: #{densenet_fwd.3} parent=1 // pred_fallthru
      _
    // Predicated region
    $region90: #{densenet_fwd.3} parent=1 // pred_check
      _
    $region91: #{densenet_fwd.3} parent=1 // pred_check_branch
      %122 = sbr.rel (0) target = $region93
    $region92: #{densenet_fwd.3} parent=1 // pred_region
      _
    $region93: #{densenet_fwd.3} parent=1 // pred_fallthru
      _
    // Predicated region
    $region94: #{densenet_fwd.3} parent=1 // pred_check
      _
    $region95: #{densenet_fwd.3} parent=1 // pred_check_branch
      %124 = sbr.rel (0) target = $region97
    $region96: #{densenet_fwd.3} parent=1 // pred_region
      _
    $region97: #{densenet_fwd.3} parent=1 // pred_fallthru
      _
    // Predicated region
    $region98: #{densenet_fwd.3} parent=1 // pred_check
      _
    $region99: #{densenet_fwd.3} parent=1 // pred_check_branch
      %126 = sbr.rel (0) target = $region101
    $region100: #{densenet_fwd.3} parent=1 // pred_region
      _
    $region101: #{densenet_fwd.3} parent=1 // pred_fallthru
      _
    // Predicated region
    $region102: #{densenet_fwd.3} parent=1 // pred_check
      _
    $region103: #{densenet_fwd.3} parent=1 // pred_check_branch
      %128 = sbr.rel (0) target = $region105
    $region104: #{densenet_fwd.3} parent=1 // pred_region
      _
    $region105: #{densenet_fwd.3} parent=1 // pred_fallthru
      _
    // Predicated region
    $region106: #{densenet_fwd.3} parent=1 // pred_check
      _
    $region107: #{densenet_fwd.3} parent=1 // pred_check_branch
      %130 = sbr.rel (0) target = $region109
    $region108: #{densenet_fwd.3} parent=1 // pred_region
      _
    $region109: #{densenet_fwd.3} parent=1 // pred_fallthru
      _
    // Predicated region
    $region110: #{densenet_fwd.3} parent=1 // pred_check
      _
    $region111: #{densenet_fwd.3} parent=1 // pred_check_branch
      %132 = sbr.rel (0) target = $region113
    $region112: #{densenet_fwd.3} parent=1 // pred_region
      _
    $region113: #{densenet_fwd.3} parent=1 // pred_fallthru
      _
    // Predicated region
    $region114: #{densenet_fwd.3} parent=1 // pred_check
      _
    $region115: #{densenet_fwd.3} parent=1 // pred_check_branch
      %134 = sbr.rel (0) target = $region117
    $region116: #{densenet_fwd.3} parent=1 // pred_region
      _
    $region117: #{densenet_fwd.3} parent=1 // pred_fallthru
      _
    // Predicated region
    $region118: #{densenet_fwd.3} parent=1 // pred_check
      _
    $region119: #{densenet_fwd.3} parent=1 // pred_check_branch
      %136 = sbr.rel (0) target = $region121
    $region120: #{densenet_fwd.3} parent=1 // pred_region
      _
    $region121: #{densenet_fwd.3} parent=1 // pred_fallthru
      _
    // Predicated region
    $region122: #{densenet_fwd.3} parent=1 // pred_check
      _
    $region123: #{densenet_fwd.3} parent=1 // pred_check_branch
      %138 = sbr.rel (0) target = $region125
    $region124: #{densenet_fwd.3} parent=1 // pred_region
      _
    $region125: #{densenet_fwd.3} parent=1 // pred_fallthru
      _
    // Predicated region
    $region126: #{densenet_fwd.3} parent=1 // pred_check
      _
    $region127: #{densenet_fwd.3} parent=1 // pred_check_branch
      %140 = sbr.rel (0) target = $region129
    $region128: #{densenet_fwd.3} parent=1 // pred_region
      _
    $region129: #{densenet_fwd.3} parent=1 // pred_fallthru
      _
    // Predicated region
    $region130: #{densenet_fwd.3} parent=1 // pred_check
      _
    $region131: #{densenet_fwd.3} parent=1 // pred_check_branch
      %142 = sbr.rel (0) target = $region133
    $region132: #{densenet_fwd.3} parent=1 // pred_region
      _
    $region133: #{densenet_fwd.3} parent=1 // pred_fallthru
      _
    // Predicated region
    $region134: #{densenet_fwd.3} parent=1 // pred_check
      _
    $region135: #{densenet_fwd.3} parent=1 // pred_check_branch
      %144 = sbr.rel (0) target = $region137
    $region136: #{densenet_fwd.3} parent=1 // pred_region
      _
    $region137: #{densenet_fwd.3} parent=1 // pred_fallthru
      _
    // Predicated region
    $region138: #{densenet_fwd.3} parent=1 // pred_check
      _
    $region139: #{densenet_fwd.3} parent=1 // pred_check_branch
      %146 = sbr.rel (0) target = $region141
    $region140: #{densenet_fwd.3} parent=1 // pred_region
      _
    $region141: #{densenet_fwd.3} parent=1 // pred_fallthru
      _
    %v148 = vld [vmem:[%s1] sm:$0xff]
    %v149 = vld [vmem:[%s1 + $0x8] sm:$0xff]
    %v150 = vld [vmem:[%s1 + $0x10] sm:$0xff]
    %v151 = vld [vmem:[%s1 + $0x18] sm:$0xff]
    %v152 = vld [vmem:[%s1 + $0x20] sm:$0xff]
    %v153 = vld [vmem:[%s1 + $0x28] sm:$0xff]
    %v154 = vld [vmem:[%s1 + $0x30] sm:$0xff]
    %v155 = vld [vmem:[%s1 + $0x38] sm:$0xff]
    %v156 = vld [vmem:[%s1 + $0x40] sm:$0xff]
    %v157 = vld [vmem:[%s1 + $0x48] sm:$0xff]
    %v158 = vld [vmem:[%s1 + $0x50] sm:$0xff]
    %v159 = vld [vmem:[%s1 + $0x58] sm:$0xff]
    %v160 = vld [vmem:[%s1 + $0x60] sm:$0xff]
    %v161 = vld [vmem:[%s1 + $0x68] sm:$0xff]
    %v162 = vld [vmem:[%s1 + $0x70] sm:$0xff]
    %v163 = vld [vmem:[%s1 + $0x78] sm:$0xff]
    %vm164 = vcmask 523264
    %165 = vst.msk [vmem:[#allocation2] sm:$0xff] %vm164, %v148
    %166 = vst.msk [vmem:[#allocation2 + $0x8] sm:$0xff] %vm164, %v149
    %167 = vst.msk [vmem:[#allocation2 + $0x10] sm:$0xff] %vm164, %v150
    %168 = vst.msk [vmem:[#allocation2 + $0x18] sm:$0xff] %vm164, %v151
    %169 = vst.msk [vmem:[#allocation2 + $0x20] sm:$0xff] %vm164, %v152
    %170 = vst.msk [vmem:[#allocation2 + $0x28] sm:$0xff] %vm164, %v153
    %171 = vst.msk [vmem:[#allocation2 + $0x30] sm:$0xff] %vm164, %v154
    %172 = vst.msk [vmem:[#allocation2 + $0x38] sm:$0xff] %vm164, %v155
    %173 = vst.msk [vmem:[#allocation2 + $0x40] sm:$0xff] %vm164, %v156
    %174 = vst.msk [vmem:[#allocation2 + $0x48] sm:$0xff] %vm164, %v157
    %175 = vst.msk [vmem:[#allocation2 + $0x50] sm:$0xff] %vm164, %v158
    %176 = vst.msk [vmem:[#allocation2 + $0x58] sm:$0xff] %vm164, %v159
    %177 = vst.msk [vmem:[#allocation2 + $0x60] sm:$0xff] %vm164, %v160
    %178 = vst.msk [vmem:[#allocation2 + $0x68] sm:$0xff] %vm164, %v161
    %179 = vst.msk [vmem:[#allocation2 + $0x70] sm:$0xff] %vm164, %v162
    %180 = vst.msk [vmem:[#allocation2 + $0x78] sm:$0xff] %vm164, %v163
    %v181 = vld [vmem:[%s3] sm:$0xff]
    %v182 = vld [vmem:[%s3 + $0x8] sm:$0xff]
    %v183 = vld [vmem:[%s3 + $0x10] sm:$0xff]
    %v184 = vld [vmem:[%s3 + $0x18] sm:$0xff]
    %v185 = vld [vmem:[%s3 + $0x20] sm:$0xff]
    %v186 = vld [vmem:[%s3 + $0x28] sm:$0xff]
    %v187 = vld [vmem:[%s3 + $0x30] sm:$0xff]
    %v188 = vld [vmem:[%s3 + $0x38] sm:$0xff]
    %v189 = vld [vmem:[%s3 + $0x40] sm:$0xff]
    %v190 = vld [vmem:[%s3 + $0x48] sm:$0xff]
    %v191 = vld [vmem:[%s3 + $0x50] sm:$0xff]
    %v192 = vld [vmem:[%s3 + $0x58] sm:$0xff]
    %v193 = vld [vmem:[%s3 + $0x60] sm:$0xff]
    %v194 = vld [vmem:[%s3 + $0x68] sm:$0xff]
    %v195 = vld [vmem:[%s3 + $0x70] sm:$0xff]
    %v196 = vld [vmem:[%s3 + $0x78] sm:$0xff]
    %v197 = vld [vmem:[#allocation2] sm:$0xff]
    %v198 = vld [vmem:[#allocation2 + $0x8] sm:$0xff]
    %v199 = vld [vmem:[#allocation2 + $0x10] sm:$0xff]
    %v200 = vld [vmem:[#allocation2 + $0x18] sm:$0xff]
    %v201 = vld [vmem:[#allocation2 + $0x20] sm:$0xff]
    %v202 = vld [vmem:[#allocation2 + $0x28] sm:$0xff]
    %v203 = vld [vmem:[#allocation2 + $0x30] sm:$0xff]
    %v204 = vld [vmem:[#allocation2 + $0x38] sm:$0xff]
    %v205 = vld [vmem:[#allocation2 + $0x40] sm:$0xff]
    %v206 = vld [vmem:[#allocation2 + $0x48] sm:$0xff]
    %v207 = vld [vmem:[#allocation2 + $0x50] sm:$0xff]
    %v208 = vld [vmem:[#allocation2 + $0x58] sm:$0xff]
    %v209 = vld [vmem:[#allocation2 + $0x60] sm:$0xff]
    %v210 = vld [vmem:[#allocation2 + $0x68] sm:$0xff]
    %v211 = vld [vmem:[#allocation2 + $0x70] sm:$0xff]
    %v212 = vld [vmem:[#allocation2 + $0x78] sm:$0xff]
    %v213 = vsel %vm164, %v197, 0.0
    %v214 = vsel %vm164, %v198, 0.0
    %v215 = vadd.f32 %v213, %v214
    %v216 = vsel %vm164, %v199, 0.0
    %v217 = vadd.f32 %v215, %v216
    %v218 = vsel %vm164, %v200, 0.0
    %v219 = vadd.f32 %v217, %v218
    %v220 = vsel %vm164, %v201, 0.0
    %v221 = vadd.f32 %v219, %v220
    %v222 = vsel %vm164, %v202, 0.0
    %v223 = vadd.f32 %v221, %v222
    %v224 = vsel %vm164, %v203, 0.0
    %v225 = vadd.f32 %v223, %v224
    %v226 = vsel %vm164, %v204, 0.0
    %v227 = vadd.f32 %v225, %v226
    %v228 = vsel %vm164, %v205, 0.0
    %v229 = vadd.f32 %v227, %v228
    %v230 = vsel %vm164, %v206, 0.0
    %v231 = vadd.f32 %v229, %v230
    %v232 = vsel %vm164, %v207, 0.0
    %v233 = vadd.f32 %v231, %v232
    %v234 = vsel %vm164, %v208, 0.0
    %v235 = vadd.f32 %v233, %v234
    %v236 = vsel %vm164, %v209, 0.0
    %v237 = vadd.f32 %v235, %v236
    %v238 = vsel %vm164, %v210, 0.0
    %v239 = vadd.f32 %v237, %v238
    %v240 = vsel %vm164, %v211, 0.0
    %v241 = vadd.f32 %v239, %v240
    %v242 = vsel %vm164, %v212, 0.0
    %v243 = vadd.f32 %v241, %v242
    %v244 = vrot.slane %v243, 4
    %v245 = vadd.f32 %v243, %v244
    %v246 = vrot.slane %v245, 2
    %v247 = vadd.f32 %v245, %v246
    %v248 = vrot.slane %v247, 1
    %v249 = vadd.f32 %v247, %v248
    %v250 = vmul.f32 %v249, 0.0078125
    %v251 = vmul.f32 %v197, %v197
    %v252 = vmul.f32 %v198, %v198
    %v253 = vmul.f32 %v199, %v199
    %v254 = vmul.f32 %v200, %v200
    %v255 = vmul.f32 %v201, %v201
    %v256 = vmul.f32 %v202, %v202
    %v257 = vmul.f32 %v203, %v203
    %v258 = vmul.f32 %v204, %v204
    %v259 = vmul.f32 %v205, %v205
    %v260 = vmul.f32 %v206, %v206
    %v261 = vmul.f32 %v207, %v207
    %v262 = vmul.f32 %v208, %v208
    %v263 = vmul.f32 %v209, %v209
    %v264 = vmul.f32 %v210, %v210
    %v265 = vmul.f32 %v211, %v211
    %v266 = vmul.f32 %v212, %v212
    %v267 = vsel %vm164, %v251, 0.0
    %v268 = vsel %vm164, %v252, 0.0
    %v269 = vadd.f32 %v267, %v268
    %v270 = vsel %vm164, %v253, 0.0
    %v271 = vadd.f32 %v269, %v270
    %v272 = vsel %vm164, %v254, 0.0
    %v273 = vadd.f32 %v271, %v272
    %v274 = vsel %vm164, %v255, 0.0
    %v275 = vadd.f32 %v273, %v274
    %v276 = vsel %vm164, %v256, 0.0
    %v277 = vadd.f32 %v275, %v276
    %v278 = vsel %vm164, %v257, 0.0
    %v279 = vadd.f32 %v277, %v278
    %v280 = vsel %vm164, %v258, 0.0
    %v281 = vadd.f32 %v279, %v280
    %v282 = vsel %vm164, %v259, 0.0
    %v283 = vadd.f32 %v281, %v282
    %v284 = vsel %vm164, %v260, 0.0
    %v285 = vadd.f32 %v283, %v284
    %v286 = vsel %vm164, %v261, 0.0
    %v287 = vadd.f32 %v285, %v286
    %v288 = vsel %vm164, %v262, 0.0
    %v289 = vadd.f32 %v287, %v288
    %v290 = vsel %vm164, %v263, 0.0
    %v291 = vadd.f32 %v289, %v290
    %v292 = vsel %vm164, %v264, 0.0
    %v293 = vadd.f32 %v291, %v292
    %v294 = vsel %vm164, %v265, 0.0
    %v295 = vadd.f32 %v293, %v294
    %v296 = vsel %vm164, %v266, 0.0
    %v297 = vadd.f32 %v295, %v296
    %v298 = vrot.slane %v297, 4
    %v299 = vadd.f32 %v297, %v298
    %v300 = vrot.slane %v299, 2
    %v301 = vadd.f32 %v299, %v300
    %v302 = vrot.slane %v301, 1
    %v303 = vadd.f32 %v301, %v302
    %v304 = vmul.f32 %v303, 0.0078125
    %v305 = vmul.f32 %v250, %v250
    %v306 = vsub.f32 %v304, %v305
    %v307 = vmax.f32 %v306, 0.0
    %v308 = vld [vmem:[%s5] sm:$0x1]
    %v309 = vadd.f32 %v307, 1e-05
    %v310 = vrsqrt.pop %v309
    %v311 = vmul.f32 %v308, %v310
    %v312 = vld [vmem:[%s7] sm:$0x1]
    %v313 = vmul.f32 %v250, %v311
    %v314 = vsub.f32 %v312, %v313
    %v316 = vlaneseq
    %v317 = vshrl.u32 %v316, 7
    %v318 = vsub.s32 0, %v317
    %v319 = vrot.slane %v311, %v318
    %v321 = vmul.f32 %v197, %v319
    %v322 = vmul.f32 %v198, %v319
    %v323 = vmul.f32 %v199, %v319
    %v324 = vmul.f32 %v200, %v319
    %v325 = vmul.f32 %v201, %v319
    %v326 = vmul.f32 %v202, %v319
    %v327 = vmul.f32 %v203, %v319
    %v328 = vmul.f32 %v204, %v319
    %v329 = vmul.f32 %v205, %v319
    %v330 = vmul.f32 %v206, %v319
    %v331 = vmul.f32 %v207, %v319
    %v332 = vmul.f32 %v208, %v319
    %v333 = vmul.f32 %v209, %v319
    %v334 = vmul.f32 %v210, %v319
    %v335 = vmul.f32 %v211, %v319
    %v336 = vmul.f32 %v212, %v319
    %v338 = vlaneseq
    %v339 = vshrl.u32 %v338, 7
    %v340 = vsub.s32 0, %v339
    %v341 = vrot.slane %v314, %v340
    %v343 = vadd.f32 %v321, %v341
    %v344 = vadd.f32 %v322, %v341
    %v345 = vadd.f32 %v323, %v341
    %v346 = vadd.f32 %v324, %v341
    %v347 = vadd.f32 %v325, %v341
    %v348 = vadd.f32 %v326, %v341
    %v349 = vadd.f32 %v327, %v341
    %v350 = vadd.f32 %v328, %v341
    %v351 = vadd.f32 %v329, %v341
    %v352 = vadd.f32 %v330, %v341
    %v353 = vadd.f32 %v331, %v341
    %v354 = vadd.f32 %v332, %v341
    %v355 = vadd.f32 %v333, %v341
    %v356 = vadd.f32 %v334, %v341
    %v357 = vadd.f32 %v335, %v341
    %v358 = vadd.f32 %v336, %v341
    %v359 = vmax.f32 %v343, 0.0
    %v360 = vmax.f32 %v344, 0.0
    %v361 = vmax.f32 %v345, 0.0
    %v362 = vmax.f32 %v346, 0.0
    %v363 = vmax.f32 %v347, 0.0
    %v364 = vmax.f32 %v348, 0.0
    %v365 = vmax.f32 %v349, 0.0
    %v366 = vmax.f32 %v350, 0.0
    %v367 = vmax.f32 %v351, 0.0
    %v368 = vmax.f32 %v352, 0.0
    %v369 = vmax.f32 %v353, 0.0
    %v370 = vmax.f32 %v354, 0.0
    %v371 = vmax.f32 %v355, 0.0
    %v372 = vmax.f32 %v356, 0.0
    %v373 = vmax.f32 %v357, 0.0
    %v374 = vmax.f32 %v358, 0.0
    %v375 = vpack.c.bf16 %v360, %v359
    %v376 = vpack.c.bf16 %v362, %v361
    %v377 = vpack.c.bf16 %v364, %v363
    %v378 = vpack.c.bf16 %v366, %v365
    %v379 = vpack.c.bf16 %v368, %v367
    %v380 = vpack.c.bf16 %v370, %v369
    %v381 = vpack.c.bf16 %v372, %v371
    %v382 = vpack.c.bf16 %v374, %v373
    %v383 = vld [vmem:[%s9] sm:$0xf]
    %v384 = vld [vmem:[%s9 + $0x4] sm:$0xf]
    %v385 = vld [vmem:[%s9 + $0x8] sm:$0xf]
    %v386 = vld [vmem:[%s9 + $0xc] sm:$0xf]
    %v387 = vld [vmem:[%s9 + $0x10] sm:$0xf]
    %v388 = vld [vmem:[%s9 + $0x14] sm:$0xf]
    %v389 = vld [vmem:[%s9 + $0x18] sm:$0xf]
    %v390 = vld [vmem:[%s9 + $0x1c] sm:$0xf]
    %v399 = vunpack.c.l.b16 %v383
    %v400 = vunpack.c.l.b16 %v384
    %v401 = vunpack.c.l.b16 %v385
    %v402 = vunpack.c.l.b16 %v386
    %v403 = vunpack.c.l.b16 %v387
    %v404 = vunpack.c.l.b16 %v388
    %v405 = vunpack.c.l.b16 %v389
    %v406 = vunpack.c.l.b16 %v390
    %v407 = vpack.c.b16 %v400, %v399
    %v408 = vpack.c.b16 %v402, %v401
    %v409 = vpack.c.b16 %v404, %v403
    %v410 = vpack.c.b16 %v406, %v405
    %v416 = vsel %vm164, %v375, 0
    %v419 = vsel %vm164, %v376, 0
    %v422 = vsel %vm164, %v377, 0
    %v425 = vsel %vm164, %v378, 0
    %v428 = vsel %vm164, %v379, 0
    %v431 = vsel %vm164, %v380, 0
    %v434 = vsel %vm164, %v381, 0
    %v437 = vsel %vm164, %v382, 0
    %439 = vmatprep.subr.bf16.mxu0 0
    %440 = vmatpush1.bf16.msra.mxu0 %v407
    %441 = vmatprep.subr.bf16.mxu0 0
    %442 = vmatpush1.bf16.msra.mxu0 %v408
    %443 = vmatprep.subr.bf16.mxu0 0
    %444 = vmatpush1.bf16.msra.mxu0 %v409
    %445 = vmatprep.subr.bf16.mxu0 0
    %446 = vmatpush1.bf16.msra.mxu0 %v410
    %447 = vmatprep.subr.bf16.mxu0 0
    %448 = vmatpush1.bf16.msra.mxu0 0
    %449 = vmatprep.subr.bf16.mxu0 0
    %450 = vmatpush1.bf16.msra.mxu0 0
    %451 = vmatprep.subr.bf16.mxu0 0
    %452 = vmatpush1.bf16.msra.mxu0 0
    %453 = vmatprep.subr.bf16.mxu0 0
    %454 = vmatpush1.bf16.msra.mxu0 0
    %455 = vmatprep.subr.bf16.mxu0 0
    %456 = vmatpush1.bf16.msra.mxu0 0
    %457 = vmatprep.subr.bf16.mxu0 0
    %458 = vmatpush1.bf16.msra.mxu0 0
    %459 = vmatprep.subr.bf16.mxu0 0
    %460 = vmatpush1.bf16.msra.mxu0 0
    %461 = vmatprep.subr.bf16.mxu0 0
    %462 = vmatpush1.bf16.msra.mxu0 0
    %463 = vmatprep.subr.bf16.mxu0 0
    %464 = vmatpush1.bf16.msra.mxu0 0
    %465 = vmatprep.subr.bf16.mxu0 0
    %466 = vmatpush1.bf16.msra.mxu0 0
    %467 = vmatprep.subr.bf16.mxu0 0
    %468 = vmatpush1.bf16.msra.mxu0 0
    %469 = vmatprep.subr.bf16.mxu0 0
    %470 = vmatpush1.bf16.msra.mxu0 0
    %471 = vmatprep.mubr.bf16.mxu0 0
    %472 = vmatmul.mubr.bf16.gmra.mrb[0].mxu0 %v416
    %v473 = vpop.f32.mrb[0].mxu0
    %v474 = vadd.f32 0.0, %v473
    %v475 = vpop.f32.mrb[0].mxu0
    %v476 = vpop.f32.mrb[0].mxu0
    %v477 = vadd.f32 0.0, %v476
    %v478 = vpop.f32.mrb[0].mxu0
    %479 = vmatprep.mubr.bf16.mxu0 0
    %480 = vmatmul.mubr.bf16.gmra.mrb[0].mxu0 %v419
    %v481 = vpop.f32.mrb[0].mxu0
    %v482 = vadd.f32 0.0, %v481
    %v483 = vpop.f32.mrb[0].mxu0
    %v484 = vpop.f32.mrb[0].mxu0
    %v485 = vadd.f32 0.0, %v484
    %v486 = vpop.f32.mrb[0].mxu0
    %487 = vmatprep.mubr.bf16.mxu0 0
    %488 = vmatmul.mubr.bf16.gmra.mrb[0].mxu0 %v422
    %v489 = vpop.f32.mrb[0].mxu0
    %v490 = vadd.f32 0.0, %v489
    %v491 = vpop.f32.mrb[0].mxu0
    %v492 = vpop.f32.mrb[0].mxu0
    %v493 = vadd.f32 0.0, %v492
    %v494 = vpop.f32.mrb[0].mxu0
    %495 = vmatprep.mubr.bf16.mxu0 0
    %496 = vmatmul.mubr.bf16.gmra.mrb[0].mxu0 %v425
    %v497 = vpop.f32.mrb[0].mxu0
    %v498 = vadd.f32 0.0, %v497
    %v499 = vpop.f32.mrb[0].mxu0
    %v500 = vpop.f32.mrb[0].mxu0
    %v501 = vadd.f32 0.0, %v500
    %v502 = vpop.f32.mrb[0].mxu0
    %503 = vmatprep.mubr.bf16.mxu0 0
    %504 = vmatmul.mubr.bf16.gmra.mrb[0].mxu0 %v428
    %v505 = vpop.f32.mrb[0].mxu0
    %v506 = vadd.f32 0.0, %v505
    %v507 = vpop.f32.mrb[0].mxu0
    %v508 = vpop.f32.mrb[0].mxu0
    %v509 = vadd.f32 0.0, %v508
    %v510 = vpop.f32.mrb[0].mxu0
    %511 = vmatprep.mubr.bf16.mxu0 0
    %512 = vmatmul.mubr.bf16.gmra.mrb[0].mxu0 %v431
    %v513 = vpop.f32.mrb[0].mxu0
    %v514 = vadd.f32 0.0, %v513
    %v515 = vpop.f32.mrb[0].mxu0
    %v516 = vpop.f32.mrb[0].mxu0
    %v517 = vadd.f32 0.0, %v516
    %v518 = vpop.f32.mrb[0].mxu0
    %519 = vmatprep.mubr.bf16.mxu0 0
    %520 = vmatmul.mubr.bf16.gmra.mrb[0].mxu0 %v434
    %v521 = vpop.f32.mrb[0].mxu0
    %v522 = vadd.f32 0.0, %v521
    %v523 = vpop.f32.mrb[0].mxu0
    %v524 = vpop.f32.mrb[0].mxu0
    %v525 = vadd.f32 0.0, %v524
    %v526 = vpop.f32.mrb[0].mxu0
    %527 = vmatprep.mubr.bf16.mxu0 0
    %528 = vmatmul.mubr.bf16.gmra.mrb[0].mxu0 %v437
    %v529 = vpop.f32.mrb[0].mxu0
    %v530 = vadd.f32 0.0, %v529
    %v531 = vpop.f32.mrb[0].mxu0
    %v532 = vpop.f32.mrb[0].mxu0
    %v533 = vadd.f32 0.0, %v532
    %v534 = vpop.f32.mrb[0].mxu0
    %535 = vdwg.mxu0
    %vm536 = vcmask 261120
    %v537 = vsel %vm536, %v474, 0.0
    %v538 = vsel %vm536, %v477, 0.0
    %v539 = vadd.f32 %v537, %v538
    %v540 = vsel %vm536, %v482, 0.0
    %v541 = vadd.f32 %v539, %v540
    %v542 = vsel %vm536, %v485, 0.0
    %v543 = vadd.f32 %v541, %v542
    %v544 = vsel %vm536, %v490, 0.0
    %v545 = vadd.f32 %v543, %v544
    %v546 = vsel %vm536, %v493, 0.0
    %v547 = vadd.f32 %v545, %v546
    %v548 = vsel %vm536, %v498, 0.0
    %v549 = vadd.f32 %v547, %v548
    %v550 = vsel %vm536, %v501, 0.0
    %v551 = vadd.f32 %v549, %v550
    %v552 = vsel %vm536, %v506, 0.0
    %v553 = vadd.f32 %v551, %v552
    %v554 = vsel %vm536, %v509, 0.0
    %v555 = vadd.f32 %v553, %v554
    %v556 = vsel %vm536, %v514, 0.0
    %v557 = vadd.f32 %v555, %v556
    %v558 = vsel %vm536, %v517, 0.0
    %v559 = vadd.f32 %v557, %v558
    %v560 = vsel %vm536, %v522, 0.0
    %v561 = vadd.f32 %v559, %v560
    %v562 = vsel %vm536, %v525, 0.0
    %v563 = vadd.f32 %v561, %v562
    %v564 = vsel %vm536, %v530, 0.0
    %v565 = vadd.f32 %v563, %v564
    %v566 = vsel %vm536, %v533, 0.0
    %v567 = vadd.f32 %v565, %v566
    %v568 = vrot.slane %v567, 4
    %v569 = vadd.f32 %v567, %v568
    %v570 = vrot.slane %v569, 2
    %v571 = vadd.f32 %v569, %v570
    %v572 = vrot.slane %v571, 1
    %v573 = vadd.f32 %v571, %v572
    %v574 = vmul.f32 %v573, 0.0078125
    %v575 = vmul.f32 %v474, %v474
    %v576 = vmul.f32 %v477, %v477
    %v577 = vmul.f32 %v482, %v482
    %v578 = vmul.f32 %v485, %v485
    %v579 = vmul.f32 %v490, %v490
    %v580 = vmul.f32 %v493, %v493
    %v581 = vmul.f32 %v498, %v498
    %v582 = vmul.f32 %v501, %v501
    %v583 = vmul.f32 %v506, %v506
    %v584 = vmul.f32 %v509, %v509
    %v585 = vmul.f32 %v514, %v514
    %v586 = vmul.f32 %v517, %v517
    %v587 = vmul.f32 %v522, %v522
    %v588 = vmul.f32 %v525, %v525
    %v589 = vmul.f32 %v530, %v530
    %v590 = vmul.f32 %v533, %v533
    %v591 = vsel %vm536, %v575, 0.0
    %v592 = vsel %vm536, %v576, 0.0
    %v593 = vadd.f32 %v591, %v592
    %v594 = vsel %vm536, %v577, 0.0
    %v595 = vadd.f32 %v593, %v594
    %v596 = vsel %vm536, %v578, 0.0
    %v597 = vadd.f32 %v595, %v596
    %v598 = vsel %vm536, %v579, 0.0
    %v599 = vadd.f32 %v597, %v598
    %v600 = vsel %vm536, %v580, 0.0
    %v601 = vadd.f32 %v599, %v600
    %v602 = vsel %vm536, %v581, 0.0
    %v603 = vadd.f32 %v601, %v602
    %v604 = vsel %vm536, %v582, 0.0
    %v605 = vadd.f32 %v603, %v604
    %v606 = vsel %vm536, %v583, 0.0
    %v607 = vadd.f32 %v605, %v606
    %v608 = vsel %vm536, %v584, 0.0
    %v609 = vadd.f32 %v607, %v608
    %v610 = vsel %vm536, %v585, 0.0
    %v611 = vadd.f32 %v609, %v610
    %v612 = vsel %vm536, %v586, 0.0
    %v613 = vadd.f32 %v611, %v612
    %v614 = vsel %vm536, %v587, 0.0
    %v615 = vadd.f32 %v613, %v614
    %v616 = vsel %vm536, %v588, 0.0
    %v617 = vadd.f32 %v615, %v616
    %v618 = vsel %vm536, %v589, 0.0
    %v619 = vadd.f32 %v617, %v618
    %v620 = vsel %vm536, %v590, 0.0
    %v621 = vadd.f32 %v619, %v620
    %v622 = vrot.slane %v621, 4
    %v623 = vadd.f32 %v621, %v622
    %v624 = vrot.slane %v623, 2
    %v625 = vadd.f32 %v623, %v624
    %v626 = vrot.slane %v625, 1
    %v627 = vadd.f32 %v625, %v626
    %v628 = vmul.f32 %v627, 0.0078125
    %v629 = vmul.f32 %v574, %v574
    %v630 = vsub.f32 %v628, %v629
    %v631 = vmax.f32 %v630, 0.0
    %v632 = vld [vmem:[%s11] sm:$0x1]
    %v633 = vadd.f32 %v631, 1e-05
    %v634 = vrsqrt.pop %v633
    %v635 = vmul.f32 %v632, %v634
    %v636 = vld [vmem:[%s13] sm:$0x1]
    %v637 = vmul.f32 %v574, %v635
    %v638 = vsub.f32 %v636, %v637
    %v640 = vlaneseq
    %v641 = vshrl.u32 %v640, 7
    %v642 = vsub.s32 0, %v641
    %v643 = vrot.slane %v635, %v642
    %v645 = vmul.f32 %v474, %v643
    %v646 = vmul.f32 %v477, %v643
    %v647 = vmul.f32 %v482, %v643
    %v648 = vmul.f32 %v485, %v643
    %v649 = vmul.f32 %v490, %v643
    %v650 = vmul.f32 %v493, %v643
    %v651 = vmul.f32 %v498, %v643
    %v652 = vmul.f32 %v501, %v643
    %v653 = vmul.f32 %v506, %v643
    %v654 = vmul.f32 %v509, %v643
    %v655 = vmul.f32 %v514, %v643
    %v656 = vmul.f32 %v517, %v643
    %v657 = vmul.f32 %v522, %v643
    %v658 = vmul.f32 %v525, %v643
    %v659 = vmul.f32 %v530, %v643
    %v660 = vmul.f32 %v533, %v643
    %v662 = vlaneseq
    %v663 = vshrl.u32 %v662, 7
    %v664 = vsub.s32 0, %v663
    %v665 = vrot.slane %v638, %v664
    %v667 = vadd.f32 %v645, %v665
    %v668 = vadd.f32 %v646, %v665
    %v669 = vadd.f32 %v647, %v665
    %v670 = vadd.f32 %v648, %v665
    %v671 = vadd.f32 %v649, %v665
    %v672 = vadd.f32 %v650, %v665
    %v673 = vadd.f32 %v651, %v665
    %v674 = vadd.f32 %v652, %v665
    %v675 = vadd.f32 %v653, %v665
    %v676 = vadd.f32 %v654, %v665
    %v677 = vadd.f32 %v655, %v665
    %v678 = vadd.f32 %v656, %v665
    %v679 = vadd.f32 %v657, %v665
    %v680 = vadd.f32 %v658, %v665
    %v681 = vadd.f32 %v659, %v665
    %v682 = vadd.f32 %v660, %v665
    %v683 = vmax.f32 %v667, 0.0
    %v684 = vmax.f32 %v668, 0.0
    %v685 = vmax.f32 %v669, 0.0
    %v686 = vmax.f32 %v670, 0.0
    %v687 = vmax.f32 %v671, 0.0
    %v688 = vmax.f32 %v672, 0.0
    %v689 = vmax.f32 %v673, 0.0
    %v690 = vmax.f32 %v674, 0.0
    %v691 = vmax.f32 %v675, 0.0
    %v692 = vmax.f32 %v676, 0.0
    %v693 = vmax.f32 %v677, 0.0
    %v694 = vmax.f32 %v678, 0.0
    %v695 = vmax.f32 %v679, 0.0
    %v696 = vmax.f32 %v680, 0.0
    %v697 = vmax.f32 %v681, 0.0
    %v698 = vmax.f32 %v682, 0.0
    %v699 = vpack.c.bf16 %v684, %v683
    %v700 = vpack.c.bf16 %v686, %v685
    %v701 = vpack.c.bf16 %v688, %v687
    %v702 = vpack.c.bf16 %v690, %v689
    %v703 = vpack.c.bf16 %v692, %v691
    %v704 = vpack.c.bf16 %v694, %v693
    %v705 = vpack.c.bf16 %v696, %v695
    %v706 = vpack.c.bf16 %v698, %v697
    %v707 = vld [vmem:[%s15] sm:$0xf]
    %v708 = vld [vmem:[%s15 + $0x4] sm:$0xf]
    %v709 = vld [vmem:[%s15 + $0x8] sm:$0xf]
    %v710 = vld [vmem:[%s15 + $0xc] sm:$0xf]
    %v715 = vunpack.c.l.b16 %v707
    %v716 = vunpack.c.l.b16 %v708
    %v717 = vunpack.c.l.b16 %v709
    %v718 = vunpack.c.l.b16 %v710
    %v719 = vpack.c.b16 %v716, %v715
    %v720 = vpack.c.b16 %v718, %v717
    %v724 = vsel %vm536, %v699, 0
    %v727 = vsel %vm536, %v700, 0
    %v730 = vsel %vm536, %v701, 0
    %v733 = vsel %vm536, %v702, 0
    %v736 = vsel %vm536, %v703, 0
    %v739 = vsel %vm536, %v704, 0
    %v742 = vsel %vm536, %v705, 0
    %v745 = vsel %vm536, %v706, 0
    %747 = vmatprep.subr.bf16.mxu0 0
    %748 = vmatpush1.bf16.msra.mxu0 %v719
    %749 = vmatprep.subr.bf16.mxu0 0
    %750 = vmatpush1.bf16.msra.mxu0 %v720
    %751 = vmatprep.subr.bf16.mxu0 0
    %752 = vmatpush1.bf16.msra.mxu0 0
    %753 = vmatprep.subr.bf16.mxu0 0
    %754 = vmatpush1.bf16.msra.mxu0 0
    %755 = vmatprep.subr.bf16.mxu0 0
    %756 = vmatpush1.bf16.msra.mxu0 0
    %757 = vmatprep.subr.bf16.mxu0 0
    %758 = vmatpush1.bf16.msra.mxu0 0
    %759 = vmatprep.subr.bf16.mxu0 0
    %760 = vmatpush1.bf16.msra.mxu0 0
    %761 = vmatprep.subr.bf16.mxu0 0
    %762 = vmatpush1.bf16.msra.mxu0 0
    %763 = vmatprep.subr.bf16.mxu0 0
    %764 = vmatpush1.bf16.msra.mxu0 0
    %765 = vmatprep.subr.bf16.mxu0 0
    %766 = vmatpush1.bf16.msra.mxu0 0
    %767 = vmatprep.subr.bf16.mxu0 0
    %768 = vmatpush1.bf16.msra.mxu0 0
    %769 = vmatprep.subr.bf16.mxu0 0
    %770 = vmatpush1.bf16.msra.mxu0 0
    %771 = vmatprep.subr.bf16.mxu0 0
    %772 = vmatpush1.bf16.msra.mxu0 0
    %773 = vmatprep.subr.bf16.mxu0 0
    %774 = vmatpush1.bf16.msra.mxu0 0
    %775 = vmatprep.subr.bf16.mxu0 0
    %776 = vmatpush1.bf16.msra.mxu0 0
    %777 = vmatprep.subr.bf16.mxu0 0
    %778 = vmatpush1.bf16.msra.mxu0 0
    %779 = vmatprep.mubr.bf16.mxu0 0
    %780 = vmatmul.mubr.bf16.gmra.mrb[0].mxu0 %v724
    %v781 = vpop.f32.mrb[0].mxu0
    %v782 = vadd.f32 0.0, %v781
    %v783 = vpop.f32.mrb[0].mxu0
    %v784 = vpop.f32.mrb[0].mxu0
    %v785 = vadd.f32 0.0, %v784
    %v786 = vpop.f32.mrb[0].mxu0
    %787 = vmatprep.mubr.bf16.mxu0 0
    %788 = vmatmul.mubr.bf16.gmra.mrb[0].mxu0 %v727
    %v789 = vpop.f32.mrb[0].mxu0
    %v790 = vadd.f32 0.0, %v789
    %v791 = vpop.f32.mrb[0].mxu0
    %v792 = vpop.f32.mrb[0].mxu0
    %v793 = vadd.f32 0.0, %v792
    %v794 = vpop.f32.mrb[0].mxu0
    %795 = vmatprep.mubr.bf16.mxu0 0
    %796 = vmatmul.mubr.bf16.gmra.mrb[0].mxu0 %v730
    %v797 = vpop.f32.mrb[0].mxu0
    %v798 = vadd.f32 0.0, %v797
    %v799 = vpop.f32.mrb[0].mxu0
    %v800 = vpop.f32.mrb[0].mxu0
    %v801 = vadd.f32 0.0, %v800
    %v802 = vpop.f32.mrb[0].mxu0
    %803 = vmatprep.mubr.bf16.mxu0 0
    %804 = vmatmul.mubr.bf16.gmra.mrb[0].mxu0 %v733
    %v805 = vpop.f32.mrb[0].mxu0
    %v806 = vadd.f32 0.0, %v805
    %v807 = vpop.f32.mrb[0].mxu0
    %v808 = vpop.f32.mrb[0].mxu0
    %v809 = vadd.f32 0.0, %v808
    %v810 = vpop.f32.mrb[0].mxu0
    %811 = vmatprep.mubr.bf16.mxu0 0
    %812 = vmatmul.mubr.bf16.gmra.mrb[0].mxu0 %v736
    %v813 = vpop.f32.mrb[0].mxu0
    %v814 = vadd.f32 0.0, %v813
    %v815 = vpop.f32.mrb[0].mxu0
    %v816 = vpop.f32.mrb[0].mxu0
    %v817 = vadd.f32 0.0, %v816
    %v818 = vpop.f32.mrb[0].mxu0
    %819 = vmatprep.mubr.bf16.mxu0 0
    %820 = vmatmul.mubr.bf16.gmra.mrb[0].mxu0 %v739
    %v821 = vpop.f32.mrb[0].mxu0
    %v822 = vadd.f32 0.0, %v821
    %v823 = vpop.f32.mrb[0].mxu0
    %v824 = vpop.f32.mrb[0].mxu0
    %v825 = vadd.f32 0.0, %v824
    %v826 = vpop.f32.mrb[0].mxu0
    %827 = vmatprep.mubr.bf16.mxu0 0
    %828 = vmatmul.mubr.bf16.gmra.mrb[0].mxu0 %v742
    %v829 = vpop.f32.mrb[0].mxu0
    %v830 = vadd.f32 0.0, %v829
    %v831 = vpop.f32.mrb[0].mxu0
    %v832 = vpop.f32.mrb[0].mxu0
    %v833 = vadd.f32 0.0, %v832
    %v834 = vpop.f32.mrb[0].mxu0
    %835 = vmatprep.mubr.bf16.mxu0 0
    %836 = vmatmul.mubr.bf16.gmra.mrb[0].mxu0 %v745
    %v837 = vpop.f32.mrb[0].mxu0
    %v838 = vadd.f32 0.0, %v837
    %v839 = vpop.f32.mrb[0].mxu0
    %v840 = vpop.f32.mrb[0].mxu0
    %v841 = vadd.f32 0.0, %v840
    %v842 = vpop.f32.mrb[0].mxu0
    %843 = vdwg.mxu0
    %v844 = vrot.slane %v782, 7
    %v845 = vrot.slane %v785, 7
    %v846 = vrot.slane %v790, 7
    %v847 = vrot.slane %v793, 7
    %v848 = vrot.slane %v798, 7
    %v849 = vrot.slane %v801, 7
    %v850 = vrot.slane %v806, 7
    %v851 = vrot.slane %v809, 7
    %v852 = vrot.slane %v814, 7
    %v853 = vrot.slane %v817, 7
    %v854 = vrot.slane %v822, 7
    %v855 = vrot.slane %v825, 7
    %v856 = vrot.slane %v830, 7
    %v857 = vrot.slane %v833, 7
    %v858 = vrot.slane %v838, 7
    %v859 = vrot.slane %v841, 7
    %v860 = vlaneseq
    %v861 = vshrl.u32 %v860, 7
    %vm862 = vcmp.lt.s32.totalorder %v861, 1
    %v863 = vsel %vm862, %v858, %v859
    %v864 = vsel %vm862, %v857, %v858
    %v865 = vsel %vm862, %v856, %v857
    %v866 = vsel %vm862, %v855, %v856
    %v867 = vsel %vm862, %v854, %v855
    %v868 = vsel %vm862, %v853, %v854
    %v869 = vsel %vm862, %v852, %v853
    %v870 = vsel %vm862, %v851, %v852
    %v871 = vsel %vm862, %v850, %v851
    %v872 = vsel %vm862, %v849, %v850
    %v873 = vsel %vm862, %v848, %v849
    %v874 = vsel %vm862, %v847, %v848
    %v875 = vsel %vm862, %v846, %v847
    %v876 = vsel %vm862, %v845, %v846
    %v877 = vsel %vm862, %v844, %v845
    %v878 = vsel %vm862, %v859, %v844
    %880 = vset.pattern.permute.xlu0 0
    %881 = vperm.xlu0 %880, %v181
    %v882 = vpop.permute.xlu0 %881
    %885 = vset.pattern.permute.xlu0 0
    %886 = vperm.xlu0 %885, %v182
    %v887 = vpop.permute.xlu0 %886
    %890 = vset.pattern.permute.xlu0 0
    %891 = vperm.xlu0 %890, %v183
    %v892 = vpop.permute.xlu0 %891
    %895 = vset.pattern.permute.xlu0 0
    %896 = vperm.xlu0 %895, %v184
    %v897 = vpop.permute.xlu0 %896
    %900 = vset.pattern.permute.xlu0 0
    %901 = vperm.xlu0 %900, %v185
    %v902 = vpop.permute.xlu0 %901
    %905 = vset.pattern.permute.xlu0 0
    %906 = vperm.xlu0 %905, %v186
    %v907 = vpop.permute.xlu0 %906
    %910 = vset.pattern.permute.xlu0 0
    %911 = vperm.xlu0 %910, %v187
    %v912 = vpop.permute.xlu0 %911
    %915 = vset.pattern.permute.xlu0 0
    %916 = vperm.xlu0 %915, %v188
    %v917 = vpop.permute.xlu0 %916
    %920 = vset.pattern.permute.xlu0 0
    %921 = vperm.xlu0 %920, %v189
    %v922 = vpop.permute.xlu0 %921
    %925 = vset.pattern.permute.xlu0 0
    %926 = vperm.xlu0 %925, %v190
    %v927 = vpop.permute.xlu0 %926
    %930 = vset.pattern.permute.xlu0 0
    %931 = vperm.xlu0 %930, %v191
    %v932 = vpop.permute.xlu0 %931
    %935 = vset.pattern.permute.xlu0 0
    %936 = vperm.xlu0 %935, %v192
    %v937 = vpop.permute.xlu0 %936
    %940 = vset.pattern.permute.xlu0 0
    %941 = vperm.xlu0 %940, %v193
    %v942 = vpop.permute.xlu0 %941
    %945 = vset.pattern.permute.xlu0 0
    %946 = vperm.xlu0 %945, %v194
    %v947 = vpop.permute.xlu0 %946
    %950 = vset.pattern.permute.xlu0 0
    %951 = vperm.xlu0 %950, %v195
    %v952 = vpop.permute.xlu0 %951
    %955 = vset.pattern.permute.xlu0 0
    %956 = vperm.xlu0 %955, %v196
    %v957 = vpop.permute.xlu0 %956
    %v959 = vmul.f32 %v863, %v882
    %v960 = vmul.f32 %v878, %v887
    %v961 = vmul.f32 %v877, %v892
    %v962 = vmul.f32 %v876, %v897
    %v963 = vmul.f32 %v875, %v902
    %v964 = vmul.f32 %v874, %v907
    %v965 = vmul.f32 %v873, %v912
    %v966 = vmul.f32 %v872, %v917
    %v967 = vmul.f32 %v871, %v922
    %v968 = vmul.f32 %v870, %v927
    %v969 = vmul.f32 %v869, %v932
    %v970 = vmul.f32 %v868, %v937
    %v971 = vmul.f32 %v867, %v942
    %v972 = vmul.f32 %v866, %v947
    %v973 = vmul.f32 %v865, %v952
    %v974 = vmul.f32 %v864, %v957
    %v975 = vadd.f32 %v959, 0.0
    %v976 = vadd.f32 %v960, 0.0
    %v977 = vadd.f32 %v961, 0.0
    %v978 = vadd.f32 %v962, 0.0
    %v979 = vadd.f32 %v963, 0.0
    %v980 = vadd.f32 %v964, 0.0
    %v981 = vadd.f32 %v965, 0.0
    %v982 = vadd.f32 %v966, 0.0
    %v983 = vadd.f32 %v967, 0.0
    %v984 = vadd.f32 %v968, 0.0
    %v985 = vadd.f32 %v969, 0.0
    %v986 = vadd.f32 %v970, 0.0
    %v987 = vadd.f32 %v971, 0.0
    %v988 = vadd.f32 %v972, 0.0
    %v989 = vadd.f32 %v973, 0.0
    %v990 = vadd.f32 %v974, 0.0
    %1007 = vrot.lane.b32.xlu0 %v782, 120
    %v1008 = vpop.permute.xlu0 %1007
    %1009 = vrot.lane.b32.xlu0 %v785, 120
    %v1010 = vpop.permute.xlu0 %1009
    %1011 = vrot.lane.b32.xlu0 %v790, 120
    %v1012 = vpop.permute.xlu0 %1011
    %1013 = vrot.lane.b32.xlu0 %v793, 120
    %v1014 = vpop.permute.xlu0 %1013
    %1015 = vrot.lane.b32.xlu0 %v798, 120
    %v1016 = vpop.permute.xlu0 %1015
    %1017 = vrot.lane.b32.xlu0 %v801, 120
    %v1018 = vpop.permute.xlu0 %1017
    %1019 = vrot.lane.b32.xlu0 %v806, 120
    %v1020 = vpop.permute.xlu0 %1019
    %1021 = vrot.lane.b32.xlu0 %v809, 120
    %v1022 = vpop.permute.xlu0 %1021
    %1023 = vrot.lane.b32.xlu0 %v814, 120
    %v1024 = vpop.permute.xlu0 %1023
    %1025 = vrot.lane.b32.xlu0 %v817, 120
    %v1026 = vpop.permute.xlu0 %1025
    %1027 = vrot.lane.b32.xlu0 %v822, 120
    %v1028 = vpop.permute.xlu0 %1027
    %1029 = vrot.lane.b32.xlu0 %v825, 120
    %v1030 = vpop.permute.xlu0 %1029
    %1031 = vrot.lane.b32.xlu0 %v830, 120
    %v1032 = vpop.permute.xlu0 %1031
    %1033 = vrot.lane.b32.xlu0 %v833, 120
    %v1034 = vpop.permute.xlu0 %1033
    %1035 = vrot.lane.b32.xlu0 %v838, 120
    %v1036 = vpop.permute.xlu0 %1035
    %1037 = vrot.lane.b32.xlu0 %v841, 120
    %v1038 = vpop.permute.xlu0 %1037
    %1055 = vset.pattern.permute.xlu0 1
    %1056 = vperm.xlu0 %1055, %v181
    %v1057 = vpop.permute.xlu0 %1056
    %1059 = vset.pattern.permute.xlu0 1
    %1060 = vperm.xlu0 %1059, %v182
    %v1061 = vpop.permute.xlu0 %1060
    %1063 = vset.pattern.permute.xlu0 1
    %1064 = vperm.xlu0 %1063, %v183
    %v1065 = vpop.permute.xlu0 %1064
    %1067 = vset.pattern.permute.xlu0 1
    %1068 = vperm.xlu0 %1067, %v184
    %v1069 = vpop.permute.xlu0 %1068
    %1071 = vset.pattern.permute.xlu0 1
    %1072 = vperm.xlu0 %1071, %v185
    %v1073 = vpop.permute.xlu0 %1072
    %1075 = vset.pattern.permute.xlu0 1
    %1076 = vperm.xlu0 %1075, %v186
    %v1077 = vpop.permute.xlu0 %1076
    %1079 = vset.pattern.permute.xlu0 1
    %1080 = vperm.xlu0 %1079, %v187
    %v1081 = vpop.permute.xlu0 %1080
    %1083 = vset.pattern.permute.xlu0 1
    %1084 = vperm.xlu0 %1083, %v188
    %v1085 = vpop.permute.xlu0 %1084
    %1087 = vset.pattern.permute.xlu0 1
    %1088 = vperm.xlu0 %1087, %v189
    %v1089 = vpop.permute.xlu0 %1088
    %1091 = vset.pattern.permute.xlu0 1
    %1092 = vperm.xlu0 %1091, %v190
    %v1093 = vpop.permute.xlu0 %1092
    %1095 = vset.pattern.permute.xlu0 1
    %1096 = vperm.xlu0 %1095, %v191
    %v1097 = vpop.permute.xlu0 %1096
    %1099 = vset.pattern.permute.xlu0 1
    %1100 = vperm.xlu0 %1099, %v192
    %v1101 = vpop.permute.xlu0 %1100
    %1103 = vset.pattern.permute.xlu0 1
    %1104 = vperm.xlu0 %1103, %v193
    %v1105 = vpop.permute.xlu0 %1104
    %1107 = vset.pattern.permute.xlu0 1
    %1108 = vperm.xlu0 %1107, %v194
    %v1109 = vpop.permute.xlu0 %1108
    %1111 = vset.pattern.permute.xlu0 1
    %1112 = vperm.xlu0 %1111, %v195
    %v1113 = vpop.permute.xlu0 %1112
    %1115 = vset.pattern.permute.xlu0 1
    %1116 = vperm.xlu0 %1115, %v196
    %v1117 = vpop.permute.xlu0 %1116
    %v1119 = vmul.f32 %v1038, %v1057
    %v1120 = vmul.f32 %v1008, %v1061
    %v1121 = vmul.f32 %v1010, %v1065
    %v1122 = vmul.f32 %v1012, %v1069
    %v1123 = vmul.f32 %v1014, %v1073
    %v1124 = vmul.f32 %v1016, %v1077
    %v1125 = vmul.f32 %v1018, %v1081
    %v1126 = vmul.f32 %v1020, %v1085
    %v1127 = vmul.f32 %v1022, %v1089
    %v1128 = vmul.f32 %v1024, %v1093
    %v1129 = vmul.f32 %v1026, %v1097
    %v1130 = vmul.f32 %v1028, %v1101
    %v1131 = vmul.f32 %v1030, %v1105
    %v1132 = vmul.f32 %v1032, %v1109
    %v1133 = vmul.f32 %v1034, %v1113
    %v1134 = vmul.f32 %v1036, %v1117
    %v1135 = vadd.f32 %v975, %v1119
    %v1136 = vadd.f32 %v976, %v1120
    %v1137 = vadd.f32 %v977, %v1121
    %v1138 = vadd.f32 %v978, %v1122
    %v1139 = vadd.f32 %v979, %v1123
    %v1140 = vadd.f32 %v980, %v1124
    %v1141 = vadd.f32 %v981, %v1125
    %v1142 = vadd.f32 %v982, %v1126
    %v1143 = vadd.f32 %v983, %v1127
    %v1144 = vadd.f32 %v984, %v1128
    %v1145 = vadd.f32 %v985, %v1129
    %v1146 = vadd.f32 %v986, %v1130
    %v1147 = vadd.f32 %v987, %v1131
    %v1148 = vadd.f32 %v988, %v1132
    %v1149 = vadd.f32 %v989, %v1133
    %v1150 = vadd.f32 %v990, %v1134
    %1151 = vrot.lane.b32.xlu0 %v782, 112
    %v1152 = vpop.permute.xlu0 %1151
    %1153 = vrot.lane.b32.xlu0 %v785, 112
    %v1154 = vpop.permute.xlu0 %1153
    %1155 = vrot.lane.b32.xlu0 %v790, 112
    %v1156 = vpop.permute.xlu0 %1155
    %1157 = vrot.lane.b32.xlu0 %v793, 112
    %v1158 = vpop.permute.xlu0 %1157
    %1159 = vrot.lane.b32.xlu0 %v798, 112
    %v1160 = vpop.permute.xlu0 %1159
    %1161 = vrot.lane.b32.xlu0 %v801, 112
    %v1162 = vpop.permute.xlu0 %1161
    %1163 = vrot.lane.b32.xlu0 %v806, 112
    %v1164 = vpop.permute.xlu0 %1163
    %1165 = vrot.lane.b32.xlu0 %v809, 112
    %v1166 = vpop.permute.xlu0 %1165
    %1167 = vrot.lane.b32.xlu0 %v814, 112
    %v1168 = vpop.permute.xlu0 %1167
    %1169 = vrot.lane.b32.xlu0 %v817, 112
    %v1170 = vpop.permute.xlu0 %1169
    %1171 = vrot.lane.b32.xlu0 %v822, 112
    %v1172 = vpop.permute.xlu0 %1171
    %1173 = vrot.lane.b32.xlu0 %v825, 112
    %v1174 = vpop.permute.xlu0 %1173
    %1175 = vrot.lane.b32.xlu0 %v830, 112
    %v1176 = vpop.permute.xlu0 %1175
    %1177 = vrot.lane.b32.xlu0 %v833, 112
    %v1178 = vpop.permute.xlu0 %1177
    %1179 = vrot.lane.b32.xlu0 %v838, 112
    %v1180 = vpop.permute.xlu0 %1179
    %1181 = vrot.lane.b32.xlu0 %v841, 112
    %v1182 = vpop.permute.xlu0 %1181
    %v1199 = vrot.slane %v1152, 1
    %v1200 = vrot.slane %v1154, 1
    %v1201 = vrot.slane %v1156, 1
    %v1202 = vrot.slane %v1158, 1
    %v1203 = vrot.slane %v1160, 1
    %v1204 = vrot.slane %v1162, 1
    %v1205 = vrot.slane %v1164, 1
    %v1206 = vrot.slane %v1166, 1
    %v1207 = vrot.slane %v1168, 1
    %v1208 = vrot.slane %v1170, 1
    %v1209 = vrot.slane %v1172, 1
    %v1210 = vrot.slane %v1174, 1
    %v1211 = vrot.slane %v1176, 1
    %v1212 = vrot.slane %v1178, 1
    %v1213 = vrot.slane %v1180, 1
    %v1214 = vrot.slane %v1182, 1
    %vm1215 = vcmp.lt.s32.totalorder %v861, 7
    %v1216 = vsel %vm1215, %v1213, %v1214
    %v1217 = vsel %vm1215, %v1212, %v1213
    %v1218 = vsel %vm1215, %v1211, %v1212
    %v1219 = vsel %vm1215, %v1210, %v1211
    %v1220 = vsel %vm1215, %v1209, %v1210
    %v1221 = vsel %vm1215, %v1208, %v1209
    %v1222 = vsel %vm1215, %v1207, %v1208
    %v1223 = vsel %vm1215, %v1206, %v1207
    %v1224 = vsel %vm1215, %v1205, %v1206
    %v1225 = vsel %vm1215, %v1204, %v1205
    %v1226 = vsel %vm1215, %v1203, %v1204
    %v1227 = vsel %vm1215, %v1202, %v1203
    %v1228 = vsel %vm1215, %v1201, %v1202
    %v1229 = vsel %vm1215, %v1200, %v1201
    %v1230 = vsel %vm1215, %v1199, %v1200
    %v1231 = vsel %vm1215, %v1214, %v1199
    %1232 = vset.pattern.permute.xlu0 2
    %1233 = vperm.xlu0 %1232, %v181
    %v1234 = vpop.permute.xlu0 %1233
    %1236 = vset.pattern.permute.xlu0 2
    %1237 = vperm.xlu0 %1236, %v182
    %v1238 = vpop.permute.xlu0 %1237
    %1240 = vset.pattern.permute.xlu0 2
    %1241 = vperm.xlu0 %1240, %v183
    %v1242 = vpop.permute.xlu0 %1241
    %1244 = vset.pattern.permute.xlu0 2
    %1245 = vperm.xlu0 %1244, %v184
    %v1246 = vpop.permute.xlu0 %1245
    %1248 = vset.pattern.permute.xlu0 2
    %1249 = vperm.xlu0 %1248, %v185
    %v1250 = vpop.permute.xlu0 %1249
    %1252 = vset.pattern.permute.xlu0 2
    %1253 = vperm.xlu0 %1252, %v186
    %v1254 = vpop.permute.xlu0 %1253
    %1256 = vset.pattern.permute.xlu0 2
    %1257 = vperm.xlu0 %1256, %v187
    %v1258 = vpop.permute.xlu0 %1257
    %1260 = vset.pattern.permute.xlu0 2
    %1261 = vperm.xlu0 %1260, %v188
    %v1262 = vpop.permute.xlu0 %1261
    %1264 = vset.pattern.permute.xlu0 2
    %1265 = vperm.xlu0 %1264, %v189
    %v1266 = vpop.permute.xlu0 %1265
    %1268 = vset.pattern.permute.xlu0 2
    %1269 = vperm.xlu0 %1268, %v190
    %v1270 = vpop.permute.xlu0 %1269
    %1272 = vset.pattern.permute.xlu0 2
    %1273 = vperm.xlu0 %1272, %v191
    %v1274 = vpop.permute.xlu0 %1273
    %1276 = vset.pattern.permute.xlu0 2
    %1277 = vperm.xlu0 %1276, %v192
    %v1278 = vpop.permute.xlu0 %1277
    %1280 = vset.pattern.permute.xlu0 2
    %1281 = vperm.xlu0 %1280, %v193
    %v1282 = vpop.permute.xlu0 %1281
    %1284 = vset.pattern.permute.xlu0 2
    %1285 = vperm.xlu0 %1284, %v194
    %v1286 = vpop.permute.xlu0 %1285
    %1288 = vset.pattern.permute.xlu0 2
    %1289 = vperm.xlu0 %1288, %v195
    %v1290 = vpop.permute.xlu0 %1289
    %1292 = vset.pattern.permute.xlu0 2
    %1293 = vperm.xlu0 %1292, %v196
    %v1294 = vpop.permute.xlu0 %1293
    %v1296 = vmul.f32 %v1231, %v1234
    %v1297 = vmul.f32 %v1230, %v1238
    %v1298 = vmul.f32 %v1229, %v1242
    %v1299 = vmul.f32 %v1228, %v1246
    %v1300 = vmul.f32 %v1227, %v1250
    %v1301 = vmul.f32 %v1226, %v1254
    %v1302 = vmul.f32 %v1225, %v1258
    %v1303 = vmul.f32 %v1224, %v1262
    %v1304 = vmul.f32 %v1223, %v1266
    %v1305 = vmul.f32 %v1222, %v1270
    %v1306 = vmul.f32 %v1221, %v1274
    %v1307 = vmul.f32 %v1220, %v1278
    %v1308 = vmul.f32 %v1219, %v1282
    %v1309 = vmul.f32 %v1218, %v1286
    %v1310 = vmul.f32 %v1217, %v1290
    %v1311 = vmul.f32 %v1216, %v1294
    %v1312 = vadd.f32 %v1135, %v1296
    %v1313 = vadd.f32 %v1136, %v1297
    %v1314 = vadd.f32 %v1137, %v1298
    %v1315 = vadd.f32 %v1138, %v1299
    %v1316 = vadd.f32 %v1139, %v1300
    %v1317 = vadd.f32 %v1140, %v1301
    %v1318 = vadd.f32 %v1141, %v1302
    %v1319 = vadd.f32 %v1142, %v1303
    %v1320 = vadd.f32 %v1143, %v1304
    %v1321 = vadd.f32 %v1144, %v1305
    %v1322 = vadd.f32 %v1145, %v1306
    %v1323 = vadd.f32 %v1146, %v1307
    %v1324 = vadd.f32 %v1147, %v1308
    %v1325 = vadd.f32 %v1148, %v1309
    %v1326 = vadd.f32 %v1149, %v1310
    %v1327 = vadd.f32 %v1150, %v1311
    %1328 = vrot.lane.b32.xlu0 %v782, 104
    %v1329 = vpop.permute.xlu0 %1328
    %1330 = vrot.lane.b32.xlu0 %v785, 104
    %v1331 = vpop.permute.xlu0 %1330
    %1332 = vrot.lane.b32.xlu0 %v790, 104
    %v1333 = vpop.permute.xlu0 %1332
    %1334 = vrot.lane.b32.xlu0 %v793, 104
    %v1335 = vpop.permute.xlu0 %1334
    %1336 = vrot.lane.b32.xlu0 %v798, 104
    %v1337 = vpop.permute.xlu0 %1336
    %1338 = vrot.lane.b32.xlu0 %v801, 104
    %v1339 = vpop.permute.xlu0 %1338
    %1340 = vrot.lane.b32.xlu0 %v806, 104
    %v1341 = vpop.permute.xlu0 %1340
    %1342 = vrot.lane.b32.xlu0 %v809, 104
    %v1343 = vpop.permute.xlu0 %1342
    %1344 = vrot.lane.b32.xlu0 %v814, 104
    %v1345 = vpop.permute.xlu0 %1344
    %1346 = vrot.lane.b32.xlu0 %v817, 104
    %v1347 = vpop.permute.xlu0 %1346
    %1348 = vrot.lane.b32.xlu0 %v822, 104
    %v1349 = vpop.permute.xlu0 %1348
    %1350 = vrot.lane.b32.xlu0 %v825, 104
    %v1351 = vpop.permute.xlu0 %1350
    %1352 = vrot.lane.b32.xlu0 %v830, 104
    %v1353 = vpop.permute.xlu0 %1352
    %1354 = vrot.lane.b32.xlu0 %v833, 104
    %v1355 = vpop.permute.xlu0 %1354
    %1356 = vrot.lane.b32.xlu0 %v838, 104
    %v1357 = vpop.permute.xlu0 %1356
    %1358 = vrot.lane.b32.xlu0 %v841, 104
    %v1359 = vpop.permute.xlu0 %1358
    %v1376 = vrot.slane %v1329, 7
    %v1377 = vrot.slane %v1331, 7
    %v1378 = vrot.slane %v1333, 7
    %v1379 = vrot.slane %v1335, 7
    %v1380 = vrot.slane %v1337, 7
    %v1381 = vrot.slane %v1339, 7
    %v1382 = vrot.slane %v1341, 7
    %v1383 = vrot.slane %v1343, 7
    %v1384 = vrot.slane %v1345, 7
    %v1385 = vrot.slane %v1347, 7
    %v1386 = vrot.slane %v1349, 7
    %v1387 = vrot.slane %v1351, 7
    %v1388 = vrot.slane %v1353, 7
    %v1389 = vrot.slane %v1355, 7
    %v1390 = vrot.slane %v1357, 7
    %v1391 = vrot.slane %v1359, 7
    %v1392 = vsel %vm862, %v1390, %v1391
    %v1393 = vsel %vm862, %v1389, %v1390
    %v1394 = vsel %vm862, %v1388, %v1389
    %v1395 = vsel %vm862, %v1387, %v1388
    %v1396 = vsel %vm862, %v1386, %v1387
    %v1397 = vsel %vm862, %v1385, %v1386
    %v1398 = vsel %vm862, %v1384, %v1385
    %v1399 = vsel %vm862, %v1383, %v1384
    %v1400 = vsel %vm862, %v1382, %v1383
    %v1401 = vsel %vm862, %v1381, %v1382
    %v1402 = vsel %vm862, %v1380, %v1381
    %v1403 = vsel %vm862, %v1379, %v1380
    %v1404 = vsel %vm862, %v1378, %v1379
    %v1405 = vsel %vm862, %v1377, %v1378
    %v1406 = vsel %vm862, %v1376, %v1377
    %v1407 = vsel %vm862, %v1391, %v1376
    %1408 = vset.pattern.permute.xlu0 3
    %1409 = vperm.xlu0 %1408, %v181
    %v1410 = vpop.permute.xlu0 %1409
    %1412 = vset.pattern.permute.xlu0 3
    %1413 = vperm.xlu0 %1412, %v182
    %v1414 = vpop.permute.xlu0 %1413
    %1416 = vset.pattern.permute.xlu0 3
    %1417 = vperm.xlu0 %1416, %v183
    %v1418 = vpop.permute.xlu0 %1417
    %1420 = vset.pattern.permute.xlu0 3
    %1421 = vperm.xlu0 %1420, %v184
    %v1422 = vpop.permute.xlu0 %1421
    %1424 = vset.pattern.permute.xlu0 3
    %1425 = vperm.xlu0 %1424, %v185
    %v1426 = vpop.permute.xlu0 %1425
    %1428 = vset.pattern.permute.xlu0 3
    %1429 = vperm.xlu0 %1428, %v186
    %v1430 = vpop.permute.xlu0 %1429
    %1432 = vset.pattern.permute.xlu0 3
    %1433 = vperm.xlu0 %1432, %v187
    %v1434 = vpop.permute.xlu0 %1433
    %1436 = vset.pattern.permute.xlu0 3
    %1437 = vperm.xlu0 %1436, %v188
    %v1438 = vpop.permute.xlu0 %1437
    %1440 = vset.pattern.permute.xlu0 3
    %1441 = vperm.xlu0 %1440, %v189
    %v1442 = vpop.permute.xlu0 %1441
    %1444 = vset.pattern.permute.xlu0 3
    %1445 = vperm.xlu0 %1444, %v190
    %v1446 = vpop.permute.xlu0 %1445
    %1448 = vset.pattern.permute.xlu0 3
    %1449 = vperm.xlu0 %1448, %v191
    %v1450 = vpop.permute.xlu0 %1449
    %1452 = vset.pattern.permute.xlu0 3
    %1453 = vperm.xlu0 %1452, %v192
    %v1454 = vpop.permute.xlu0 %1453
    %1456 = vset.pattern.permute.xlu0 3
    %1457 = vperm.xlu0 %1456, %v193
    %v1458 = vpop.permute.xlu0 %1457
    %1460 = vset.pattern.permute.xlu0 3
    %1461 = vperm.xlu0 %1460, %v194
    %v1462 = vpop.permute.xlu0 %1461
    %1464 = vset.pattern.permute.xlu0 3
    %1465 = vperm.xlu0 %1464, %v195
    %v1466 = vpop.permute.xlu0 %1465
    %1468 = vset.pattern.permute.xlu0 3
    %1469 = vperm.xlu0 %1468, %v196
    %v1470 = vpop.permute.xlu0 %1469
    %v1472 = vmul.f32 %v1407, %v1410
    %v1473 = vmul.f32 %v1406, %v1414
    %v1474 = vmul.f32 %v1405, %v1418
    %v1475 = vmul.f32 %v1404, %v1422
    %v1476 = vmul.f32 %v1403, %v1426
    %v1477 = vmul.f32 %v1402, %v1430
    %v1478 = vmul.f32 %v1401, %v1434
    %v1479 = vmul.f32 %v1400, %v1438
    %v1480 = vmul.f32 %v1399, %v1442
    %v1481 = vmul.f32 %v1398, %v1446
    %v1482 = vmul.f32 %v1397, %v1450
    %v1483 = vmul.f32 %v1396, %v1454
    %v1484 = vmul.f32 %v1395, %v1458
    %v1485 = vmul.f32 %v1394, %v1462
    %v1486 = vmul.f32 %v1393, %v1466
    %v1487 = vmul.f32 %v1392, %v1470
    %v1488 = vadd.f32 %v1312, %v1472
    %v1489 = vadd.f32 %v1313, %v1473
    %v1490 = vadd.f32 %v1314, %v1474
    %v1491 = vadd.f32 %v1315, %v1475
    %v1492 = vadd.f32 %v1316, %v1476
    %v1493 = vadd.f32 %v1317, %v1477
    %v1494 = vadd.f32 %v1318, %v1478
    %v1495 = vadd.f32 %v1319, %v1479
    %v1496 = vadd.f32 %v1320, %v1480
    %v1497 = vadd.f32 %v1321, %v1481
    %v1498 = vadd.f32 %v1322, %v1482
    %v1499 = vadd.f32 %v1323, %v1483
    %v1500 = vadd.f32 %v1324, %v1484
    %v1501 = vadd.f32 %v1325, %v1485
    %v1502 = vadd.f32 %v1326, %v1486
    %v1503 = vadd.f32 %v1327, %v1487
    %1504 = vset.pattern.permute.xlu0 4
    %1505 = vperm.xlu0 %1504, %v181
    %v1506 = vpop.permute.xlu0 %1505
    %1508 = vset.pattern.permute.xlu0 4
    %1509 = vperm.xlu0 %1508, %v182
    %v1510 = vpop.permute.xlu0 %1509
    %1512 = vset.pattern.permute.xlu0 4
    %1513 = vperm.xlu0 %1512, %v183
    %v1514 = vpop.permute.xlu0 %1513
    %1516 = vset.pattern.permute.xlu0 4
    %1517 = vperm.xlu0 %1516, %v184
    %v1518 = vpop.permute.xlu0 %1517
    %1520 = vset.pattern.permute.xlu0 4
    %1521 = vperm.xlu0 %1520, %v185
    %v1522 = vpop.permute.xlu0 %1521
    %1524 = vset.pattern.permute.xlu0 4
    %1525 = vperm.xlu0 %1524, %v186
    %v1526 = vpop.permute.xlu0 %1525
    %1528 = vset.pattern.permute.xlu0 4
    %1529 = vperm.xlu0 %1528, %v187
    %v1530 = vpop.permute.xlu0 %1529
    %1532 = vset.pattern.permute.xlu0 4
    %1533 = vperm.xlu0 %1532, %v188
    %v1534 = vpop.permute.xlu0 %1533
    %1536 = vset.pattern.permute.xlu0 4
    %1537 = vperm.xlu0 %1536, %v189
    %v1538 = vpop.permute.xlu0 %1537
    %1540 = vset.pattern.permute.xlu0 4
    %1541 = vperm.xlu0 %1540, %v190
    %v1542 = vpop.permute.xlu0 %1541
    %1544 = vset.pattern.permute.xlu0 4
    %1545 = vperm.xlu0 %1544, %v191
    %v1546 = vpop.permute.xlu0 %1545
    %1548 = vset.pattern.permute.xlu0 4
    %1549 = vperm.xlu0 %1548, %v192
    %v1550 = vpop.permute.xlu0 %1549
    %1552 = vset.pattern.permute.xlu0 4
    %1553 = vperm.xlu0 %1552, %v193
    %v1554 = vpop.permute.xlu0 %1553
    %1556 = vset.pattern.permute.xlu0 4
    %1557 = vperm.xlu0 %1556, %v194
    %v1558 = vpop.permute.xlu0 %1557
    %1560 = vset.pattern.permute.xlu0 4
    %1561 = vperm.xlu0 %1560, %v195
    %v1562 = vpop.permute.xlu0 %1561
    %1564 = vset.pattern.permute.xlu0 4
    %1565 = vperm.xlu0 %1564, %v196
    %v1566 = vpop.permute.xlu0 %1565
    %v1568 = vmul.f32 %v782, %v1506
    %v1569 = vmul.f32 %v785, %v1510
    %v1570 = vmul.f32 %v790, %v1514
    %v1571 = vmul.f32 %v793, %v1518
    %v1572 = vmul.f32 %v798, %v1522
    %v1573 = vmul.f32 %v801, %v1526
    %v1574 = vmul.f32 %v806, %v1530
    %v1575 = vmul.f32 %v809, %v1534
    %v1576 = vmul.f32 %v814, %v1538
    %v1577 = vmul.f32 %v817, %v1542
    %v1578 = vmul.f32 %v822, %v1546
    %v1579 = vmul.f32 %v825, %v1550
    %v1580 = vmul.f32 %v830, %v1554
    %v1581 = vmul.f32 %v833, %v1558
    %v1582 = vmul.f32 %v838, %v1562
    %v1583 = vmul.f32 %v841, %v1566
    %1600 = vrot.lane.b32.xlu0 %v1568, 96
    %v1601 = vpop.permute.xlu0 %1600
    %1602 = vrot.lane.b32.xlu0 %v1569, 96
    %v1603 = vpop.permute.xlu0 %1602
    %1604 = vrot.lane.b32.xlu0 %v1570, 96
    %v1605 = vpop.permute.xlu0 %1604
    %1606 = vrot.lane.b32.xlu0 %v1571, 96
    %v1607 = vpop.permute.xlu0 %1606
    %1608 = vrot.lane.b32.xlu0 %v1572, 96
    %v1609 = vpop.permute.xlu0 %1608
    %1610 = vrot.lane.b32.xlu0 %v1573, 96
    %v1611 = vpop.permute.xlu0 %1610
    %1612 = vrot.lane.b32.xlu0 %v1574, 96
    %v1613 = vpop.permute.xlu0 %1612
    %1614 = vrot.lane.b32.xlu0 %v1575, 96
    %v1615 = vpop.permute.xlu0 %1614
    %1616 = vrot.lane.b32.xlu0 %v1576, 96
    %v1617 = vpop.permute.xlu0 %1616
    %1618 = vrot.lane.b32.xlu0 %v1577, 96
    %v1619 = vpop.permute.xlu0 %1618
    %1620 = vrot.lane.b32.xlu0 %v1578, 96
    %v1621 = vpop.permute.xlu0 %1620
    %1622 = vrot.lane.b32.xlu0 %v1579, 96
    %v1623 = vpop.permute.xlu0 %1622
    %1624 = vrot.lane.b32.xlu0 %v1580, 96
    %v1625 = vpop.permute.xlu0 %1624
    %1626 = vrot.lane.b32.xlu0 %v1581, 96
    %v1627 = vpop.permute.xlu0 %1626
    %1628 = vrot.lane.b32.xlu0 %v1582, 96
    %v1629 = vpop.permute.xlu0 %1628
    %1630 = vrot.lane.b32.xlu0 %v1583, 96
    %v1631 = vpop.permute.xlu0 %1630
    %v1648 = vadd.f32 %v1488, %v1601
    %v1649 = vadd.f32 %v1489, %v1603
    %v1650 = vadd.f32 %v1490, %v1605
    %v1651 = vadd.f32 %v1491, %v1607
    %v1652 = vadd.f32 %v1492, %v1609
    %v1653 = vadd.f32 %v1493, %v1611
    %v1654 = vadd.f32 %v1494, %v1613
    %v1655 = vadd.f32 %v1495, %v1615
    %v1656 = vadd.f32 %v1496, %v1617
    %v1657 = vadd.f32 %v1497, %v1619
    %v1658 = vadd.f32 %v1498, %v1621
    %v1659 = vadd.f32 %v1499, %v1623
    %v1660 = vadd.f32 %v1500, %v1625
    %v1661 = vadd.f32 %v1501, %v1627
    %v1662 = vadd.f32 %v1502, %v1629
    %v1663 = vadd.f32 %v1503, %v1631
    %1664 = vrot.lane.b32.xlu0 %v782, 88
    %v1665 = vpop.permute.xlu0 %1664
    %1666 = vrot.lane.b32.xlu0 %v785, 88
    %v1667 = vpop.permute.xlu0 %1666
    %1668 = vrot.lane.b32.xlu0 %v790, 88
    %v1669 = vpop.permute.xlu0 %1668
    %1670 = vrot.lane.b32.xlu0 %v793, 88
    %v1671 = vpop.permute.xlu0 %1670
    %1672 = vrot.lane.b32.xlu0 %v798, 88
    %v1673 = vpop.permute.xlu0 %1672
    %1674 = vrot.lane.b32.xlu0 %v801, 88
    %v1675 = vpop.permute.xlu0 %1674
    %1676 = vrot.lane.b32.xlu0 %v806, 88
    %v1677 = vpop.permute.xlu0 %1676
    %1678 = vrot.lane.b32.xlu0 %v809, 88
    %v1679 = vpop.permute.xlu0 %1678
    %1680 = vrot.lane.b32.xlu0 %v814, 88
    %v1681 = vpop.permute.xlu0 %1680
    %1682 = vrot.lane.b32.xlu0 %v817, 88
    %v1683 = vpop.permute.xlu0 %1682
    %1684 = vrot.lane.b32.xlu0 %v822, 88
    %v1685 = vpop.permute.xlu0 %1684
    %1686 = vrot.lane.b32.xlu0 %v825, 88
    %v1687 = vpop.permute.xlu0 %1686
    %1688 = vrot.lane.b32.xlu0 %v830, 88
    %v1689 = vpop.permute.xlu0 %1688
    %1690 = vrot.lane.b32.xlu0 %v833, 88
    %v1691 = vpop.permute.xlu0 %1690
    %1692 = vrot.lane.b32.xlu0 %v838, 88
    %v1693 = vpop.permute.xlu0 %1692
    %1694 = vrot.lane.b32.xlu0 %v841, 88
    %v1695 = vpop.permute.xlu0 %1694
    %v1712 = vrot.slane %v1665, 1
    %v1713 = vrot.slane %v1667, 1
    %v1714 = vrot.slane %v1669, 1
    %v1715 = vrot.slane %v1671, 1
    %v1716 = vrot.slane %v1673, 1
    %v1717 = vrot.slane %v1675, 1
    %v1718 = vrot.slane %v1677, 1
    %v1719 = vrot.slane %v1679, 1
    %v1720 = vrot.slane %v1681, 1
    %v1721 = vrot.slane %v1683, 1
    %v1722 = vrot.slane %v1685, 1
    %v1723 = vrot.slane %v1687, 1
    %v1724 = vrot.slane %v1689, 1
    %v1725 = vrot.slane %v1691, 1
    %v1726 = vrot.slane %v1693, 1
    %v1727 = vrot.slane %v1695, 1
    %v1728 = vsel %vm1215, %v1726, %v1727
    %v1729 = vsel %vm1215, %v1725, %v1726
    %v1730 = vsel %vm1215, %v1724, %v1725
    %v1731 = vsel %vm1215, %v1723, %v1724
    %v1732 = vsel %vm1215, %v1722, %v1723
    %v1733 = vsel %vm1215, %v1721, %v1722
    %v1734 = vsel %vm1215, %v1720, %v1721
    %v1735 = vsel %vm1215, %v1719, %v1720
    %v1736 = vsel %vm1215, %v1718, %v1719
    %v1737 = vsel %vm1215, %v1717, %v1718
    %v1738 = vsel %vm1215, %v1716, %v1717
    %v1739 = vsel %vm1215, %v1715, %v1716
    %v1740 = vsel %vm1215, %v1714, %v1715
    %v1741 = vsel %vm1215, %v1713, %v1714
    %v1742 = vsel %vm1215, %v1712, %v1713
    %v1743 = vsel %vm1215, %v1727, %v1712
    %1744 = vset.pattern.permute.xlu0 5
    %1745 = vperm.xlu0 %1744, %v181
    %v1746 = vpop.permute.xlu0 %1745
    %1748 = vset.pattern.permute.xlu0 5
    %1749 = vperm.xlu0 %1748, %v182
    %v1750 = vpop.permute.xlu0 %1749
    %1752 = vset.pattern.permute.xlu0 5
    %1753 = vperm.xlu0 %1752, %v183
    %v1754 = vpop.permute.xlu0 %1753
    %1756 = vset.pattern.permute.xlu0 5
    %1757 = vperm.xlu0 %1756, %v184
    %v1758 = vpop.permute.xlu0 %1757
    %1760 = vset.pattern.permute.xlu0 5
    %1761 = vperm.xlu0 %1760, %v185
    %v1762 = vpop.permute.xlu0 %1761
    %1764 = vset.pattern.permute.xlu0 5
    %1765 = vperm.xlu0 %1764, %v186
    %v1766 = vpop.permute.xlu0 %1765
    %1768 = vset.pattern.permute.xlu0 5
    %1769 = vperm.xlu0 %1768, %v187
    %v1770 = vpop.permute.xlu0 %1769
    %1772 = vset.pattern.permute.xlu0 5
    %1773 = vperm.xlu0 %1772, %v188
    %v1774 = vpop.permute.xlu0 %1773
    %1776 = vset.pattern.permute.xlu0 5
    %1777 = vperm.xlu0 %1776, %v189
    %v1778 = vpop.permute.xlu0 %1777
    %1780 = vset.pattern.permute.xlu0 5
    %1781 = vperm.xlu0 %1780, %v190
    %v1782 = vpop.permute.xlu0 %1781
    %1784 = vset.pattern.permute.xlu0 5
    %1785 = vperm.xlu0 %1784, %v191
    %v1786 = vpop.permute.xlu0 %1785
    %1788 = vset.pattern.permute.xlu0 5
    %1789 = vperm.xlu0 %1788, %v192
    %v1790 = vpop.permute.xlu0 %1789
    %1792 = vset.pattern.permute.xlu0 5
    %1793 = vperm.xlu0 %1792, %v193
    %v1794 = vpop.permute.xlu0 %1793
    %1796 = vset.pattern.permute.xlu0 5
    %1797 = vperm.xlu0 %1796, %v194
    %v1798 = vpop.permute.xlu0 %1797
    %1800 = vset.pattern.permute.xlu0 5
    %1801 = vperm.xlu0 %1800, %v195
    %v1802 = vpop.permute.xlu0 %1801
    %1804 = vset.pattern.permute.xlu0 5
    %1805 = vperm.xlu0 %1804, %v196
    %v1806 = vpop.permute.xlu0 %1805
    %v1808 = vmul.f32 %v1742, %v1746
    %v1809 = vmul.f32 %v1741, %v1750
    %v1810 = vmul.f32 %v1740, %v1754
    %v1811 = vmul.f32 %v1739, %v1758
    %v1812 = vmul.f32 %v1738, %v1762
    %v1813 = vmul.f32 %v1737, %v1766
    %v1814 = vmul.f32 %v1736, %v1770
    %v1815 = vmul.f32 %v1735, %v1774
    %v1816 = vmul.f32 %v1734, %v1778
    %v1817 = vmul.f32 %v1733, %v1782
    %v1818 = vmul.f32 %v1732, %v1786
    %v1819 = vmul.f32 %v1731, %v1790
    %v1820 = vmul.f32 %v1730, %v1794
    %v1821 = vmul.f32 %v1729, %v1798
    %v1822 = vmul.f32 %v1728, %v1802
    %v1823 = vmul.f32 %v1743, %v1806
    %v1824 = vadd.f32 %v1648, %v1808
    %v1825 = vadd.f32 %v1649, %v1809
    %v1826 = vadd.f32 %v1650, %v1810
    %v1827 = vadd.f32 %v1651, %v1811
    %v1828 = vadd.f32 %v1652, %v1812
    %v1829 = vadd.f32 %v1653, %v1813
    %v1830 = vadd.f32 %v1654, %v1814
    %v1831 = vadd.f32 %v1655, %v1815
    %v1832 = vadd.f32 %v1656, %v1816
    %v1833 = vadd.f32 %v1657, %v1817
    %v1834 = vadd.f32 %v1658, %v1818
    %v1835 = vadd.f32 %v1659, %v1819
    %v1836 = vadd.f32 %v1660, %v1820
    %v1837 = vadd.f32 %v1661, %v1821
    %v1838 = vadd.f32 %v1662, %v1822
    %v1839 = vadd.f32 %v1663, %v1823
    %1840 = vrot.lane.b32.xlu0 %v782, 80
    %v1841 = vpop.permute.xlu0 %1840
    %1842 = vrot.lane.b32.xlu0 %v785, 80
    %v1843 = vpop.permute.xlu0 %1842
    %1844 = vrot.lane.b32.xlu0 %v790, 80
    %v1845 = vpop.permute.xlu0 %1844
    %1846 = vrot.lane.b32.xlu0 %v793, 80
    %v1847 = vpop.permute.xlu0 %1846
    %1848 = vrot.lane.b32.xlu0 %v798, 80
    %v1849 = vpop.permute.xlu0 %1848
    %1850 = vrot.lane.b32.xlu0 %v801, 80
    %v1851 = vpop.permute.xlu0 %1850
    %1852 = vrot.lane.b32.xlu0 %v806, 80
    %v1853 = vpop.permute.xlu0 %1852
    %1854 = vrot.lane.b32.xlu0 %v809, 80
    %v1855 = vpop.permute.xlu0 %1854
    %1856 = vrot.lane.b32.xlu0 %v814, 80
    %v1857 = vpop.permute.xlu0 %1856
    %1858 = vrot.lane.b32.xlu0 %v817, 80
    %v1859 = vpop.permute.xlu0 %1858
    %1860 = vrot.lane.b32.xlu0 %v822, 80
    %v1861 = vpop.permute.xlu0 %1860
    %1862 = vrot.lane.b32.xlu0 %v825, 80
    %v1863 = vpop.permute.xlu0 %1862
    %1864 = vrot.lane.b32.xlu0 %v830, 80
    %v1865 = vpop.permute.xlu0 %1864
    %1866 = vrot.lane.b32.xlu0 %v833, 80
    %v1867 = vpop.permute.xlu0 %1866
    %1868 = vrot.lane.b32.xlu0 %v838, 80
    %v1869 = vpop.permute.xlu0 %1868
    %1870 = vrot.lane.b32.xlu0 %v841, 80
    %v1871 = vpop.permute.xlu0 %1870
    %v1888 = vrot.slane %v1841, 7
    %v1889 = vrot.slane %v1843, 7
    %v1890 = vrot.slane %v1845, 7
    %v1891 = vrot.slane %v1847, 7
    %v1892 = vrot.slane %v1849, 7
    %v1893 = vrot.slane %v1851, 7
    %v1894 = vrot.slane %v1853, 7
    %v1895 = vrot.slane %v1855, 7
    %v1896 = vrot.slane %v1857, 7
    %v1897 = vrot.slane %v1859, 7
    %v1898 = vrot.slane %v1861, 7
    %v1899 = vrot.slane %v1863, 7
    %v1900 = vrot.slane %v1865, 7
    %v1901 = vrot.slane %v1867, 7
    %v1902 = vrot.slane %v1869, 7
    %v1903 = vrot.slane %v1871, 7
    %v1904 = vsel %vm862, %v1902, %v1903
    %v1905 = vsel %vm862, %v1901, %v1902
    %v1906 = vsel %vm862, %v1900, %v1901
    %v1907 = vsel %vm862, %v1899, %v1900
    %v1908 = vsel %vm862, %v1898, %v1899
    %v1909 = vsel %vm862, %v1897, %v1898
    %v1910 = vsel %vm862, %v1896, %v1897
    %v1911 = vsel %vm862, %v1895, %v1896
    %v1912 = vsel %vm862, %v1894, %v1895
    %v1913 = vsel %vm862, %v1893, %v1894
    %v1914 = vsel %vm862, %v1892, %v1893
    %v1915 = vsel %vm862, %v1891, %v1892
    %v1916 = vsel %vm862, %v1890, %v1891
    %v1917 = vsel %vm862, %v1889, %v1890
    %v1918 = vsel %vm862, %v1888, %v1889
    %v1919 = vsel %vm862, %v1903, %v1888
    %1920 = vset.pattern.permute.xlu0 6
    %1921 = vperm.xlu0 %1920, %v181
    %v1922 = vpop.permute.xlu0 %1921
    %1924 = vset.pattern.permute.xlu0 6
    %1925 = vperm.xlu0 %1924, %v182
    %v1926 = vpop.permute.xlu0 %1925
    %1928 = vset.pattern.permute.xlu0 6
    %1929 = vperm.xlu0 %1928, %v183
    %v1930 = vpop.permute.xlu0 %1929
    %1932 = vset.pattern.permute.xlu0 6
    %1933 = vperm.xlu0 %1932, %v184
    %v1934 = vpop.permute.xlu0 %1933
    %1936 = vset.pattern.permute.xlu0 6
    %1937 = vperm.xlu0 %1936, %v185
    %v1938 = vpop.permute.xlu0 %1937
    %1940 = vset.pattern.permute.xlu0 6
    %1941 = vperm.xlu0 %1940, %v186
    %v1942 = vpop.permute.xlu0 %1941
    %1944 = vset.pattern.permute.xlu0 6
    %1945 = vperm.xlu0 %1944, %v187
    %v1946 = vpop.permute.xlu0 %1945
    %1948 = vset.pattern.permute.xlu0 6
    %1949 = vperm.xlu0 %1948, %v188
    %v1950 = vpop.permute.xlu0 %1949
    %1952 = vset.pattern.permute.xlu0 6
    %1953 = vperm.xlu0 %1952, %v189
    %v1954 = vpop.permute.xlu0 %1953
    %1956 = vset.pattern.permute.xlu0 6
    %1957 = vperm.xlu0 %1956, %v190
    %v1958 = vpop.permute.xlu0 %1957
    %1960 = vset.pattern.permute.xlu0 6
    %1961 = vperm.xlu0 %1960, %v191
    %v1962 = vpop.permute.xlu0 %1961
    %1964 = vset.pattern.permute.xlu0 6
    %1965 = vperm.xlu0 %1964, %v192
    %v1966 = vpop.permute.xlu0 %1965
    %1968 = vset.pattern.permute.xlu0 6
    %1969 = vperm.xlu0 %1968, %v193
    %v1970 = vpop.permute.xlu0 %1969
    %1972 = vset.pattern.permute.xlu0 6
    %1973 = vperm.xlu0 %1972, %v194
    %v1974 = vpop.permute.xlu0 %1973
    %1976 = vset.pattern.permute.xlu0 6
    %1977 = vperm.xlu0 %1976, %v195
    %v1978 = vpop.permute.xlu0 %1977
    %1980 = vset.pattern.permute.xlu0 6
    %1981 = vperm.xlu0 %1980, %v196
    %v1982 = vpop.permute.xlu0 %1981
    %v1984 = vmul.f32 %v1918, %v1922
    %v1985 = vmul.f32 %v1917, %v1926
    %v1986 = vmul.f32 %v1916, %v1930
    %v1987 = vmul.f32 %v1915, %v1934
    %v1988 = vmul.f32 %v1914, %v1938
    %v1989 = vmul.f32 %v1913, %v1942
    %v1990 = vmul.f32 %v1912, %v1946
    %v1991 = vmul.f32 %v1911, %v1950
    %v1992 = vmul.f32 %v1910, %v1954
    %v1993 = vmul.f32 %v1909, %v1958
    %v1994 = vmul.f32 %v1908, %v1962
    %v1995 = vmul.f32 %v1907, %v1966
    %v1996 = vmul.f32 %v1906, %v1970
    %v1997 = vmul.f32 %v1905, %v1974
    %v1998 = vmul.f32 %v1904, %v1978
    %v1999 = vmul.f32 %v1919, %v1982
    %v2000 = vadd.f32 %v1824, %v1984
    %v2001 = vadd.f32 %v1825, %v1985
    %v2002 = vadd.f32 %v1826, %v1986
    %v2003 = vadd.f32 %v1827, %v1987
    %v2004 = vadd.f32 %v1828, %v1988
    %v2005 = vadd.f32 %v1829, %v1989
    %v2006 = vadd.f32 %v1830, %v1990
    %v2007 = vadd.f32 %v1831, %v1991
    %v2008 = vadd.f32 %v1832, %v1992
    %v2009 = vadd.f32 %v1833, %v1993
    %v2010 = vadd.f32 %v1834, %v1994
    %v2011 = vadd.f32 %v1835, %v1995
    %v2012 = vadd.f32 %v1836, %v1996
    %v2013 = vadd.f32 %v1837, %v1997
    %v2014 = vadd.f32 %v1838, %v1998
    %v2015 = vadd.f32 %v1839, %v1999
    %2016 = vrot.lane.b32.xlu0 %v782, 72
    %v2017 = vpop.permute.xlu0 %2016
    %2018 = vrot.lane.b32.xlu0 %v785, 72
    %v2019 = vpop.permute.xlu0 %2018
    %2020 = vrot.lane.b32.xlu0 %v790, 72
    %v2021 = vpop.permute.xlu0 %2020
    %2022 = vrot.lane.b32.xlu0 %v793, 72
    %v2023 = vpop.permute.xlu0 %2022
    %2024 = vrot.lane.b32.xlu0 %v798, 72
    %v2025 = vpop.permute.xlu0 %2024
    %2026 = vrot.lane.b32.xlu0 %v801, 72
    %v2027 = vpop.permute.xlu0 %2026
    %2028 = vrot.lane.b32.xlu0 %v806, 72
    %v2029 = vpop.permute.xlu0 %2028
    %2030 = vrot.lane.b32.xlu0 %v809, 72
    %v2031 = vpop.permute.xlu0 %2030
    %2032 = vrot.lane.b32.xlu0 %v814, 72
    %v2033 = vpop.permute.xlu0 %2032
    %2034 = vrot.lane.b32.xlu0 %v817, 72
    %v2035 = vpop.permute.xlu0 %2034
    %2036 = vrot.lane.b32.xlu0 %v822, 72
    %v2037 = vpop.permute.xlu0 %2036
    %2038 = vrot.lane.b32.xlu0 %v825, 72
    %v2039 = vpop.permute.xlu0 %2038
    %2040 = vrot.lane.b32.xlu0 %v830, 72
    %v2041 = vpop.permute.xlu0 %2040
    %2042 = vrot.lane.b32.xlu0 %v833, 72
    %v2043 = vpop.permute.xlu0 %2042
    %2044 = vrot.lane.b32.xlu0 %v838, 72
    %v2045 = vpop.permute.xlu0 %2044
    %2046 = vrot.lane.b32.xlu0 %v841, 72
    %v2047 = vpop.permute.xlu0 %2046
    %2064 = vset.pattern.permute.xlu0 7
    %2065 = vperm.xlu0 %2064, %v181
    %v2066 = vpop.permute.xlu0 %2065
    %2068 = vset.pattern.permute.xlu0 7
    %2069 = vperm.xlu0 %2068, %v182
    %v2070 = vpop.permute.xlu0 %2069
    %2072 = vset.pattern.permute.xlu0 7
    %2073 = vperm.xlu0 %2072, %v183
    %v2074 = vpop.permute.xlu0 %2073
    %2076 = vset.pattern.permute.xlu0 7
    %2077 = vperm.xlu0 %2076, %v184
    %v2078 = vpop.permute.xlu0 %2077
    %2080 = vset.pattern.permute.xlu0 7
    %2081 = vperm.xlu0 %2080, %v185
    %v2082 = vpop.permute.xlu0 %2081
    %2084 = vset.pattern.permute.xlu0 7
    %2085 = vperm.xlu0 %2084, %v186
    %v2086 = vpop.permute.xlu0 %2085
    %2088 = vset.pattern.permute.xlu0 7
    %2089 = vperm.xlu0 %2088, %v187
    %v2090 = vpop.permute.xlu0 %2089
    %2092 = vset.pattern.permute.xlu0 7
    %2093 = vperm.xlu0 %2092, %v188
    %v2094 = vpop.permute.xlu0 %2093
    %2096 = vset.pattern.permute.xlu0 7
    %2097 = vperm.xlu0 %2096, %v189
    %v2098 = vpop.permute.xlu0 %2097
    %2100 = vset.pattern.permute.xlu0 7
    %2101 = vperm.xlu0 %2100, %v190
    %v2102 = vpop.permute.xlu0 %2101
    %2104 = vset.pattern.permute.xlu0 7
    %2105 = vperm.xlu0 %2104, %v191
    %v2106 = vpop.permute.xlu0 %2105
    %2108 = vset.pattern.permute.xlu0 7
    %2109 = vperm.xlu0 %2108, %v192
    %v2110 = vpop.permute.xlu0 %2109
    %2112 = vset.pattern.permute.xlu0 7
    %2113 = vperm.xlu0 %2112, %v193
    %v2114 = vpop.permute.xlu0 %2113
    %2116 = vset.pattern.permute.xlu0 7
    %2117 = vperm.xlu0 %2116, %v194
    %v2118 = vpop.permute.xlu0 %2117
    %2120 = vset.pattern.permute.xlu0 7
    %2121 = vperm.xlu0 %2120, %v195
    %v2122 = vpop.permute.xlu0 %2121
    %2124 = vset.pattern.permute.xlu0 7
    %2125 = vperm.xlu0 %2124, %v196
    %v2126 = vpop.permute.xlu0 %2125
    %v2128 = vmul.f32 %v2019, %v2066
    %v2129 = vmul.f32 %v2021, %v2070
    %v2130 = vmul.f32 %v2023, %v2074
    %v2131 = vmul.f32 %v2025, %v2078
    %v2132 = vmul.f32 %v2027, %v2082
    %v2133 = vmul.f32 %v2029, %v2086
    %v2134 = vmul.f32 %v2031, %v2090
    %v2135 = vmul.f32 %v2033, %v2094
    %v2136 = vmul.f32 %v2035, %v2098
    %v2137 = vmul.f32 %v2037, %v2102
    %v2138 = vmul.f32 %v2039, %v2106
    %v2139 = vmul.f32 %v2041, %v2110
    %v2140 = vmul.f32 %v2043, %v2114
    %v2141 = vmul.f32 %v2045, %v2118
    %v2142 = vmul.f32 %v2047, %v2122
    %v2143 = vmul.f32 %v2017, %v2126
    %v2144 = vadd.f32 %v2000, %v2128
    %v2145 = vadd.f32 %v2001, %v2129
    %v2146 = vadd.f32 %v2002, %v2130
    %v2147 = vadd.f32 %v2003, %v2131
    %v2148 = vadd.f32 %v2004, %v2132
    %v2149 = vadd.f32 %v2005, %v2133
    %v2150 = vadd.f32 %v2006, %v2134
    %v2151 = vadd.f32 %v2007, %v2135
    %v2152 = vadd.f32 %v2008, %v2136
    %v2153 = vadd.f32 %v2009, %v2137
    %v2154 = vadd.f32 %v2010, %v2138
    %v2155 = vadd.f32 %v2011, %v2139
    %v2156 = vadd.f32 %v2012, %v2140
    %v2157 = vadd.f32 %v2013, %v2141
    %v2158 = vadd.f32 %v2014, %v2142
    %v2159 = vadd.f32 %v2015, %v2143
    %2160 = vrot.lane.b32.xlu0 %v782, 64
    %v2161 = vpop.permute.xlu0 %2160
    %2162 = vrot.lane.b32.xlu0 %v785, 64
    %v2163 = vpop.permute.xlu0 %2162
    %2164 = vrot.lane.b32.xlu0 %v790, 64
    %v2165 = vpop.permute.xlu0 %2164
    %2166 = vrot.lane.b32.xlu0 %v793, 64
    %v2167 = vpop.permute.xlu0 %2166
    %2168 = vrot.lane.b32.xlu0 %v798, 64
    %v2169 = vpop.permute.xlu0 %2168
    %2170 = vrot.lane.b32.xlu0 %v801, 64
    %v2171 = vpop.permute.xlu0 %2170
    %2172 = vrot.lane.b32.xlu0 %v806, 64
    %v2173 = vpop.permute.xlu0 %2172
    %2174 = vrot.lane.b32.xlu0 %v809, 64
    %v2175 = vpop.permute.xlu0 %2174
    %2176 = vrot.lane.b32.xlu0 %v814, 64
    %v2177 = vpop.permute.xlu0 %2176
    %2178 = vrot.lane.b32.xlu0 %v817, 64
    %v2179 = vpop.permute.xlu0 %2178
    %2180 = vrot.lane.b32.xlu0 %v822, 64
    %v2181 = vpop.permute.xlu0 %2180
    %2182 = vrot.lane.b32.xlu0 %v825, 64
    %v2183 = vpop.permute.xlu0 %2182
    %2184 = vrot.lane.b32.xlu0 %v830, 64
    %v2185 = vpop.permute.xlu0 %2184
    %2186 = vrot.lane.b32.xlu0 %v833, 64
    %v2187 = vpop.permute.xlu0 %2186
    %2188 = vrot.lane.b32.xlu0 %v838, 64
    %v2189 = vpop.permute.xlu0 %2188
    %2190 = vrot.lane.b32.xlu0 %v841, 64
    %v2191 = vpop.permute.xlu0 %2190
    %v2208 = vrot.slane %v2161, 1
    %v2209 = vrot.slane %v2163, 1
    %v2210 = vrot.slane %v2165, 1
    %v2211 = vrot.slane %v2167, 1
    %v2212 = vrot.slane %v2169, 1
    %v2213 = vrot.slane %v2171, 1
    %v2214 = vrot.slane %v2173, 1
    %v2215 = vrot.slane %v2175, 1
    %v2216 = vrot.slane %v2177, 1
    %v2217 = vrot.slane %v2179, 1
    %v2218 = vrot.slane %v2181, 1
    %v2219 = vrot.slane %v2183, 1
    %v2220 = vrot.slane %v2185, 1
    %v2221 = vrot.slane %v2187, 1
    %v2222 = vrot.slane %v2189, 1
    %v2223 = vrot.slane %v2191, 1
    %v2224 = vsel %vm1215, %v2222, %v2223
    %v2225 = vsel %vm1215, %v2221, %v2222
    %v2226 = vsel %vm1215, %v2220, %v2221
    %v2227 = vsel %vm1215, %v2219, %v2220
    %v2228 = vsel %vm1215, %v2218, %v2219
    %v2229 = vsel %vm1215, %v2217, %v2218
    %v2230 = vsel %vm1215, %v2216, %v2217
    %v2231 = vsel %vm1215, %v2215, %v2216
    %v2232 = vsel %vm1215, %v2214, %v2215
    %v2233 = vsel %vm1215, %v2213, %v2214
    %v2234 = vsel %vm1215, %v2212, %v2213
    %v2235 = vsel %vm1215, %v2211, %v2212
    %v2236 = vsel %vm1215, %v2210, %v2211
    %v2237 = vsel %vm1215, %v2209, %v2210
    %v2238 = vsel %vm1215, %v2208, %v2209
    %v2239 = vsel %vm1215, %v2223, %v2208
    %2240 = vset.pattern.permute.xlu0 8
    %2241 = vperm.xlu0 %2240, %v181
    %v2242 = vpop.permute.xlu0 %2241
    %2244 = vset.pattern.permute.xlu0 8
    %2245 = vperm.xlu0 %2244, %v182
    %v2246 = vpop.permute.xlu0 %2245
    %2248 = vset.pattern.permute.xlu0 8
    %2249 = vperm.xlu0 %2248, %v183
    %v2250 = vpop.permute.xlu0 %2249
    %2252 = vset.pattern.permute.xlu0 8
    %2253 = vperm.xlu0 %2252, %v184
    %v2254 = vpop.permute.xlu0 %2253
    %2256 = vset.pattern.permute.xlu0 8
    %2257 = vperm.xlu0 %2256, %v185
    %v2258 = vpop.permute.xlu0 %2257
    %2260 = vset.pattern.permute.xlu0 8
    %2261 = vperm.xlu0 %2260, %v186
    %v2262 = vpop.permute.xlu0 %2261
    %2264 = vset.pattern.permute.xlu0 8
    %2265 = vperm.xlu0 %2264, %v187
    %v2266 = vpop.permute.xlu0 %2265
    %2268 = vset.pattern.permute.xlu0 8
    %2269 = vperm.xlu0 %2268, %v188
    %v2270 = vpop.permute.xlu0 %2269
    %2272 = vset.pattern.permute.xlu0 8
    %2273 = vperm.xlu0 %2272, %v189
    %v2274 = vpop.permute.xlu0 %2273
    %2276 = vset.pattern.permute.xlu0 8
    %2277 = vperm.xlu0 %2276, %v190
    %v2278 = vpop.permute.xlu0 %2277
    %2280 = vset.pattern.permute.xlu0 8
    %2281 = vperm.xlu0 %2280, %v191
    %v2282 = vpop.permute.xlu0 %2281
    %2284 = vset.pattern.permute.xlu0 8
    %2285 = vperm.xlu0 %2284, %v192
    %v2286 = vpop.permute.xlu0 %2285
    %2288 = vset.pattern.permute.xlu0 8
    %2289 = vperm.xlu0 %2288, %v193
    %v2290 = vpop.permute.xlu0 %2289
    %2292 = vset.pattern.permute.xlu0 8
    %2293 = vperm.xlu0 %2292, %v194
    %v2294 = vpop.permute.xlu0 %2293
    %2296 = vset.pattern.permute.xlu0 8
    %2297 = vperm.xlu0 %2296, %v195
    %v2298 = vpop.permute.xlu0 %2297
    %2300 = vset.pattern.permute.xlu0 8
    %2301 = vperm.xlu0 %2300, %v196
    %v2302 = vpop.permute.xlu0 %2301
    %v2304 = vmul.f32 %v2237, %v2242
    %v2305 = vmul.f32 %v2236, %v2246
    %v2306 = vmul.f32 %v2235, %v2250
    %v2307 = vmul.f32 %v2234, %v2254
    %v2308 = vmul.f32 %v2233, %v2258
    %v2309 = vmul.f32 %v2232, %v2262
    %v2310 = vmul.f32 %v2231, %v2266
    %v2311 = vmul.f32 %v2230, %v2270
    %v2312 = vmul.f32 %v2229, %v2274
    %v2313 = vmul.f32 %v2228, %v2278
    %v2314 = vmul.f32 %v2227, %v2282
    %v2315 = vmul.f32 %v2226, %v2286
    %v2316 = vmul.f32 %v2225, %v2290
    %v2317 = vmul.f32 %v2224, %v2294
    %v2318 = vmul.f32 %v2239, %v2298
    %v2319 = vmul.f32 %v2238, %v2302
    %v2320 = vadd.f32 %v2144, %v2304
    %v2321 = vadd.f32 %v2145, %v2305
    %v2322 = vadd.f32 %v2146, %v2306
    %v2323 = vadd.f32 %v2147, %v2307
    %v2324 = vadd.f32 %v2148, %v2308
    %v2325 = vadd.f32 %v2149, %v2309
    %v2326 = vadd.f32 %v2150, %v2310
    %v2327 = vadd.f32 %v2151, %v2311
    %v2328 = vadd.f32 %v2152, %v2312
    %v2329 = vadd.f32 %v2153, %v2313
    %v2330 = vadd.f32 %v2154, %v2314
    %v2331 = vadd.f32 %v2155, %v2315
    %v2332 = vadd.f32 %v2156, %v2316
    %v2333 = vadd.f32 %v2157, %v2317
    %v2334 = vadd.f32 %v2158, %v2318
    %v2335 = vadd.f32 %v2159, %v2319
    %2352 = vrot.lane.b32.xlu0 %v2320, 64
    %v2353 = vpop.permute.xlu0 %2352
    %2354 = vrot.lane.b32.xlu0 %v2321, 64
    %v2355 = vpop.permute.xlu0 %2354
    %2356 = vrot.lane.b32.xlu0 %v2322, 64
    %v2357 = vpop.permute.xlu0 %2356
    %2358 = vrot.lane.b32.xlu0 %v2323, 64
    %v2359 = vpop.permute.xlu0 %2358
    %2360 = vrot.lane.b32.xlu0 %v2324, 64
    %v2361 = vpop.permute.xlu0 %2360
    %2362 = vrot.lane.b32.xlu0 %v2325, 64
    %v2363 = vpop.permute.xlu0 %2362
    %2364 = vrot.lane.b32.xlu0 %v2326, 64
    %v2365 = vpop.permute.xlu0 %2364
    %2366 = vrot.lane.b32.xlu0 %v2327, 64
    %v2367 = vpop.permute.xlu0 %2366
    %2368 = vrot.lane.b32.xlu0 %v2328, 64
    %v2369 = vpop.permute.xlu0 %2368
    %2370 = vrot.lane.b32.xlu0 %v2329, 64
    %v2371 = vpop.permute.xlu0 %2370
    %2372 = vrot.lane.b32.xlu0 %v2330, 64
    %v2373 = vpop.permute.xlu0 %2372
    %2374 = vrot.lane.b32.xlu0 %v2331, 64
    %v2375 = vpop.permute.xlu0 %2374
    %2376 = vrot.lane.b32.xlu0 %v2332, 64
    %v2377 = vpop.permute.xlu0 %2376
    %2378 = vrot.lane.b32.xlu0 %v2333, 64
    %v2379 = vpop.permute.xlu0 %2378
    %2380 = vrot.lane.b32.xlu0 %v2334, 64
    %v2381 = vpop.permute.xlu0 %2380
    %2382 = vrot.lane.b32.xlu0 %v2335, 64
    %v2383 = vpop.permute.xlu0 %2382
    %vm2400 = vcmask 589312
    %2401 = vst.msk [vmem:[#allocation2] sm:$0xff] %vm2400, %v2353
    %2402 = vst.msk [vmem:[#allocation2 + $0x8] sm:$0xff] %vm2400, %v2355
    %2403 = vst.msk [vmem:[#allocation2 + $0x10] sm:$0xff] %vm2400, %v2357
    %2404 = vst.msk [vmem:[#allocation2 + $0x18] sm:$0xff] %vm2400, %v2359
    %2405 = vst.msk [vmem:[#allocation2 + $0x20] sm:$0xff] %vm2400, %v2361
    %2406 = vst.msk [vmem:[#allocation2 + $0x28] sm:$0xff] %vm2400, %v2363
    %2407 = vst.msk [vmem:[#allocation2 + $0x30] sm:$0xff] %vm2400, %v2365
    %2408 = vst.msk [vmem:[#allocation2 + $0x38] sm:$0xff] %vm2400, %v2367
    %2409 = vst.msk [vmem:[#allocation2 + $0x40] sm:$0xff] %vm2400, %v2369
    %2410 = vst.msk [vmem:[#allocation2 + $0x48] sm:$0xff] %vm2400, %v2371
    %2411 = vst.msk [vmem:[#allocation2 + $0x50] sm:$0xff] %vm2400, %v2373
    %2412 = vst.msk [vmem:[#allocation2 + $0x58] sm:$0xff] %vm2400, %v2375
    %2413 = vst.msk [vmem:[#allocation2 + $0x60] sm:$0xff] %vm2400, %v2377
    %2414 = vst.msk [vmem:[#allocation2 + $0x68] sm:$0xff] %vm2400, %v2379
    %2415 = vst.msk [vmem:[#allocation2 + $0x70] sm:$0xff] %vm2400, %v2381
    %2416 = vst.msk [vmem:[#allocation2 + $0x78] sm:$0xff] %vm2400, %v2383
    %v2417 = vld [vmem:[#allocation2] sm:$0xff]
    %v2418 = vld [vmem:[#allocation2 + $0x8] sm:$0xff]
    %v2419 = vld [vmem:[#allocation2 + $0x10] sm:$0xff]
    %v2420 = vld [vmem:[#allocation2 + $0x18] sm:$0xff]
    %v2421 = vld [vmem:[#allocation2 + $0x20] sm:$0xff]
    %v2422 = vld [vmem:[#allocation2 + $0x28] sm:$0xff]
    %v2423 = vld [vmem:[#allocation2 + $0x30] sm:$0xff]
    %v2424 = vld [vmem:[#allocation2 + $0x38] sm:$0xff]
    %v2425 = vld [vmem:[#allocation2 + $0x40] sm:$0xff]
    %v2426 = vld [vmem:[#allocation2 + $0x48] sm:$0xff]
    %v2427 = vld [vmem:[#allocation2 + $0x50] sm:$0xff]
    %v2428 = vld [vmem:[#allocation2 + $0x58] sm:$0xff]
    %v2429 = vld [vmem:[#allocation2 + $0x60] sm:$0xff]
    %v2430 = vld [vmem:[#allocation2 + $0x68] sm:$0xff]
    %v2431 = vld [vmem:[#allocation2 + $0x70] sm:$0xff]
    %v2432 = vld [vmem:[#allocation2 + $0x78] sm:$0xff]
    %vm2433 = vcmask 588800
    %v2434 = vsel %vm2433, %v2417, 0.0
    %v2435 = vsel %vm2433, %v2418, 0.0
    %v2436 = vadd.f32 %v2434, %v2435
    %v2437 = vsel %vm2433, %v2419, 0.0
    %v2438 = vadd.f32 %v2436, %v2437
    %v2439 = vsel %vm2433, %v2420, 0.0
    %v2440 = vadd.f32 %v2438, %v2439
    %v2441 = vsel %vm2433, %v2421, 0.0
    %v2442 = vadd.f32 %v2440, %v2441
    %v2443 = vsel %vm2433, %v2422, 0.0
    %v2444 = vadd.f32 %v2442, %v2443
    %v2445 = vsel %vm2433, %v2423, 0.0
    %v2446 = vadd.f32 %v2444, %v2445
    %v2447 = vsel %vm2433, %v2424, 0.0
    %v2448 = vadd.f32 %v2446, %v2447
    %v2449 = vsel %vm2433, %v2425, 0.0
    %v2450 = vadd.f32 %v2448, %v2449
    %v2451 = vsel %vm2433, %v2426, 0.0
    %v2452 = vadd.f32 %v2450, %v2451
    %v2453 = vsel %vm2433, %v2427, 0.0
    %v2454 = vadd.f32 %v2452, %v2453
    %v2455 = vsel %vm2433, %v2428, 0.0
    %v2456 = vadd.f32 %v2454, %v2455
    %v2457 = vsel %vm2433, %v2429, 0.0
    %v2458 = vadd.f32 %v2456, %v2457
    %v2459 = vsel %vm2433, %v2430, 0.0
    %v2460 = vadd.f32 %v2458, %v2459
    %v2461 = vsel %vm2433, %v2431, 0.0
    %v2462 = vadd.f32 %v2460, %v2461
    %v2463 = vsel %vm2433, %v2432, 0.0
    %v2464 = vadd.f32 %v2462, %v2463
    %v2465 = vrot.slane %v2464, 4
    %v2466 = vadd.f32 %v2464, %v2465
    %v2467 = vrot.slane %v2466, 2
    %v2468 = vadd.f32 %v2466, %v2467
    %v2469 = vrot.slane %v2468, 1
    %v2470 = vadd.f32 %v2468, %v2469
    %v2471 = vmul.f32 %v2470, 0.0078125
    %v2472 = vmul.f32 %v2417, %v2417
    %v2473 = vmul.f32 %v2418, %v2418
    %v2474 = vmul.f32 %v2419, %v2419
    %v2475 = vmul.f32 %v2420, %v2420
    %v2476 = vmul.f32 %v2421, %v2421
    %v2477 = vmul.f32 %v2422, %v2422
    %v2478 = vmul.f32 %v2423, %v2423
    %v2479 = vmul.f32 %v2424, %v2424
    %v2480 = vmul.f32 %v2425, %v2425
    %v2481 = vmul.f32 %v2426, %v2426
    %v2482 = vmul.f32 %v2427, %v2427
    %v2483 = vmul.f32 %v2428, %v2428
    %v2484 = vmul.f32 %v2429, %v2429
    %v2485 = vmul.f32 %v2430, %v2430
    %v2486 = vmul.f32 %v2431, %v2431
    %v2487 = vmul.f32 %v2432, %v2432
    %v2488 = vsel %vm2433, %v2472, 0.0
    %v2489 = vsel %vm2433, %v2473, 0.0
    %v2490 = vadd.f32 %v2488, %v2489
    %v2491 = vsel %vm2433, %v2474, 0.0
    %v2492 = vadd.f32 %v2490, %v2491
    %v2493 = vsel %vm2433, %v2475, 0.0
    %v2494 = vadd.f32 %v2492, %v2493
    %v2495 = vsel %vm2433, %v2476, 0.0
    %v2496 = vadd.f32 %v2494, %v2495
    %v2497 = vsel %vm2433, %v2477, 0.0
    %v2498 = vadd.f32 %v2496, %v2497
    %v2499 = vsel %vm2433, %v2478, 0.0
    %v2500 = vadd.f32 %v2498, %v2499
    %v2501 = vsel %vm2433, %v2479, 0.0
    %v2502 = vadd.f32 %v2500, %v2501
    %v2503 = vsel %vm2433, %v2480, 0.0
    %v2504 = vadd.f32 %v2502, %v2503
    %v2505 = vsel %vm2433, %v2481, 0.0
    %v2506 = vadd.f32 %v2504, %v2505
    %v2507 = vsel %vm2433, %v2482, 0.0
    %v2508 = vadd.f32 %v2506, %v2507
    %v2509 = vsel %vm2433, %v2483, 0.0
    %v2510 = vadd.f32 %v2508, %v2509
    %v2511 = vsel %vm2433, %v2484, 0.0
    %v2512 = vadd.f32 %v2510, %v2511
    %v2513 = vsel %vm2433, %v2485, 0.0
    %v2514 = vadd.f32 %v2512, %v2513
    %v2515 = vsel %vm2433, %v2486, 0.0
    %v2516 = vadd.f32 %v2514, %v2515
    %v2517 = vsel %vm2433, %v2487, 0.0
    %v2518 = vadd.f32 %v2516, %v2517
    %v2519 = vrot.slane %v2518, 4
    %v2520 = vadd.f32 %v2518, %v2519
    %v2521 = vrot.slane %v2520, 2
    %v2522 = vadd.f32 %v2520, %v2521
    %v2523 = vrot.slane %v2522, 1
    %v2524 = vadd.f32 %v2522, %v2523
    %v2525 = vmul.f32 %v2524, 0.0078125
    %v2526 = vmul.f32 %v2471, %v2471
    %v2527 = vsub.f32 %v2525, %v2526
    %v2528 = vmax.f32 %v2527, 0.0
    %v2529 = vld [vmem:[%s17] sm:$0x1]
    %v2530 = vadd.f32 %v2528, 1e-05
    %v2531 = vrsqrt.pop %v2530
    %v2532 = vmul.f32 %v2529, %v2531
    %v2533 = vld [vmem:[%s19] sm:$0x1]
    %v2534 = vmul.f32 %v2471, %v2532
    %v2535 = vsub.f32 %v2533, %v2534
    %v2537 = vlaneseq
    %v2538 = vshrl.u32 %v2537, 7
    %v2539 = vsub.s32 0, %v2538
    %v2540 = vrot.slane %v2532, %v2539
    %v2542 = vmul.f32 %v2417, %v2540
    %v2543 = vmul.f32 %v2418, %v2540
    %v2544 = vmul.f32 %v2419, %v2540
    %v2545 = vmul.f32 %v2420, %v2540
    %v2546 = vmul.f32 %v2421, %v2540
    %v2547 = vmul.f32 %v2422, %v2540
    %v2548 = vmul.f32 %v2423, %v2540
    %v2549 = vmul.f32 %v2424, %v2540
    %v2550 = vmul.f32 %v2425, %v2540
    %v2551 = vmul.f32 %v2426, %v2540
    %v2552 = vmul.f32 %v2427, %v2540
    %v2553 = vmul.f32 %v2428, %v2540
    %v2554 = vmul.f32 %v2429, %v2540
    %v2555 = vmul.f32 %v2430, %v2540
    %v2556 = vmul.f32 %v2431, %v2540
    %v2557 = vmul.f32 %v2432, %v2540
    %v2559 = vlaneseq
    %v2560 = vshrl.u32 %v2559, 7
    %v2561 = vsub.s32 0, %v2560
    %v2562 = vrot.slane %v2535, %v2561
    %v2564 = vadd.f32 %v2542, %v2562
    %v2565 = vadd.f32 %v2543, %v2562
    %v2566 = vadd.f32 %v2544, %v2562
    %v2567 = vadd.f32 %v2545, %v2562
    %v2568 = vadd.f32 %v2546, %v2562
    %v2569 = vadd.f32 %v2547, %v2562
    %v2570 = vadd.f32 %v2548, %v2562
    %v2571 = vadd.f32 %v2549, %v2562
    %v2572 = vadd.f32 %v2550, %v2562
    %v2573 = vadd.f32 %v2551, %v2562
    %v2574 = vadd.f32 %v2552, %v2562
    %v2575 = vadd.f32 %v2553, %v2562
    %v2576 = vadd.f32 %v2554, %v2562
    %v2577 = vadd.f32 %v2555, %v2562
    %v2578 = vadd.f32 %v2556, %v2562
    %v2579 = vadd.f32 %v2557, %v2562
    %v2580 = vmax.f32 %v2564, 0.0
    %v2581 = vmax.f32 %v2565, 0.0
    %v2582 = vmax.f32 %v2566, 0.0
    %v2583 = vmax.f32 %v2567, 0.0
    %v2584 = vmax.f32 %v2568, 0.0
    %v2585 = vmax.f32 %v2569, 0.0
    %v2586 = vmax.f32 %v2570, 0.0
    %v2587 = vmax.f32 %v2571, 0.0
    %v2588 = vmax.f32 %v2572, 0.0
    %v2589 = vmax.f32 %v2573, 0.0
    %v2590 = vmax.f32 %v2574, 0.0
    %v2591 = vmax.f32 %v2575, 0.0
    %v2592 = vmax.f32 %v2576, 0.0
    %v2593 = vmax.f32 %v2577, 0.0
    %v2594 = vmax.f32 %v2578, 0.0
    %v2595 = vmax.f32 %v2579, 0.0
    %v2596 = vpack.c.bf16 %v2581, %v2580
    %v2597 = vpack.c.bf16 %v2583, %v2582
    %v2598 = vpack.c.bf16 %v2585, %v2584
    %v2599 = vpack.c.bf16 %v2587, %v2586
    %v2600 = vpack.c.bf16 %v2589, %v2588
    %v2601 = vpack.c.bf16 %v2591, %v2590
    %v2602 = vpack.c.bf16 %v2593, %v2592
    %v2603 = vpack.c.bf16 %v2595, %v2594
    %v2604 = vld [vmem:[%s21] sm:$0xf]
    %v2605 = vld [vmem:[%s21 + $0x4] sm:$0xf]
    %v2606 = vld [vmem:[%s21 + $0x8] sm:$0xf]
    %v2607 = vld [vmem:[%s21 + $0xc] sm:$0xf]
    %v2608 = vld [vmem:[%s21 + $0x10] sm:$0xf]
    %v2609 = vld [vmem:[%s21 + $0x14] sm:$0xf]
    %v2610 = vld [vmem:[%s21 + $0x18] sm:$0xf]
    %v2611 = vld [vmem:[%s21 + $0x1c] sm:$0xf]
    %v2612 = vld [vmem:[%s21 + $0x20] sm:$0xf]
    %v2622 = vunpack.c.l.b16 %v2604
    %v2623 = vunpack.c.l.b16 %v2605
    %v2624 = vunpack.c.l.b16 %v2606
    %v2625 = vunpack.c.l.b16 %v2607
    %v2626 = vunpack.c.l.b16 %v2608
    %v2627 = vunpack.c.l.b16 %v2609
    %v2628 = vunpack.c.l.b16 %v2610
    %v2629 = vunpack.c.l.b16 %v2611
    %v2630 = vunpack.c.l.b16 %v2612
    %v2631 = vpack.c.b16 %v2623, %v2622
    %v2632 = vpack.c.b16 %v2625, %v2624
    %v2633 = vpack.c.b16 %v2627, %v2626
    %v2634 = vpack.c.b16 %v2629, %v2628
    %v2635 = vpack.c.b16 %v2630, %v2630
    %v2641 = vsel %vm2433, %v2596, 0
    %v2644 = vsel %vm2433, %v2597, 0
    %v2647 = vsel %vm2433, %v2598, 0
    %v2650 = vsel %vm2433, %v2599, 0
    %v2653 = vsel %vm2433, %v2600, 0
    %v2656 = vsel %vm2433, %v2601, 0
    %v2659 = vsel %vm2433, %v2602, 0
    %v2662 = vsel %vm2433, %v2603, 0
    %vm2664 = vcmask 1043456
    %v2666 = vsel %vm2664, %v2635, 0
    %2668 = vmatprep.subr.bf16.mxu0 0
    %2669 = vmatpush1.bf16.msra.mxu0 %v2631
    %2670 = vmatprep.subr.bf16.mxu0 0
    %2671 = vmatpush1.bf16.msra.mxu0 %v2632
    %2672 = vmatprep.subr.bf16.mxu0 0
    %2673 = vmatpush1.bf16.msra.mxu0 %v2633
    %2674 = vmatprep.subr.bf16.mxu0 0
    %2675 = vmatpush1.bf16.msra.mxu0 %v2634
    %2676 = vmatprep.subr.bf16.mxu0 0
    %2677 = vmatpush1.bf16.msra.mxu0 %v2666
    %2678 = vmatprep.subr.bf16.mxu0 0
    %2679 = vmatpush1.bf16.msra.mxu0 0
    %2680 = vmatprep.subr.bf16.mxu0 0
    %2681 = vmatpush1.bf16.msra.mxu0 0
    %2682 = vmatprep.subr.bf16.mxu0 0
    %2683 = vmatpush1.bf16.msra.mxu0 0
    %2684 = vmatprep.subr.bf16.mxu0 0
    %2685 = vmatpush1.bf16.msra.mxu0 0
    %2686 = vmatprep.subr.bf16.mxu0 0
    %2687 = vmatpush1.bf16.msra.mxu0 0
    %2688 = vmatprep.subr.bf16.mxu0 0
    %2689 = vmatpush1.bf16.msra.mxu0 0
    %2690 = vmatprep.subr.bf16.mxu0 0
    %2691 = vmatpush1.bf16.msra.mxu0 0
    %2692 = vmatprep.subr.bf16.mxu0 0
    %2693 = vmatpush1.bf16.msra.mxu0 0
    %2694 = vmatprep.subr.bf16.mxu0 0
    %2695 = vmatpush1.bf16.msra.mxu0 0
    %2696 = vmatprep.subr.bf16.mxu0 0
    %2697 = vmatpush1.bf16.msra.mxu0 0
    %2698 = vmatprep.subr.bf16.mxu0 0
    %2699 = vmatpush1.bf16.msra.mxu0 0
    %2700 = vmatprep.mubr.bf16.mxu0 0
    %2701 = vmatmul.mubr.bf16.gmra.mrb[0].mxu0 %v2641
    %v2702 = vpop.f32.mrb[0].mxu0
    %v2703 = vadd.f32 0.0, %v2702
    %v2704 = vpop.f32.mrb[0].mxu0
    %v2705 = vpop.f32.mrb[0].mxu0
    %v2706 = vadd.f32 0.0, %v2705
    %v2707 = vpop.f32.mrb[0].mxu0
    %2708 = vmatprep.mubr.bf16.mxu0 0
    %2709 = vmatmul.mubr.bf16.gmra.mrb[0].mxu0 %v2644
    %v2710 = vpop.f32.mrb[0].mxu0
    %v2711 = vadd.f32 0.0, %v2710
    %v2712 = vpop.f32.mrb[0].mxu0
    %v2713 = vpop.f32.mrb[0].mxu0
    %v2714 = vadd.f32 0.0, %v2713
    %v2715 = vpop.f32.mrb[0].mxu0
    %2716 = vmatprep.mubr.bf16.mxu0 0
    %2717 = vmatmul.mubr.bf16.gmra.mrb[0].mxu0 %v2647
    %v2718 = vpop.f32.mrb[0].mxu0
    %v2719 = vadd.f32 0.0, %v2718
    %v2720 = vpop.f32.mrb[0].mxu0
    %v2721 = vpop.f32.mrb[0].mxu0
    %v2722 = vadd.f32 0.0, %v2721
    %v2723 = vpop.f32.mrb[0].mxu0
    %2724 = vmatprep.mubr.bf16.mxu0 0
    %2725 = vmatmul.mubr.bf16.gmra.mrb[0].mxu0 %v2650
    %v2726 = vpop.f32.mrb[0].mxu0
    %v2727 = vadd.f32 0.0, %v2726
    %v2728 = vpop.f32.mrb[0].mxu0
    %v2729 = vpop.f32.mrb[0].mxu0
    %v2730 = vadd.f32 0.0, %v2729
    %v2731 = vpop.f32.mrb[0].mxu0
    %2732 = vmatprep.mubr.bf16.mxu0 0
    %2733 = vmatmul.mubr.bf16.gmra.mrb[0].mxu0 %v2653
    %v2734 = vpop.f32.mrb[0].mxu0
    %v2735 = vadd.f32 0.0, %v2734
    %v2736 = vpop.f32.mrb[0].mxu0
    %v2737 = vpop.f32.mrb[0].mxu0
    %v2738 = vadd.f32 0.0, %v2737
    %v2739 = vpop.f32.mrb[0].mxu0
    %2740 = vmatprep.mubr.bf16.mxu0 0
    %2741 = vmatmul.mubr.bf16.gmra.mrb[0].mxu0 %v2656
    %v2742 = vpop.f32.mrb[0].mxu0
    %v2743 = vadd.f32 0.0, %v2742
    %v2744 = vpop.f32.mrb[0].mxu0
    %v2745 = vpop.f32.mrb[0].mxu0
    %v2746 = vadd.f32 0.0, %v2745
    %v2747 = vpop.f32.mrb[0].mxu0
    %2748 = vmatprep.mubr.bf16.mxu0 0
    %2749 = vmatmul.mubr.bf16.gmra.mrb[0].mxu0 %v2659
    %v2750 = vpop.f32.mrb[0].mxu0
    %v2751 = vadd.f32 0.0, %v2750
    %v2752 = vpop.f32.mrb[0].mxu0
    %v2753 = vpop.f32.mrb[0].mxu0
    %v2754 = vadd.f32 0.0, %v2753
    %v2755 = vpop.f32.mrb[0].mxu0
    %2756 = vmatprep.mubr.bf16.mxu0 0
    %2757 = vmatmul.mubr.bf16.gmra.mrb[0].mxu0 %v2662
    %v2758 = vpop.f32.mrb[0].mxu0
    %v2759 = vadd.f32 0.0, %v2758
    %v2760 = vpop.f32.mrb[0].mxu0
    %v2761 = vpop.f32.mrb[0].mxu0
    %v2762 = vadd.f32 0.0, %v2761
    %v2763 = vpop.f32.mrb[0].mxu0
    %2764 = vdwg.mxu0
    %v2765 = vsel %vm536, %v2703, 0.0
    %v2766 = vsel %vm536, %v2706, 0.0
    %v2767 = vadd.f32 %v2765, %v2766
    %v2768 = vsel %vm536, %v2711, 0.0
    %v2769 = vadd.f32 %v2767, %v2768
    %v2770 = vsel %vm536, %v2714, 0.0
    %v2771 = vadd.f32 %v2769, %v2770
    %v2772 = vsel %vm536, %v2719, 0.0
    %v2773 = vadd.f32 %v2771, %v2772
    %v2774 = vsel %vm536, %v2722, 0.0
    %v2775 = vadd.f32 %v2773, %v2774
    %v2776 = vsel %vm536, %v2727, 0.0
    %v2777 = vadd.f32 %v2775, %v2776
    %v2778 = vsel %vm536, %v2730, 0.0
    %v2779 = vadd.f32 %v2777, %v2778
    %v2780 = vsel %vm536, %v2735, 0.0
    %v2781 = vadd.f32 %v2779, %v2780
    %v2782 = vsel %vm536, %v2738, 0.0
    %v2783 = vadd.f32 %v2781, %v2782
    %v2784 = vsel %vm536, %v2743, 0.0
    %v2785 = vadd.f32 %v2783, %v2784
    %v2786 = vsel %vm536, %v2746, 0.0
    %v2787 = vadd.f32 %v2785, %v2786
    %v2788 = vsel %vm536, %v2751, 0.0
    %v2789 = vadd.f32 %v2787, %v2788
    %v2790 = vsel %vm536, %v2754, 0.0
    %v2791 = vadd.f32 %v2789, %v2790
    %v2792 = vsel %vm536, %v2759, 0.0
    %v2793 = vadd.f32 %v2791, %v2792
    %v2794 = vsel %vm536, %v2762, 0.0
    %v2795 = vadd.f32 %v2793, %v2794
    %v2796 = vrot.slane %v2795, 4
    %v2797 = vadd.f32 %v2795, %v2796
    %v2798 = vrot.slane %v2797, 2
    %v2799 = vadd.f32 %v2797, %v2798
    %v2800 = vrot.slane %v2799, 1
    %v2801 = vadd.f32 %v2799, %v2800
    %v2802 = vmul.f32 %v2801, 0.0078125
    %v2803 = vmul.f32 %v2703, %v2703
    %v2804 = vmul.f32 %v2706, %v2706
    %v2805 = vmul.f32 %v2711, %v2711
    %v2806 = vmul.f32 %v2714, %v2714
    %v2807 = vmul.f32 %v2719, %v2719
    %v2808 = vmul.f32 %v2722, %v2722
    %v2809 = vmul.f32 %v2727, %v2727
    %v2810 = vmul.f32 %v2730, %v2730
    %v2811 = vmul.f32 %v2735, %v2735
    %v2812 = vmul.f32 %v2738, %v2738
    %v2813 = vmul.f32 %v2743, %v2743
    %v2814 = vmul.f32 %v2746, %v2746
    %v2815 = vmul.f32 %v2751, %v2751
    %v2816 = vmul.f32 %v2754, %v2754
    %v2817 = vmul.f32 %v2759, %v2759
    %v2818 = vmul.f32 %v2762, %v2762
    %v2819 = vsel %vm536, %v2803, 0.0
    %v2820 = vsel %vm536, %v2804, 0.0
    %v2821 = vadd.f32 %v2819, %v2820
    %v2822 = vsel %vm536, %v2805, 0.0
    %v2823 = vadd.f32 %v2821, %v2822
    %v2824 = vsel %vm536, %v2806, 0.0
    %v2825 = vadd.f32 %v2823, %v2824
    %v2826 = vsel %vm536, %v2807, 0.0
    %v2827 = vadd.f32 %v2825, %v2826
    %v2828 = vsel %vm536, %v2808, 0.0
    %v2829 = vadd.f32 %v2827, %v2828
    %v2830 = vsel %vm536, %v2809, 0.0
    %v2831 = vadd.f32 %v2829, %v2830
    %v2832 = vsel %vm536, %v2810, 0.0
    %v2833 = vadd.f32 %v2831, %v2832
    %v2834 = vsel %vm536, %v2811, 0.0
    %v2835 = vadd.f32 %v2833, %v2834
    %v2836 = vsel %vm536, %v2812, 0.0
    %v2837 = vadd.f32 %v2835, %v2836
    %v2838 = vsel %vm536, %v2813, 0.0
    %v2839 = vadd.f32 %v2837, %v2838
    %v2840 = vsel %vm536, %v2814, 0.0
    %v2841 = vadd.f32 %v2839, %v2840
    %v2842 = vsel %vm536, %v2815, 0.0
    %v2843 = vadd.f32 %v2841, %v2842
    %v2844 = vsel %vm536, %v2816, 0.0
    %v2845 = vadd.f32 %v2843, %v2844
    %v2846 = vsel %vm536, %v2817, 0.0
    %v2847 = vadd.f32 %v2845, %v2846
    %v2848 = vsel %vm536, %v2818, 0.0
    %v2849 = vadd.f32 %v2847, %v2848
    %v2850 = vrot.slane %v2849, 4
    %v2851 = vadd.f32 %v2849, %v2850
    %v2852 = vrot.slane %v2851, 2
    %v2853 = vadd.f32 %v2851, %v2852
    %v2854 = vrot.slane %v2853, 1
    %v2855 = vadd.f32 %v2853, %v2854
    %v2856 = vmul.f32 %v2855, 0.0078125
    %v2857 = vmul.f32 %v2802, %v2802
    %v2858 = vsub.f32 %v2856, %v2857
    %v2859 = vmax.f32 %v2858, 0.0
    %v2860 = vld [vmem:[%s23] sm:$0x1]
    %v2861 = vadd.f32 %v2859, 1e-05
    %v2862 = vrsqrt.pop %v2861
    %v2863 = vmul.f32 %v2860, %v2862
    %v2864 = vld [vmem:[%s25] sm:$0x1]
    %v2865 = vmul.f32 %v2802, %v2863
    %v2866 = vsub.f32 %v2864, %v2865
    %v2868 = vlaneseq
    %v2869 = vshrl.u32 %v2868, 7
    %v2870 = vsub.s32 0, %v2869
    %v2871 = vrot.slane %v2863, %v2870
    %v2873 = vmul.f32 %v2703, %v2871
    %v2874 = vmul.f32 %v2706, %v2871
    %v2875 = vmul.f32 %v2711, %v2871
    %v2876 = vmul.f32 %v2714, %v2871
    %v2877 = vmul.f32 %v2719, %v2871
    %v2878 = vmul.f32 %v2722, %v2871
    %v2879 = vmul.f32 %v2727, %v2871
    %v2880 = vmul.f32 %v2730, %v2871
    %v2881 = vmul.f32 %v2735, %v2871
    %v2882 = vmul.f32 %v2738, %v2871
    %v2883 = vmul.f32 %v2743, %v2871
    %v2884 = vmul.f32 %v2746, %v2871
    %v2885 = vmul.f32 %v2751, %v2871
    %v2886 = vmul.f32 %v2754, %v2871
    %v2887 = vmul.f32 %v2759, %v2871
    %v2888 = vmul.f32 %v2762, %v2871
    %v2890 = vlaneseq
    %v2891 = vshrl.u32 %v2890, 7
    %v2892 = vsub.s32 0, %v2891
    %v2893 = vrot.slane %v2866, %v2892
    %v2895 = vadd.f32 %v2873, %v2893
    %v2896 = vadd.f32 %v2874, %v2893
    %v2897 = vadd.f32 %v2875, %v2893
    %v2898 = vadd.f32 %v2876, %v2893
    %v2899 = vadd.f32 %v2877, %v2893
    %v2900 = vadd.f32 %v2878, %v2893
    %v2901 = vadd.f32 %v2879, %v2893
    %v2902 = vadd.f32 %v2880, %v2893
    %v2903 = vadd.f32 %v2881, %v2893
    %v2904 = vadd.f32 %v2882, %v2893
    %v2905 = vadd.f32 %v2883, %v2893
    %v2906 = vadd.f32 %v2884, %v2893
    %v2907 = vadd.f32 %v2885, %v2893
    %v2908 = vadd.f32 %v2886, %v2893
    %v2909 = vadd.f32 %v2887, %v2893
    %v2910 = vadd.f32 %v2888, %v2893
    %v2911 = vmax.f32 %v2895, 0.0
    %v2912 = vmax.f32 %v2896, 0.0
    %v2913 = vmax.f32 %v2897, 0.0
    %v2914 = vmax.f32 %v2898, 0.0
    %v2915 = vmax.f32 %v2899, 0.0
    %v2916 = vmax.f32 %v2900, 0.0
    %v2917 = vmax.f32 %v2901, 0.0
    %v2918 = vmax.f32 %v2902, 0.0
    %v2919 = vmax.f32 %v2903, 0.0
    %v2920 = vmax.f32 %v2904, 0.0
    %v2921 = vmax.f32 %v2905, 0.0
    %v2922 = vmax.f32 %v2906, 0.0
    %v2923 = vmax.f32 %v2907, 0.0
    %v2924 = vmax.f32 %v2908, 0.0
    %v2925 = vmax.f32 %v2909, 0.0
    %v2926 = vmax.f32 %v2910, 0.0
    %v2927 = vpack.c.bf16 %v2912, %v2911
    %v2928 = vpack.c.bf16 %v2914, %v2913
    %v2929 = vpack.c.bf16 %v2916, %v2915
    %v2930 = vpack.c.bf16 %v2918, %v2917
    %v2931 = vpack.c.bf16 %v2920, %v2919
    %v2932 = vpack.c.bf16 %v2922, %v2921
    %v2933 = vpack.c.bf16 %v2924, %v2923
    %v2934 = vpack.c.bf16 %v2926, %v2925
    %v2935 = vld [vmem:[%s27] sm:$0xf]
    %v2936 = vld [vmem:[%s27 + $0x4] sm:$0xf]
    %v2937 = vld [vmem:[%s27 + $0x8] sm:$0xf]
    %v2938 = vld [vmem:[%s27 + $0xc] sm:$0xf]
    %v2943 = vunpack.c.l.b16 %v2935
    %v2944 = vunpack.c.l.b16 %v2936
    %v2945 = vunpack.c.l.b16 %v2937
    %v2946 = vunpack.c.l.b16 %v2938
    %v2947 = vpack.c.b16 %v2944, %v2943
    %v2948 = vpack.c.b16 %v2946, %v2945
    %v2952 = vsel %vm536, %v2927, 0
    %v2955 = vsel %vm536, %v2928, 0
    %v2958 = vsel %vm536, %v2929, 0
    %v2961 = vsel %vm536, %v2930, 0
    %v2964 = vsel %vm536, %v2931, 0
    %v2967 = vsel %vm536, %v2932, 0
    %v2970 = vsel %vm536, %v2933, 0
    %v2973 = vsel %vm536, %v2934, 0
    %2975 = vmatprep.subr.bf16.mxu0 0
    %2976 = vmatpush1.bf16.msra.mxu0 %v2947
    %2977 = vmatprep.subr.bf16.mxu0 0
    %2978 = vmatpush1.bf16.msra.mxu0 %v2948
    %2979 = vmatprep.subr.bf16.mxu0 0
    %2980 = vmatpush1.bf16.msra.mxu0 0
    %2981 = vmatprep.subr.bf16.mxu0 0
    %2982 = vmatpush1.bf16.msra.mxu0 0
    %2983 = vmatprep.subr.bf16.mxu0 0
    %2984 = vmatpush1.bf16.msra.mxu0 0
    %2985 = vmatprep.subr.bf16.mxu0 0
    %2986 = vmatpush1.bf16.msra.mxu0 0
    %2987 = vmatprep.subr.bf16.mxu0 0
    %2988 = vmatpush1.bf16.msra.mxu0 0
    %2989 = vmatprep.subr.bf16.mxu0 0
    %2990 = vmatpush1.bf16.msra.mxu0 0
    %2991 = vmatprep.subr.bf16.mxu0 0
    %2992 = vmatpush1.bf16.msra.mxu0 0
    %2993 = vmatprep.subr.bf16.mxu0 0
    %2994 = vmatpush1.bf16.msra.mxu0 0
    %2995 = vmatprep.subr.bf16.mxu0 0
    %2996 = vmatpush1.bf16.msra.mxu0 0
    %2997 = vmatprep.subr.bf16.mxu0 0
    %2998 = vmatpush1.bf16.msra.mxu0 0
    %2999 = vmatprep.subr.bf16.mxu0 0
    %3000 = vmatpush1.bf16.msra.mxu0 0
    %3001 = vmatprep.subr.bf16.mxu0 0
    %3002 = vmatpush1.bf16.msra.mxu0 0
    %3003 = vmatprep.subr.bf16.mxu0 0
    %3004 = vmatpush1.bf16.msra.mxu0 0
    %3005 = vmatprep.subr.bf16.mxu0 0
    %3006 = vmatpush1.bf16.msra.mxu0 0
    %3007 = vmatprep.mubr.bf16.mxu0 0
    %3008 = vmatmul.mubr.bf16.gmra.mrb[0].mxu0 %v2952
    %v3009 = vpop.f32.mrb[0].mxu0
    %v3010 = vadd.f32 0.0, %v3009
    %v3011 = vpop.f32.mrb[0].mxu0
    %v3012 = vpop.f32.mrb[0].mxu0
    %v3013 = vadd.f32 0.0, %v3012
    %v3014 = vpop.f32.mrb[0].mxu0
    %3015 = vmatprep.mubr.bf16.mxu0 0
    %3016 = vmatmul.mubr.bf16.gmra.mrb[0].mxu0 %v2955
    %v3017 = vpop.f32.mrb[0].mxu0
    %v3018 = vadd.f32 0.0, %v3017
    %v3019 = vpop.f32.mrb[0].mxu0
    %v3020 = vpop.f32.mrb[0].mxu0
    %v3021 = vadd.f32 0.0, %v3020
    %v3022 = vpop.f32.mrb[0].mxu0
    %3023 = vmatprep.mubr.bf16.mxu0 0
    %3024 = vmatmul.mubr.bf16.gmra.mrb[0].mxu0 %v2958
    %v3025 = vpop.f32.mrb[0].mxu0
    %v3026 = vadd.f32 0.0, %v3025
    %v3027 = vpop.f32.mrb[0].mxu0
    %v3028 = vpop.f32.mrb[0].mxu0
    %v3029 = vadd.f32 0.0, %v3028
    %v3030 = vpop.f32.mrb[0].mxu0
    %3031 = vmatprep.mubr.bf16.mxu0 0
    %3032 = vmatmul.mubr.bf16.gmra.mrb[0].mxu0 %v2961
    %v3033 = vpop.f32.mrb[0].mxu0
    %v3034 = vadd.f32 0.0, %v3033
    %v3035 = vpop.f32.mrb[0].mxu0
    %v3036 = vpop.f32.mrb[0].mxu0
    %v3037 = vadd.f32 0.0, %v3036
    %v3038 = vpop.f32.mrb[0].mxu0
    %3039 = vmatprep.mubr.bf16.mxu0 0
    %3040 = vmatmul.mubr.bf16.gmra.mrb[0].mxu0 %v2964
    %v3041 = vpop.f32.mrb[0].mxu0
    %v3042 = vadd.f32 0.0, %v3041
    %v3043 = vpop.f32.mrb[0].mxu0
    %v3044 = vpop.f32.mrb[0].mxu0
    %v3045 = vadd.f32 0.0, %v3044
    %v3046 = vpop.f32.mrb[0].mxu0
    %3047 = vmatprep.mubr.bf16.mxu0 0
    %3048 = vmatmul.mubr.bf16.gmra.mrb[0].mxu0 %v2967
    %v3049 = vpop.f32.mrb[0].mxu0
    %v3050 = vadd.f32 0.0, %v3049
    %v3051 = vpop.f32.mrb[0].mxu0
    %v3052 = vpop.f32.mrb[0].mxu0
    %v3053 = vadd.f32 0.0, %v3052
    %v3054 = vpop.f32.mrb[0].mxu0
    %3055 = vmatprep.mubr.bf16.mxu0 0
    %3056 = vmatmul.mubr.bf16.gmra.mrb[0].mxu0 %v2970
    %v3057 = vpop.f32.mrb[0].mxu0
    %v3058 = vadd.f32 0.0, %v3057
    %v3059 = vpop.f32.mrb[0].mxu0
    %v3060 = vpop.f32.mrb[0].mxu0
    %v3061 = vadd.f32 0.0, %v3060
    %v3062 = vpop.f32.mrb[0].mxu0
    %3063 = vmatprep.mubr.bf16.mxu0 0
    %3064 = vmatmul.mubr.bf16.gmra.mrb[0].mxu0 %v2973
    %v3065 = vpop.f32.mrb[0].mxu0
    %v3066 = vadd.f32 0.0, %v3065
    %v3067 = vpop.f32.mrb[0].mxu0
    %v3068 = vpop.f32.mrb[0].mxu0
    %v3069 = vadd.f32 0.0, %v3068
    %v3070 = vpop.f32.mrb[0].mxu0
    %3071 = vdwg.mxu0
    %v3072 = vrot.slane %v3010, 7
    %v3073 = vrot.slane %v3013, 7
    %v3074 = vrot.slane %v3018, 7
    %v3075 = vrot.slane %v3021, 7
    %v3076 = vrot.slane %v3026, 7
    %v3077 = vrot.slane %v3029, 7
    %v3078 = vrot.slane %v3034, 7
    %v3079 = vrot.slane %v3037, 7
    %v3080 = vrot.slane %v3042, 7
    %v3081 = vrot.slane %v3045, 7
    %v3082 = vrot.slane %v3050, 7
    %v3083 = vrot.slane %v3053, 7
    %v3084 = vrot.slane %v3058, 7
    %v3085 = vrot.slane %v3061, 7
    %v3086 = vrot.slane %v3066, 7
    %v3087 = vrot.slane %v3069, 7
    %v3088 = vsel %vm862, %v3086, %v3087
    %v3089 = vsel %vm862, %v3085, %v3086
    %v3090 = vsel %vm862, %v3084, %v3085
    %v3091 = vsel %vm862, %v3083, %v3084
    %v3092 = vsel %vm862, %v3082, %v3083
    %v3093 = vsel %vm862, %v3081, %v3082
    %v3094 = vsel %vm862, %v3080, %v3081
    %v3095 = vsel %vm862, %v3079, %v3080
    %v3096 = vsel %vm862, %v3078, %v3079
    %v3097 = vsel %vm862, %v3077, %v3078
    %v3098 = vsel %vm862, %v3076, %v3077
    %v3099 = vsel %vm862, %v3075, %v3076
    %v3100 = vsel %vm862, %v3074, %v3075
    %v3101 = vsel %vm862, %v3073, %v3074
    %v3102 = vsel %vm862, %v3072, %v3073
    %v3103 = vsel %vm862, %v3087, %v3072
    %v3104 = vmul.f32 %v3088, %v882
    %v3105 = vmul.f32 %v3103, %v887
    %v3106 = vmul.f32 %v3102, %v892
    %v3107 = vmul.f32 %v3101, %v897
    %v3108 = vmul.f32 %v3100, %v902
    %v3109 = vmul.f32 %v3099, %v907
    %v3110 = vmul.f32 %v3098, %v912
    %v3111 = vmul.f32 %v3097, %v917
    %v3112 = vmul.f32 %v3096, %v922
    %v3113 = vmul.f32 %v3095, %v927
    %v3114 = vmul.f32 %v3094, %v932
    %v3115 = vmul.f32 %v3093, %v937
    %v3116 = vmul.f32 %v3092, %v942
    %v3117 = vmul.f32 %v3091, %v947
    %v3118 = vmul.f32 %v3090, %v952
    %v3119 = vmul.f32 %v3089, %v957
    %v3120 = vadd.f32 %v3104, 0.0
    %v3121 = vadd.f32 %v3105, 0.0
    %v3122 = vadd.f32 %v3106, 0.0
    %v3123 = vadd.f32 %v3107, 0.0
    %v3124 = vadd.f32 %v3108, 0.0
    %v3125 = vadd.f32 %v3109, 0.0
    %v3126 = vadd.f32 %v3110, 0.0
    %v3127 = vadd.f32 %v3111, 0.0
    %v3128 = vadd.f32 %v3112, 0.0
    %v3129 = vadd.f32 %v3113, 0.0
    %v3130 = vadd.f32 %v3114, 0.0
    %v3131 = vadd.f32 %v3115, 0.0
    %v3132 = vadd.f32 %v3116, 0.0
    %v3133 = vadd.f32 %v3117, 0.0
    %v3134 = vadd.f32 %v3118, 0.0
    %v3135 = vadd.f32 %v3119, 0.0
    %3152 = vrot.lane.b32.xlu0 %v3010, 120
    %v3153 = vpop.permute.xlu0 %3152
    %3154 = vrot.lane.b32.xlu0 %v3013, 120
    %v3155 = vpop.permute.xlu0 %3154
    %3156 = vrot.lane.b32.xlu0 %v3018, 120
    %v3157 = vpop.permute.xlu0 %3156
    %3158 = vrot.lane.b32.xlu0 %v3021, 120
    %v3159 = vpop.permute.xlu0 %3158
    %3160 = vrot.lane.b32.xlu0 %v3026, 120
    %v3161 = vpop.permute.xlu0 %3160
    %3162 = vrot.lane.b32.xlu0 %v3029, 120
    %v3163 = vpop.permute.xlu0 %3162
    %3164 = vrot.lane.b32.xlu0 %v3034, 120
    %v3165 = vpop.permute.xlu0 %3164
    %3166 = vrot.lane.b32.xlu0 %v3037, 120
    %v3167 = vpop.permute.xlu0 %3166
    %3168 = vrot.lane.b32.xlu0 %v3042, 120
    %v3169 = vpop.permute.xlu0 %3168
    %3170 = vrot.lane.b32.xlu0 %v3045, 120
    %v3171 = vpop.permute.xlu0 %3170
    %3172 = vrot.lane.b32.xlu0 %v3050, 120
    %v3173 = vpop.permute.xlu0 %3172
    %3174 = vrot.lane.b32.xlu0 %v3053, 120
    %v3175 = vpop.permute.xlu0 %3174
    %3176 = vrot.lane.b32.xlu0 %v3058, 120
    %v3177 = vpop.permute.xlu0 %3176
    %3178 = vrot.lane.b32.xlu0 %v3061, 120
    %v3179 = vpop.permute.xlu0 %3178
    %3180 = vrot.lane.b32.xlu0 %v3066, 120
    %v3181 = vpop.permute.xlu0 %3180
    %3182 = vrot.lane.b32.xlu0 %v3069, 120
    %v3183 = vpop.permute.xlu0 %3182
    %v3200 = vmul.f32 %v3183, %v1057
    %v3201 = vmul.f32 %v3153, %v1061
    %v3202 = vmul.f32 %v3155, %v1065
    %v3203 = vmul.f32 %v3157, %v1069
    %v3204 = vmul.f32 %v3159, %v1073
    %v3205 = vmul.f32 %v3161, %v1077
    %v3206 = vmul.f32 %v3163, %v1081
    %v3207 = vmul.f32 %v3165, %v1085
    %v3208 = vmul.f32 %v3167, %v1089
    %v3209 = vmul.f32 %v3169, %v1093
    %v3210 = vmul.f32 %v3171, %v1097
    %v3211 = vmul.f32 %v3173, %v1101
    %v3212 = vmul.f32 %v3175, %v1105
    %v3213 = vmul.f32 %v3177, %v1109
    %v3214 = vmul.f32 %v3179, %v1113
    %v3215 = vmul.f32 %v3181, %v1117
    %v3216 = vadd.f32 %v3120, %v3200
    %v3217 = vadd.f32 %v3121, %v3201
    %v3218 = vadd.f32 %v3122, %v3202
    %v3219 = vadd.f32 %v3123, %v3203
    %v3220 = vadd.f32 %v3124, %v3204
    %v3221 = vadd.f32 %v3125, %v3205
    %v3222 = vadd.f32 %v3126, %v3206
    %v3223 = vadd.f32 %v3127, %v3207
    %v3224 = vadd.f32 %v3128, %v3208
    %v3225 = vadd.f32 %v3129, %v3209
    %v3226 = vadd.f32 %v3130, %v3210
    %v3227 = vadd.f32 %v3131, %v3211
    %v3228 = vadd.f32 %v3132, %v3212
    %v3229 = vadd.f32 %v3133, %v3213
    %v3230 = vadd.f32 %v3134, %v3214
    %v3231 = vadd.f32 %v3135, %v3215
    %3232 = vrot.lane.b32.xlu0 %v3010, 112
    %v3233 = vpop.permute.xlu0 %3232
    %3234 = vrot.lane.b32.xlu0 %v3013, 112
    %v3235 = vpop.permute.xlu0 %3234
    %3236 = vrot.lane.b32.xlu0 %v3018, 112
    %v3237 = vpop.permute.xlu0 %3236
    %3238 = vrot.lane.b32.xlu0 %v3021, 112
    %v3239 = vpop.permute.xlu0 %3238
    %3240 = vrot.lane.b32.xlu0 %v3026, 112
    %v3241 = vpop.permute.xlu0 %3240
    %3242 = vrot.lane.b32.xlu0 %v3029, 112
    %v3243 = vpop.permute.xlu0 %3242
    %3244 = vrot.lane.b32.xlu0 %v3034, 112
    %v3245 = vpop.permute.xlu0 %3244
    %3246 = vrot.lane.b32.xlu0 %v3037, 112
    %v3247 = vpop.permute.xlu0 %3246
    %3248 = vrot.lane.b32.xlu0 %v3042, 112
    %v3249 = vpop.permute.xlu0 %3248
    %3250 = vrot.lane.b32.xlu0 %v3045, 112
    %v3251 = vpop.permute.xlu0 %3250
    %3252 = vrot.lane.b32.xlu0 %v3050, 112
    %v3253 = vpop.permute.xlu0 %3252
    %3254 = vrot.lane.b32.xlu0 %v3053, 112
    %v3255 = vpop.permute.xlu0 %3254
    %3256 = vrot.lane.b32.xlu0 %v3058, 112
    %v3257 = vpop.permute.xlu0 %3256
    %3258 = vrot.lane.b32.xlu0 %v3061, 112
    %v3259 = vpop.permute.xlu0 %3258
    %3260 = vrot.lane.b32.xlu0 %v3066, 112
    %v3261 = vpop.permute.xlu0 %3260
    %3262 = vrot.lane.b32.xlu0 %v3069, 112
    %v3263 = vpop.permute.xlu0 %3262
    %v3280 = vrot.slane %v3233, 1
    %v3281 = vrot.slane %v3235, 1
    %v3282 = vrot.slane %v3237, 1
    %v3283 = vrot.slane %v3239, 1
    %v3284 = vrot.slane %v3241, 1
    %v3285 = vrot.slane %v3243, 1
    %v3286 = vrot.slane %v3245, 1
    %v3287 = vrot.slane %v3247, 1
    %v3288 = vrot.slane %v3249, 1
    %v3289 = vrot.slane %v3251, 1
    %v3290 = vrot.slane %v3253, 1
    %v3291 = vrot.slane %v3255, 1
    %v3292 = vrot.slane %v3257, 1
    %v3293 = vrot.slane %v3259, 1
    %v3294 = vrot.slane %v3261, 1
    %v3295 = vrot.slane %v3263, 1
    %v3296 = vsel %vm1215, %v3294, %v3295
    %v3297 = vsel %vm1215, %v3293, %v3294
    %v3298 = vsel %vm1215, %v3292, %v3293
    %v3299 = vsel %vm1215, %v3291, %v3292
    %v3300 = vsel %vm1215, %v3290, %v3291
    %v3301 = vsel %vm1215, %v3289, %v3290
    %v3302 = vsel %vm1215, %v3288, %v3289
    %v3303 = vsel %vm1215, %v3287, %v3288
    %v3304 = vsel %vm1215, %v3286, %v3287
    %v3305 = vsel %vm1215, %v3285, %v3286
    %v3306 = vsel %vm1215, %v3284, %v3285
    %v3307 = vsel %vm1215, %v3283, %v3284
    %v3308 = vsel %vm1215, %v3282, %v3283
    %v3309 = vsel %vm1215, %v3281, %v3282
    %v3310 = vsel %vm1215, %v3280, %v3281
    %v3311 = vsel %vm1215, %v3295, %v3280
    %v3312 = vmul.f32 %v3311, %v1234
    %v3313 = vmul.f32 %v3310, %v1238
    %v3314 = vmul.f32 %v3309, %v1242
    %v3315 = vmul.f32 %v3308, %v1246
    %v3316 = vmul.f32 %v3307, %v1250
    %v3317 = vmul.f32 %v3306, %v1254
    %v3318 = vmul.f32 %v3305, %v1258
    %v3319 = vmul.f32 %v3304, %v1262
    %v3320 = vmul.f32 %v3303, %v1266
    %v3321 = vmul.f32 %v3302, %v1270
    %v3322 = vmul.f32 %v3301, %v1274
    %v3323 = vmul.f32 %v3300, %v1278
    %v3324 = vmul.f32 %v3299, %v1282
    %v3325 = vmul.f32 %v3298, %v1286
    %v3326 = vmul.f32 %v3297, %v1290
    %v3327 = vmul.f32 %v3296, %v1294
    %v3328 = vadd.f32 %v3216, %v3312
    %v3329 = vadd.f32 %v3217, %v3313
    %v3330 = vadd.f32 %v3218, %v3314
    %v3331 = vadd.f32 %v3219, %v3315
    %v3332 = vadd.f32 %v3220, %v3316
    %v3333 = vadd.f32 %v3221, %v3317
    %v3334 = vadd.f32 %v3222, %v3318
    %v3335 = vadd.f32 %v3223, %v3319
    %v3336 = vadd.f32 %v3224, %v3320
    %v3337 = vadd.f32 %v3225, %v3321
    %v3338 = vadd.f32 %v3226, %v3322
    %v3339 = vadd.f32 %v3227, %v3323
    %v3340 = vadd.f32 %v3228, %v3324
    %v3341 = vadd.f32 %v3229, %v3325
    %v3342 = vadd.f32 %v3230, %v3326
    %v3343 = vadd.f32 %v3231, %v3327
    %3344 = vrot.lane.b32.xlu0 %v3010, 104
    %v3345 = vpop.permute.xlu0 %3344
    %3346 = vrot.lane.b32.xlu0 %v3013, 104
    %v3347 = vpop.permute.xlu0 %3346
    %3348 = vrot.lane.b32.xlu0 %v3018, 104
    %v3349 = vpop.permute.xlu0 %3348
    %3350 = vrot.lane.b32.xlu0 %v3021, 104
    %v3351 = vpop.permute.xlu0 %3350
    %3352 = vrot.lane.b32.xlu0 %v3026, 104
    %v3353 = vpop.permute.xlu0 %3352
    %3354 = vrot.lane.b32.xlu0 %v3029, 104
    %v3355 = vpop.permute.xlu0 %3354
    %3356 = vrot.lane.b32.xlu0 %v3034, 104
    %v3357 = vpop.permute.xlu0 %3356
    %3358 = vrot.lane.b32.xlu0 %v3037, 104
    %v3359 = vpop.permute.xlu0 %3358
    %3360 = vrot.lane.b32.xlu0 %v3042, 104
    %v3361 = vpop.permute.xlu0 %3360
    %3362 = vrot.lane.b32.xlu0 %v3045, 104
    %v3363 = vpop.permute.xlu0 %3362
    %3364 = vrot.lane.b32.xlu0 %v3050, 104
    %v3365 = vpop.permute.xlu0 %3364
    %3366 = vrot.lane.b32.xlu0 %v3053, 104
    %v3367 = vpop.permute.xlu0 %3366
    %3368 = vrot.lane.b32.xlu0 %v3058, 104
    %v3369 = vpop.permute.xlu0 %3368
    %3370 = vrot.lane.b32.xlu0 %v3061, 104
    %v3371 = vpop.permute.xlu0 %3370
    %3372 = vrot.lane.b32.xlu0 %v3066, 104
    %v3373 = vpop.permute.xlu0 %3372
    %3374 = vrot.lane.b32.xlu0 %v3069, 104
    %v3375 = vpop.permute.xlu0 %3374
    %v3392 = vrot.slane %v3345, 7
    %v3393 = vrot.slane %v3347, 7
    %v3394 = vrot.slane %v3349, 7
    %v3395 = vrot.slane %v3351, 7
    %v3396 = vrot.slane %v3353, 7
    %v3397 = vrot.slane %v3355, 7
    %v3398 = vrot.slane %v3357, 7
    %v3399 = vrot.slane %v3359, 7
    %v3400 = vrot.slane %v3361, 7
    %v3401 = vrot.slane %v3363, 7
    %v3402 = vrot.slane %v3365, 7
    %v3403 = vrot.slane %v3367, 7
    %v3404 = vrot.slane %v3369, 7
    %v3405 = vrot.slane %v3371, 7
    %v3406 = vrot.slane %v3373, 7
    %v3407 = vrot.slane %v3375, 7
    %v3408 = vsel %vm862, %v3406, %v3407
    %v3409 = vsel %vm862, %v3405, %v3406
    %v3410 = vsel %vm862, %v3404, %v3405
    %v3411 = vsel %vm862, %v3403, %v3404
    %v3412 = vsel %vm862, %v3402, %v3403
    %v3413 = vsel %vm862, %v3401, %v3402
    %v3414 = vsel %vm862, %v3400, %v3401
    %v3415 = vsel %vm862, %v3399, %v3400
    %v3416 = vsel %vm862, %v3398, %v3399
    %v3417 = vsel %vm862, %v3397, %v3398
    %v3418 = vsel %vm862, %v3396, %v3397
    %v3419 = vsel %vm862, %v3395, %v3396
    %v3420 = vsel %vm862, %v3394, %v3395
    %v3421 = vsel %vm862, %v3393, %v3394
    %v3422 = vsel %vm862, %v3392, %v3393
    %v3423 = vsel %vm862, %v3407, %v3392
    %v3424 = vmul.f32 %v3423, %v1410
    %v3425 = vmul.f32 %v3422, %v1414
    %v3426 = vmul.f32 %v3421, %v1418
    %v3427 = vmul.f32 %v3420, %v1422
    %v3428 = vmul.f32 %v3419, %v1426
    %v3429 = vmul.f32 %v3418, %v1430
    %v3430 = vmul.f32 %v3417, %v1434
    %v3431 = vmul.f32 %v3416, %v1438
    %v3432 = vmul.f32 %v3415, %v1442
    %v3433 = vmul.f32 %v3414, %v1446
    %v3434 = vmul.f32 %v3413, %v1450
    %v3435 = vmul.f32 %v3412, %v1454
    %v3436 = vmul.f32 %v3411, %v1458
    %v3437 = vmul.f32 %v3410, %v1462
    %v3438 = vmul.f32 %v3409, %v1466
    %v3439 = vmul.f32 %v3408, %v1470
    %v3440 = vadd.f32 %v3328, %v3424
    %v3441 = vadd.f32 %v3329, %v3425
    %v3442 = vadd.f32 %v3330, %v3426
    %v3443 = vadd.f32 %v3331, %v3427
    %v3444 = vadd.f32 %v3332, %v3428
    %v3445 = vadd.f32 %v3333, %v3429
    %v3446 = vadd.f32 %v3334, %v3430
    %v3447 = vadd.f32 %v3335, %v3431
    %v3448 = vadd.f32 %v3336, %v3432
    %v3449 = vadd.f32 %v3337, %v3433
    %v3450 = vadd.f32 %v3338, %v3434
    %v3451 = vadd.f32 %v3339, %v3435
    %v3452 = vadd.f32 %v3340, %v3436
    %v3453 = vadd.f32 %v3341, %v3437
    %v3454 = vadd.f32 %v3342, %v3438
    %v3455 = vadd.f32 %v3343, %v3439
    %v3456 = vmul.f32 %v3010, %v1506
    %v3457 = vmul.f32 %v3013, %v1510
    %v3458 = vmul.f32 %v3018, %v1514
    %v3459 = vmul.f32 %v3021, %v1518
    %v3460 = vmul.f32 %v3026, %v1522
    %v3461 = vmul.f32 %v3029, %v1526
    %v3462 = vmul.f32 %v3034, %v1530
    %v3463 = vmul.f32 %v3037, %v1534
    %v3464 = vmul.f32 %v3042, %v1538
    %v3465 = vmul.f32 %v3045, %v1542
    %v3466 = vmul.f32 %v3050, %v1546
    %v3467 = vmul.f32 %v3053, %v1550
    %v3468 = vmul.f32 %v3058, %v1554
    %v3469 = vmul.f32 %v3061, %v1558
    %v3470 = vmul.f32 %v3066, %v1562
    %v3471 = vmul.f32 %v3069, %v1566
    %3488 = vrot.lane.b32.xlu0 %v3456, 96
    %v3489 = vpop.permute.xlu0 %3488
    %3490 = vrot.lane.b32.xlu0 %v3457, 96
    %v3491 = vpop.permute.xlu0 %3490
    %3492 = vrot.lane.b32.xlu0 %v3458, 96
    %v3493 = vpop.permute.xlu0 %3492
    %3494 = vrot.lane.b32.xlu0 %v3459, 96
    %v3495 = vpop.permute.xlu0 %3494
    %3496 = vrot.lane.b32.xlu0 %v3460, 96
    %v3497 = vpop.permute.xlu0 %3496
    %3498 = vrot.lane.b32.xlu0 %v3461, 96
    %v3499 = vpop.permute.xlu0 %3498
    %3500 = vrot.lane.b32.xlu0 %v3462, 96
    %v3501 = vpop.permute.xlu0 %3500
    %3502 = vrot.lane.b32.xlu0 %v3463, 96
    %v3503 = vpop.permute.xlu0 %3502
    %3504 = vrot.lane.b32.xlu0 %v3464, 96
    %v3505 = vpop.permute.xlu0 %3504
    %3506 = vrot.lane.b32.xlu0 %v3465, 96
    %v3507 = vpop.permute.xlu0 %3506
    %3508 = vrot.lane.b32.xlu0 %v3466, 96
    %v3509 = vpop.permute.xlu0 %3508
    %3510 = vrot.lane.b32.xlu0 %v3467, 96
    %v3511 = vpop.permute.xlu0 %3510
    %3512 = vrot.lane.b32.xlu0 %v3468, 96
    %v3513 = vpop.permute.xlu0 %3512
    %3514 = vrot.lane.b32.xlu0 %v3469, 96
    %v3515 = vpop.permute.xlu0 %3514
    %3516 = vrot.lane.b32.xlu0 %v3470, 96
    %v3517 = vpop.permute.xlu0 %3516
    %3518 = vrot.lane.b32.xlu0 %v3471, 96
    %v3519 = vpop.permute.xlu0 %3518
    %v3536 = vadd.f32 %v3440, %v3489
    %v3537 = vadd.f32 %v3441, %v3491
    %v3538 = vadd.f32 %v3442, %v3493
    %v3539 = vadd.f32 %v3443, %v3495
    %v3540 = vadd.f32 %v3444, %v3497
    %v3541 = vadd.f32 %v3445, %v3499
    %v3542 = vadd.f32 %v3446, %v3501
    %v3543 = vadd.f32 %v3447, %v3503
    %v3544 = vadd.f32 %v3448, %v3505
    %v3545 = vadd.f32 %v3449, %v3507
    %v3546 = vadd.f32 %v3450, %v3509
    %v3547 = vadd.f32 %v3451, %v3511
    %v3548 = vadd.f32 %v3452, %v3513
    %v3549 = vadd.f32 %v3453, %v3515
    %v3550 = vadd.f32 %v3454, %v3517
    %v3551 = vadd.f32 %v3455, %v3519
    %3552 = vrot.lane.b32.xlu0 %v3010, 88
    %v3553 = vpop.permute.xlu0 %3552
    %3554 = vrot.lane.b32.xlu0 %v3013, 88
    %v3555 = vpop.permute.xlu0 %3554
    %3556 = vrot.lane.b32.xlu0 %v3018, 88
    %v3557 = vpop.permute.xlu0 %3556
    %3558 = vrot.lane.b32.xlu0 %v3021, 88
    %v3559 = vpop.permute.xlu0 %3558
    %3560 = vrot.lane.b32.xlu0 %v3026, 88
    %v3561 = vpop.permute.xlu0 %3560
    %3562 = vrot.lane.b32.xlu0 %v3029, 88
    %v3563 = vpop.permute.xlu0 %3562
    %3564 = vrot.lane.b32.xlu0 %v3034, 88
    %v3565 = vpop.permute.xlu0 %3564
    %3566 = vrot.lane.b32.xlu0 %v3037, 88
    %v3567 = vpop.permute.xlu0 %3566
    %3568 = vrot.lane.b32.xlu0 %v3042, 88
    %v3569 = vpop.permute.xlu0 %3568
    %3570 = vrot.lane.b32.xlu0 %v3045, 88
    %v3571 = vpop.permute.xlu0 %3570
    %3572 = vrot.lane.b32.xlu0 %v3050, 88
    %v3573 = vpop.permute.xlu0 %3572
    %3574 = vrot.lane.b32.xlu0 %v3053, 88
    %v3575 = vpop.permute.xlu0 %3574
    %3576 = vrot.lane.b32.xlu0 %v3058, 88
    %v3577 = vpop.permute.xlu0 %3576
    %3578 = vrot.lane.b32.xlu0 %v3061, 88
    %v3579 = vpop.permute.xlu0 %3578
    %3580 = vrot.lane.b32.xlu0 %v3066, 88
    %v3581 = vpop.permute.xlu0 %3580
    %3582 = vrot.lane.b32.xlu0 %v3069, 88
    %v3583 = vpop.permute.xlu0 %3582
    %v3600 = vrot.slane %v3553, 1
    %v3601 = vrot.slane %v3555, 1
    %v3602 = vrot.slane %v3557, 1
    %v3603 = vrot.slane %v3559, 1
    %v3604 = vrot.slane %v3561, 1
    %v3605 = vrot.slane %v3563, 1
    %v3606 = vrot.slane %v3565, 1
    %v3607 = vrot.slane %v3567, 1
    %v3608 = vrot.slane %v3569, 1
    %v3609 = vrot.slane %v3571, 1
    %v3610 = vrot.slane %v3573, 1
    %v3611 = vrot.slane %v3575, 1
    %v3612 = vrot.slane %v3577, 1
    %v3613 = vrot.slane %v3579, 1
    %v3614 = vrot.slane %v3581, 1
    %v3615 = vrot.slane %v3583, 1
    %v3616 = vsel %vm1215, %v3614, %v3615
    %v3617 = vsel %vm1215, %v3613, %v3614
    %v3618 = vsel %vm1215, %v3612, %v3613
    %v3619 = vsel %vm1215, %v3611, %v3612
    %v3620 = vsel %vm1215, %v3610, %v3611
    %v3621 = vsel %vm1215, %v3609, %v3610
    %v3622 = vsel %vm1215, %v3608, %v3609
    %v3623 = vsel %vm1215, %v3607, %v3608
    %v3624 = vsel %vm1215, %v3606, %v3607
    %v3625 = vsel %vm1215, %v3605, %v3606
    %v3626 = vsel %vm1215, %v3604, %v3605
    %v3627 = vsel %vm1215, %v3603, %v3604
    %v3628 = vsel %vm1215, %v3602, %v3603
    %v3629 = vsel %vm1215, %v3601, %v3602
    %v3630 = vsel %vm1215, %v3600, %v3601
    %v3631 = vsel %vm1215, %v3615, %v3600
    %v3632 = vmul.f32 %v3630, %v1746
    %v3633 = vmul.f32 %v3629, %v1750
    %v3634 = vmul.f32 %v3628, %v1754
    %v3635 = vmul.f32 %v3627, %v1758
    %v3636 = vmul.f32 %v3626, %v1762
    %v3637 = vmul.f32 %v3625, %v1766
    %v3638 = vmul.f32 %v3624, %v1770
    %v3639 = vmul.f32 %v3623, %v1774
    %v3640 = vmul.f32 %v3622, %v1778
    %v3641 = vmul.f32 %v3621, %v1782
    %v3642 = vmul.f32 %v3620, %v1786
    %v3643 = vmul.f32 %v3619, %v1790
    %v3644 = vmul.f32 %v3618, %v1794
    %v3645 = vmul.f32 %v3617, %v1798
    %v3646 = vmul.f32 %v3616, %v1802
    %v3647 = vmul.f32 %v3631, %v1806
    %v3648 = vadd.f32 %v3536, %v3632
    %v3649 = vadd.f32 %v3537, %v3633
    %v3650 = vadd.f32 %v3538, %v3634
    %v3651 = vadd.f32 %v3539, %v3635
    %v3652 = vadd.f32 %v3540, %v3636
    %v3653 = vadd.f32 %v3541, %v3637
    %v3654 = vadd.f32 %v3542, %v3638
    %v3655 = vadd.f32 %v3543, %v3639
    %v3656 = vadd.f32 %v3544, %v3640
    %v3657 = vadd.f32 %v3545, %v3641
    %v3658 = vadd.f32 %v3546, %v3642
    %v3659 = vadd.f32 %v3547, %v3643
    %v3660 = vadd.f32 %v3548, %v3644
    %v3661 = vadd.f32 %v3549, %v3645
    %v3662 = vadd.f32 %v3550, %v3646
    %v3663 = vadd.f32 %v3551, %v3647
    %3664 = vrot.lane.b32.xlu0 %v3010, 80
    %v3665 = vpop.permute.xlu0 %3664
    %3666 = vrot.lane.b32.xlu0 %v3013, 80
    %v3667 = vpop.permute.xlu0 %3666
    %3668 = vrot.lane.b32.xlu0 %v3018, 80
    %v3669 = vpop.permute.xlu0 %3668
    %3670 = vrot.lane.b32.xlu0 %v3021, 80
    %v3671 = vpop.permute.xlu0 %3670
    %3672 = vrot.lane.b32.xlu0 %v3026, 80
    %v3673 = vpop.permute.xlu0 %3672
    %3674 = vrot.lane.b32.xlu0 %v3029, 80
    %v3675 = vpop.permute.xlu0 %3674
    %3676 = vrot.lane.b32.xlu0 %v3034, 80
    %v3677 = vpop.permute.xlu0 %3676
    %3678 = vrot.lane.b32.xlu0 %v3037, 80
    %v3679 = vpop.permute.xlu0 %3678
    %3680 = vrot.lane.b32.xlu0 %v3042, 80
    %v3681 = vpop.permute.xlu0 %3680
    %3682 = vrot.lane.b32.xlu0 %v3045, 80
    %v3683 = vpop.permute.xlu0 %3682
    %3684 = vrot.lane.b32.xlu0 %v3050, 80
    %v3685 = vpop.permute.xlu0 %3684
    %3686 = vrot.lane.b32.xlu0 %v3053, 80
    %v3687 = vpop.permute.xlu0 %3686
    %3688 = vrot.lane.b32.xlu0 %v3058, 80
    %v3689 = vpop.permute.xlu0 %3688
    %3690 = vrot.lane.b32.xlu0 %v3061, 80
    %v3691 = vpop.permute.xlu0 %3690
    %3692 = vrot.lane.b32.xlu0 %v3066, 80
    %v3693 = vpop.permute.xlu0 %3692
    %3694 = vrot.lane.b32.xlu0 %v3069, 80
    %v3695 = vpop.permute.xlu0 %3694
    %v3712 = vrot.slane %v3665, 7
    %v3713 = vrot.slane %v3667, 7
    %v3714 = vrot.slane %v3669, 7
    %v3715 = vrot.slane %v3671, 7
    %v3716 = vrot.slane %v3673, 7
    %v3717 = vrot.slane %v3675, 7
    %v3718 = vrot.slane %v3677, 7
    %v3719 = vrot.slane %v3679, 7
    %v3720 = vrot.slane %v3681, 7
    %v3721 = vrot.slane %v3683, 7
    %v3722 = vrot.slane %v3685, 7
    %v3723 = vrot.slane %v3687, 7
    %v3724 = vrot.slane %v3689, 7
    %v3725 = vrot.slane %v3691, 7
    %v3726 = vrot.slane %v3693, 7
    %v3727 = vrot.slane %v3695, 7
    %v3728 = vsel %vm862, %v3726, %v3727
    %v3729 = vsel %vm862, %v3725, %v3726
    %v3730 = vsel %vm862, %v3724, %v3725
    %v3731 = vsel %vm862, %v3723, %v3724
    %v3732 = vsel %vm862, %v3722, %v3723
    %v3733 = vsel %vm862, %v3721, %v3722
    %v3734 = vsel %vm862, %v3720, %v3721
    %v3735 = vsel %vm862, %v3719, %v3720
    %v3736 = vsel %vm862, %v3718, %v3719
    %v3737 = vsel %vm862, %v3717, %v3718
    %v3738 = vsel %vm862, %v3716, %v3717
    %v3739 = vsel %vm862, %v3715, %v3716
    %v3740 = vsel %vm862, %v3714, %v3715
    %v3741 = vsel %vm862, %v3713, %v3714
    %v3742 = vsel %vm862, %v3712, %v3713
    %v3743 = vsel %vm862, %v3727, %v3712
    %v3744 = vmul.f32 %v3742, %v1922
    %v3745 = vmul.f32 %v3741, %v1926
    %v3746 = vmul.f32 %v3740, %v1930
    %v3747 = vmul.f32 %v3739, %v1934
    %v3748 = vmul.f32 %v3738, %v1938
    %v3749 = vmul.f32 %v3737, %v1942
    %v3750 = vmul.f32 %v3736, %v1946
    %v3751 = vmul.f32 %v3735, %v1950
    %v3752 = vmul.f32 %v3734, %v1954
    %v3753 = vmul.f32 %v3733, %v1958
    %v3754 = vmul.f32 %v3732, %v1962
    %v3755 = vmul.f32 %v3731, %v1966
    %v3756 = vmul.f32 %v3730, %v1970
    %v3757 = vmul.f32 %v3729, %v1974
    %v3758 = vmul.f32 %v3728, %v1978
    %v3759 = vmul.f32 %v3743, %v1982
    %v3760 = vadd.f32 %v3648, %v3744
    %v3761 = vadd.f32 %v3649, %v3745
    %v3762 = vadd.f32 %v3650, %v3746
    %v3763 = vadd.f32 %v3651, %v3747
    %v3764 = vadd.f32 %v3652, %v3748
    %v3765 = vadd.f32 %v3653, %v3749
    %v3766 = vadd.f32 %v3654, %v3750
    %v3767 = vadd.f32 %v3655, %v3751
    %v3768 = vadd.f32 %v3656, %v3752
    %v3769 = vadd.f32 %v3657, %v3753
    %v3770 = vadd.f32 %v3658, %v3754
    %v3771 = vadd.f32 %v3659, %v3755
    %v3772 = vadd.f32 %v3660, %v3756
    %v3773 = vadd.f32 %v3661, %v3757
    %v3774 = vadd.f32 %v3662, %v3758
    %v3775 = vadd.f32 %v3663, %v3759
    %3776 = vrot.lane.b32.xlu0 %v3010, 72
    %v3777 = vpop.permute.xlu0 %3776
    %3778 = vrot.lane.b32.xlu0 %v3013, 72
    %v3779 = vpop.permute.xlu0 %3778
    %3780 = vrot.lane.b32.xlu0 %v3018, 72
    %v3781 = vpop.permute.xlu0 %3780
    %3782 = vrot.lane.b32.xlu0 %v3021, 72
    %v3783 = vpop.permute.xlu0 %3782
    %3784 = vrot.lane.b32.xlu0 %v3026, 72
    %v3785 = vpop.permute.xlu0 %3784
    %3786 = vrot.lane.b32.xlu0 %v3029, 72
    %v3787 = vpop.permute.xlu0 %3786
    %3788 = vrot.lane.b32.xlu0 %v3034, 72
    %v3789 = vpop.permute.xlu0 %3788
    %3790 = vrot.lane.b32.xlu0 %v3037, 72
    %v3791 = vpop.permute.xlu0 %3790
    %3792 = vrot.lane.b32.xlu0 %v3042, 72
    %v3793 = vpop.permute.xlu0 %3792
    %3794 = vrot.lane.b32.xlu0 %v3045, 72
    %v3795 = vpop.permute.xlu0 %3794
    %3796 = vrot.lane.b32.xlu0 %v3050, 72
    %v3797 = vpop.permute.xlu0 %3796
    %3798 = vrot.lane.b32.xlu0 %v3053, 72
    %v3799 = vpop.permute.xlu0 %3798
    %3800 = vrot.lane.b32.xlu0 %v3058, 72
    %v3801 = vpop.permute.xlu0 %3800
    %3802 = vrot.lane.b32.xlu0 %v3061, 72
    %v3803 = vpop.permute.xlu0 %3802
    %3804 = vrot.lane.b32.xlu0 %v3066, 72
    %v3805 = vpop.permute.xlu0 %3804
    %3806 = vrot.lane.b32.xlu0 %v3069, 72
    %v3807 = vpop.permute.xlu0 %3806
    %v3824 = vmul.f32 %v3779, %v2066
    %v3825 = vmul.f32 %v3781, %v2070
    %v3826 = vmul.f32 %v3783, %v2074
    %v3827 = vmul.f32 %v3785, %v2078
    %v3828 = vmul.f32 %v3787, %v2082
    %v3829 = vmul.f32 %v3789, %v2086
    %v3830 = vmul.f32 %v3791, %v2090
    %v3831 = vmul.f32 %v3793, %v2094
    %v3832 = vmul.f32 %v3795, %v2098
    %v3833 = vmul.f32 %v3797, %v2102
    %v3834 = vmul.f32 %v3799, %v2106
    %v3835 = vmul.f32 %v3801, %v2110
    %v3836 = vmul.f32 %v3803, %v2114
    %v3837 = vmul.f32 %v3805, %v2118
    %v3838 = vmul.f32 %v3807, %v2122
    %v3839 = vmul.f32 %v3777, %v2126
    %v3840 = vadd.f32 %v3760, %v3824
    %v3841 = vadd.f32 %v3761, %v3825
    %v3842 = vadd.f32 %v3762, %v3826
    %v3843 = vadd.f32 %v3763, %v3827
    %v3844 = vadd.f32 %v3764, %v3828
    %v3845 = vadd.f32 %v3765, %v3829
    %v3846 = vadd.f32 %v3766, %v3830
    %v3847 = vadd.f32 %v3767, %v3831
    %v3848 = vadd.f32 %v3768, %v3832
    %v3849 = vadd.f32 %v3769, %v3833
    %v3850 = vadd.f32 %v3770, %v3834
    %v3851 = vadd.f32 %v3771, %v3835
    %v3852 = vadd.f32 %v3772, %v3836
    %v3853 = vadd.f32 %v3773, %v3837
    %v3854 = vadd.f32 %v3774, %v3838
    %v3855 = vadd.f32 %v3775, %v3839
    %3856 = vrot.lane.b32.xlu0 %v3010, 64
    %v3857 = vpop.permute.xlu0 %3856
    %3858 = vrot.lane.b32.xlu0 %v3013, 64
    %v3859 = vpop.permute.xlu0 %3858
    %3860 = vrot.lane.b32.xlu0 %v3018, 64
    %v3861 = vpop.permute.xlu0 %3860
    %3862 = vrot.lane.b32.xlu0 %v3021, 64
    %v3863 = vpop.permute.xlu0 %3862
    %3864 = vrot.lane.b32.xlu0 %v3026, 64
    %v3865 = vpop.permute.xlu0 %3864
    %3866 = vrot.lane.b32.xlu0 %v3029, 64
    %v3867 = vpop.permute.xlu0 %3866
    %3868 = vrot.lane.b32.xlu0 %v3034, 64
    %v3869 = vpop.permute.xlu0 %3868
    %3870 = vrot.lane.b32.xlu0 %v3037, 64
    %v3871 = vpop.permute.xlu0 %3870
    %3872 = vrot.lane.b32.xlu0 %v3042, 64
    %v3873 = vpop.permute.xlu0 %3872
    %3874 = vrot.lane.b32.xlu0 %v3045, 64
    %v3875 = vpop.permute.xlu0 %3874
    %3876 = vrot.lane.b32.xlu0 %v3050, 64
    %v3877 = vpop.permute.xlu0 %3876
    %3878 = vrot.lane.b32.xlu0 %v3053, 64
    %v3879 = vpop.permute.xlu0 %3878
    %3880 = vrot.lane.b32.xlu0 %v3058, 64
    %v3881 = vpop.permute.xlu0 %3880
    %3882 = vrot.lane.b32.xlu0 %v3061, 64
    %v3883 = vpop.permute.xlu0 %3882
    %3884 = vrot.lane.b32.xlu0 %v3066, 64
    %v3885 = vpop.permute.xlu0 %3884
    %3886 = vrot.lane.b32.xlu0 %v3069, 64
    %v3887 = vpop.permute.xlu0 %3886
    %v3904 = vrot.slane %v3857, 1
    %v3905 = vrot.slane %v3859, 1
    %v3906 = vrot.slane %v3861, 1
    %v3907 = vrot.slane %v3863, 1
    %v3908 = vrot.slane %v3865, 1
    %v3909 = vrot.slane %v3867, 1
    %v3910 = vrot.slane %v3869, 1
    %v3911 = vrot.slane %v3871, 1
    %v3912 = vrot.slane %v3873, 1
    %v3913 = vrot.slane %v3875, 1
    %v3914 = vrot.slane %v3877, 1
    %v3915 = vrot.slane %v3879, 1
    %v3916 = vrot.slane %v3881, 1
    %v3917 = vrot.slane %v3883, 1
    %v3918 = vrot.slane %v3885, 1
    %v3919 = vrot.slane %v3887, 1
    %v3920 = vsel %vm1215, %v3918, %v3919
    %v3921 = vsel %vm1215, %v3917, %v3918
    %v3922 = vsel %vm1215, %v3916, %v3917
    %v3923 = vsel %vm1215, %v3915, %v3916
    %v3924 = vsel %vm1215, %v3914, %v3915
    %v3925 = vsel %vm1215, %v3913, %v3914
    %v3926 = vsel %vm1215, %v3912, %v3913
    %v3927 = vsel %vm1215, %v3911, %v3912
    %v3928 = vsel %vm1215, %v3910, %v3911
    %v3929 = vsel %vm1215, %v3909, %v3910
    %v3930 = vsel %vm1215, %v3908, %v3909
    %v3931 = vsel %vm1215, %v3907, %v3908
    %v3932 = vsel %vm1215, %v3906, %v3907
    %v3933 = vsel %vm1215, %v3905, %v3906
    %v3934 = vsel %vm1215, %v3904, %v3905
    %v3935 = vsel %vm1215, %v3919, %v3904
    %v3936 = vmul.f32 %v3933, %v2242
    %v3937 = vmul.f32 %v3932, %v2246
    %v3938 = vmul.f32 %v3931, %v2250
    %v3939 = vmul.f32 %v3930, %v2254
    %v3940 = vmul.f32 %v3929, %v2258
    %v3941 = vmul.f32 %v3928, %v2262
    %v3942 = vmul.f32 %v3927, %v2266
    %v3943 = vmul.f32 %v3926, %v2270
    %v3944 = vmul.f32 %v3925, %v2274
    %v3945 = vmul.f32 %v3924, %v2278
    %v3946 = vmul.f32 %v3923, %v2282
    %v3947 = vmul.f32 %v3922, %v2286
    %v3948 = vmul.f32 %v3921, %v2290
    %v3949 = vmul.f32 %v3920, %v2294
    %v3950 = vmul.f32 %v3935, %v2298
    %v3951 = vmul.f32 %v3934, %v2302
    %v3952 = vadd.f32 %v3840, %v3936
    %v3953 = vadd.f32 %v3841, %v3937
    %v3954 = vadd.f32 %v3842, %v3938
    %v3955 = vadd.f32 %v3843, %v3939
    %v3956 = vadd.f32 %v3844, %v3940
    %v3957 = vadd.f32 %v3845, %v3941
    %v3958 = vadd.f32 %v3846, %v3942
    %v3959 = vadd.f32 %v3847, %v3943
    %v3960 = vadd.f32 %v3848, %v3944
    %v3961 = vadd.f32 %v3849, %v3945
    %v3962 = vadd.f32 %v3850, %v3946
    %v3963 = vadd.f32 %v3851, %v3947
    %v3964 = vadd.f32 %v3852, %v3948
    %v3965 = vadd.f32 %v3853, %v3949
    %v3966 = vadd.f32 %v3854, %v3950
    %v3967 = vadd.f32 %v3855, %v3951
    %3984 = vrot.lane.b32.xlu0 %v3952, 72
    %v3985 = vpop.permute.xlu0 %3984
    %3986 = vrot.lane.b32.xlu0 %v3953, 72
    %v3987 = vpop.permute.xlu0 %3986
    %3988 = vrot.lane.b32.xlu0 %v3954, 72
    %v3989 = vpop.permute.xlu0 %3988
    %3990 = vrot.lane.b32.xlu0 %v3955, 72
    %v3991 = vpop.permute.xlu0 %3990
    %3992 = vrot.lane.b32.xlu0 %v3956, 72
    %v3993 = vpop.permute.xlu0 %3992
    %3994 = vrot.lane.b32.xlu0 %v3957, 72
    %v3995 = vpop.permute.xlu0 %3994
    %3996 = vrot.lane.b32.xlu0 %v3958, 72
    %v3997 = vpop.permute.xlu0 %3996
    %3998 = vrot.lane.b32.xlu0 %v3959, 72
    %v3999 = vpop.permute.xlu0 %3998
    %4000 = vrot.lane.b32.xlu0 %v3960, 72
    %v4001 = vpop.permute.xlu0 %4000
    %4002 = vrot.lane.b32.xlu0 %v3961, 72
    %v4003 = vpop.permute.xlu0 %4002
    %4004 = vrot.lane.b32.xlu0 %v3962, 72
    %v4005 = vpop.permute.xlu0 %4004
    %4006 = vrot.lane.b32.xlu0 %v3963, 72
    %v4007 = vpop.permute.xlu0 %4006
    %4008 = vrot.lane.b32.xlu0 %v3964, 72
    %v4009 = vpop.permute.xlu0 %4008
    %4010 = vrot.lane.b32.xlu0 %v3965, 72
    %v4011 = vpop.permute.xlu0 %4010
    %4012 = vrot.lane.b32.xlu0 %v3966, 72
    %v4013 = vpop.permute.xlu0 %4012
    %4014 = vrot.lane.b32.xlu0 %v3967, 72
    %v4015 = vpop.permute.xlu0 %4014
    %vm4032 = vcmask 654912
    %4033 = vst.msk [vmem:[#allocation2] sm:$0xff] %vm4032, %v3985
    %4034 = vst.msk [vmem:[#allocation2 + $0x8] sm:$0xff] %vm4032, %v3987
    %4035 = vst.msk [vmem:[#allocation2 + $0x10] sm:$0xff] %vm4032, %v3989
    %4036 = vst.msk [vmem:[#allocation2 + $0x18] sm:$0xff] %vm4032, %v3991
    %4037 = vst.msk [vmem:[#allocation2 + $0x20] sm:$0xff] %vm4032, %v3993
    %4038 = vst.msk [vmem:[#allocation2 + $0x28] sm:$0xff] %vm4032, %v3995
    %4039 = vst.msk [vmem:[#allocation2 + $0x30] sm:$0xff] %vm4032, %v3997
    %4040 = vst.msk [vmem:[#allocation2 + $0x38] sm:$0xff] %vm4032, %v3999
    %4041 = vst.msk [vmem:[#allocation2 + $0x40] sm:$0xff] %vm4032, %v4001
    %4042 = vst.msk [vmem:[#allocation2 + $0x48] sm:$0xff] %vm4032, %v4003
    %4043 = vst.msk [vmem:[#allocation2 + $0x50] sm:$0xff] %vm4032, %v4005
    %4044 = vst.msk [vmem:[#allocation2 + $0x58] sm:$0xff] %vm4032, %v4007
    %4045 = vst.msk [vmem:[#allocation2 + $0x60] sm:$0xff] %vm4032, %v4009
    %4046 = vst.msk [vmem:[#allocation2 + $0x68] sm:$0xff] %vm4032, %v4011
    %4047 = vst.msk [vmem:[#allocation2 + $0x70] sm:$0xff] %vm4032, %v4013
    %4048 = vst.msk [vmem:[#allocation2 + $0x78] sm:$0xff] %vm4032, %v4015
    %v4049 = vld [vmem:[#allocation2] sm:$0xff]
    %v4050 = vld [vmem:[#allocation2 + $0x8] sm:$0xff]
    %v4051 = vld [vmem:[#allocation2 + $0x10] sm:$0xff]
    %v4052 = vld [vmem:[#allocation2 + $0x18] sm:$0xff]
    %v4053 = vld [vmem:[#allocation2 + $0x20] sm:$0xff]
    %v4054 = vld [vmem:[#allocation2 + $0x28] sm:$0xff]
    %v4055 = vld [vmem:[#allocation2 + $0x30] sm:$0xff]
    %v4056 = vld [vmem:[#allocation2 + $0x38] sm:$0xff]
    %v4057 = vld [vmem:[#allocation2 + $0x40] sm:$0xff]
    %v4058 = vld [vmem:[#allocation2 + $0x48] sm:$0xff]
    %v4059 = vld [vmem:[#allocation2 + $0x50] sm:$0xff]
    %v4060 = vld [vmem:[#allocation2 + $0x58] sm:$0xff]
    %v4061 = vld [vmem:[#allocation2 + $0x60] sm:$0xff]
    %v4062 = vld [vmem:[#allocation2 + $0x68] sm:$0xff]
    %v4063 = vld [vmem:[#allocation2 + $0x70] sm:$0xff]
    %v4064 = vld [vmem:[#allocation2 + $0x78] sm:$0xff]
    %vm4065 = vcmask 654336
    %v4066 = vsel %vm4065, %v4049, 0.0
    %v4067 = vsel %vm4065, %v4050, 0.0
    %v4068 = vadd.f32 %v4066, %v4067
    %v4069 = vsel %vm4065, %v4051, 0.0
    %v4070 = vadd.f32 %v4068, %v4069
    %v4071 = vsel %vm4065, %v4052, 0.0
    %v4072 = vadd.f32 %v4070, %v4071
    %v4073 = vsel %vm4065, %v4053, 0.0
    %v4074 = vadd.f32 %v4072, %v4073
    %v4075 = vsel %vm4065, %v4054, 0.0
    %v4076 = vadd.f32 %v4074, %v4075
    %v4077 = vsel %vm4065, %v4055, 0.0
    %v4078 = vadd.f32 %v4076, %v4077
    %v4079 = vsel %vm4065, %v4056, 0.0
    %v4080 = vadd.f32 %v4078, %v4079
    %v4081 = vsel %vm4065, %v4057, 0.0
    %v4082 = vadd.f32 %v4080, %v4081
    %v4083 = vsel %vm4065, %v4058, 0.0
    %v4084 = vadd.f32 %v4082, %v4083
    %v4085 = vsel %vm4065, %v4059, 0.0
    %v4086 = vadd.f32 %v4084, %v4085
    %v4087 = vsel %vm4065, %v4060, 0.0
    %v4088 = vadd.f32 %v4086, %v4087
    %v4089 = vsel %vm4065, %v4061, 0.0
    %v4090 = vadd.f32 %v4088, %v4089
    %v4091 = vsel %vm4065, %v4062, 0.0
    %v4092 = vadd.f32 %v4090, %v4091
    %v4093 = vsel %vm4065, %v4063, 0.0
    %v4094 = vadd.f32 %v4092, %v4093
    %v4095 = vsel %vm4065, %v4064, 0.0
    %v4096 = vadd.f32 %v4094, %v4095
    %v4097 = vrot.slane %v4096, 4
    %v4098 = vadd.f32 %v4096, %v4097
    %v4099 = vrot.slane %v4098, 2
    %v4100 = vadd.f32 %v4098, %v4099
    %v4101 = vrot.slane %v4100, 1
    %v4102 = vadd.f32 %v4100, %v4101
    %v4103 = vmul.f32 %v4102, 0.0078125
    %v4104 = vmul.f32 %v4049, %v4049
    %v4105 = vmul.f32 %v4050, %v4050
    %v4106 = vmul.f32 %v4051, %v4051
    %v4107 = vmul.f32 %v4052, %v4052
    %v4108 = vmul.f32 %v4053, %v4053
    %v4109 = vmul.f32 %v4054, %v4054
    %v4110 = vmul.f32 %v4055, %v4055
    %v4111 = vmul.f32 %v4056, %v4056
    %v4112 = vmul.f32 %v4057, %v4057
    %v4113 = vmul.f32 %v4058, %v4058
    %v4114 = vmul.f32 %v4059, %v4059
    %v4115 = vmul.f32 %v4060, %v4060
    %v4116 = vmul.f32 %v4061, %v4061
    %v4117 = vmul.f32 %v4062, %v4062
    %v4118 = vmul.f32 %v4063, %v4063
    %v4119 = vmul.f32 %v4064, %v4064
    %v4120 = vsel %vm4065, %v4104, 0.0
    %v4121 = vsel %vm4065, %v4105, 0.0
    %v4122 = vadd.f32 %v4120, %v4121
    %v4123 = vsel %vm4065, %v4106, 0.0
    %v4124 = vadd.f32 %v4122, %v4123
    %v4125 = vsel %vm4065, %v4107, 0.0
    %v4126 = vadd.f32 %v4124, %v4125
    %v4127 = vsel %vm4065, %v4108, 0.0
    %v4128 = vadd.f32 %v4126, %v4127
    %v4129 = vsel %vm4065, %v4109, 0.0
    %v4130 = vadd.f32 %v4128, %v4129
    %v4131 = vsel %vm4065, %v4110, 0.0
    %v4132 = vadd.f32 %v4130, %v4131
    %v4133 = vsel %vm4065, %v4111, 0.0
    %v4134 = vadd.f32 %v4132, %v4133
    %v4135 = vsel %vm4065, %v4112, 0.0
    %v4136 = vadd.f32 %v4134, %v4135
    %v4137 = vsel %vm4065, %v4113, 0.0
    %v4138 = vadd.f32 %v4136, %v4137
    %v4139 = vsel %vm4065, %v4114, 0.0
    %v4140 = vadd.f32 %v4138, %v4139
    %v4141 = vsel %vm4065, %v4115, 0.0
    %v4142 = vadd.f32 %v4140, %v4141
    %v4143 = vsel %vm4065, %v4116, 0.0
    %v4144 = vadd.f32 %v4142, %v4143
    %v4145 = vsel %vm4065, %v4117, 0.0
    %v4146 = vadd.f32 %v4144, %v4145
    %v4147 = vsel %vm4065, %v4118, 0.0
    %v4148 = vadd.f32 %v4146, %v4147
    %v4149 = vsel %vm4065, %v4119, 0.0
    %v4150 = vadd.f32 %v4148, %v4149
    %v4151 = vrot.slane %v4150, 4
    %v4152 = vadd.f32 %v4150, %v4151
    %v4153 = vrot.slane %v4152, 2
    %v4154 = vadd.f32 %v4152, %v4153
    %v4155 = vrot.slane %v4154, 1
    %v4156 = vadd.f32 %v4154, %v4155
    %v4157 = vmul.f32 %v4156, 0.0078125
    %v4158 = vmul.f32 %v4103, %v4103
    %v4159 = vsub.f32 %v4157, %v4158
    %v4160 = vmax.f32 %v4159, 0.0
    %v4161 = vld [vmem:[%s31] sm:$0x1]
    %v4162 = vadd.f32 %v4160, 1e-05
    %v4163 = vrsqrt.pop %v4162
    %v4164 = vmul.f32 %v4161, %v4163
    %v4165 = vld [vmem:[%s33] sm:$0x1]
    %v4166 = vmul.f32 %v4103, %v4164
    %v4167 = vsub.f32 %v4165, %v4166
    %v4169 = vlaneseq
    %v4170 = vshrl.u32 %v4169, 7
    %v4171 = vsub.s32 0, %v4170
    %v4172 = vrot.slane %v4164, %v4171
    %v4174 = vmul.f32 %v4049, %v4172
    %v4175 = vmul.f32 %v4050, %v4172
    %v4176 = vmul.f32 %v4051, %v4172
    %v4177 = vmul.f32 %v4052, %v4172
    %v4178 = vmul.f32 %v4053, %v4172
    %v4179 = vmul.f32 %v4054, %v4172
    %v4180 = vmul.f32 %v4055, %v4172
    %v4181 = vmul.f32 %v4056, %v4172
    %v4182 = vmul.f32 %v4057, %v4172
    %v4183 = vmul.f32 %v4058, %v4172
    %v4184 = vmul.f32 %v4059, %v4172
    %v4185 = vmul.f32 %v4060, %v4172
    %v4186 = vmul.f32 %v4061, %v4172
    %v4187 = vmul.f32 %v4062, %v4172
    %v4188 = vmul.f32 %v4063, %v4172
    %v4189 = vmul.f32 %v4064, %v4172
    %v4191 = vlaneseq
    %v4192 = vshrl.u32 %v4191, 7
    %v4193 = vsub.s32 0, %v4192
    %v4194 = vrot.slane %v4167, %v4193
    %v4196 = vadd.f32 %v4174, %v4194
    %v4197 = vadd.f32 %v4175, %v4194
    %v4198 = vadd.f32 %v4176, %v4194
    %v4199 = vadd.f32 %v4177, %v4194
    %v4200 = vadd.f32 %v4178, %v4194
    %v4201 = vadd.f32 %v4179, %v4194
    %v4202 = vadd.f32 %v4180, %v4194
    %v4203 = vadd.f32 %v4181, %v4194
    %v4204 = vadd.f32 %v4182, %v4194
    %v4205 = vadd.f32 %v4183, %v4194
    %v4206 = vadd.f32 %v4184, %v4194
    %v4207 = vadd.f32 %v4185, %v4194
    %v4208 = vadd.f32 %v4186, %v4194
    %v4209 = vadd.f32 %v4187, %v4194
    %v4210 = vadd.f32 %v4188, %v4194
    %v4211 = vadd.f32 %v4189, %v4194
    %v4212 = vmax.f32 %v4196, 0.0
    %v4213 = vmax.f32 %v4197, 0.0
    %v4214 = vmax.f32 %v4198, 0.0
    %v4215 = vmax.f32 %v4199, 0.0
    %v4216 = vmax.f32 %v4200, 0.0
    %v4217 = vmax.f32 %v4201, 0.0
    %v4218 = vmax.f32 %v4202, 0.0
    %v4219 = vmax.f32 %v4203, 0.0
    %v4220 = vmax.f32 %v4204, 0.0
    %v4221 = vmax.f32 %v4205, 0.0
    %v4222 = vmax.f32 %v4206, 0.0
    %v4223 = vmax.f32 %v4207, 0.0
    %v4224 = vmax.f32 %v4208, 0.0
    %v4225 = vmax.f32 %v4209, 0.0
    %v4226 = vmax.f32 %v4210, 0.0
    %v4227 = vmax.f32 %v4211, 0.0
    %v4228 = vpack.c.bf16 %v4213, %v4212
    %v4229 = vpack.c.bf16 %v4215, %v4214
    %v4230 = vpack.c.bf16 %v4217, %v4216
    %v4231 = vpack.c.bf16 %v4219, %v4218
    %v4232 = vpack.c.bf16 %v4221, %v4220
    %v4233 = vpack.c.bf16 %v4223, %v4222
    %v4234 = vpack.c.bf16 %v4225, %v4224
    %v4235 = vpack.c.bf16 %v4227, %v4226
    %v4236 = vld [vmem:[%s35] sm:$0xf]
    %v4237 = vld [vmem:[%s35 + $0x4] sm:$0xf]
    %v4238 = vld [vmem:[%s35 + $0x8] sm:$0xf]
    %v4239 = vld [vmem:[%s35 + $0xc] sm:$0xf]
    %v4240 = vld [vmem:[%s35 + $0x10] sm:$0xf]
    %v4241 = vld [vmem:[%s35 + $0x14] sm:$0xf]
    %v4242 = vld [vmem:[%s35 + $0x18] sm:$0xf]
    %v4243 = vld [vmem:[%s35 + $0x1c] sm:$0xf]
    %v4244 = vld [vmem:[%s35 + $0x20] sm:$0xf]
    %v4245 = vld [vmem:[%s35 + $0x24] sm:$0xf]
    %v4256 = vunpack.c.l.b16 %v4236
    %v4257 = vunpack.c.l.b16 %v4237
    %v4258 = vunpack.c.l.b16 %v4238
    %v4259 = vunpack.c.l.b16 %v4239
    %v4260 = vunpack.c.l.b16 %v4240
    %v4261 = vunpack.c.l.b16 %v4241
    %v4262 = vunpack.c.l.b16 %v4242
    %v4263 = vunpack.c.l.b16 %v4243
    %v4264 = vunpack.c.l.b16 %v4244
    %v4265 = vunpack.c.l.b16 %v4245
    %v4266 = vpack.c.b16 %v4257, %v4256
    %v4267 = vpack.c.b16 %v4259, %v4258
    %v4268 = vpack.c.b16 %v4261, %v4260
    %v4269 = vpack.c.b16 %v4263, %v4262
    %v4270 = vpack.c.b16 %v4265, %v4264
    %v4277 = vsel %vm4065, %v4228, 0
    %v4280 = vsel %vm4065, %v4229, 0
    %v4283 = vsel %vm4065, %v4230, 0
    %v4286 = vsel %vm4065, %v4231, 0
    %v4289 = vsel %vm4065, %v4232, 0
    %v4292 = vsel %vm4065, %v4233, 0
    %v4295 = vsel %vm4065, %v4234, 0
    %v4298 = vsel %vm4065, %v4235, 0
    %4300 = vmatprep.subr.bf16.mxu0 0
    %4301 = vmatpush1.bf16.msra.mxu0 %v4266
    %4302 = vmatprep.subr.bf16.mxu0 0
    %4303 = vmatpush1.bf16.msra.mxu0 %v4267
    %4304 = vmatprep.subr.bf16.mxu0 0
    %4305 = vmatpush1.bf16.msra.mxu0 %v4268
    %4306 = vmatprep.subr.bf16.mxu0 0
    %4307 = vmatpush1.bf16.msra.mxu0 %v4269
    %4308 = vmatprep.subr.bf16.mxu0 0
    %4309 = vmatpush1.bf16.msra.mxu0 %v4270
    %4310 = vmatprep.subr.bf16.mxu0 0
    %4311 = vmatpush1.bf16.msra.mxu0 0
    %4312 = vmatprep.subr.bf16.mxu0 0
    %4313 = vmatpush1.bf16.msra.mxu0 0
    %4314 = vmatprep.subr.bf16.mxu0 0
    %4315 = vmatpush1.bf16.msra.mxu0 0
    %4316 = vmatprep.subr.bf16.mxu0 0
    %4317 = vmatpush1.bf16.msra.mxu0 0
    %4318 = vmatprep.subr.bf16.mxu0 0
    %4319 = vmatpush1.bf16.msra.mxu0 0
    %4320 = vmatprep.subr.bf16.mxu0 0
    %4321 = vmatpush1.bf16.msra.mxu0 0
    %4322 = vmatprep.subr.bf16.mxu0 0
    %4323 = vmatpush1.bf16.msra.mxu0 0
    %4324 = vmatprep.subr.bf16.mxu0 0
    %4325 = vmatpush1.bf16.msra.mxu0 0
    %4326 = vmatprep.subr.bf16.mxu0 0
    %4327 = vmatpush1.bf16.msra.mxu0 0
    %4328 = vmatprep.subr.bf16.mxu0 0
    %4329 = vmatpush1.bf16.msra.mxu0 0
    %4330 = vmatprep.subr.bf16.mxu0 0
    %4331 = vmatpush1.bf16.msra.mxu0 0
    %4332 = vmatprep.mubr.bf16.mxu0 0
    %4333 = vmatmul.mubr.bf16.gmra.mrb[0].mxu0 %v4277
    %v4334 = vpop.f32.mrb[0].mxu0
    %v4335 = vadd.f32 0.0, %v4334
    %v4336 = vpop.f32.mrb[0].mxu0
    %v4337 = vpop.f32.mrb[0].mxu0
    %v4338 = vadd.f32 0.0, %v4337
    %v4339 = vpop.f32.mrb[0].mxu0
    %4340 = vmatprep.mubr.bf16.mxu0 0
    %4341 = vmatmul.mubr.bf16.gmra.mrb[0].mxu0 %v4280
    %v4342 = vpop.f32.mrb[0].mxu0
    %v4343 = vadd.f32 0.0, %v4342
    %v4344 = vpop.f32.mrb[0].mxu0
    %v4345 = vpop.f32.mrb[0].mxu0
    %v4346 = vadd.f32 0.0, %v4345
    %v4347 = vpop.f32.mrb[0].mxu0
    %4348 = vmatprep.mubr.bf16.mxu0 0
    %4349 = vmatmul.mubr.bf16.gmra.mrb[0].mxu0 %v4283
    %v4350 = vpop.f32.mrb[0].mxu0
    %v4351 = vadd.f32 0.0, %v4350
    %v4352 = vpop.f32.mrb[0].mxu0
    %v4353 = vpop.f32.mrb[0].mxu0
    %v4354 = vadd.f32 0.0, %v4353
    %v4355 = vpop.f32.mrb[0].mxu0
    %4356 = vmatprep.mubr.bf16.mxu0 0
    %4357 = vmatmul.mubr.bf16.gmra.mrb[0].mxu0 %v4286
    %v4358 = vpop.f32.mrb[0].mxu0
    %v4359 = vadd.f32 0.0, %v4358
    %v4360 = vpop.f32.mrb[0].mxu0
    %v4361 = vpop.f32.mrb[0].mxu0
    %v4362 = vadd.f32 0.0, %v4361
    %v4363 = vpop.f32.mrb[0].mxu0
    %4364 = vmatprep.mubr.bf16.mxu0 0
    %4365 = vmatmul.mubr.bf16.gmra.mrb[0].mxu0 %v4289
    %v4366 = vpop.f32.mrb[0].mxu0
    %v4367 = vadd.f32 0.0, %v4366
    %v4368 = vpop.f32.mrb[0].mxu0
    %v4369 = vpop.f32.mrb[0].mxu0
    %v4370 = vadd.f32 0.0, %v4369
    %v4371 = vpop.f32.mrb[0].mxu0
    %4372 = vmatprep.mubr.bf16.mxu0 0
    %4373 = vmatmul.mubr.bf16.gmra.mrb[0].mxu0 %v4292
    %v4374 = vpop.f32.mrb[0].mxu0
    %v4375 = vadd.f32 0.0, %v4374
    %v4376 = vpop.f32.mrb[0].mxu0
    %v4377 = vpop.f32.mrb[0].mxu0
    %v4378 = vadd.f32 0.0, %v4377
    %v4379 = vpop.f32.mrb[0].mxu0
    %4380 = vmatprep.mubr.bf16.mxu0 0
    %4381 = vmatmul.mubr.bf16.gmra.mrb[0].mxu0 %v4295
    %v4382 = vpop.f32.mrb[0].mxu0
    %v4383 = vadd.f32 0.0, %v4382
    %v4384 = vpop.f32.mrb[0].mxu0
    %v4385 = vpop.f32.mrb[0].mxu0
    %v4386 = vadd.f32 0.0, %v4385
    %v4387 = vpop.f32.mrb[0].mxu0
    %4388 = vmatprep.mubr.bf16.mxu0 0
    %4389 = vmatmul.mubr.bf16.gmra.mrb[0].mxu0 %v4298
    %v4390 = vpop.f32.mrb[0].mxu0
    %v4391 = vadd.f32 0.0, %v4390
    %v4392 = vpop.f32.mrb[0].mxu0
    %v4393 = vpop.f32.mrb[0].mxu0
    %v4394 = vadd.f32 0.0, %v4393
    %v4395 = vpop.f32.mrb[0].mxu0
    %4396 = vdwg.mxu0
    %v4397 = vld [vmem:[%s29] sm:$0xff]
    %v4398 = vld [vmem:[%s29 + $0x8] sm:$0xff]
    %v4399 = vld [vmem:[%s29 + $0x10] sm:$0xff]
    %v4400 = vld [vmem:[%s29 + $0x18] sm:$0xff]
    %4401 = vmatprep.subr.mxu0 0.0
    %4402 = vmatpush1.msra.mxu0 %v4335
    %4403 = vmatprep.subr.mxu0 0.0
    %4404 = vmatpush1.msra.mxu0 %v4338
    %4405 = vmatprep.subr.mxu0 0.0
    %4406 = vmatpush1.msra.mxu0 %v4343
    %4407 = vmatprep.subr.mxu0 0.0
    %4408 = vmatpush1.msra.mxu0 %v4346
    %4409 = vmatprep.subr.mxu0 0.0
    %4410 = vmatpush1.msra.mxu0 %v4351
    %4411 = vmatprep.subr.mxu0 0.0
    %4412 = vmatpush1.msra.mxu0 %v4354
    %4413 = vmatprep.subr.mxu0 0.0
    %4414 = vmatpush1.msra.mxu0 %v4359
    %4415 = vmatprep.subr.mxu0 0.0
    %4416 = vmatpush1.msra.mxu0 %v4362
    %4417 = vmatprep.subr.mxu0 0.0
    %4418 = vmatpush1.msra.mxu0 %v4367
    %4419 = vmatprep.subr.mxu0 0.0
    %4420 = vmatpush1.msra.mxu0 %v4370
    %4421 = vmatprep.subr.mxu0 0.0
    %4422 = vmatpush1.msra.mxu0 %v4375
    %4423 = vmatprep.subr.mxu0 0.0
    %4424 = vmatpush1.msra.mxu0 %v4378
    %4425 = vmatprep.subr.mxu0 0.0
    %4426 = vmatpush1.msra.mxu0 %v4383
    %4427 = vmatprep.subr.mxu0 0.0
    %4428 = vmatpush1.msra.mxu0 %v4386
    %4429 = vmatprep.subr.mxu0 0.0
    %4430 = vmatpush1.msra.mxu0 %v4391
    %4431 = vmatprep.subr.mxu0 0.0
    %4432 = vmatpush1.msra.mxu0 %v4394
    %4433 = vmatprep.subr.mxu0 0.0
    %4434 = vmatpush1.msra.mxu0 0.0
    %4435 = vmatprep.subr.mxu0 0.0
    %4436 = vmatpush1.msra.mxu0 0.0
    %4437 = vmatprep.subr.mxu0 0.0
    %4438 = vmatpush1.msra.mxu0 0.0
    %4439 = vmatprep.subr.mxu0 0.0
    %4440 = vmatpush1.msra.mxu0 0.0
    %4441 = vmatprep.subr.mxu0 0.0
    %4442 = vmatpush1.msra.mxu0 0.0
    %4443 = vmatprep.subr.mxu0 0.0
    %4444 = vmatpush1.msra.mxu0 0.0
    %4445 = vmatprep.subr.mxu0 0.0
    %4446 = vmatpush1.msra.mxu0 0.0
    %4447 = vmatprep.subr.mxu0 0.0
    %4448 = vmatpush1.msra.mxu0 0.0
    %4449 = vmatprep.subr.mxu0 0.0
    %4450 = vmatpush1.msra.mxu0 0.0
    %4451 = vmatprep.subr.mxu0 0.0
    %4452 = vmatpush1.msra.mxu0 0.0
    %4453 = vmatprep.subr.mxu0 0.0
    %4454 = vmatpush1.msra.mxu0 0.0
    %4455 = vmatprep.subr.mxu0 0.0
    %4456 = vmatpush1.msra.mxu0 0.0
    %4457 = vmatprep.subr.mxu0 0.0
    %4458 = vmatpush1.msra.mxu0 0.0
    %4459 = vmatprep.subr.mxu0 0.0
    %4460 = vmatpush1.msra.mxu0 0.0
    %4461 = vmatprep.subr.mxu0 0.0
    %4462 = vmatpush1.msra.mxu0 0.0
    %4463 = vmatprep.subr.mxu0 0.0
    %4464 = vmatpush1.msra.mxu0 0.0
    %4465 = vmatprep.mubr.f32.mxu0 0.0
    %4466 = vmatmul.mubr.f32.gmra.mrb[0].mxu0 %v4397
    %v4467 = vpop.f32.mrb[0].mxu0
    %v4468 = vadd.f32 0.0, %v4467
    %v4469 = vpop.f32.mrb[0].mxu0
    %4470 = vmatprep.mubr.f32.mxu0 0.0
    %4471 = vmatmul.mubr.f32.gmra.mrb[0].mxu0 %v4398
    %v4472 = vpop.f32.mrb[0].mxu0
    %v4473 = vadd.f32 0.0, %v4472
    %v4474 = vpop.f32.mrb[0].mxu0
    %4475 = vmatprep.mubr.f32.mxu0 0.0
    %4476 = vmatmul.mubr.f32.gmra.mrb[0].mxu0 %v4399
    %v4477 = vpop.f32.mrb[0].mxu0
    %v4478 = vadd.f32 0.0, %v4477
    %v4479 = vpop.f32.mrb[0].mxu0
    %4480 = vmatprep.mubr.f32.mxu0 0.0
    %4481 = vmatmul.mubr.f32.gmra.mrb[0].mxu0 %v4400
    %v4482 = vpop.f32.mrb[0].mxu0
    %v4483 = vadd.f32 0.0, %v4482
    %v4484 = vpop.f32.mrb[0].mxu0
    %4485 = vdwg.mxu0
    %vm4486 = vcmask 326656
    %4487 = vst.msk [vmem:[#allocation3] sm:$0xff] %vm4486, %v4468
    %4488 = vst.msk [vmem:[#allocation3 + $0x8] sm:$0xff] %vm4486, %v4473
    %4489 = vst.msk [vmem:[#allocation3 + $0x10] sm:$0xff] %vm4486, %v4478
    %4490 = vst.msk [vmem:[#allocation3 + $0x18] sm:$0xff] %vm4486, %v4483
    %v4491 = vld [vmem:[%s37] sm:$0xff]
    %v4492 = vld [vmem:[%s37 + $0x8] sm:$0xff]
    %v4493 = vld [vmem:[%s37 + $0x10] sm:$0xff]
    %v4494 = vld [vmem:[%s37 + $0x18] sm:$0xff]
    %v4495 = vld [vmem:[#allocation3] sm:$0xff]
    %v4496 = vld [vmem:[#allocation3 + $0x8] sm:$0xff]
    %v4497 = vld [vmem:[#allocation3 + $0x10] sm:$0xff]
    %v4498 = vld [vmem:[#allocation3 + $0x18] sm:$0xff]
    %v4499 = vsel %vm4486, %v4495, 0.0
    %v4500 = vsel %vm4486, %v4496, 0.0
    %v4501 = vadd.f32 %v4499, %v4500
    %v4502 = vsel %vm4486, %v4497, 0.0
    %v4503 = vadd.f32 %v4501, %v4502
    %v4504 = vsel %vm4486, %v4498, 0.0
    %v4505 = vadd.f32 %v4503, %v4504
    %v4506 = vrot.slane %v4505, 4
    %v4507 = vadd.f32 %v4505, %v4506
    %v4508 = vrot.slane %v4507, 2
    %v4509 = vadd.f32 %v4507, %v4508
    %v4510 = vrot.slane %v4509, 1
    %v4511 = vadd.f32 %v4509, %v4510
    %v4512 = vmul.f32 %v4511, 0.03125
    %v4513 = vmul.f32 %v4495, %v4495
    %v4514 = vmul.f32 %v4496, %v4496
    %v4515 = vmul.f32 %v4497, %v4497
    %v4516 = vmul.f32 %v4498, %v4498
    %v4517 = vsel %vm4486, %v4513, 0.0
    %v4518 = vsel %vm4486, %v4514, 0.0
    %v4519 = vadd.f32 %v4517, %v4518
    %v4520 = vsel %vm4486, %v4515, 0.0
    %v4521 = vadd.f32 %v4519, %v4520
    %v4522 = vsel %vm4486, %v4516, 0.0
    %v4523 = vadd.f32 %v4521, %v4522
    %v4524 = vrot.slane %v4523, 4
    %v4525 = vadd.f32 %v4523, %v4524
    %v4526 = vrot.slane %v4525, 2
    %v4527 = vadd.f32 %v4525, %v4526
    %v4528 = vrot.slane %v4527, 1
    %v4529 = vadd.f32 %v4527, %v4528
    %v4530 = vmul.f32 %v4529, 0.03125
    %v4531 = vmul.f32 %v4512, %v4512
    %v4532 = vsub.f32 %v4530, %v4531
    %v4533 = vmax.f32 %v4532, 0.0
    %v4534 = vld [vmem:[%s39] sm:$0x1]
    %v4535 = vadd.f32 %v4533, 1e-05
    %v4536 = vrsqrt.pop %v4535
    %v4537 = vmul.f32 %v4534, %v4536
    %v4538 = vld [vmem:[%s41] sm:$0x1]
    %v4539 = vmul.f32 %v4512, %v4537
    %v4540 = vsub.f32 %v4538, %v4539
    %v4542 = vlaneseq
    %v4543 = vshrl.u32 %v4542, 7
    %v4544 = vsub.s32 0, %v4543
    %v4545 = vrot.slane %v4537, %v4544
    %v4547 = vmul.f32 %v4495, %v4545
    %v4548 = vmul.f32 %v4496, %v4545
    %v4549 = vmul.f32 %v4497, %v4545
    %v4550 = vmul.f32 %v4498, %v4545
    %v4552 = vlaneseq
    %v4553 = vshrl.u32 %v4552, 7
    %v4554 = vsub.s32 0, %v4553
    %v4555 = vrot.slane %v4540, %v4554
    %v4557 = vadd.f32 %v4547, %v4555
    %v4558 = vadd.f32 %v4548, %v4555
    %v4559 = vadd.f32 %v4549, %v4555
    %v4560 = vadd.f32 %v4550, %v4555
    %v4561 = vmax.f32 %v4557, 0.0
    %v4562 = vmax.f32 %v4558, 0.0
    %v4563 = vmax.f32 %v4559, 0.0
    %v4564 = vmax.f32 %v4560, 0.0
    %v4565 = vpack.c.bf16 %v4562, %v4561
    %v4566 = vpack.c.bf16 %v4564, %v4563
    %v4567 = vld [vmem:[%s43] sm:$0xf]
    %v4568 = vld [vmem:[%s43 + $0x4] sm:$0xf]
    %v4569 = vld [vmem:[%s43 + $0x8] sm:$0xf]
    %v4570 = vld [vmem:[%s43 + $0xc] sm:$0xf]
    %v4571 = vld [vmem:[%s43 + $0x10] sm:$0xf]
    %v4577 = vunpack.c.l.b16 %v4567
    %v4578 = vunpack.c.l.b16 %v4568
    %v4579 = vunpack.c.l.b16 %v4569
    %v4580 = vunpack.c.l.b16 %v4570
    %v4581 = vunpack.c.l.b16 %v4571
    %v4582 = vpack.c.b16 %v4578, %v4577
    %v4583 = vpack.c.b16 %v4580, %v4579
    %v4584 = vpack.c.b16 %v4581, %v4581
    %v4588 = vsel %vm4486, %v4565, 0
    %v4591 = vsel %vm4486, %v4566, 0
    %v4594 = vsel %vm2664, %v4584, 0
    %4596 = vmatprep.subr.bf16.mxu0 0
    %4597 = vmatpush1.bf16.msra.mxu0 %v4582
    %4598 = vmatprep.subr.bf16.mxu0 0
    %4599 = vmatpush1.bf16.msra.mxu0 %v4583
    %4600 = vmatprep.subr.bf16.mxu0 0
    %4601 = vmatpush1.bf16.msra.mxu0 %v4594
    %4602 = vmatprep.subr.bf16.mxu0 0
    %4603 = vmatpush1.bf16.msra.mxu0 0
    %4604 = vmatprep.subr.bf16.mxu0 0
    %4605 = vmatpush1.bf16.msra.mxu0 0
    %4606 = vmatprep.subr.bf16.mxu0 0
    %4607 = vmatpush1.bf16.msra.mxu0 0
    %4608 = vmatprep.subr.bf16.mxu0 0
    %4609 = vmatpush1.bf16.msra.mxu0 0
    %4610 = vmatprep.subr.bf16.mxu0 0
    %4611 = vmatpush1.bf16.msra.mxu0 0
    %4612 = vmatprep.subr.bf16.mxu0 0
    %4613 = vmatpush1.bf16.msra.mxu0 0
    %4614 = vmatprep.subr.bf16.mxu0 0
    %4615 = vmatpush1.bf16.msra.mxu0 0
    %4616 = vmatprep.subr.bf16.mxu0 0
    %4617 = vmatpush1.bf16.msra.mxu0 0
    %4618 = vmatprep.subr.bf16.mxu0 0
    %4619 = vmatpush1.bf16.msra.mxu0 0
    %4620 = vmatprep.subr.bf16.mxu0 0
    %4621 = vmatpush1.bf16.msra.mxu0 0
    %4622 = vmatprep.subr.bf16.mxu0 0
    %4623 = vmatpush1.bf16.msra.mxu0 0
    %4624 = vmatprep.subr.bf16.mxu0 0
    %4625 = vmatpush1.bf16.msra.mxu0 0
    %4626 = vmatprep.subr.bf16.mxu0 0
    %4627 = vmatpush1.bf16.msra.mxu0 0
    %4628 = vmatprep.mubr.bf16.mxu0 0
    %4629 = vmatmul.mubr.bf16.gmra.mrb[0].mxu0 %v4588
    %v4630 = vpop.f32.mrb[0].mxu0
    %v4631 = vadd.f32 0.0, %v4630
    %v4632 = vpop.f32.mrb[0].mxu0
    %v4633 = vpop.f32.mrb[0].mxu0
    %v4634 = vadd.f32 0.0, %v4633
    %v4635 = vpop.f32.mrb[0].mxu0
    %4636 = vmatprep.mubr.bf16.mxu0 0
    %4637 = vmatmul.mubr.bf16.gmra.mrb[0].mxu0 %v4591
    %v4638 = vpop.f32.mrb[0].mxu0
    %v4639 = vadd.f32 0.0, %v4638
    %v4640 = vpop.f32.mrb[0].mxu0
    %v4641 = vpop.f32.mrb[0].mxu0
    %v4642 = vadd.f32 0.0, %v4641
    %v4643 = vpop.f32.mrb[0].mxu0
    %4644 = vdwg.mxu0
    %v4645 = vsel %vm536, %v4631, 0.0
    %v4646 = vsel %vm536, %v4634, 0.0
    %v4647 = vadd.f32 %v4645, %v4646
    %v4648 = vsel %vm536, %v4639, 0.0
    %v4649 = vadd.f32 %v4647, %v4648
    %v4650 = vsel %vm536, %v4642, 0.0
    %v4651 = vadd.f32 %v4649, %v4650
    %v4652 = vrot.slane %v4651, 4
    %v4653 = vadd.f32 %v4651, %v4652
    %v4654 = vrot.slane %v4653, 2
    %v4655 = vadd.f32 %v4653, %v4654
    %v4656 = vrot.slane %v4655, 1
    %v4657 = vadd.f32 %v4655, %v4656
    %v4658 = vmul.f32 %v4657, 0.03125
    %v4659 = vmul.f32 %v4631, %v4631
    %v4660 = vmul.f32 %v4634, %v4634
    %v4661 = vmul.f32 %v4639, %v4639
    %v4662 = vmul.f32 %v4642, %v4642
    %v4663 = vsel %vm536, %v4659, 0.0
    %v4664 = vsel %vm536, %v4660, 0.0
    %v4665 = vadd.f32 %v4663, %v4664
    %v4666 = vsel %vm536, %v4661, 0.0
    %v4667 = vadd.f32 %v4665, %v4666
    %v4668 = vsel %vm536, %v4662, 0.0
    %v4669 = vadd.f32 %v4667, %v4668
    %v4670 = vrot.slane %v4669, 4
    %v4671 = vadd.f32 %v4669, %v4670
    %v4672 = vrot.slane %v4671, 2
    %v4673 = vadd.f32 %v4671, %v4672
    %v4674 = vrot.slane %v4673, 1
    %v4675 = vadd.f32 %v4673, %v4674
    %v4676 = vmul.f32 %v4675, 0.03125
    %v4677 = vmul.f32 %v4658, %v4658
    %v4678 = vsub.f32 %v4676, %v4677
    %v4679 = vmax.f32 %v4678, 0.0
    %v4680 = vld [vmem:[%s45] sm:$0x1]
    %v4681 = vadd.f32 %v4679, 1e-05
    %v4682 = vrsqrt.pop %v4681
    %v4683 = vmul.f32 %v4680, %v4682
    %v4684 = vld [vmem:[%s47] sm:$0x1]
    %v4685 = vmul.f32 %v4658, %v4683
    %v4686 = vsub.f32 %v4684, %v4685
    %v4688 = vlaneseq
    %v4689 = vshrl.u32 %v4688, 7
    %v4690 = vsub.s32 0, %v4689
    %v4691 = vrot.slane %v4683, %v4690
    %v4693 = vmul.f32 %v4631, %v4691
    %v4694 = vmul.f32 %v4634, %v4691
    %v4695 = vmul.f32 %v4639, %v4691
    %v4696 = vmul.f32 %v4642, %v4691
    %v4698 = vlaneseq
    %v4699 = vshrl.u32 %v4698, 7
    %v4700 = vsub.s32 0, %v4699
    %v4701 = vrot.slane %v4686, %v4700
    %v4703 = vadd.f32 %v4693, %v4701
    %v4704 = vadd.f32 %v4694, %v4701
    %v4705 = vadd.f32 %v4695, %v4701
    %v4706 = vadd.f32 %v4696, %v4701
    %v4707 = vmax.f32 %v4703, 0.0
    %v4708 = vmax.f32 %v4704, 0.0
    %v4709 = vmax.f32 %v4705, 0.0
    %v4710 = vmax.f32 %v4706, 0.0
    %v4711 = vpack.c.bf16 %v4708, %v4707
    %v4712 = vpack.c.bf16 %v4710, %v4709
    %v4713 = vld [vmem:[%s49] sm:$0xf]
    %v4714 = vld [vmem:[%s49 + $0x4] sm:$0xf]
    %v4715 = vld [vmem:[%s49 + $0x8] sm:$0xf]
    %v4716 = vld [vmem:[%s49 + $0xc] sm:$0xf]
    %v4721 = vunpack.c.l.b16 %v4713
    %v4722 = vunpack.c.l.b16 %v4714
    %v4723 = vunpack.c.l.b16 %v4715
    %v4724 = vunpack.c.l.b16 %v4716
    %v4725 = vpack.c.b16 %v4722, %v4721
    %v4726 = vpack.c.b16 %v4724, %v4723
    %v4730 = vsel %vm536, %v4711, 0
    %v4733 = vsel %vm536, %v4712, 0
    %4735 = vmatprep.subr.bf16.mxu0 0
    %4736 = vmatpush1.bf16.msra.mxu0 %v4725
    %4737 = vmatprep.subr.bf16.mxu0 0
    %4738 = vmatpush1.bf16.msra.mxu0 %v4726
    %4739 = vmatprep.subr.bf16.mxu0 0
    %4740 = vmatpush1.bf16.msra.mxu0 0
    %4741 = vmatprep.subr.bf16.mxu0 0
    %4742 = vmatpush1.bf16.msra.mxu0 0
    %4743 = vmatprep.subr.bf16.mxu0 0
    %4744 = vmatpush1.bf16.msra.mxu0 0
    %4745 = vmatprep.subr.bf16.mxu0 0
    %4746 = vmatpush1.bf16.msra.mxu0 0
    %4747 = vmatprep.subr.bf16.mxu0 0
    %4748 = vmatpush1.bf16.msra.mxu0 0
    %4749 = vmatprep.subr.bf16.mxu0 0
    %4750 = vmatpush1.bf16.msra.mxu0 0
    %4751 = vmatprep.subr.bf16.mxu0 0
    %4752 = vmatpush1.bf16.msra.mxu0 0
    %4753 = vmatprep.subr.bf16.mxu0 0
    %4754 = vmatpush1.bf16.msra.mxu0 0
    %4755 = vmatprep.subr.bf16.mxu0 0
    %4756 = vmatpush1.bf16.msra.mxu0 0
    %4757 = vmatprep.subr.bf16.mxu0 0
    %4758 = vmatpush1.bf16.msra.mxu0 0
    %4759 = vmatprep.subr.bf16.mxu0 0
    %4760 = vmatpush1.bf16.msra.mxu0 0
    %4761 = vmatprep.subr.bf16.mxu0 0
    %4762 = vmatpush1.bf16.msra.mxu0 0
    %4763 = vmatprep.subr.bf16.mxu0 0
    %4764 = vmatpush1.bf16.msra.mxu0 0
    %4765 = vmatprep.subr.bf16.mxu0 0
    %4766 = vmatpush1.bf16.msra.mxu0 0
    %4767 = vmatprep.mubr.bf16.mxu0 0
    %4768 = vmatmul.mubr.bf16.gmra.mrb[0].mxu0 %v4730
    %v4769 = vpop.f32.mrb[0].mxu0
    %v4770 = vadd.f32 0.0, %v4769
    %v4771 = vpop.f32.mrb[0].mxu0
    %v4772 = vpop.f32.mrb[0].mxu0
    %v4773 = vadd.f32 0.0, %v4772
    %v4774 = vpop.f32.mrb[0].mxu0
    %4775 = vmatprep.mubr.bf16.mxu0 0
    %4776 = vmatmul.mubr.bf16.gmra.mrb[0].mxu0 %v4733
    %v4777 = vpop.f32.mrb[0].mxu0
    %v4778 = vadd.f32 0.0, %v4777
    %v4779 = vpop.f32.mrb[0].mxu0
    %v4780 = vpop.f32.mrb[0].mxu0
    %v4781 = vadd.f32 0.0, %v4780
    %v4782 = vpop.f32.mrb[0].mxu0
    %4783 = vdwg.mxu0
    %v4784 = vrot.slane %v4770, 3
    %v4785 = vrot.slane %v4773, 3
    %v4786 = vrot.slane %v4778, 3
    %v4787 = vrot.slane %v4781, 3
    %vm4788 = vcmp.lt.s32.totalorder %v861, 5
    %v4789 = vsel %vm4788, %v4786, %v4787
    %v4790 = vsel %vm4788, %v4785, %v4786
    %v4791 = vsel %vm4788, %v4784, %v4785
    %v4792 = vsel %vm4788, %v4787, %v4784
    %4794 = vset.pattern.permute.xlu0 0
    %4795 = vperm.xlu0 %4794, %v4491
    %v4796 = vpop.permute.xlu0 %4795
    %4799 = vset.pattern.permute.xlu0 0
    %4800 = vperm.xlu0 %4799, %v4492
    %v4801 = vpop.permute.xlu0 %4800
    %4804 = vset.pattern.permute.xlu0 0
    %4805 = vperm.xlu0 %4804, %v4493
    %v4806 = vpop.permute.xlu0 %4805
    %4809 = vset.pattern.permute.xlu0 0
    %4810 = vperm.xlu0 %4809, %v4494
    %v4811 = vpop.permute.xlu0 %4810
    %v4813 = vmul.f32 %v4792, %v4796
    %v4814 = vmul.f32 %v4791, %v4801
    %v4815 = vmul.f32 %v4790, %v4806
    %v4816 = vmul.f32 %v4789, %v4811
    %v4817 = vadd.f32 %v4813, 0.0
    %v4818 = vadd.f32 %v4814, 0.0
    %v4819 = vadd.f32 %v4815, 0.0
    %v4820 = vadd.f32 %v4816, 0.0
    %4825 = vrot.lane.b32.xlu0 %v4770, 120
    %v4826 = vpop.permute.xlu0 %4825
    %4827 = vrot.lane.b32.xlu0 %v4773, 120
    %v4828 = vpop.permute.xlu0 %4827
    %4829 = vrot.lane.b32.xlu0 %v4778, 120
    %v4830 = vpop.permute.xlu0 %4829
    %4831 = vrot.lane.b32.xlu0 %v4781, 120
    %v4832 = vpop.permute.xlu0 %4831
    %v4837 = vrot.slane %v4826, 4
    %v4838 = vrot.slane %v4828, 4
    %v4839 = vrot.slane %v4830, 4
    %v4840 = vrot.slane %v4832, 4
    %vm4841 = vcmp.lt.s32.totalorder %v861, 4
    %v4842 = vsel %vm4841, %v4839, %v4840
    %v4843 = vsel %vm4841, %v4838, %v4839
    %v4844 = vsel %vm4841, %v4837, %v4838
    %v4845 = vsel %vm4841, %v4840, %v4837
    %4846 = vset.pattern.permute.xlu0 1
    %4847 = vperm.xlu0 %4846, %v4491
    %v4848 = vpop.permute.xlu0 %4847
    %4850 = vset.pattern.permute.xlu0 1
    %4851 = vperm.xlu0 %4850, %v4492
    %v4852 = vpop.permute.xlu0 %4851
    %4854 = vset.pattern.permute.xlu0 1
    %4855 = vperm.xlu0 %4854, %v4493
    %v4856 = vpop.permute.xlu0 %4855
    %4858 = vset.pattern.permute.xlu0 1
    %4859 = vperm.xlu0 %4858, %v4494
    %v4860 = vpop.permute.xlu0 %4859
    %v4862 = vmul.f32 %v4845, %v4848
    %v4863 = vmul.f32 %v4844, %v4852
    %v4864 = vmul.f32 %v4843, %v4856
    %v4865 = vmul.f32 %v4842, %v4860
    %v4866 = vadd.f32 %v4817, %v4862
    %v4867 = vadd.f32 %v4818, %v4863
    %v4868 = vadd.f32 %v4819, %v4864
    %v4869 = vadd.f32 %v4820, %v4865
    %4870 = vrot.lane.b32.xlu0 %v4770, 112
    %v4871 = vpop.permute.xlu0 %4870
    %4872 = vrot.lane.b32.xlu0 %v4773, 112
    %v4873 = vpop.permute.xlu0 %4872
    %4874 = vrot.lane.b32.xlu0 %v4778, 112
    %v4875 = vpop.permute.xlu0 %4874
    %4876 = vrot.lane.b32.xlu0 %v4781, 112
    %v4877 = vpop.permute.xlu0 %4876
    %v4882 = vrot.slane %v4871, 5
    %v4883 = vrot.slane %v4873, 5
    %v4884 = vrot.slane %v4875, 5
    %v4885 = vrot.slane %v4877, 5
    %vm4886 = vcmp.lt.s32.totalorder %v861, 3
    %v4887 = vsel %vm4886, %v4884, %v4885
    %v4888 = vsel %vm4886, %v4883, %v4884
    %v4889 = vsel %vm4886, %v4882, %v4883
    %v4890 = vsel %vm4886, %v4885, %v4882
    %4891 = vset.pattern.permute.xlu0 2
    %4892 = vperm.xlu0 %4891, %v4491
    %v4893 = vpop.permute.xlu0 %4892
    %4895 = vset.pattern.permute.xlu0 2
    %4896 = vperm.xlu0 %4895, %v4492
    %v4897 = vpop.permute.xlu0 %4896
    %4899 = vset.pattern.permute.xlu0 2
    %4900 = vperm.xlu0 %4899, %v4493
    %v4901 = vpop.permute.xlu0 %4900
    %4903 = vset.pattern.permute.xlu0 2
    %4904 = vperm.xlu0 %4903, %v4494
    %v4905 = vpop.permute.xlu0 %4904
    %v4907 = vmul.f32 %v4890, %v4893
    %v4908 = vmul.f32 %v4889, %v4897
    %v4909 = vmul.f32 %v4888, %v4901
    %v4910 = vmul.f32 %v4887, %v4905
    %v4911 = vadd.f32 %v4866, %v4907
    %v4912 = vadd.f32 %v4867, %v4908
    %v4913 = vadd.f32 %v4868, %v4909
    %v4914 = vadd.f32 %v4869, %v4910
    %4915 = vrot.lane.b32.xlu0 %v4770, 104
    %v4916 = vpop.permute.xlu0 %4915
    %4917 = vrot.lane.b32.xlu0 %v4773, 104
    %v4918 = vpop.permute.xlu0 %4917
    %4919 = vrot.lane.b32.xlu0 %v4778, 104
    %v4920 = vpop.permute.xlu0 %4919
    %4921 = vrot.lane.b32.xlu0 %v4781, 104
    %v4922 = vpop.permute.xlu0 %4921
    %v4927 = vrot.slane %v4916, 7
    %v4928 = vrot.slane %v4918, 7
    %v4929 = vrot.slane %v4920, 7
    %v4930 = vrot.slane %v4922, 7
    %v4931 = vsel %vm862, %v4929, %v4930
    %v4932 = vsel %vm862, %v4928, %v4929
    %v4933 = vsel %vm862, %v4927, %v4928
    %v4934 = vsel %vm862, %v4930, %v4927
    %4935 = vset.pattern.permute.xlu0 3
    %4936 = vperm.xlu0 %4935, %v4491
    %v4937 = vpop.permute.xlu0 %4936
    %4939 = vset.pattern.permute.xlu0 3
    %4940 = vperm.xlu0 %4939, %v4492
    %v4941 = vpop.permute.xlu0 %4940
    %4943 = vset.pattern.permute.xlu0 3
    %4944 = vperm.xlu0 %4943, %v4493
    %v4945 = vpop.permute.xlu0 %4944
    %4947 = vset.pattern.permute.xlu0 3
    %4948 = vperm.xlu0 %4947, %v4494
    %v4949 = vpop.permute.xlu0 %4948
    %v4951 = vmul.f32 %v4934, %v4937
    %v4952 = vmul.f32 %v4933, %v4941
    %v4953 = vmul.f32 %v4932, %v4945
    %v4954 = vmul.f32 %v4931, %v4949
    %v4955 = vadd.f32 %v4911, %v4951
    %v4956 = vadd.f32 %v4912, %v4952
    %v4957 = vadd.f32 %v4913, %v4953
    %v4958 = vadd.f32 %v4914, %v4954
    %4959 = vset.pattern.permute.xlu0 4
    %4960 = vperm.xlu0 %4959, %v4491
    %v4961 = vpop.permute.xlu0 %4960
    %4963 = vset.pattern.permute.xlu0 4
    %4964 = vperm.xlu0 %4963, %v4492
    %v4965 = vpop.permute.xlu0 %4964
    %4967 = vset.pattern.permute.xlu0 4
    %4968 = vperm.xlu0 %4967, %v4493
    %v4969 = vpop.permute.xlu0 %4968
    %4971 = vset.pattern.permute.xlu0 4
    %4972 = vperm.xlu0 %4971, %v4494
    %v4973 = vpop.permute.xlu0 %4972
    %v4975 = vmul.f32 %v4770, %v4961
    %v4976 = vmul.f32 %v4773, %v4965
    %v4977 = vmul.f32 %v4778, %v4969
    %v4978 = vmul.f32 %v4781, %v4973
    %4983 = vrot.lane.b32.xlu0 %v4975, 96
    %v4984 = vpop.permute.xlu0 %4983
    %4985 = vrot.lane.b32.xlu0 %v4976, 96
    %v4986 = vpop.permute.xlu0 %4985
    %4987 = vrot.lane.b32.xlu0 %v4977, 96
    %v4988 = vpop.permute.xlu0 %4987
    %4989 = vrot.lane.b32.xlu0 %v4978, 96
    %v4990 = vpop.permute.xlu0 %4989
    %v4995 = vadd.f32 %v4955, %v4984
    %v4996 = vadd.f32 %v4956, %v4986
    %v4997 = vadd.f32 %v4957, %v4988
    %v4998 = vadd.f32 %v4958, %v4990
    %4999 = vrot.lane.b32.xlu0 %v4770, 88
    %v5000 = vpop.permute.xlu0 %4999
    %5001 = vrot.lane.b32.xlu0 %v4773, 88
    %v5002 = vpop.permute.xlu0 %5001
    %5003 = vrot.lane.b32.xlu0 %v4778, 88
    %v5004 = vpop.permute.xlu0 %5003
    %5005 = vrot.lane.b32.xlu0 %v4781, 88
    %v5006 = vpop.permute.xlu0 %5005
    %v5011 = vrot.slane %v5000, 1
    %v5012 = vrot.slane %v5002, 1
    %v5013 = vrot.slane %v5004, 1
    %v5014 = vrot.slane %v5006, 1
    %v5015 = vsel %vm1215, %v5013, %v5014
    %v5016 = vsel %vm1215, %v5012, %v5013
    %v5017 = vsel %vm1215, %v5011, %v5012
    %v5018 = vsel %vm1215, %v5014, %v5011
    %5019 = vset.pattern.permute.xlu0 5
    %5020 = vperm.xlu0 %5019, %v4491
    %v5021 = vpop.permute.xlu0 %5020
    %5023 = vset.pattern.permute.xlu0 5
    %5024 = vperm.xlu0 %5023, %v4492
    %v5025 = vpop.permute.xlu0 %5024
    %5027 = vset.pattern.permute.xlu0 5
    %5028 = vperm.xlu0 %5027, %v4493
    %v5029 = vpop.permute.xlu0 %5028
    %5031 = vset.pattern.permute.xlu0 5
    %5032 = vperm.xlu0 %5031, %v4494
    %v5033 = vpop.permute.xlu0 %5032
    %v5035 = vmul.f32 %v5017, %v5021
    %v5036 = vmul.f32 %v5016, %v5025
    %v5037 = vmul.f32 %v5015, %v5029
    %v5038 = vmul.f32 %v5018, %v5033
    %v5039 = vadd.f32 %v4995, %v5035
    %v5040 = vadd.f32 %v4996, %v5036
    %v5041 = vadd.f32 %v4997, %v5037
    %v5042 = vadd.f32 %v4998, %v5038
    %5043 = vrot.lane.b32.xlu0 %v4770, 80
    %v5044 = vpop.permute.xlu0 %5043
    %5045 = vrot.lane.b32.xlu0 %v4773, 80
    %v5046 = vpop.permute.xlu0 %5045
    %5047 = vrot.lane.b32.xlu0 %v4778, 80
    %v5048 = vpop.permute.xlu0 %5047
    %5049 = vrot.lane.b32.xlu0 %v4781, 80
    %v5050 = vpop.permute.xlu0 %5049
    %v5055 = vrot.slane %v5044, 3
    %v5056 = vrot.slane %v5046, 3
    %v5057 = vrot.slane %v5048, 3
    %v5058 = vrot.slane %v5050, 3
    %v5059 = vsel %vm4788, %v5057, %v5058
    %v5060 = vsel %vm4788, %v5056, %v5057
    %v5061 = vsel %vm4788, %v5055, %v5056
    %v5062 = vsel %vm4788, %v5058, %v5055
    %5063 = vset.pattern.permute.xlu0 6
    %5064 = vperm.xlu0 %5063, %v4491
    %v5065 = vpop.permute.xlu0 %5064
    %5067 = vset.pattern.permute.xlu0 6
    %5068 = vperm.xlu0 %5067, %v4492
    %v5069 = vpop.permute.xlu0 %5068
    %5071 = vset.pattern.permute.xlu0 6
    %5072 = vperm.xlu0 %5071, %v4493
    %v5073 = vpop.permute.xlu0 %5072
    %5075 = vset.pattern.permute.xlu0 6
    %5076 = vperm.xlu0 %5075, %v4494
    %v5077 = vpop.permute.xlu0 %5076
    %v5079 = vmul.f32 %v5061, %v5065
    %v5080 = vmul.f32 %v5060, %v5069
    %v5081 = vmul.f32 %v5059, %v5073
    %v5082 = vmul.f32 %v5062, %v5077
    %v5083 = vadd.f32 %v5039, %v5079
    %v5084 = vadd.f32 %v5040, %v5080
    %v5085 = vadd.f32 %v5041, %v5081
    %v5086 = vadd.f32 %v5042, %v5082
    %5087 = vrot.lane.b32.xlu0 %v4770, 72
    %v5088 = vpop.permute.xlu0 %5087
    %5089 = vrot.lane.b32.xlu0 %v4773, 72
    %v5090 = vpop.permute.xlu0 %5089
    %5091 = vrot.lane.b32.xlu0 %v4778, 72
    %v5092 = vpop.permute.xlu0 %5091
    %5093 = vrot.lane.b32.xlu0 %v4781, 72
    %v5094 = vpop.permute.xlu0 %5093
    %v5099 = vrot.slane %v5088, 4
    %v5100 = vrot.slane %v5090, 4
    %v5101 = vrot.slane %v5092, 4
    %v5102 = vrot.slane %v5094, 4
    %v5103 = vsel %vm4841, %v5101, %v5102
    %v5104 = vsel %vm4841, %v5100, %v5101
    %v5105 = vsel %vm4841, %v5099, %v5100
    %v5106 = vsel %vm4841, %v5102, %v5099
    %5107 = vset.pattern.permute.xlu0 7
    %5108 = vperm.xlu0 %5107, %v4491
    %v5109 = vpop.permute.xlu0 %5108
    %5111 = vset.pattern.permute.xlu0 7
    %5112 = vperm.xlu0 %5111, %v4492
    %v5113 = vpop.permute.xlu0 %5112
    %5115 = vset.pattern.permute.xlu0 7
    %5116 = vperm.xlu0 %5115, %v4493
    %v5117 = vpop.permute.xlu0 %5116
    %5119 = vset.pattern.permute.xlu0 7
    %5120 = vperm.xlu0 %5119, %v4494
    %v5121 = vpop.permute.xlu0 %5120
    %v5123 = vmul.f32 %v5105, %v5109
    %v5124 = vmul.f32 %v5104, %v5113
    %v5125 = vmul.f32 %v5103, %v5117
    %v5126 = vmul.f32 %v5106, %v5121
    %v5127 = vadd.f32 %v5083, %v5123
    %v5128 = vadd.f32 %v5084, %v5124
    %v5129 = vadd.f32 %v5085, %v5125
    %v5130 = vadd.f32 %v5086, %v5126
    %5131 = vrot.lane.b32.xlu0 %v4770, 64
    %v5132 = vpop.permute.xlu0 %5131
    %5133 = vrot.lane.b32.xlu0 %v4773, 64
    %v5134 = vpop.permute.xlu0 %5133
    %5135 = vrot.lane.b32.xlu0 %v4778, 64
    %v5136 = vpop.permute.xlu0 %5135
    %5137 = vrot.lane.b32.xlu0 %v4781, 64
    %v5138 = vpop.permute.xlu0 %5137
    %v5143 = vrot.slane %v5132, 5
    %v5144 = vrot.slane %v5134, 5
    %v5145 = vrot.slane %v5136, 5
    %v5146 = vrot.slane %v5138, 5
    %v5147 = vsel %vm4886, %v5145, %v5146
    %v5148 = vsel %vm4886, %v5144, %v5145
    %v5149 = vsel %vm4886, %v5143, %v5144
    %v5150 = vsel %vm4886, %v5146, %v5143
    %5151 = vset.pattern.permute.xlu0 8
    %5152 = vperm.xlu0 %5151, %v4491
    %v5153 = vpop.permute.xlu0 %5152
    %5155 = vset.pattern.permute.xlu0 8
    %5156 = vperm.xlu0 %5155, %v4492
    %v5157 = vpop.permute.xlu0 %5156
    %5159 = vset.pattern.permute.xlu0 8
    %5160 = vperm.xlu0 %5159, %v4493
    %v5161 = vpop.permute.xlu0 %5160
    %5163 = vset.pattern.permute.xlu0 8
    %5164 = vperm.xlu0 %5163, %v4494
    %v5165 = vpop.permute.xlu0 %5164
    %v5167 = vmul.f32 %v5149, %v5153
    %v5168 = vmul.f32 %v5148, %v5157
    %v5169 = vmul.f32 %v5147, %v5161
    %v5170 = vmul.f32 %v5150, %v5165
    %v5171 = vadd.f32 %v5127, %v5167
    %v5172 = vadd.f32 %v5128, %v5168
    %v5173 = vadd.f32 %v5129, %v5169
    %v5174 = vadd.f32 %v5130, %v5170
    %5179 = vrot.lane.b32.xlu0 %v5171, 40
    %v5180 = vpop.permute.xlu0 %5179
    %5181 = vrot.lane.b32.xlu0 %v5172, 40
    %v5182 = vpop.permute.xlu0 %5181
    %5183 = vrot.lane.b32.xlu0 %v5173, 40
    %v5184 = vpop.permute.xlu0 %5183
    %5185 = vrot.lane.b32.xlu0 %v5174, 40
    %v5186 = vpop.permute.xlu0 %5185
    %vm5191 = vcmask 392512
    %5192 = vst.msk [vmem:[#allocation3] sm:$0xff] %vm5191, %v5180
    %5193 = vst.msk [vmem:[#allocation3 + $0x8] sm:$0xff] %vm5191, %v5182
    %5194 = vst.msk [vmem:[#allocation3 + $0x10] sm:$0xff] %vm5191, %v5184
    %5195 = vst.msk [vmem:[#allocation3 + $0x18] sm:$0xff] %vm5191, %v5186
    %v5196 = vld [vmem:[#allocation3] sm:$0xff]
    %v5197 = vld [vmem:[#allocation3 + $0x8] sm:$0xff]
    %v5198 = vld [vmem:[#allocation3 + $0x10] sm:$0xff]
    %v5199 = vld [vmem:[#allocation3 + $0x18] sm:$0xff]
    %vm5200 = vcmask 392192
    %v5201 = vsel %vm5200, %v5196, 0.0
    %v5202 = vsel %vm5200, %v5197, 0.0
    %v5203 = vadd.f32 %v5201, %v5202
    %v5204 = vsel %vm5200, %v5198, 0.0
    %v5205 = vadd.f32 %v5203, %v5204
    %v5206 = vsel %vm5200, %v5199, 0.0
    %v5207 = vadd.f32 %v5205, %v5206
    %v5208 = vrot.slane %v5207, 4
    %v5209 = vadd.f32 %v5207, %v5208
    %v5210 = vrot.slane %v5209, 2
    %v5211 = vadd.f32 %v5209, %v5210
    %v5212 = vrot.slane %v5211, 1
    %v5213 = vadd.f32 %v5211, %v5212
    %v5214 = vmul.f32 %v5213, 0.03125
    %v5215 = vmul.f32 %v5196, %v5196
    %v5216 = vmul.f32 %v5197, %v5197
    %v5217 = vmul.f32 %v5198, %v5198
    %v5218 = vmul.f32 %v5199, %v5199
    %v5219 = vsel %vm5200, %v5215, 0.0
    %v5220 = vsel %vm5200, %v5216, 0.0
    %v5221 = vadd.f32 %v5219, %v5220
    %v5222 = vsel %vm5200, %v5217, 0.0
    %v5223 = vadd.f32 %v5221, %v5222
    %v5224 = vsel %vm5200, %v5218, 0.0
    %v5225 = vadd.f32 %v5223, %v5224
    %v5226 = vrot.slane %v5225, 4
    %v5227 = vadd.f32 %v5225, %v5226
    %v5228 = vrot.slane %v5227, 2
    %v5229 = vadd.f32 %v5227, %v5228
    %v5230 = vrot.slane %v5229, 1
    %v5231 = vadd.f32 %v5229, %v5230
    %v5232 = vmul.f32 %v5231, 0.03125
    %v5233 = vmul.f32 %v5214, %v5214
    %v5234 = vsub.f32 %v5232, %v5233
    %v5235 = vmax.f32 %v5234, 0.0
    %v5236 = vld [vmem:[%s51] sm:$0x1]
    %v5237 = vadd.f32 %v5235, 1e-05
    %v5238 = vrsqrt.pop %v5237
    %v5239 = vmul.f32 %v5236, %v5238
    %v5240 = vld [vmem:[%s53] sm:$0x1]
    %v5241 = vmul.f32 %v5214, %v5239
    %v5242 = vsub.f32 %v5240, %v5241
    %v5244 = vlaneseq
    %v5245 = vshrl.u32 %v5244, 7
    %v5246 = vsub.s32 0, %v5245
    %v5247 = vrot.slane %v5239, %v5246
    %v5249 = vmul.f32 %v5196, %v5247
    %v5250 = vmul.f32 %v5197, %v5247
    %v5251 = vmul.f32 %v5198, %v5247
    %v5252 = vmul.f32 %v5199, %v5247
    %v5254 = vlaneseq
    %v5255 = vshrl.u32 %v5254, 7
    %v5256 = vsub.s32 0, %v5255
    %v5257 = vrot.slane %v5242, %v5256
    %v5259 = vadd.f32 %v5249, %v5257
    %v5260 = vadd.f32 %v5250, %v5257
    %v5261 = vadd.f32 %v5251, %v5257
    %v5262 = vadd.f32 %v5252, %v5257
    %v5263 = vmax.f32 %v5259, 0.0
    %v5264 = vmax.f32 %v5260, 0.0
    %v5265 = vmax.f32 %v5261, 0.0
    %v5266 = vmax.f32 %v5262, 0.0
    %v5267 = vpack.c.bf16 %v5264, %v5263
    %v5268 = vpack.c.bf16 %v5266, %v5265
    %v5269 = vld [vmem:[%s55] sm:$0xf]
    %v5270 = vld [vmem:[%s55 + $0x4] sm:$0xf]
    %v5271 = vld [vmem:[%s55 + $0x8] sm:$0xf]
    %v5272 = vld [vmem:[%s55 + $0xc] sm:$0xf]
    %v5273 = vld [vmem:[%s55 + $0x10] sm:$0xf]
    %v5274 = vld [vmem:[%s55 + $0x14] sm:$0xf]
    %v5281 = vunpack.c.l.b16 %v5269
    %v5282 = vunpack.c.l.b16 %v5270
    %v5283 = vunpack.c.l.b16 %v5271
    %v5284 = vunpack.c.l.b16 %v5272
    %v5285 = vunpack.c.l.b16 %v5273
    %v5286 = vunpack.c.l.b16 %v5274
    %v5287 = vpack.c.b16 %v5282, %v5281
    %v5288 = vpack.c.b16 %v5284, %v5283
    %v5289 = vpack.c.b16 %v5286, %v5285
    %v5294 = vsel %vm5200, %v5267, 0
    %v5297 = vsel %vm5200, %v5268, 0
    %5299 = vmatprep.subr.bf16.mxu0 0
    %5300 = vmatpush1.bf16.msra.mxu0 %v5287
    %5301 = vmatprep.subr.bf16.mxu0 0
    %5302 = vmatpush1.bf16.msra.mxu0 %v5288
    %5303 = vmatprep.subr.bf16.mxu0 0
    %5304 = vmatpush1.bf16.msra.mxu0 %v5289
    %5305 = vmatprep.subr.bf16.mxu0 0
    %5306 = vmatpush1.bf16.msra.mxu0 0
    %5307 = vmatprep.subr.bf16.mxu0 0
    %5308 = vmatpush1.bf16.msra.mxu0 0
    %5309 = vmatprep.subr.bf16.mxu0 0
    %5310 = vmatpush1.bf16.msra.mxu0 0
    %5311 = vmatprep.subr.bf16.mxu0 0
    %5312 = vmatpush1.bf16.msra.mxu0 0
    %5313 = vmatprep.subr.bf16.mxu0 0
    %5314 = vmatpush1.bf16.msra.mxu0 0
    %5315 = vmatprep.subr.bf16.mxu0 0
    %5316 = vmatpush1.bf16.msra.mxu0 0
    %5317 = vmatprep.subr.bf16.mxu0 0
    %5318 = vmatpush1.bf16.msra.mxu0 0
    %5319 = vmatprep.subr.bf16.mxu0 0
    %5320 = vmatpush1.bf16.msra.mxu0 0
    %5321 = vmatprep.subr.bf16.mxu0 0
    %5322 = vmatpush1.bf16.msra.mxu0 0
    %5323 = vmatprep.subr.bf16.mxu0 0
    %5324 = vmatpush1.bf16.msra.mxu0 0
    %5325 = vmatprep.subr.bf16.mxu0 0
    %5326 = vmatpush1.bf16.msra.mxu0 0
    %5327 = vmatprep.subr.bf16.mxu0 0
    %5328 = vmatpush1.bf16.msra.mxu0 0
    %5329 = vmatprep.subr.bf16.mxu0 0
    %5330 = vmatpush1.bf16.msra.mxu0 0
    %5331 = vmatprep.mubr.bf16.mxu0 0
    %5332 = vmatmul.mubr.bf16.gmra.mrb[0].mxu0 %v5294
    %v5333 = vpop.f32.mrb[0].mxu0
    %v5334 = vadd.f32 0.0, %v5333
    %v5335 = vpop.f32.mrb[0].mxu0
    %v5336 = vpop.f32.mrb[0].mxu0
    %v5337 = vadd.f32 0.0, %v5336
    %v5338 = vpop.f32.mrb[0].mxu0
    %5339 = vmatprep.mubr.bf16.mxu0 0
    %5340 = vmatmul.mubr.bf16.gmra.mrb[0].mxu0 %v5297
    %v5341 = vpop.f32.mrb[0].mxu0
    %v5342 = vadd.f32 0.0, %v5341
    %v5343 = vpop.f32.mrb[0].mxu0
    %v5344 = vpop.f32.mrb[0].mxu0
    %v5345 = vadd.f32 0.0, %v5344
    %v5346 = vpop.f32.mrb[0].mxu0
    %5347 = vdwg.mxu0
    %v5348 = vsel %vm536, %v5334, 0.0
    %v5349 = vsel %vm536, %v5337, 0.0
    %v5350 = vadd.f32 %v5348, %v5349
    %v5351 = vsel %vm536, %v5342, 0.0
    %v5352 = vadd.f32 %v5350, %v5351
    %v5353 = vsel %vm536, %v5345, 0.0
    %v5354 = vadd.f32 %v5352, %v5353
    %v5355 = vrot.slane %v5354, 4
    %v5356 = vadd.f32 %v5354, %v5355
    %v5357 = vrot.slane %v5356, 2
    %v5358 = vadd.f32 %v5356, %v5357
    %v5359 = vrot.slane %v5358, 1
    %v5360 = vadd.f32 %v5358, %v5359
    %v5361 = vmul.f32 %v5360, 0.03125
    %v5362 = vmul.f32 %v5334, %v5334
    %v5363 = vmul.f32 %v5337, %v5337
    %v5364 = vmul.f32 %v5342, %v5342
    %v5365 = vmul.f32 %v5345, %v5345
    %v5366 = vsel %vm536, %v5362, 0.0
    %v5367 = vsel %vm536, %v5363, 0.0
    %v5368 = vadd.f32 %v5366, %v5367
    %v5369 = vsel %vm536, %v5364, 0.0
    %v5370 = vadd.f32 %v5368, %v5369
    %v5371 = vsel %vm536, %v5365, 0.0
    %v5372 = vadd.f32 %v5370, %v5371
    %v5373 = vrot.slane %v5372, 4
    %v5374 = vadd.f32 %v5372, %v5373
    %v5375 = vrot.slane %v5374, 2
    %v5376 = vadd.f32 %v5374, %v5375
    %v5377 = vrot.slane %v5376, 1
    %v5378 = vadd.f32 %v5376, %v5377
    %v5379 = vmul.f32 %v5378, 0.03125
    %v5380 = vmul.f32 %v5361, %v5361
    %v5381 = vsub.f32 %v5379, %v5380
    %v5382 = vmax.f32 %v5381, 0.0
    %v5383 = vld [vmem:[%s57] sm:$0x1]
    %v5384 = vadd.f32 %v5382, 1e-05
    %v5385 = vrsqrt.pop %v5384
    %v5386 = vmul.f32 %v5383, %v5385
    %v5387 = vld [vmem:[%s59] sm:$0x1]
    %v5388 = vmul.f32 %v5361, %v5386
    %v5389 = vsub.f32 %v5387, %v5388
    %v5391 = vlaneseq
    %v5392 = vshrl.u32 %v5391, 7
    %v5393 = vsub.s32 0, %v5392
    %v5394 = vrot.slane %v5386, %v5393
    %v5396 = vmul.f32 %v5334, %v5394
    %v5397 = vmul.f32 %v5337, %v5394
    %v5398 = vmul.f32 %v5342, %v5394
    %v5399 = vmul.f32 %v5345, %v5394
    %v5401 = vlaneseq
    %v5402 = vshrl.u32 %v5401, 7
    %v5403 = vsub.s32 0, %v5402
    %v5404 = vrot.slane %v5389, %v5403
    %v5406 = vadd.f32 %v5396, %v5404
    %v5407 = vadd.f32 %v5397, %v5404
    %v5408 = vadd.f32 %v5398, %v5404
    %v5409 = vadd.f32 %v5399, %v5404
    %v5410 = vmax.f32 %v5406, 0.0
    %v5411 = vmax.f32 %v5407, 0.0
    %v5412 = vmax.f32 %v5408, 0.0
    %v5413 = vmax.f32 %v5409, 0.0
    %v5414 = vpack.c.bf16 %v5411, %v5410
    %v5415 = vpack.c.bf16 %v5413, %v5412
    %v5416 = vld [vmem:[%s61] sm:$0xf]
    %v5417 = vld [vmem:[%s61 + $0x4] sm:$0xf]
    %v5418 = vld [vmem:[%s61 + $0x8] sm:$0xf]
    %v5419 = vld [vmem:[%s61 + $0xc] sm:$0xf]
    %v5424 = vunpack.c.l.b16 %v5416
    %v5425 = vunpack.c.l.b16 %v5417
    %v5426 = vunpack.c.l.b16 %v5418
    %v5427 = vunpack.c.l.b16 %v5419
    %v5428 = vpack.c.b16 %v5425, %v5424
    %v5429 = vpack.c.b16 %v5427, %v5426
    %v5433 = vsel %vm536, %v5414, 0
    %v5436 = vsel %vm536, %v5415, 0
    %5438 = vmatprep.subr.bf16.mxu0 0
    %5439 = vmatpush1.bf16.msra.mxu0 %v5428
    %5440 = vmatprep.subr.bf16.mxu0 0
    %5441 = vmatpush1.bf16.msra.mxu0 %v5429
    %5442 = vmatprep.subr.bf16.mxu0 0
    %5443 = vmatpush1.bf16.msra.mxu0 0
    %5444 = vmatprep.subr.bf16.mxu0 0
    %5445 = vmatpush1.bf16.msra.mxu0 0
    %5446 = vmatprep.subr.bf16.mxu0 0
    %5447 = vmatpush1.bf16.msra.mxu0 0
    %5448 = vmatprep.subr.bf16.mxu0 0
    %5449 = vmatpush1.bf16.msra.mxu0 0
    %5450 = vmatprep.subr.bf16.mxu0 0
    %5451 = vmatpush1.bf16.msra.mxu0 0
    %5452 = vmatprep.subr.bf16.mxu0 0
    %5453 = vmatpush1.bf16.msra.mxu0 0
    %5454 = vmatprep.subr.bf16.mxu0 0
    %5455 = vmatpush1.bf16.msra.mxu0 0
    %5456 = vmatprep.subr.bf16.mxu0 0
    %5457 = vmatpush1.bf16.msra.mxu0 0
    %5458 = vmatprep.subr.bf16.mxu0 0
    %5459 = vmatpush1.bf16.msra.mxu0 0
    %5460 = vmatprep.subr.bf16.mxu0 0
    %5461 = vmatpush1.bf16.msra.mxu0 0
    %5462 = vmatprep.subr.bf16.mxu0 0
    %5463 = vmatpush1.bf16.msra.mxu0 0
    %5464 = vmatprep.subr.bf16.mxu0 0
    %5465 = vmatpush1.bf16.msra.mxu0 0
    %5466 = vmatprep.subr.bf16.mxu0 0
    %5467 = vmatpush1.bf16.msra.mxu0 0
    %5468 = vmatprep.subr.bf16.mxu0 0
    %5469 = vmatpush1.bf16.msra.mxu0 0
    %5470 = vmatprep.mubr.bf16.mxu0 0
    %5471 = vmatmul.mubr.bf16.gmra.mrb[0].mxu0 %v5433
    %v5472 = vpop.f32.mrb[0].mxu0
    %v5473 = vadd.f32 0.0, %v5472
    %v5474 = vpop.f32.mrb[0].mxu0
    %v5475 = vpop.f32.mrb[0].mxu0
    %v5476 = vadd.f32 0.0, %v5475
    %v5477 = vpop.f32.mrb[0].mxu0
    %5478 = vmatprep.mubr.bf16.mxu0 0
    %5479 = vmatmul.mubr.bf16.gmra.mrb[0].mxu0 %v5436
    %v5480 = vpop.f32.mrb[0].mxu0
    %v5481 = vadd.f32 0.0, %v5480
    %v5482 = vpop.f32.mrb[0].mxu0
    %v5483 = vpop.f32.mrb[0].mxu0
    %v5484 = vadd.f32 0.0, %v5483
    %v5485 = vpop.f32.mrb[0].mxu0
    %5486 = vdwg.mxu0
    %v5487 = vrot.slane %v5473, 3
    %v5488 = vrot.slane %v5476, 3
    %v5489 = vrot.slane %v5481, 3
    %v5490 = vrot.slane %v5484, 3
    %v5491 = vsel %vm4788, %v5489, %v5490
    %v5492 = vsel %vm4788, %v5488, %v5489
    %v5493 = vsel %vm4788, %v5487, %v5488
    %v5494 = vsel %vm4788, %v5490, %v5487
    %v5495 = vmul.f32 %v5494, %v4796
    %v5496 = vmul.f32 %v5493, %v4801
    %v5497 = vmul.f32 %v5492, %v4806
    %v5498 = vmul.f32 %v5491, %v4811
    %v5499 = vadd.f32 %v5495, 0.0
    %v5500 = vadd.f32 %v5496, 0.0
    %v5501 = vadd.f32 %v5497, 0.0
    %v5502 = vadd.f32 %v5498, 0.0
    %5507 = vrot.lane.b32.xlu0 %v5473, 120
    %v5508 = vpop.permute.xlu0 %5507
    %5509 = vrot.lane.b32.xlu0 %v5476, 120
    %v5510 = vpop.permute.xlu0 %5509
    %5511 = vrot.lane.b32.xlu0 %v5481, 120
    %v5512 = vpop.permute.xlu0 %5511
    %5513 = vrot.lane.b32.xlu0 %v5484, 120
    %v5514 = vpop.permute.xlu0 %5513
    %v5519 = vrot.slane %v5508, 4
    %v5520 = vrot.slane %v5510, 4
    %v5521 = vrot.slane %v5512, 4
    %v5522 = vrot.slane %v5514, 4
    %v5523 = vsel %vm4841, %v5521, %v5522
    %v5524 = vsel %vm4841, %v5520, %v5521
    %v5525 = vsel %vm4841, %v5519, %v5520
    %v5526 = vsel %vm4841, %v5522, %v5519
    %v5527 = vmul.f32 %v5526, %v4848
    %v5528 = vmul.f32 %v5525, %v4852
    %v5529 = vmul.f32 %v5524, %v4856
    %v5530 = vmul.f32 %v5523, %v4860
    %v5531 = vadd.f32 %v5499, %v5527
    %v5532 = vadd.f32 %v5500, %v5528
    %v5533 = vadd.f32 %v5501, %v5529
    %v5534 = vadd.f32 %v5502, %v5530
    %5535 = vrot.lane.b32.xlu0 %v5473, 112
    %v5536 = vpop.permute.xlu0 %5535
    %5537 = vrot.lane.b32.xlu0 %v5476, 112
    %v5538 = vpop.permute.xlu0 %5537
    %5539 = vrot.lane.b32.xlu0 %v5481, 112
    %v5540 = vpop.permute.xlu0 %5539
    %5541 = vrot.lane.b32.xlu0 %v5484, 112
    %v5542 = vpop.permute.xlu0 %5541
    %v5547 = vrot.slane %v5536, 5
    %v5548 = vrot.slane %v5538, 5
    %v5549 = vrot.slane %v5540, 5
    %v5550 = vrot.slane %v5542, 5
    %v5551 = vsel %vm4886, %v5549, %v5550
    %v5552 = vsel %vm4886, %v5548, %v5549
    %v5553 = vsel %vm4886, %v5547, %v5548
    %v5554 = vsel %vm4886, %v5550, %v5547
    %v5555 = vmul.f32 %v5554, %v4893
    %v5556 = vmul.f32 %v5553, %v4897
    %v5557 = vmul.f32 %v5552, %v4901
    %v5558 = vmul.f32 %v5551, %v4905
    %v5559 = vadd.f32 %v5531, %v5555
    %v5560 = vadd.f32 %v5532, %v5556
    %v5561 = vadd.f32 %v5533, %v5557
    %v5562 = vadd.f32 %v5534, %v5558
    %5563 = vrot.lane.b32.xlu0 %v5473, 104
    %v5564 = vpop.permute.xlu0 %5563
    %5565 = vrot.lane.b32.xlu0 %v5476, 104
    %v5566 = vpop.permute.xlu0 %5565
    %5567 = vrot.lane.b32.xlu0 %v5481, 104
    %v5568 = vpop.permute.xlu0 %5567
    %5569 = vrot.lane.b32.xlu0 %v5484, 104
    %v5570 = vpop.permute.xlu0 %5569
    %v5575 = vrot.slane %v5564, 7
    %v5576 = vrot.slane %v5566, 7
    %v5577 = vrot.slane %v5568, 7
    %v5578 = vrot.slane %v5570, 7
    %v5579 = vsel %vm862, %v5577, %v5578
    %v5580 = vsel %vm862, %v5576, %v5577
    %v5581 = vsel %vm862, %v5575, %v5576
    %v5582 = vsel %vm862, %v5578, %v5575
    %v5583 = vmul.f32 %v5582, %v4937
    %v5584 = vmul.f32 %v5581, %v4941
    %v5585 = vmul.f32 %v5580, %v4945
    %v5586 = vmul.f32 %v5579, %v4949
    %v5587 = vadd.f32 %v5559, %v5583
    %v5588 = vadd.f32 %v5560, %v5584
    %v5589 = vadd.f32 %v5561, %v5585
    %v5590 = vadd.f32 %v5562, %v5586
    %v5591 = vmul.f32 %v5473, %v4961
    %v5592 = vmul.f32 %v5476, %v4965
    %v5593 = vmul.f32 %v5481, %v4969
    %v5594 = vmul.f32 %v5484, %v4973
    %5599 = vrot.lane.b32.xlu0 %v5591, 96
    %v5600 = vpop.permute.xlu0 %5599
    %5601 = vrot.lane.b32.xlu0 %v5592, 96
    %v5602 = vpop.permute.xlu0 %5601
    %5603 = vrot.lane.b32.xlu0 %v5593, 96
    %v5604 = vpop.permute.xlu0 %5603
    %5605 = vrot.lane.b32.xlu0 %v5594, 96
    %v5606 = vpop.permute.xlu0 %5605
    %v5611 = vadd.f32 %v5587, %v5600
    %v5612 = vadd.f32 %v5588, %v5602
    %v5613 = vadd.f32 %v5589, %v5604
    %v5614 = vadd.f32 %v5590, %v5606
    %5615 = vrot.lane.b32.xlu0 %v5473, 88
    %v5616 = vpop.permute.xlu0 %5615
    %5617 = vrot.lane.b32.xlu0 %v5476, 88
    %v5618 = vpop.permute.xlu0 %5617
    %5619 = vrot.lane.b32.xlu0 %v5481, 88
    %v5620 = vpop.permute.xlu0 %5619
    %5621 = vrot.lane.b32.xlu0 %v5484, 88
    %v5622 = vpop.permute.xlu0 %5621
    %v5627 = vrot.slane %v5616, 1
    %v5628 = vrot.slane %v5618, 1
    %v5629 = vrot.slane %v5620, 1
    %v5630 = vrot.slane %v5622, 1
    %v5631 = vsel %vm1215, %v5629, %v5630
    %v5632 = vsel %vm1215, %v5628, %v5629
    %v5633 = vsel %vm1215, %v5627, %v5628
    %v5634 = vsel %vm1215, %v5630, %v5627
    %v5635 = vmul.f32 %v5633, %v5021
    %v5636 = vmul.f32 %v5632, %v5025
    %v5637 = vmul.f32 %v5631, %v5029
    %v5638 = vmul.f32 %v5634, %v5033
    %v5639 = vadd.f32 %v5611, %v5635
    %v5640 = vadd.f32 %v5612, %v5636
    %v5641 = vadd.f32 %v5613, %v5637
    %v5642 = vadd.f32 %v5614, %v5638
    %5643 = vrot.lane.b32.xlu0 %v5473, 80
    %v5644 = vpop.permute.xlu0 %5643
    %5645 = vrot.lane.b32.xlu0 %v5476, 80
    %v5646 = vpop.permute.xlu0 %5645
    %5647 = vrot.lane.b32.xlu0 %v5481, 80
    %v5648 = vpop.permute.xlu0 %5647
    %5649 = vrot.lane.b32.xlu0 %v5484, 80
    %v5650 = vpop.permute.xlu0 %5649
    %v5655 = vrot.slane %v5644, 3
    %v5656 = vrot.slane %v5646, 3
    %v5657 = vrot.slane %v5648, 3
    %v5658 = vrot.slane %v5650, 3
    %v5659 = vsel %vm4788, %v5657, %v5658
    %v5660 = vsel %vm4788, %v5656, %v5657
    %v5661 = vsel %vm4788, %v5655, %v5656
    %v5662 = vsel %vm4788, %v5658, %v5655
    %v5663 = vmul.f32 %v5661, %v5065
    %v5664 = vmul.f32 %v5660, %v5069
    %v5665 = vmul.f32 %v5659, %v5073
    %v5666 = vmul.f32 %v5662, %v5077
    %v5667 = vadd.f32 %v5639, %v5663
    %v5668 = vadd.f32 %v5640, %v5664
    %v5669 = vadd.f32 %v5641, %v5665
    %v5670 = vadd.f32 %v5642, %v5666
    %5671 = vrot.lane.b32.xlu0 %v5473, 72
    %v5672 = vpop.permute.xlu0 %5671
    %5673 = vrot.lane.b32.xlu0 %v5476, 72
    %v5674 = vpop.permute.xlu0 %5673
    %5675 = vrot.lane.b32.xlu0 %v5481, 72
    %v5676 = vpop.permute.xlu0 %5675
    %5677 = vrot.lane.b32.xlu0 %v5484, 72
    %v5678 = vpop.permute.xlu0 %5677
    %v5683 = vrot.slane %v5672, 4
    %v5684 = vrot.slane %v5674, 4
    %v5685 = vrot.slane %v5676, 4
    %v5686 = vrot.slane %v5678, 4
    %v5687 = vsel %vm4841, %v5685, %v5686
    %v5688 = vsel %vm4841, %v5684, %v5685
    %v5689 = vsel %vm4841, %v5683, %v5684
    %v5690 = vsel %vm4841, %v5686, %v5683
    %v5691 = vmul.f32 %v5689, %v5109
    %v5692 = vmul.f32 %v5688, %v5113
    %v5693 = vmul.f32 %v5687, %v5117
    %v5694 = vmul.f32 %v5690, %v5121
    %v5695 = vadd.f32 %v5667, %v5691
    %v5696 = vadd.f32 %v5668, %v5692
    %v5697 = vadd.f32 %v5669, %v5693
    %v5698 = vadd.f32 %v5670, %v5694
    %5699 = vrot.lane.b32.xlu0 %v5473, 64
    %v5700 = vpop.permute.xlu0 %5699
    %5701 = vrot.lane.b32.xlu0 %v5476, 64
    %v5702 = vpop.permute.xlu0 %5701
    %5703 = vrot.lane.b32.xlu0 %v5481, 64
    %v5704 = vpop.permute.xlu0 %5703
    %5705 = vrot.lane.b32.xlu0 %v5484, 64
    %v5706 = vpop.permute.xlu0 %5705
    %v5711 = vrot.slane %v5700, 5
    %v5712 = vrot.slane %v5702, 5
    %v5713 = vrot.slane %v5704, 5
    %v5714 = vrot.slane %v5706, 5
    %v5715 = vsel %vm4886, %v5713, %v5714
    %v5716 = vsel %vm4886, %v5712, %v5713
    %v5717 = vsel %vm4886, %v5711, %v5712
    %v5718 = vsel %vm4886, %v5714, %v5711
    %v5719 = vmul.f32 %v5717, %v5153
    %v5720 = vmul.f32 %v5716, %v5157
    %v5721 = vmul.f32 %v5715, %v5161
    %v5722 = vmul.f32 %v5718, %v5165
    %v5723 = vadd.f32 %v5695, %v5719
    %v5724 = vadd.f32 %v5696, %v5720
    %v5725 = vadd.f32 %v5697, %v5721
    %v5726 = vadd.f32 %v5698, %v5722
    %5731 = vrot.lane.b32.xlu0 %v5723, 48
    %v5732 = vpop.permute.xlu0 %5731
    %5733 = vrot.lane.b32.xlu0 %v5724, 48
    %v5734 = vpop.permute.xlu0 %5733
    %5735 = vrot.lane.b32.xlu0 %v5725, 48
    %v5736 = vpop.permute.xlu0 %5735
    %5737 = vrot.lane.b32.xlu0 %v5726, 48
    %v5738 = vpop.permute.xlu0 %5737
    %vm5743 = vcmask 458112
    %5744 = vst.msk [vmem:[#allocation3] sm:$0xff] %vm5743, %v5732
    %5745 = vst.msk [vmem:[#allocation3 + $0x8] sm:$0xff] %vm5743, %v5734
    %5746 = vst.msk [vmem:[#allocation3 + $0x10] sm:$0xff] %vm5743, %v5736
    %5747 = vst.msk [vmem:[#allocation3 + $0x18] sm:$0xff] %vm5743, %v5738
    %v5748 = vld [vmem:[#allocation3] sm:$0xff]
    %v5749 = vld [vmem:[#allocation3 + $0x8] sm:$0xff]
    %v5750 = vld [vmem:[#allocation3 + $0x10] sm:$0xff]
    %v5751 = vld [vmem:[#allocation3 + $0x18] sm:$0xff]
    %vm5752 = vcmask 457728
    %v5753 = vsel %vm5752, %v5748, 0.0
    %v5754 = vsel %vm5752, %v5749, 0.0
    %v5755 = vadd.f32 %v5753, %v5754
    %v5756 = vsel %vm5752, %v5750, 0.0
    %v5757 = vadd.f32 %v5755, %v5756
    %v5758 = vsel %vm5752, %v5751, 0.0
    %v5759 = vadd.f32 %v5757, %v5758
    %v5760 = vrot.slane %v5759, 4
    %v5761 = vadd.f32 %v5759, %v5760
    %v5762 = vrot.slane %v5761, 2
    %v5763 = vadd.f32 %v5761, %v5762
    %v5764 = vrot.slane %v5763, 1
    %v5765 = vadd.f32 %v5763, %v5764
    %v5766 = vmul.f32 %v5765, 0.03125
    %v5767 = vmul.f32 %v5748, %v5748
    %v5768 = vmul.f32 %v5749, %v5749
    %v5769 = vmul.f32 %v5750, %v5750
    %v5770 = vmul.f32 %v5751, %v5751
    %v5771 = vsel %vm5752, %v5767, 0.0
    %v5772 = vsel %vm5752, %v5768, 0.0
    %v5773 = vadd.f32 %v5771, %v5772
    %v5774 = vsel %vm5752, %v5769, 0.0
    %v5775 = vadd.f32 %v5773, %v5774
    %v5776 = vsel %vm5752, %v5770, 0.0
    %v5777 = vadd.f32 %v5775, %v5776
    %v5778 = vrot.slane %v5777, 4
    %v5779 = vadd.f32 %v5777, %v5778
    %v5780 = vrot.slane %v5779, 2
    %v5781 = vadd.f32 %v5779, %v5780
    %v5782 = vrot.slane %v5781, 1
    %v5783 = vadd.f32 %v5781, %v5782
    %v5784 = vmul.f32 %v5783, 0.03125
    %v5785 = vmul.f32 %v5766, %v5766
    %v5786 = vsub.f32 %v5784, %v5785
    %v5787 = vmax.f32 %v5786, 0.0
    %v5788 = vld [vmem:[%s63] sm:$0x1]
    %v5789 = vadd.f32 %v5787, 1e-05
    %v5790 = vrsqrt.pop %v5789
    %v5791 = vmul.f32 %v5788, %v5790
    %v5792 = vld [vmem:[%s65] sm:$0x1]
    %v5793 = vmul.f32 %v5766, %v5791
    %v5794 = vsub.f32 %v5792, %v5793
    %v5796 = vlaneseq
    %v5797 = vshrl.u32 %v5796, 7
    %v5798 = vsub.s32 0, %v5797
    %v5799 = vrot.slane %v5791, %v5798
    %v5801 = vmul.f32 %v5748, %v5799
    %v5802 = vmul.f32 %v5749, %v5799
    %v5803 = vmul.f32 %v5750, %v5799
    %v5804 = vmul.f32 %v5751, %v5799
    %v5806 = vlaneseq
    %v5807 = vshrl.u32 %v5806, 7
    %v5808 = vsub.s32 0, %v5807
    %v5809 = vrot.slane %v5794, %v5808
    %v5811 = vadd.f32 %v5801, %v5809
    %v5812 = vadd.f32 %v5802, %v5809
    %v5813 = vadd.f32 %v5803, %v5809
    %v5814 = vadd.f32 %v5804, %v5809
    %v5815 = vmax.f32 %v5811, 0.0
    %v5816 = vmax.f32 %v5812, 0.0
    %v5817 = vmax.f32 %v5813, 0.0
    %v5818 = vmax.f32 %v5814, 0.0
    %v5819 = vsel %vm5752, %v5815, 0.0
    %v5820 = vsel %vm5752, %v5816, 0.0
    %v5821 = vadd.f32 %v5819, %v5820
    %v5822 = vrot.slane %v5821, 4
    %v5823 = vadd.f32 %v5821, %v5822
    %v5824 = vrot.slane %v5823, 2
    %v5825 = vadd.f32 %v5823, %v5824
    %v5826 = vrot.slane %v5825, 1
    %v5827 = vadd.f32 %v5825, %v5826
    %v5828 = vsel %vm5752, %v5817, 0.0
    %v5829 = vsel %vm5752, %v5818, 0.0
    %v5830 = vadd.f32 %v5828, %v5829
    %v5831 = vrot.slane %v5830, 4
    %v5832 = vadd.f32 %v5830, %v5831
    %v5833 = vrot.slane %v5832, 2
    %v5834 = vadd.f32 %v5832, %v5833
    %v5835 = vrot.slane %v5834, 1
    %v5836 = vadd.f32 %v5834, %v5835
    %v5837 = vmul.f32 %v5827, 0.0625
    %v5838 = vmul.f32 %v5836, 0.0625
    %v5839 = vld [vmem:[%s67] sm:$0xff]
    %v5840 = vld [vmem:[%s67 + $0x8] sm:$0xff]
    %v5841 = vld [vmem:[%s67 + $0x10] sm:$0xff]
    %v5842 = vld [vmem:[%s67 + $0x18] sm:$0xff]
    %v5843 = vld [vmem:[%s67 + $0x20] sm:$0xff]
    %v5844 = vld [vmem:[%s67 + $0x28] sm:$0xff]
    %v5845 = vld [vmem:[%s67 + $0x30] sm:$0xff]
    %v5846 = vld [vmem:[%s69] sm:$0x1]
    %v5848 = vlaneseq
    %v5849 = vshrl.u32 %v5848, 7
    %v5850 = vsub.s32 0, %v5849
    %v5851 = vrot.slane %v5846, %v5850
    %vm5855 = vcmask 1041409
    %v5856 = vsel %vm5855, %v5838, %v5837
    %v5857 = vsel %vm5752, %v5856, 0
    %5859 = vmatprep.subr.mxu0 0.0
    %5860 = vmatpush1.msra.mxu0 %v5839
    %5861 = vmatprep.subr.mxu0 0.0
    %5862 = vmatpush1.msra.mxu0 %v5840
    %5863 = vmatprep.subr.mxu0 0.0
    %5864 = vmatpush1.msra.mxu0 %v5841
    %5865 = vmatprep.subr.mxu0 0.0
    %5866 = vmatpush1.msra.mxu0 %v5842
    %5867 = vmatprep.subr.mxu0 0.0
    %5868 = vmatpush1.msra.mxu0 %v5843
    %5869 = vmatprep.subr.mxu0 0.0
    %5870 = vmatpush1.msra.mxu0 %v5844
    %5871 = vmatprep.subr.mxu0 0.0
    %5872 = vmatpush1.msra.mxu0 %v5845
    %5873 = vmatprep.subr.mxu0 0.0
    %5874 = vmatpush1.msra.mxu0 0.0
    %5875 = vmatprep.subr.mxu0 0.0
    %5876 = vmatpush1.msra.mxu0 0.0
    %5877 = vmatprep.subr.mxu0 0.0
    %5878 = vmatpush1.msra.mxu0 0.0
    %5879 = vmatprep.subr.mxu0 0.0
    %5880 = vmatpush1.msra.mxu0 0.0
    %5881 = vmatprep.subr.mxu0 0.0
    %5882 = vmatpush1.msra.mxu0 0.0
    %5883 = vmatprep.subr.mxu0 0.0
    %5884 = vmatpush1.msra.mxu0 0.0
    %5885 = vmatprep.subr.mxu0 0.0
    %5886 = vmatpush1.msra.mxu0 0.0
    %5887 = vmatprep.subr.mxu0 0.0
    %5888 = vmatpush1.msra.mxu0 0.0
    %5889 = vmatprep.subr.mxu0 0.0
    %5890 = vmatpush1.msra.mxu0 0.0
    %5891 = vmatprep.subr.mxu0 0.0
    %5892 = vmatpush1.msra.mxu0 0.0
    %5893 = vmatprep.subr.mxu0 0.0
    %5894 = vmatpush1.msra.mxu0 0.0
    %5895 = vmatprep.subr.mxu0 0.0
    %5896 = vmatpush1.msra.mxu0 0.0
    %5897 = vmatprep.subr.mxu0 0.0
    %5898 = vmatpush1.msra.mxu0 0.0
    %5899 = vmatprep.subr.mxu0 0.0
    %5900 = vmatpush1.msra.mxu0 0.0
    %5901 = vmatprep.subr.mxu0 0.0
    %5902 = vmatpush1.msra.mxu0 0.0
    %5903 = vmatprep.subr.mxu0 0.0
    %5904 = vmatpush1.msra.mxu0 0.0
    %5905 = vmatprep.subr.mxu0 0.0
    %5906 = vmatpush1.msra.mxu0 0.0
    %5907 = vmatprep.subr.mxu0 0.0
    %5908 = vmatpush1.msra.mxu0 0.0
    %5909 = vmatprep.subr.mxu0 0.0
    %5910 = vmatpush1.msra.mxu0 0.0
    %5911 = vmatprep.subr.mxu0 0.0
    %5912 = vmatpush1.msra.mxu0 0.0
    %5913 = vmatprep.subr.mxu0 0.0
    %5914 = vmatpush1.msra.mxu0 0.0
    %5915 = vmatprep.subr.mxu0 0.0
    %5916 = vmatpush1.msra.mxu0 0.0
    %5917 = vmatprep.subr.mxu0 0.0
    %5918 = vmatpush1.msra.mxu0 0.0
    %5919 = vmatprep.subr.mxu0 0.0
    %5920 = vmatpush1.msra.mxu0 0.0
    %5921 = vmatprep.subr.mxu0 0.0
    %5922 = vmatpush1.msra.mxu0 0.0
    %5923 = vmatprep.mubr.f32.mxu0 0.0
    %5924 = vmatmul.mubr.f32.gmra.mrb[0].mxu0 %v5857
    %v5925 = vpop.f32.mrb[0].mxu0
    %v5926 = vadd.f32 %v5851, %v5925
    %v5927 = vpop.f32.mrb[0].mxu0
    %5928 = vdwg.mxu0
    %vm5929 = vcmask 74752
    %5930 = vst.msk [vmem:[#allocation4] sm:$0x3] %vm5929, %v5926
    // Predicated region
    $region142: #{densenet_fwd.3} parent=1 // pred_check
      _
    $region143: #{densenet_fwd.3} parent=1 // pred_check_branch
      %5932 = sbr.rel (0) target = $region145
    $region144: #{densenet_fwd.3} parent=1 // pred_region
      %s5934 = ssub.s32 32, 32
      %5935 = vsyncadd [#allocation5], %s5934
      %s5937 = sshll.u32 [#allocation4], 4
      %s5938 = int_to_ptr.vmem [resolvable:$true] %s5937
      %5940 = dma.vmem_to_hbm [thread:$0]  %s5938, 32, %s71, [#allocation5]
    $region145: #{densenet_fwd.3} parent=1 // pred_fallthru
      _
    // Predicated region
    $region146: #{densenet_fwd.3} parent=1 // pred_check
      _
    $region147: #{densenet_fwd.3} parent=1 // pred_check_branch
      %5942 = sbr.rel (0) target = $region149
    $region148: #{densenet_fwd.3} parent=1 // pred_region
      %5943 = dma.done [#allocation5], 32
    $region149: #{densenet_fwd.3} parent=1 // pred_fallthru
      _
    %5944 = vsyncpa [#allocation5], 1

</llo_original>
